<compile_context>
chip_gen: v7x
topology: tpu7x:2x2x1
jax: 0.10.0
libtpu: 0.0.40
codegen_flags: <defaults>
</compile_context>

<pallas_src>
import jax
import jax.numpy as jnp
from jax.experimental import pallas as pl
from jax.experimental.pallas import tpu as pltpu

BN_EPS = 1e-5


def _round_up(x, m):
    return (x + m - 1) // m * m


def _tpu_budgets():
    """Pick scoped-VMEM limit and max M-tile from the chip generation."""
    try:
        cap = pltpu.get_tpu_info().vmem_capacity_bytes
    except Exception:
        cap = 64 * 1024 * 1024              # conservative (v7x-sized) default
    if cap >= 100 * 1024 * 1024:            # v5e / v6e: 128 MiB physical VMEM
        return 64 * 1024 * 1024, 1024
    return 40 * 1024 * 1024, 512            # v7x: 64 MiB physical VMEM


VMEM_LIMIT, MAX_TILE_M = _tpu_budgets()


def _pick_tile(M):
    """Balanced M tiling: >= 2 grid steps when possible (v7x dual-TC sharding),
    tiles multiples of 16 (bf16 sublane pack), row padding kept < 16."""
    num = max(1, -(-M // MAX_TILE_M))
    if num == 1 and M > 16:
        num = 2
    tile = _round_up(-(-M // num), 16)
    num = -(-M // tile)
    return tile, num


# ----------------------------------------------------------------------------
# Pallas kernels
# ----------------------------------------------------------------------------

def _conv_relu_stats(patches, w, b):
    """Batched matmul + bias + ReLU (bf16 out) + per-tile BN channel partials.

    patches: (G, M, K) bf16, w: (G, K_pad, Coutp) bf16, b: (1, Coutp) f32.
    Returns y (G, M_pad, Coutp) bf16 and stats (G*grid_m, 2, Coutp) f32 where,
    per tile, row 0 = per-channel sum over valid rows, row 1 = sum of squares.
    """
    G, M, K = patches.shape
    _, K_pad, Coutp = w.shape
    tile_m, grid_m = _pick_tile(M)
    M_pad = tile_m * grid_m
    if M_pad != M or K_pad != K:
        patches = jnp.pad(patches, ((0, 0), (0, M_pad - M), (0, K_pad - K)))
    needs_mask = M_pad != M

    def kernel(p_ref, w_ref, b_ref, y_ref, s_ref):
        acc = jnp.dot(p_ref[0], w_ref[0], preferred_element_type=jnp.float32)
        y = jnp.maximum(acc + b_ref[...], 0.0)       # ReLU before BN (reference order)
        y_ref[0] = y.astype(y_ref.dtype)             # bf16 activation for next layer
        if needs_mask:                               # keep padded rows out of the stats
            row = (pl.program_id(1) * tile_m
                   + jax.lax.broadcasted_iota(jnp.int32, (tile_m, 1), 0))
            y = jnp.where(row < M, y, 0.0)
        s_ref[0, 0:1, :] = jnp.sum(y, axis=0, keepdims=True)
        s_ref[0, 1:2, :] = jnp.sum(y * y, axis=0, keepdims=True)

    y, stats = pl.pallas_call(
        kernel,
        out_shape=(jax.ShapeDtypeStruct((G, M_pad, Coutp), jnp.bfloat16),
                   jax.ShapeDtypeStruct((G * grid_m, 2, Coutp), jnp.float32)),
        grid=(G, grid_m),
        in_specs=[
            pl.BlockSpec((1, tile_m, K_pad), lambda g, i: (g, i, 0)),
            pl.BlockSpec((1, K_pad, Coutp), lambda g, i: (g, 0, 0)),
            pl.BlockSpec((1, Coutp), lambda g, i: (0, 0)),
        ],
        out_specs=(
            pl.BlockSpec((1, tile_m, Coutp), lambda g, i: (g, i, 0)),
            pl.BlockSpec((1, 2, Coutp), lambda g, i: (g * grid_m + i, 0, 0)),
        ),
        compiler_params=pltpu.CompilerParams(
            dimension_semantics=("parallel", "parallel"),
            vmem_limit_bytes=VMEM_LIMIT),
    )(patches, w, b)
    return y, stats


def _matmul_sigmoid(patches, w, b):
    """Final layer: matmul + bias + sigmoid, Cout pre-padded to 128 lanes."""
    M, K = patches.shape
    K_pad, Coutp = w.shape
    tile_m, grid_m = _pick_tile(M)
    M_pad = tile_m * grid_m
    if M_pad != M or K_pad != K:
        patches = jnp.pad(patches, ((0, M_pad - M), (0, K_pad - K)))

    def kernel(p_ref, w_ref, b_ref, o_ref):
        acc = jnp.dot(p_ref[...], w_ref[...], preferred_element_type=jnp.float32)
        z = acc + b_ref[...]
        o_ref[...] = 1.0 / (1.0 + jnp.exp(-z))       # exp on EUP; exact [0,1] output

    out = pl.pallas_call(
        kernel,
        out_shape=jax.ShapeDtypeStruct((M_pad, Coutp), jnp.float32),
        grid=(grid_m,),
        in_specs=[
            pl.BlockSpec((tile_m, K_pad), lambda i: (i, 0)),
            pl.BlockSpec((K_pad, Coutp), lambda i: (0, 0)),
            pl.BlockSpec((1, Coutp), lambda i: (0, 0)),
        ],
        out_specs=pl.BlockSpec((tile_m, Coutp), lambda i: (i, 0)),
        compiler_params=pltpu.CompilerParams(
            dimension_semantics=("parallel",),
            vmem_limit_bytes=VMEM_LIMIT),
    )(patches, w, b)
    return out


# ----------------------------------------------------------------------------
# JAX glue: im2col, BN scale/shift combine, layer wiring
# ----------------------------------------------------------------------------

def _im2col(x, KH, KW, stride, dilation, padding):
    """x: (N, H, W, C) -> patches (N*Ho*Wo, KH*KW*C), column order (kh, kw, c)."""
    N, H, W, C = x.shape
    Ho = (H + 2 * padding - dilation * (KH - 1) - 1) // stride + 1
    Wo = (W + 2 * padding - dilation * (KW - 1) - 1) // stride + 1
    if padding:
        x = jnp.pad(x, ((0, 0), (padding, padding), (padding, padding), (0, 0)))
    cols = []
    for kh in range(KH):
        for kw in range(KW):
            h0, w0 = kh * dilation, kw * dilation
            cols.append(jax.lax.slice(
                x, (0, h0, w0, 0),
                (N, h0 + (Ho - 1) * stride + 1, w0 + (Wo - 1) * stride + 1, C),
                (1, stride, stride, 1)))
    patches = jnp.concatenate(cols, axis=-1)
    return patches.reshape(N * Ho * Wo, KH * KW * C), (N, Ho, Wo)


def _bn_scale_shift(stats, count, gamma, beta):
    """Combine per-tile (sum, sumsq) partials into BN scale/shift (train-mode stats)."""
    tot = jnp.sum(stats, axis=0)                         # (2, Coutp)
    cout = gamma.shape[0]
    mean = tot[0, :cout] / count
    var = jnp.maximum(tot[1, :cout] / count - mean * mean, 0.0)   # biased var (torch BN train)
    scale = gamma * jax.lax.rsqrt(var + BN_EPS)
    shift = beta - mean * scale
    return scale.reshape(1, 1, 1, cout), shift.reshape(1, 1, 1, cout)


def conv_layer(x, p, cfg):
    k, stride, dil, pad = cfg["k"], cfg["stride"], cfg["dil"], cfg["pad"]
    cout = cfg["cout"]
    patches, (N, Ho, Wo) = _im2col(x, k, k, stride, dil, pad)
    M = patches.shape[0]
    if cfg.get("act", "bn_relu") == "sigmoid":
        y = _matmul_sigmoid(patches, p["w"], p["b"])
        return y[:M, :cout].reshape(N, Ho, Wo, cout), None      # f32 final output
    y, stats = _conv_relu_stats(patches[None], p["w"], p["b"])
    scale, shift = _bn_scale_shift(stats, float(M), p["gamma"], p["beta"])
    x_out = y[0, :M, :cout].reshape(N, Ho, Wo, cout)            # raw ReLU, bf16
    return x_out, (scale, shift)                                # BN applied by next layer


def deconv_layer(x, p, cfg):
    """ConvTranspose2d(k=4, s=2, p=1) via 4 sub-pixel phases in ONE pallas_call."""
    cout = cfg["cout"]
    N, H, W, _ = x.shape
    plist = []
    for r in (0, 1):
        for s in (0, 1):
            xp = jnp.pad(x, ((0, 0), (1 - r, r), (1 - s, s), (0, 0)))
            pr, _ = _im2col(xp, 2, 2, 1, 1, 0)                  # (N*H*W, 4*Cin)
            plist.append(pr)
    patches = jnp.stack(plist, axis=0)                          # (4, M, K)
    M = N * H * W
    y, stats = _conv_relu_stats(patches, p["w"], p["b"])        # (4, M_pad, Coutp) bf16
    scale, shift = _bn_scale_shift(stats, 4.0 * M, p["gamma"], p["beta"])
    # Interleave in bf16: out[n, 2h+r, 2w+s, c] = phase[2r+s][n, h, w, c]
    y = y[:, :M, :cout].reshape(2, 2, N, H, W, cout)
    y = jnp.transpose(y, (2, 3, 0, 4, 1, 5)).reshape(N, 2 * H, 2 * W, cout)
    return y, (scale, shift)


LAYERS = [
    dict(name="conv1",    typ="conv",   cin=4,   cout=32,  k=5, stride=1, dil=1,  pad=2),
    dict(name="conv2",    typ="conv",   cin=32,  cout=64,  k=3, stride=2, dil=1,  pad=1),
    dict(name="conv3",    typ="conv",   cin=64,  cout=64,  k=3, stride=1, dil=1,  pad=1),
    dict(name="conv4",    typ="conv",   cin=64,  cout=128, k=3, stride=2, dil=1,  pad=1),
    dict(name="conv5",    typ="conv",   cin=128, cout=128, k=3, stride=1, dil=1,  pad=1),
    dict(name="conv6",    typ="conv",   cin=128, cout=128, k=3, stride=1, dil=1,  pad=1),
    dict(name="conv7",    typ="conv",   cin=128, cout=128, k=3, stride=1, dil=2,  pad=2),
    dict(name="conv8",    typ="conv",   cin=128, cout=128, k=3, stride=1, dil=4,  pad=4),
    dict(name="conv9",    typ="conv",   cin=128, cout=128, k=3, stride=1, dil=8,  pad=8),
    dict(name="conv10",   typ="conv",   cin=128, cout=128, k=3, stride=1, dil=16, pad=16),
    dict(name="conv11",   typ="conv",   cin=128, cout=128, k=3, stride=1, dil=1,  pad=1),
    dict(name="conv12",   typ="conv",   cin=128, cout=128, k=3, stride=1, dil=1,  pad=1),
    dict(name="deconv13", typ="deconv", cin=128, cout=64,  k=4, stride=2, dil=1,  pad=1),
    dict(name="conv14",   typ="conv",   cin=64,  cout=64,  k=3, stride=1, dil=1,  pad=1),
    dict(name="deconv15", typ="deconv", cin=64,  cout=32,  k=4, stride=2, dil=1,  pad=1),
    dict(name="conv16",   typ="conv",   cin=32,  cout=32,  k=3, stride=1, dil=1,  pad=1),
    dict(name="conv17",   typ="conv",   cin=32,  cout=3,   k=3, stride=1, dil=1,  pad=1,
         act="sigmoid"),
]


def init_params(key):
    """Deterministic synthetic params with the same shapes as the torch module."""
    params = {}
    for cfg in LAYERS:
        key, wk, bk = jax.random.split(key, 3)
        cin, cout, k = cfg["cin"], cfg["cout"], cfg["k"]
        wshape = (cout, cin, k, k) if cfg["typ"] == "conv" else (cin, cout, k, k)
        bound = 1.0 / float(cin * k * k) ** 0.5
        p = {
            "w": jax.random.uniform(wk, wshape, jnp.float32, -bound, bound),
            "b": jax.random.uniform(bk, (cout,), jnp.float32, -bound, bound),
        }
        if cfg.get("act", "bn_relu") == "bn_relu":         # BatchNorm2d: gamma=1, beta=0
            p["gamma"] = jnp.ones((cout,), jnp.float32)
            p["beta"] = jnp.zeros((cout,), jnp.float32)
        params[cfg["name"]] = p
    return params


def prepare_params(params):
    """One-time weight re-layout / padding / bf16 cast (hoisted out of forward)."""
    prepped = {}
    for cfg in LAYERS:
        name, cin, cout, k = cfg["name"], cfg["cin"], cfg["cout"], cfg["k"]
        p = params[name]
        coutp = _round_up(cout, 128)                       # lane-dense output stores
        lp = {}
        if cfg["typ"] == "conv":
            K = k * k * cin
            K_pad = _round_up(K, 128)
            w = jnp.transpose(p["w"], (2, 3, 1, 0)).reshape(K, cout)
            w = jnp.pad(w, ((0, K_pad - K), (0, coutp - cout))).astype(jnp.bfloat16)
            if cfg.get("act", "bn_relu") != "sigmoid":
                w = w[None]                                # leading group axis of 1
            lp["w"] = w
        else:  # deconv: 4 sub-pixel phase weight matrices (2x2 taps each)
            w_t = p["w"]                                   # (Cin, Cout, 4, 4)
            K = 4 * cin
            K_pad = _round_up(K, 128)
            phases = []
            for r in (0, 1):
                for s in (0, 1):
                    # tap (dh, dw) of phase (r, s) uses w[:, :, 3-r-2*dh, 3-s-2*dw]
                    sub = w_t[:, :, 3 - r::-2, 3 - s::-2]  # (Cin, Cout, 2, 2)
                    wf = jnp.transpose(sub, (2, 3, 0, 1)).reshape(K, cout)
                    wf = jnp.pad(wf, ((0, K_pad - K), (0, coutp - cout)))
                    phases.append(wf)
            lp["w"] = jnp.stack(phases, axis=0).astype(jnp.bfloat16)   # (4, K_pad, Coutp)
        lp["b"] = jnp.pad(p["b"], (0, coutp - cout)).reshape(1, coutp).astype(jnp.float32)
        if cfg.get("act", "bn_relu") == "bn_relu":
            lp["gamma"] = p["gamma"].astype(jnp.float32)
            lp["beta"] = p["beta"].astype(jnp.float32)
        prepped[name] = lp
    return prepped


def forward(prepped, x_nchw):
    x = jnp.transpose(x_nchw, (0, 2, 3, 1)).astype(jnp.bfloat16)   # NCHW -> NHWC, bf16
    pending = None                                                 # deferred BN affine
    for cfg in LAYERS:
        if pending is not None:
            scale, shift = pending
            # Previous layer's BN, applied before this layer's zero padding so the
            # border semantics are exact; XLA fuses it into the im2col slices.
            x = (x.astype(jnp.float32) * scale + shift).astype(jnp.bfloat16)
        p = prepped[cfg["name"]]
        if cfg["typ"] == "conv":
            x, pending = conv_layer(x, p, cfg)
        else:
            x, pending = deconv_layer(x, p, cfg)
    return jnp.transpose(x, (0, 3, 1, 2))                          # NHWC -> NCHW (f32)


if __name__ == "__main__":
    key = jax.random.PRNGKey(0)
    pkey, xkey = jax.random.split(key)
    raw_params = init_params(pkey)
    prepped = prepare_params(raw_params)
    x = jax.random.normal(xkey, (2, 4, 16, 16), dtype=jnp.float32)   # NCHW, like torch

    fwd = jax.jit(forward)
    y = jax.block_until_ready(fwd(prepped, x))

    assert y.shape == (2, 3, 16, 16), y.shape
    assert y.dtype == jnp.float32
    assert bool(jnp.all(jnp.isfinite(y)))
    assert bool(jnp.all((y >= 0.0) & (y <= 1.0)))     # sigmoid output range
    print("KERNEL_OK")
</pallas_src>

<mosaic_0001>
module attributes {stable_mosaic.version = 11 : i64} {
  func.func @kernel(%arg0: i32, %arg1: i32, %arg2: memref<1x256x128xbf16, #tpu.memory_space<vmem>>, %arg3: memref<1x128x128xbf16, #tpu.memory_space<vmem>>, %arg4: memref<1x128xf32, #tpu.memory_space<vmem>>, %arg5: memref<1x256x128xbf16, #tpu.memory_space<vmem>>, %arg6: memref<1x2x128xf32, #tpu.memory_space<vmem>>) attributes {dimension_semantics = [#tpu.dimension_semantics<parallel>, #tpu.dimension_semantics<parallel>], iteration_bounds = array<i64: 1, 2>, scalar_prefetch = 0 : i64, scratch_operands = 0 : i64, tpu.core_type = #tpu.core_type<tc>, window_params = [{transform_indices = @transform_0, window_bounds = array<i64: 1, 256, 128>}, {transform_indices = @transform_1, window_bounds = array<i64: 1, 128, 128>}, {pipeline_mode = #tpu.pipeline_mode<synchronous>, transform_indices = @transform_2, window_bounds = array<i64: 1, 128>}, {transform_indices = @transform_3, window_bounds = array<i64: 1, 256, 128>}, {transform_indices = @transform_4, window_bounds = array<i64: 1, 2, 128>}]} {
    %c0 = arith.constant 0 : index
    %c0_0 = arith.constant 0 : index
    %c0_1 = arith.constant 0 : index
    %0 = vector.load %arg2[%c0, %c0_0, %c0_1] : memref<1x256x128xbf16, #tpu.memory_space<vmem>>, vector<1x256x128xbf16>
    %1 = vector.shape_cast %0 : vector<1x256x128xbf16> to vector<256x128xbf16>
    %c0_2 = arith.constant 0 : index
    %c0_3 = arith.constant 0 : index
    %c0_4 = arith.constant 0 : index
    %2 = vector.load %arg3[%c0_2, %c0_3, %c0_4] : memref<1x128x128xbf16, #tpu.memory_space<vmem>>, vector<1x128x128xbf16>
    %3 = vector.shape_cast %2 : vector<1x128x128xbf16> to vector<128x128xbf16>
    %cst = arith.constant dense<0.000000e+00> : vector<256x128xf32>
    %4 = tpu.matmul %1, %3, %cst {dimension_numbers = #tpu.dot_dimension_numbers<[1], [0], [0], [1], [0, 0, 1, 1], [], []>} : vector<256x128xbf16>, vector<128x128xbf16>, vector<256x128xf32> -> vector<256x128xf32>
    %c0_5 = arith.constant 0 : index
    %c0_6 = arith.constant 0 : index
    %5 = vector.load %arg4[%c0_5, %c0_6] : memref<1x128xf32, #tpu.memory_space<vmem>>, vector<1x128xf32>
    %6 = vector.broadcast %5 : vector<1x128xf32> to vector<256x128xf32>
    %7 = arith.addf %4, %6 : vector<256x128xf32>
    %cst_7 = arith.constant 0.000000e+00 : f32
    %8 = vector.broadcast %cst_7 : f32 to vector<256x128xf32>
    %9 = arith.maximumf %7, %8 : vector<256x128xf32>
    %10 = arith.truncf %9 : vector<256x128xf32> to vector<256x128xbf16>
    %c0_8 = arith.constant 0 : index
    %c0_9 = arith.constant 0 : index
    %c0_10 = arith.constant 0 : index
    %11 = vector.load %arg5[%c0_8, %c0_9, %c0_10] : memref<1x256x128xbf16, #tpu.memory_space<vmem>>, vector<1x256x128xbf16>
    %12 = vector.shape_cast %11 : vector<1x256x128xbf16> to vector<256x128xbf16>
    %13 = vector.shape_cast %10 : vector<256x128xbf16> to vector<1x256x128xbf16>
    tpu.vector_store %arg5[%c0_8, %c0_9, %c0_10], %13 {strides = array<i32>} : memref<1x256x128xbf16, #tpu.memory_space<vmem>>, vector<1x256x128xbf16>,
    %cst_11 = arith.constant dense<0.000000e+00> : vector<128xf32>
    %14 = vector.multi_reduction <add>, %9, %cst_11 [0] : vector<256x128xf32> to vector<128xf32>
    %15 = vector.shape_cast %14 : vector<128xf32> to vector<1x128xf32>
    %c0_12 = arith.constant 0 : index
    %c0_13 = arith.constant 0 : index
    %c0_14 = arith.constant 0 : index
    %16 = vector.load %arg6[%c0_12, %c0_13, %c0_14] : memref<1x2x128xf32, #tpu.memory_space<vmem>>, vector<1x1x128xf32>
    %17 = vector.shape_cast %16 : vector<1x1x128xf32> to vector<1x128xf32>
    %18 = vector.shape_cast %15 : vector<1x128xf32> to vector<1x1x128xf32>
    tpu.vector_store %arg6[%c0_12, %c0_13, %c0_14], %18 {strides = array<i32>} : memref<1x2x128xf32, #tpu.memory_space<vmem>>, vector<1x1x128xf32>,
    %19 = arith.mulf %9, %9 : vector<256x128xf32>
    %cst_15 = arith.constant dense<0.000000e+00> : vector<128xf32>
    %20 = vector.multi_reduction <add>, %19, %cst_15 [0] : vector<256x128xf32> to vector<128xf32>
    %21 = vector.shape_cast %20 : vector<128xf32> to vector<1x128xf32>
    %c0_16 = arith.constant 0 : index
    %c1 = arith.constant 1 : index
    %c0_17 = arith.constant 0 : index
    %22 = vector.load %arg6[%c0_16, %c1, %c0_17] : memref<1x2x128xf32, #tpu.memory_space<vmem>>, vector<1x1x128xf32>
    %23 = vector.shape_cast %22 : vector<1x1x128xf32> to vector<1x128xf32>
    %24 = vector.shape_cast %21 : vector<1x128xf32> to vector<1x1x128xf32>
    tpu.vector_store %arg6[%c0_16, %c1, %c0_17], %24 {strides = array<i32>} : memref<1x2x128xf32, #tpu.memory_space<vmem>>, vector<1x1x128xf32>,
    return
  }
  func.func @transform_0(%arg0: i32, %arg1: i32) -> (i32, i32, i32) {
    %c0_i32 = arith.constant 0 : i32
    %c0_i32_0 = arith.constant 0 : i32
    return %arg0, %arg1, %c0_i32 : i32, i32, i32
  }
  func.func @transform_1(%arg0: i32, %arg1: i32) -> (i32, i32, i32) {
    %c0_i32 = arith.constant 0 : i32
    %c0_i32_0 = arith.constant 0 : i32
    %c0_i32_1 = arith.constant 0 : i32
    return %arg0, %c0_i32, %c0_i32_0 : i32, i32, i32
  }
  func.func @transform_2(%arg0: i32, %arg1: i32) -> (i32, i32) {
    %c0_i32 = arith.constant 0 : i32
    %c0_i32_0 = arith.constant 0 : i32
    %c0_i32_1 = arith.constant 0 : i32
    return %c0_i32, %c0_i32_0 : i32, i32
  }
  func.func @transform_3(%arg0: i32, %arg1: i32) -> (i32, i32, i32) {
    %c0_i32 = arith.constant 0 : i32
    %c0_i32_0 = arith.constant 0 : i32
    return %arg0, %arg1, %c0_i32 : i32, i32, i32
  }
  func.func @transform_4(%arg0: i32, %arg1: i32) -> (i32, i32, i32) {
    %c2_i32 = arith.constant 2 : i32
    %0 = arith.muli %arg0, %c2_i32 : i32
    %1 = arith.addi %0, %arg1 : i32
    %c0_i32 = arith.constant 0 : i32
    %c0_i32_0 = arith.constant 0 : i32
    %c0_i32_1 = arith.constant 0 : i32
    return %1, %c0_i32, %c0_i32_0 : i32, i32, i32
  }
}

module attributes {stable_mosaic.version = 11 : i64} {
  func.func @kernel(%arg0: i32, %arg1: i32, %arg2: memref<1x64x384xbf16, #tpu.memory_space<vmem>>, %arg3: memref<1x384x128xbf16, #tpu.memory_space<vmem>>, %arg4: memref<1x128xf32, #tpu.memory_space<vmem>>, %arg5: memref<1x64x128xbf16, #tpu.memory_space<vmem>>, %arg6: memref<1x2x128xf32, #tpu.memory_space<vmem>>) attributes {dimension_semantics = [#tpu.dimension_semantics<parallel>, #tpu.dimension_semantics<parallel>], iteration_bounds = array<i64: 1, 2>, scalar_prefetch = 0 : i64, scratch_operands = 0 : i64, tpu.core_type = #tpu.core_type<tc>, window_params = [{transform_indices = @transform_0, window_bounds = array<i64: 1, 64, 384>}, {transform_indices = @transform_1, window_bounds = array<i64: 1, 384, 128>}, {pipeline_mode = #tpu.pipeline_mode<synchronous>, transform_indices = @transform_2, window_bounds = array<i64: 1, 128>}, {transform_indices = @transform_3, window_bounds = array<i64: 1, 64, 128>}, {transform_indices = @transform_4, window_bounds = array<i64: 1, 2, 128>}]} {
    %c0 = arith.constant 0 : index
    %c0_0 = arith.constant 0 : index
    %c0_1 = arith.constant 0 : index
    %0 = vector.load %arg2[%c0, %c0_0, %c0_1] : memref<1x64x384xbf16, #tpu.memory_space<vmem>>, vector<1x64x384xbf16>
    %1 = vector.shape_cast %0 : vector<1x64x384xbf16> to vector<64x384xbf16>
    %c0_2 = arith.constant 0 : index
    %c0_3 = arith.constant 0 : index
    %c0_4 = arith.constant 0 : index
    %2 = vector.load %arg3[%c0_2, %c0_3, %c0_4] : memref<1x384x128xbf16, #tpu.memory_space<vmem>>, vector<1x384x128xbf16>
    %3 = vector.shape_cast %2 : vector<1x384x128xbf16> to vector<384x128xbf16>
    %cst = arith.constant dense<0.000000e+00> : vector<64x128xf32>
    %4 = tpu.matmul %1, %3, %cst {dimension_numbers = #tpu.dot_dimension_numbers<[1], [0], [0], [1], [0, 0, 1, 1], [], []>} : vector<64x384xbf16>, vector<384x128xbf16>, vector<64x128xf32> -> vector<64x128xf32>
    %c0_5 = arith.constant 0 : index
    %c0_6 = arith.constant 0 : index
    %5 = vector.load %arg4[%c0_5, %c0_6] : memref<1x128xf32, #tpu.memory_space<vmem>>, vector<1x128xf32>
    %6 = vector.broadcast %5 : vector<1x128xf32> to vector<64x128xf32>
    %7 = arith.addf %4, %6 : vector<64x128xf32>
    %cst_7 = arith.constant 0.000000e+00 : f32
    %8 = vector.broadcast %cst_7 : f32 to vector<64x128xf32>
    %9 = arith.maximumf %7, %8 : vector<64x128xf32>
    %10 = arith.truncf %9 : vector<64x128xf32> to vector<64x128xbf16>
    %c0_8 = arith.constant 0 : index
    %c0_9 = arith.constant 0 : index
    %c0_10 = arith.constant 0 : index
    %11 = vector.load %arg5[%c0_8, %c0_9, %c0_10] : memref<1x64x128xbf16, #tpu.memory_space<vmem>>, vector<1x64x128xbf16>
    %12 = vector.shape_cast %11 : vector<1x64x128xbf16> to vector<64x128xbf16>
    %13 = vector.shape_cast %10 : vector<64x128xbf16> to vector<1x64x128xbf16>
    tpu.vector_store %arg5[%c0_8, %c0_9, %c0_10], %13 {strides = array<i32>} : memref<1x64x128xbf16, #tpu.memory_space<vmem>>, vector<1x64x128xbf16>,
    %cst_11 = arith.constant dense<0.000000e+00> : vector<128xf32>
    %14 = vector.multi_reduction <add>, %9, %cst_11 [0] : vector<64x128xf32> to vector<128xf32>
    %15 = vector.shape_cast %14 : vector<128xf32> to vector<1x128xf32>
    %c0_12 = arith.constant 0 : index
    %c0_13 = arith.constant 0 : index
    %c0_14 = arith.constant 0 : index
    %16 = vector.load %arg6[%c0_12, %c0_13, %c0_14] : memref<1x2x128xf32, #tpu.memory_space<vmem>>, vector<1x1x128xf32>
    %17 = vector.shape_cast %16 : vector<1x1x128xf32> to vector<1x128xf32>
    %18 = vector.shape_cast %15 : vector<1x128xf32> to vector<1x1x128xf32>
    tpu.vector_store %arg6[%c0_12, %c0_13, %c0_14], %18 {strides = array<i32>} : memref<1x2x128xf32, #tpu.memory_space<vmem>>, vector<1x1x128xf32>,
    %19 = arith.mulf %9, %9 : vector<64x128xf32>
    %cst_15 = arith.constant dense<0.000000e+00> : vector<128xf32>
    %20 = vector.multi_reduction <add>, %19, %cst_15 [0] : vector<64x128xf32> to vector<128xf32>
    %21 = vector.shape_cast %20 : vector<128xf32> to vector<1x128xf32>
    %c0_16 = arith.constant 0 : index
    %c1 = arith.constant 1 : index
    %c0_17 = arith.constant 0 : index
    %22 = vector.load %arg6[%c0_16, %c1, %c0_17] : memref<1x2x128xf32, #tpu.memory_space<vmem>>, vector<1x1x128xf32>
    %23 = vector.shape_cast %22 : vector<1x1x128xf32> to vector<1x128xf32>
    %24 = vector.shape_cast %21 : vector<1x128xf32> to vector<1x1x128xf32>
    tpu.vector_store %arg6[%c0_16, %c1, %c0_17], %24 {strides = array<i32>} : memref<1x2x128xf32, #tpu.memory_space<vmem>>, vector<1x1x128xf32>,
    return
  }
  func.func @transform_0(%arg0: i32, %arg1: i32) -> (i32, i32, i32) {
    %c0_i32 = arith.constant 0 : i32
    %c0_i32_0 = arith.constant 0 : i32
    return %arg0, %arg1, %c0_i32 : i32, i32, i32
  }
  func.func @transform_1(%arg0: i32, %arg1: i32) -> (i32, i32, i32) {
    %c0_i32 = arith.constant 0 : i32
    %c0_i32_0 = arith.constant 0 : i32
    %c0_i32_1 = arith.constant 0 : i32
    return %arg0, %c0_i32, %c0_i32_0 : i32, i32, i32
  }
  func.func @transform_2(%arg0: i32, %arg1: i32) -> (i32, i32) {
    %c0_i32 = arith.constant 0 : i32
    %c0_i32_0 = arith.constant 0 : i32
    %c0_i32_1 = arith.constant 0 : i32
    return %c0_i32, %c0_i32_0 : i32, i32
  }
  func.func @transform_3(%arg0: i32, %arg1: i32) -> (i32, i32, i32) {
    %c0_i32 = arith.constant 0 : i32
    %c0_i32_0 = arith.constant 0 : i32
    return %arg0, %arg1, %c0_i32 : i32, i32, i32
  }
  func.func @transform_4(%arg0: i32, %arg1: i32) -> (i32, i32, i32) {
    %c2_i32 = arith.constant 2 : i32
    %0 = arith.muli %arg0, %c2_i32 : i32
    %1 = arith.addi %0, %arg1 : i32
    %c0_i32 = arith.constant 0 : i32
    %c0_i32_0 = arith.constant 0 : i32
    %c0_i32_1 = arith.constant 0 : i32
    return %1, %c0_i32, %c0_i32_0 : i32, i32, i32
  }
}

module attributes {stable_mosaic.version = 11 : i64} {
  func.func @kernel(%arg0: i32, %arg1: i32, %arg2: memref<1x64x640xbf16, #tpu.memory_space<vmem>>, %arg3: memref<1x640x128xbf16, #tpu.memory_space<vmem>>, %arg4: memref<1x128xf32, #tpu.memory_space<vmem>>, %arg5: memref<1x64x128xbf16, #tpu.memory_space<vmem>>, %arg6: memref<1x2x128xf32, #tpu.memory_space<vmem>>) attributes {dimension_semantics = [#tpu.dimension_semantics<parallel>, #tpu.dimension_semantics<parallel>], iteration_bounds = array<i64: 1, 2>, scalar_prefetch = 0 : i64, scratch_operands = 0 : i64, tpu.core_type = #tpu.core_type<tc>, window_params = [{transform_indices = @transform_0, window_bounds = array<i64: 1, 64, 640>}, {transform_indices = @transform_1, window_bounds = array<i64: 1, 640, 128>}, {pipeline_mode = #tpu.pipeline_mode<synchronous>, transform_indices = @transform_2, window_bounds = array<i64: 1, 128>}, {transform_indices = @transform_3, window_bounds = array<i64: 1, 64, 128>}, {transform_indices = @transform_4, window_bounds = array<i64: 1, 2, 128>}]} {
    %c0 = arith.constant 0 : index
    %c0_0 = arith.constant 0 : index
    %c0_1 = arith.constant 0 : index
    %0 = vector.load %arg2[%c0, %c0_0, %c0_1] : memref<1x64x640xbf16, #tpu.memory_space<vmem>>, vector<1x64x640xbf16>
    %1 = vector.shape_cast %0 : vector<1x64x640xbf16> to vector<64x640xbf16>
    %c0_2 = arith.constant 0 : index
    %c0_3 = arith.constant 0 : index
    %c0_4 = arith.constant 0 : index
    %2 = vector.load %arg3[%c0_2, %c0_3, %c0_4] : memref<1x640x128xbf16, #tpu.memory_space<vmem>>, vector<1x640x128xbf16>
    %3 = vector.shape_cast %2 : vector<1x640x128xbf16> to vector<640x128xbf16>
    %cst = arith.constant dense<0.000000e+00> : vector<64x128xf32>
    %4 = tpu.matmul %1, %3, %cst {dimension_numbers = #tpu.dot_dimension_numbers<[1], [0], [0], [1], [0, 0, 1, 1], [], []>} : vector<64x640xbf16>, vector<640x128xbf16>, vector<64x128xf32> -> vector<64x128xf32>
    %c0_5 = arith.constant 0 : index
    %c0_6 = arith.constant 0 : index
    %5 = vector.load %arg4[%c0_5, %c0_6] : memref<1x128xf32, #tpu.memory_space<vmem>>, vector<1x128xf32>
    %6 = vector.broadcast %5 : vector<1x128xf32> to vector<64x128xf32>
    %7 = arith.addf %4, %6 : vector<64x128xf32>
    %cst_7 = arith.constant 0.000000e+00 : f32
    %8 = vector.broadcast %cst_7 : f32 to vector<64x128xf32>
    %9 = arith.maximumf %7, %8 : vector<64x128xf32>
    %10 = arith.truncf %9 : vector<64x128xf32> to vector<64x128xbf16>
    %c0_8 = arith.constant 0 : index
    %c0_9 = arith.constant 0 : index
    %c0_10 = arith.constant 0 : index
    %11 = vector.load %arg5[%c0_8, %c0_9, %c0_10] : memref<1x64x128xbf16, #tpu.memory_space<vmem>>, vector<1x64x128xbf16>
    %12 = vector.shape_cast %11 : vector<1x64x128xbf16> to vector<64x128xbf16>
    %13 = vector.shape_cast %10 : vector<64x128xbf16> to vector<1x64x128xbf16>
    tpu.vector_store %arg5[%c0_8, %c0_9, %c0_10], %13 {strides = array<i32>} : memref<1x64x128xbf16, #tpu.memory_space<vmem>>, vector<1x64x128xbf16>,
    %cst_11 = arith.constant dense<0.000000e+00> : vector<128xf32>
    %14 = vector.multi_reduction <add>, %9, %cst_11 [0] : vector<64x128xf32> to vector<128xf32>
    %15 = vector.shape_cast %14 : vector<128xf32> to vector<1x128xf32>
    %c0_12 = arith.constant 0 : index
    %c0_13 = arith.constant 0 : index
    %c0_14 = arith.constant 0 : index
    %16 = vector.load %arg6[%c0_12, %c0_13, %c0_14] : memref<1x2x128xf32, #tpu.memory_space<vmem>>, vector<1x1x128xf32>
    %17 = vector.shape_cast %16 : vector<1x1x128xf32> to vector<1x128xf32>
    %18 = vector.shape_cast %15 : vector<1x128xf32> to vector<1x1x128xf32>
    tpu.vector_store %arg6[%c0_12, %c0_13, %c0_14], %18 {strides = array<i32>} : memref<1x2x128xf32, #tpu.memory_space<vmem>>, vector<1x1x128xf32>,
    %19 = arith.mulf %9, %9 : vector<64x128xf32>
    %cst_15 = arith.constant dense<0.000000e+00> : vector<128xf32>
    %20 = vector.multi_reduction <add>, %19, %cst_15 [0] : vector<64x128xf32> to vector<128xf32>
    %21 = vector.shape_cast %20 : vector<128xf32> to vector<1x128xf32>
    %c0_16 = arith.constant 0 : index
    %c1 = arith.constant 1 : index
    %c0_17 = arith.constant 0 : index
    %22 = vector.load %arg6[%c0_16, %c1, %c0_17] : memref<1x2x128xf32, #tpu.memory_space<vmem>>, vector<1x1x128xf32>
    %23 = vector.shape_cast %22 : vector<1x1x128xf32> to vector<1x128xf32>
    %24 = vector.shape_cast %21 : vector<1x128xf32> to vector<1x1x128xf32>
    tpu.vector_store %arg6[%c0_16, %c1, %c0_17], %24 {strides = array<i32>} : memref<1x2x128xf32, #tpu.memory_space<vmem>>, vector<1x1x128xf32>,
    return
  }
  func.func @transform_0(%arg0: i32, %arg1: i32) -> (i32, i32, i32) {
    %c0_i32 = arith.constant 0 : i32
    %c0_i32_0 = arith.constant 0 : i32
    return %arg0, %arg1, %c0_i32 : i32, i32, i32
  }
  func.func @transform_1(%arg0: i32, %arg1: i32) -> (i32, i32, i32) {
    %c0_i32 = arith.constant 0 : i32
    %c0_i32_0 = arith.constant 0 : i32
    %c0_i32_1 = arith.constant 0 : i32
    return %arg0, %c0_i32, %c0_i32_0 : i32, i32, i32
  }
  func.func @transform_2(%arg0: i32, %arg1: i32) -> (i32, i32) {
    %c0_i32 = arith.constant 0 : i32
    %c0_i32_0 = arith.constant 0 : i32
    %c0_i32_1 = arith.constant 0 : i32
    return %c0_i32, %c0_i32_0 : i32, i32
  }
  func.func @transform_3(%arg0: i32, %arg1: i32) -> (i32, i32, i32) {
    %c0_i32 = arith.constant 0 : i32
    %c0_i32_0 = arith.constant 0 : i32
    return %arg0, %arg1, %c0_i32 : i32, i32, i32
  }
  func.func @transform_4(%arg0: i32, %arg1: i32) -> (i32, i32, i32) {
    %c2_i32 = arith.constant 2 : i32
    %0 = arith.muli %arg0, %c2_i32 : i32
    %1 = arith.addi %0, %arg1 : i32
    %c0_i32 = arith.constant 0 : i32
    %c0_i32_0 = arith.constant 0 : i32
    %c0_i32_1 = arith.constant 0 : i32
    return %1, %c0_i32, %c0_i32_0 : i32, i32, i32
  }
}

module attributes {stable_mosaic.version = 11 : i64} {
  func.func @kernel(%arg0: i32, %arg1: i32, %arg2: memref<1x16x640xbf16, #tpu.memory_space<vmem>>, %arg3: memref<1x640x128xbf16, #tpu.memory_space<vmem>>, %arg4: memref<1x128xf32, #tpu.memory_space<vmem>>, %arg5: memref<1x16x128xbf16, #tpu.memory_space<vmem>>, %arg6: memref<1x2x128xf32, #tpu.memory_space<vmem>>) attributes {dimension_semantics = [#tpu.dimension_semantics<parallel>, #tpu.dimension_semantics<parallel>], iteration_bounds = array<i64: 1, 2>, scalar_prefetch = 0 : i64, scratch_operands = 0 : i64, tpu.core_type = #tpu.core_type<tc>, window_params = [{transform_indices = @transform_0, window_bounds = array<i64: 1, 16, 640>}, {transform_indices = @transform_1, window_bounds = array<i64: 1, 640, 128>}, {pipeline_mode = #tpu.pipeline_mode<synchronous>, transform_indices = @transform_2, window_bounds = array<i64: 1, 128>}, {transform_indices = @transform_3, window_bounds = array<i64: 1, 16, 128>}, {transform_indices = @transform_4, window_bounds = array<i64: 1, 2, 128>}]} {
    %c0 = arith.constant 0 : index
    %c0_0 = arith.constant 0 : index
    %c0_1 = arith.constant 0 : index
    %0 = vector.load %arg2[%c0, %c0_0, %c0_1] : memref<1x16x640xbf16, #tpu.memory_space<vmem>>, vector<1x16x640xbf16>
    %1 = vector.shape_cast %0 : vector<1x16x640xbf16> to vector<16x640xbf16>
    %c0_2 = arith.constant 0 : index
    %c0_3 = arith.constant 0 : index
    %c0_4 = arith.constant 0 : index
    %2 = vector.load %arg3[%c0_2, %c0_3, %c0_4] : memref<1x640x128xbf16, #tpu.memory_space<vmem>>, vector<1x640x128xbf16>
    %3 = vector.shape_cast %2 : vector<1x640x128xbf16> to vector<640x128xbf16>
    %cst = arith.constant dense<0.000000e+00> : vector<16x128xf32>
    %4 = tpu.matmul %1, %3, %cst {dimension_numbers = #tpu.dot_dimension_numbers<[1], [0], [0], [1], [0, 0, 1, 1], [], []>} : vector<16x640xbf16>, vector<640x128xbf16>, vector<16x128xf32> -> vector<16x128xf32>
    %c0_5 = arith.constant 0 : index
    %c0_6 = arith.constant 0 : index
    %5 = vector.load %arg4[%c0_5, %c0_6] : memref<1x128xf32, #tpu.memory_space<vmem>>, vector<1x128xf32>
    %6 = vector.broadcast %5 : vector<1x128xf32> to vector<16x128xf32>
    %7 = arith.addf %4, %6 : vector<16x128xf32>
    %cst_7 = arith.constant 0.000000e+00 : f32
    %8 = vector.broadcast %cst_7 : f32 to vector<16x128xf32>
    %9 = arith.maximumf %7, %8 : vector<16x128xf32>
    %10 = arith.truncf %9 : vector<16x128xf32> to vector<16x128xbf16>
    %c0_8 = arith.constant 0 : index
    %c0_9 = arith.constant 0 : index
    %c0_10 = arith.constant 0 : index
    %11 = vector.load %arg5[%c0_8, %c0_9, %c0_10] : memref<1x16x128xbf16, #tpu.memory_space<vmem>>, vector<1x16x128xbf16>
    %12 = vector.shape_cast %11 : vector<1x16x128xbf16> to vector<16x128xbf16>
    %13 = vector.shape_cast %10 : vector<16x128xbf16> to vector<1x16x128xbf16>
    tpu.vector_store %arg5[%c0_8, %c0_9, %c0_10], %13 {strides = array<i32>} : memref<1x16x128xbf16, #tpu.memory_space<vmem>>, vector<1x16x128xbf16>,
    %cst_11 = arith.constant dense<0.000000e+00> : vector<128xf32>
    %14 = vector.multi_reduction <add>, %9, %cst_11 [0] : vector<16x128xf32> to vector<128xf32>
    %15 = vector.shape_cast %14 : vector<128xf32> to vector<1x128xf32>
    %c0_12 = arith.constant 0 : index
    %c0_13 = arith.constant 0 : index
    %c0_14 = arith.constant 0 : index
    %16 = vector.load %arg6[%c0_12, %c0_13, %c0_14] : memref<1x2x128xf32, #tpu.memory_space<vmem>>, vector<1x1x128xf32>
    %17 = vector.shape_cast %16 : vector<1x1x128xf32> to vector<1x128xf32>
    %18 = vector.shape_cast %15 : vector<1x128xf32> to vector<1x1x128xf32>
    tpu.vector_store %arg6[%c0_12, %c0_13, %c0_14], %18 {strides = array<i32>} : memref<1x2x128xf32, #tpu.memory_space<vmem>>, vector<1x1x128xf32>,
    %19 = arith.mulf %9, %9 : vector<16x128xf32>
    %cst_15 = arith.constant dense<0.000000e+00> : vector<128xf32>
    %20 = vector.multi_reduction <add>, %19, %cst_15 [0] : vector<16x128xf32> to vector<128xf32>
    %21 = vector.shape_cast %20 : vector<128xf32> to vector<1x128xf32>
    %c0_16 = arith.constant 0 : index
    %c1 = arith.constant 1 : index
    %c0_17 = arith.constant 0 : index
    %22 = vector.load %arg6[%c0_16, %c1, %c0_17] : memref<1x2x128xf32, #tpu.memory_space<vmem>>, vector<1x1x128xf32>
    %23 = vector.shape_cast %22 : vector<1x1x128xf32> to vector<1x128xf32>
    %24 = vector.shape_cast %21 : vector<1x128xf32> to vector<1x1x128xf32>
    tpu.vector_store %arg6[%c0_16, %c1, %c0_17], %24 {strides = array<i32>} : memref<1x2x128xf32, #tpu.memory_space<vmem>>, vector<1x1x128xf32>,
    return
  }
  func.func @transform_0(%arg0: i32, %arg1: i32) -> (i32, i32, i32) {
    %c0_i32 = arith.constant 0 : i32
    %c0_i32_0 = arith.constant 0 : i32
    return %arg0, %arg1, %c0_i32 : i32, i32, i32
  }
  func.func @transform_1(%arg0: i32, %arg1: i32) -> (i32, i32, i32) {
    %c0_i32 = arith.constant 0 : i32
    %c0_i32_0 = arith.constant 0 : i32
    %c0_i32_1 = arith.constant 0 : i32
    return %arg0, %c0_i32, %c0_i32_0 : i32, i32, i32
  }
  func.func @transform_2(%arg0: i32, %arg1: i32) -> (i32, i32) {
    %c0_i32 = arith.constant 0 : i32
    %c0_i32_0 = arith.constant 0 : i32
    %c0_i32_1 = arith.constant 0 : i32
    return %c0_i32, %c0_i32_0 : i32, i32
  }
  func.func @transform_3(%arg0: i32, %arg1: i32) -> (i32, i32, i32) {
    %c0_i32 = arith.constant 0 : i32
    %c0_i32_0 = arith.constant 0 : i32
    return %arg0, %arg1, %c0_i32 : i32, i32, i32
  }
  func.func @transform_4(%arg0: i32, %arg1: i32) -> (i32, i32, i32) {
    %c2_i32 = arith.constant 2 : i32
    %0 = arith.muli %arg0, %c2_i32 : i32
    %1 = arith.addi %0, %arg1 : i32
    %c0_i32 = arith.constant 0 : i32
    %c0_i32_0 = arith.constant 0 : i32
    %c0_i32_1 = arith.constant 0 : i32
    return %1, %c0_i32, %c0_i32_0 : i32, i32, i32
  }
}

module attributes {stable_mosaic.version = 11 : i64} {
  func.func @kernel(%arg0: i32, %arg1: i32, %arg2: memref<1x16x1152xbf16, #tpu.memory_space<vmem>>, %arg3: memref<1x1152x128xbf16, #tpu.memory_space<vmem>>, %arg4: memref<1x128xf32, #tpu.memory_space<vmem>>, %arg5: memref<1x16x128xbf16, #tpu.memory_space<vmem>>, %arg6: memref<1x2x128xf32, #tpu.memory_space<vmem>>) attributes {dimension_semantics = [#tpu.dimension_semantics<parallel>, #tpu.dimension_semantics<parallel>], iteration_bounds = array<i64: 1, 2>, scalar_prefetch = 0 : i64, scratch_operands = 0 : i64, tpu.core_type = #tpu.core_type<tc>, window_params = [{transform_indices = @transform_0, window_bounds = array<i64: 1, 16, 1152>}, {transform_indices = @transform_1, window_bounds = array<i64: 1, 1152, 128>}, {pipeline_mode = #tpu.pipeline_mode<synchronous>, transform_indices = @transform_2, window_bounds = array<i64: 1, 128>}, {transform_indices = @transform_3, window_bounds = array<i64: 1, 16, 128>}, {transform_indices = @transform_4, window_bounds = array<i64: 1, 2, 128>}]} {
    %c0 = arith.constant 0 : index
    %c0_0 = arith.constant 0 : index
    %c0_1 = arith.constant 0 : index
    %0 = vector.load %arg2[%c0, %c0_0, %c0_1] : memref<1x16x1152xbf16, #tpu.memory_space<vmem>>, vector<1x16x1152xbf16>
    %1 = vector.shape_cast %0 : vector<1x16x1152xbf16> to vector<16x1152xbf16>
    %c0_2 = arith.constant 0 : index
    %c0_3 = arith.constant 0 : index
    %c0_4 = arith.constant 0 : index
    %2 = vector.load %arg3[%c0_2, %c0_3, %c0_4] : memref<1x1152x128xbf16, #tpu.memory_space<vmem>>, vector<1x1152x128xbf16>
    %3 = vector.shape_cast %2 : vector<1x1152x128xbf16> to vector<1152x128xbf16>
    %cst = arith.constant dense<0.000000e+00> : vector<16x128xf32>
    %4 = tpu.matmul %1, %3, %cst {dimension_numbers = #tpu.dot_dimension_numbers<[1], [0], [0], [1], [0, 0, 1, 1], [], []>} : vector<16x1152xbf16>, vector<1152x128xbf16>, vector<16x128xf32> -> vector<16x128xf32>
    %c0_5 = arith.constant 0 : index
    %c0_6 = arith.constant 0 : index
    %5 = vector.load %arg4[%c0_5, %c0_6] : memref<1x128xf32, #tpu.memory_space<vmem>>, vector<1x128xf32>
    %6 = vector.broadcast %5 : vector<1x128xf32> to vector<16x128xf32>
    %7 = arith.addf %4, %6 : vector<16x128xf32>
    %cst_7 = arith.constant 0.000000e+00 : f32
    %8 = vector.broadcast %cst_7 : f32 to vector<16x128xf32>
    %9 = arith.maximumf %7, %8 : vector<16x128xf32>
    %10 = arith.truncf %9 : vector<16x128xf32> to vector<16x128xbf16>
    %c0_8 = arith.constant 0 : index
    %c0_9 = arith.constant 0 : index
    %c0_10 = arith.constant 0 : index
    %11 = vector.load %arg5[%c0_8, %c0_9, %c0_10] : memref<1x16x128xbf16, #tpu.memory_space<vmem>>, vector<1x16x128xbf16>
    %12 = vector.shape_cast %11 : vector<1x16x128xbf16> to vector<16x128xbf16>
    %13 = vector.shape_cast %10 : vector<16x128xbf16> to vector<1x16x128xbf16>
    tpu.vector_store %arg5[%c0_8, %c0_9, %c0_10], %13 {strides = array<i32>} : memref<1x16x128xbf16, #tpu.memory_space<vmem>>, vector<1x16x128xbf16>,
    %cst_11 = arith.constant dense<0.000000e+00> : vector<128xf32>
    %14 = vector.multi_reduction <add>, %9, %cst_11 [0] : vector<16x128xf32> to vector<128xf32>
    %15 = vector.shape_cast %14 : vector<128xf32> to vector<1x128xf32>
    %c0_12 = arith.constant 0 : index
    %c0_13 = arith.constant 0 : index
    %c0_14 = arith.constant 0 : index
    %16 = vector.load %arg6[%c0_12, %c0_13, %c0_14] : memref<1x2x128xf32, #tpu.memory_space<vmem>>, vector<1x1x128xf32>
    %17 = vector.shape_cast %16 : vector<1x1x128xf32> to vector<1x128xf32>
    %18 = vector.shape_cast %15 : vector<1x128xf32> to vector<1x1x128xf32>
    tpu.vector_store %arg6[%c0_12, %c0_13, %c0_14], %18 {strides = array<i32>} : memref<1x2x128xf32, #tpu.memory_space<vmem>>, vector<1x1x128xf32>,
    %19 = arith.mulf %9, %9 : vector<16x128xf32>
    %cst_15 = arith.constant dense<0.000000e+00> : vector<128xf32>
    %20 = vector.multi_reduction <add>, %19, %cst_15 [0] : vector<16x128xf32> to vector<128xf32>
    %21 = vector.shape_cast %20 : vector<128xf32> to vector<1x128xf32>
    %c0_16 = arith.constant 0 : index
    %c1 = arith.constant 1 : index
    %c0_17 = arith.constant 0 : index
    %22 = vector.load %arg6[%c0_16, %c1, %c0_17] : memref<1x2x128xf32, #tpu.memory_space<vmem>>, vector<1x1x128xf32>
    %23 = vector.shape_cast %22 : vector<1x1x128xf32> to vector<1x128xf32>
    %24 = vector.shape_cast %21 : vector<1x128xf32> to vector<1x1x128xf32>
    tpu.vector_store %arg6[%c0_16, %c1, %c0_17], %24 {strides = array<i32>} : memref<1x2x128xf32, #tpu.memory_space<vmem>>, vector<1x1x128xf32>,
    return
  }
  func.func @transform_0(%arg0: i32, %arg1: i32) -> (i32, i32, i32) {
    %c0_i32 = arith.constant 0 : i32
    %c0_i32_0 = arith.constant 0 : i32
    return %arg0, %arg1, %c0_i32 : i32, i32, i32
  }
  func.func @transform_1(%arg0: i32, %arg1: i32) -> (i32, i32, i32) {
    %c0_i32 = arith.constant 0 : i32
    %c0_i32_0 = arith.constant 0 : i32
    %c0_i32_1 = arith.constant 0 : i32
    return %arg0, %c0_i32, %c0_i32_0 : i32, i32, i32
  }
  func.func @transform_2(%arg0: i32, %arg1: i32) -> (i32, i32) {
    %c0_i32 = arith.constant 0 : i32
    %c0_i32_0 = arith.constant 0 : i32
    %c0_i32_1 = arith.constant 0 : i32
    return %c0_i32, %c0_i32_0 : i32, i32
  }
  func.func @transform_3(%arg0: i32, %arg1: i32) -> (i32, i32, i32) {
    %c0_i32 = arith.constant 0 : i32
    %c0_i32_0 = arith.constant 0 : i32
    return %arg0, %arg1, %c0_i32 : i32, i32, i32
  }
  func.func @transform_4(%arg0: i32, %arg1: i32) -> (i32, i32, i32) {
    %c2_i32 = arith.constant 2 : i32
    %0 = arith.muli %arg0, %c2_i32 : i32
    %1 = arith.addi %0, %arg1 : i32
    %c0_i32 = arith.constant 0 : i32
    %c0_i32_0 = arith.constant 0 : i32
    %c0_i32_1 = arith.constant 0 : i32
    return %1, %c0_i32, %c0_i32_0 : i32, i32, i32
  }
}

module attributes {stable_mosaic.version = 11 : i64} {
  func.func @kernel(%arg0: i32, %arg1: i32, %arg2: memref<1x16x512xbf16, #tpu.memory_space<vmem>>, %arg3: memref<1x512x128xbf16, #tpu.memory_space<vmem>>, %arg4: memref<1x128xf32, #tpu.memory_space<vmem>>, %arg5: memref<1x16x128xbf16, #tpu.memory_space<vmem>>, %arg6: memref<1x2x128xf32, #tpu.memory_space<vmem>>) attributes {dimension_semantics = [#tpu.dimension_semantics<parallel>, #tpu.dimension_semantics<parallel>], iteration_bounds = array<i64: 4, 2>, scalar_prefetch = 0 : i64, scratch_operands = 0 : i64, tpu.core_type = #tpu.core_type<tc>, window_params = [{transform_indices = @transform_0, window_bounds = array<i64: 1, 16, 512>}, {transform_indices = @transform_1, window_bounds = array<i64: 1, 512, 128>}, {pipeline_mode = #tpu.pipeline_mode<synchronous>, transform_indices = @transform_2, window_bounds = array<i64: 1, 128>}, {transform_indices = @transform_3, window_bounds = array<i64: 1, 16, 128>}, {transform_indices = @transform_4, window_bounds = array<i64: 1, 2, 128>}]} {
    %c0 = arith.constant 0 : index
    %c0_0 = arith.constant 0 : index
    %c0_1 = arith.constant 0 : index
    %0 = vector.load %arg2[%c0, %c0_0, %c0_1] : memref<1x16x512xbf16, #tpu.memory_space<vmem>>, vector<1x16x512xbf16>
    %1 = vector.shape_cast %0 : vector<1x16x512xbf16> to vector<16x512xbf16>
    %c0_2 = arith.constant 0 : index
    %c0_3 = arith.constant 0 : index
    %c0_4 = arith.constant 0 : index
    %2 = vector.load %arg3[%c0_2, %c0_3, %c0_4] : memref<1x512x128xbf16, #tpu.memory_space<vmem>>, vector<1x512x128xbf16>
    %3 = vector.shape_cast %2 : vector<1x512x128xbf16> to vector<512x128xbf16>
    %cst = arith.constant dense<0.000000e+00> : vector<16x128xf32>
    %4 = tpu.matmul %1, %3, %cst {dimension_numbers = #tpu.dot_dimension_numbers<[1], [0], [0], [1], [0, 0, 1, 1], [], []>} : vector<16x512xbf16>, vector<512x128xbf16>, vector<16x128xf32> -> vector<16x128xf32>
    %c0_5 = arith.constant 0 : index
    %c0_6 = arith.constant 0 : index
    %5 = vector.load %arg4[%c0_5, %c0_6] : memref<1x128xf32, #tpu.memory_space<vmem>>, vector<1x128xf32>
    %6 = vector.broadcast %5 : vector<1x128xf32> to vector<16x128xf32>
    %7 = arith.addf %4, %6 : vector<16x128xf32>
    %cst_7 = arith.constant 0.000000e+00 : f32
    %8 = vector.broadcast %cst_7 : f32 to vector<16x128xf32>
    %9 = arith.maximumf %7, %8 : vector<16x128xf32>
    %10 = arith.truncf %9 : vector<16x128xf32> to vector<16x128xbf16>
    %c0_8 = arith.constant 0 : index
    %c0_9 = arith.constant 0 : index
    %c0_10 = arith.constant 0 : index
    %11 = vector.load %arg5[%c0_8, %c0_9, %c0_10] : memref<1x16x128xbf16, #tpu.memory_space<vmem>>, vector<1x16x128xbf16>
    %12 = vector.shape_cast %11 : vector<1x16x128xbf16> to vector<16x128xbf16>
    %13 = vector.shape_cast %10 : vector<16x128xbf16> to vector<1x16x128xbf16>
    tpu.vector_store %arg5[%c0_8, %c0_9, %c0_10], %13 {strides = array<i32>} : memref<1x16x128xbf16, #tpu.memory_space<vmem>>, vector<1x16x128xbf16>,
    %cst_11 = arith.constant dense<0.000000e+00> : vector<128xf32>
    %14 = vector.multi_reduction <add>, %9, %cst_11 [0] : vector<16x128xf32> to vector<128xf32>
    %15 = vector.shape_cast %14 : vector<128xf32> to vector<1x128xf32>
    %c0_12 = arith.constant 0 : index
    %c0_13 = arith.constant 0 : index
    %c0_14 = arith.constant 0 : index
    %16 = vector.load %arg6[%c0_12, %c0_13, %c0_14] : memref<1x2x128xf32, #tpu.memory_space<vmem>>, vector<1x1x128xf32>
    %17 = vector.shape_cast %16 : vector<1x1x128xf32> to vector<1x128xf32>
    %18 = vector.shape_cast %15 : vector<1x128xf32> to vector<1x1x128xf32>
    tpu.vector_store %arg6[%c0_12, %c0_13, %c0_14], %18 {strides = array<i32>} : memref<1x2x128xf32, #tpu.memory_space<vmem>>, vector<1x1x128xf32>,
    %19 = arith.mulf %9, %9 : vector<16x128xf32>
    %cst_15 = arith.constant dense<0.000000e+00> : vector<128xf32>
    %20 = vector.multi_reduction <add>, %19, %cst_15 [0] : vector<16x128xf32> to vector<128xf32>
    %21 = vector.shape_cast %20 : vector<128xf32> to vector<1x128xf32>
    %c0_16 = arith.constant 0 : index
    %c1 = arith.constant 1 : index
    %c0_17 = arith.constant 0 : index
    %22 = vector.load %arg6[%c0_16, %c1, %c0_17] : memref<1x2x128xf32, #tpu.memory_space<vmem>>, vector<1x1x128xf32>
    %23 = vector.shape_cast %22 : vector<1x1x128xf32> to vector<1x128xf32>
    %24 = vector.shape_cast %21 : vector<1x128xf32> to vector<1x1x128xf32>
    tpu.vector_store %arg6[%c0_16, %c1, %c0_17], %24 {strides = array<i32>} : memref<1x2x128xf32, #tpu.memory_space<vmem>>, vector<1x1x128xf32>,
    return
  }
  func.func @transform_0(%arg0: i32, %arg1: i32) -> (i32, i32, i32) {
    %c0_i32 = arith.constant 0 : i32
    %c0_i32_0 = arith.constant 0 : i32
    return %arg0, %arg1, %c0_i32 : i32, i32, i32
  }
  func.func @transform_1(%arg0: i32, %arg1: i32) -> (i32, i32, i32) {
    %c0_i32 = arith.constant 0 : i32
    %c0_i32_0 = arith.constant 0 : i32
    %c0_i32_1 = arith.constant 0 : i32
    return %arg0, %c0_i32, %c0_i32_0 : i32, i32, i32
  }
  func.func @transform_2(%arg0: i32, %arg1: i32) -> (i32, i32) {
    %c0_i32 = arith.constant 0 : i32
    %c0_i32_0 = arith.constant 0 : i32
    %c0_i32_1 = arith.constant 0 : i32
    return %c0_i32, %c0_i32_0 : i32, i32
  }
  func.func @transform_3(%arg0: i32, %arg1: i32) -> (i32, i32, i32) {
    %c0_i32 = arith.constant 0 : i32
    %c0_i32_0 = arith.constant 0 : i32
    return %arg0, %arg1, %c0_i32 : i32, i32, i32
  }
  func.func @transform_4(%arg0: i32, %arg1: i32) -> (i32, i32, i32) {
    %c2_i32 = arith.constant 2 : i32
    %0 = arith.muli %arg0, %c2_i32 : i32
    %1 = arith.addi %0, %arg1 : i32
    %c0_i32 = arith.constant 0 : i32
    %c0_i32_0 = arith.constant 0 : i32
    %c0_i32_1 = arith.constant 0 : i32
    return %1, %c0_i32, %c0_i32_0 : i32, i32, i32
  }
}

module attributes {stable_mosaic.version = 11 : i64} {
  func.func @kernel(%arg0: i32, %arg1: i32, %arg2: memref<1x64x256xbf16, #tpu.memory_space<vmem>>, %arg3: memref<1x256x128xbf16, #tpu.memory_space<vmem>>, %arg4: memref<1x128xf32, #tpu.memory_space<vmem>>, %arg5: memref<1x64x128xbf16, #tpu.memory_space<vmem>>, %arg6: memref<1x2x128xf32, #tpu.memory_space<vmem>>) attributes {dimension_semantics = [#tpu.dimension_semantics<parallel>, #tpu.dimension_semantics<parallel>], iteration_bounds = array<i64: 4, 2>, scalar_prefetch = 0 : i64, scratch_operands = 0 : i64, tpu.core_type = #tpu.core_type<tc>, window_params = [{transform_indices = @transform_0, window_bounds = array<i64: 1, 64, 256>}, {transform_indices = @transform_1, window_bounds = array<i64: 1, 256, 128>}, {pipeline_mode = #tpu.pipeline_mode<synchronous>, transform_indices = @transform_2, window_bounds = array<i64: 1, 128>}, {transform_indices = @transform_3, window_bounds = array<i64: 1, 64, 128>}, {transform_indices = @transform_4, window_bounds = array<i64: 1, 2, 128>}]} {
    %c0 = arith.constant 0 : index
    %c0_0 = arith.constant 0 : index
    %c0_1 = arith.constant 0 : index
    %0 = vector.load %arg2[%c0, %c0_0, %c0_1] : memref<1x64x256xbf16, #tpu.memory_space<vmem>>, vector<1x64x256xbf16>
    %1 = vector.shape_cast %0 : vector<1x64x256xbf16> to vector<64x256xbf16>
    %c0_2 = arith.constant 0 : index
    %c0_3 = arith.constant 0 : index
    %c0_4 = arith.constant 0 : index
    %2 = vector.load %arg3[%c0_2, %c0_3, %c0_4] : memref<1x256x128xbf16, #tpu.memory_space<vmem>>, vector<1x256x128xbf16>
    %3 = vector.shape_cast %2 : vector<1x256x128xbf16> to vector<256x128xbf16>
    %cst = arith.constant dense<0.000000e+00> : vector<64x128xf32>
    %4 = tpu.matmul %1, %3, %cst {dimension_numbers = #tpu.dot_dimension_numbers<[1], [0], [0], [1], [0, 0, 1, 1], [], []>} : vector<64x256xbf16>, vector<256x128xbf16>, vector<64x128xf32> -> vector<64x128xf32>
    %c0_5 = arith.constant 0 : index
    %c0_6 = arith.constant 0 : index
    %5 = vector.load %arg4[%c0_5, %c0_6] : memref<1x128xf32, #tpu.memory_space<vmem>>, vector<1x128xf32>
    %6 = vector.broadcast %5 : vector<1x128xf32> to vector<64x128xf32>
    %7 = arith.addf %4, %6 : vector<64x128xf32>
    %cst_7 = arith.constant 0.000000e+00 : f32
    %8 = vector.broadcast %cst_7 : f32 to vector<64x128xf32>
    %9 = arith.maximumf %7, %8 : vector<64x128xf32>
    %10 = arith.truncf %9 : vector<64x128xf32> to vector<64x128xbf16>
    %c0_8 = arith.constant 0 : index
    %c0_9 = arith.constant 0 : index
    %c0_10 = arith.constant 0 : index
    %11 = vector.load %arg5[%c0_8, %c0_9, %c0_10] : memref<1x64x128xbf16, #tpu.memory_space<vmem>>, vector<1x64x128xbf16>
    %12 = vector.shape_cast %11 : vector<1x64x128xbf16> to vector<64x128xbf16>
    %13 = vector.shape_cast %10 : vector<64x128xbf16> to vector<1x64x128xbf16>
    tpu.vector_store %arg5[%c0_8, %c0_9, %c0_10], %13 {strides = array<i32>} : memref<1x64x128xbf16, #tpu.memory_space<vmem>>, vector<1x64x128xbf16>,
    %cst_11 = arith.constant dense<0.000000e+00> : vector<128xf32>
    %14 = vector.multi_reduction <add>, %9, %cst_11 [0] : vector<64x128xf32> to vector<128xf32>
    %15 = vector.shape_cast %14 : vector<128xf32> to vector<1x128xf32>
    %c0_12 = arith.constant 0 : index
    %c0_13 = arith.constant 0 : index
    %c0_14 = arith.constant 0 : index
    %16 = vector.load %arg6[%c0_12, %c0_13, %c0_14] : memref<1x2x128xf32, #tpu.memory_space<vmem>>, vector<1x1x128xf32>
    %17 = vector.shape_cast %16 : vector<1x1x128xf32> to vector<1x128xf32>
    %18 = vector.shape_cast %15 : vector<1x128xf32> to vector<1x1x128xf32>
    tpu.vector_store %arg6[%c0_12, %c0_13, %c0_14], %18 {strides = array<i32>} : memref<1x2x128xf32, #tpu.memory_space<vmem>>, vector<1x1x128xf32>,
    %19 = arith.mulf %9, %9 : vector<64x128xf32>
    %cst_15 = arith.constant dense<0.000000e+00> : vector<128xf32>
    %20 = vector.multi_reduction <add>, %19, %cst_15 [0] : vector<64x128xf32> to vector<128xf32>
    %21 = vector.shape_cast %20 : vector<128xf32> to vector<1x128xf32>
    %c0_16 = arith.constant 0 : index
    %c1 = arith.constant 1 : index
    %c0_17 = arith.constant 0 : index
    %22 = vector.load %arg6[%c0_16, %c1, %c0_17] : memref<1x2x128xf32, #tpu.memory_space<vmem>>, vector<1x1x128xf32>
    %23 = vector.shape_cast %22 : vector<1x1x128xf32> to vector<1x128xf32>
    %24 = vector.shape_cast %21 : vector<1x128xf32> to vector<1x1x128xf32>
    tpu.vector_store %arg6[%c0_16, %c1, %c0_17], %24 {strides = array<i32>} : memref<1x2x128xf32, #tpu.memory_space<vmem>>, vector<1x1x128xf32>,
    return
  }
  func.func @transform_0(%arg0: i32, %arg1: i32) -> (i32, i32, i32) {
    %c0_i32 = arith.constant 0 : i32
    %c0_i32_0 = arith.constant 0 : i32
    return %arg0, %arg1, %c0_i32 : i32, i32, i32
  }
  func.func @transform_1(%arg0: i32, %arg1: i32) -> (i32, i32, i32) {
    %c0_i32 = arith.constant 0 : i32
    %c0_i32_0 = arith.constant 0 : i32
    %c0_i32_1 = arith.constant 0 : i32
    return %arg0, %c0_i32, %c0_i32_0 : i32, i32, i32
  }
  func.func @transform_2(%arg0: i32, %arg1: i32) -> (i32, i32) {
    %c0_i32 = arith.constant 0 : i32
    %c0_i32_0 = arith.constant 0 : i32
    %c0_i32_1 = arith.constant 0 : i32
    return %c0_i32, %c0_i32_0 : i32, i32
  }
  func.func @transform_3(%arg0: i32, %arg1: i32) -> (i32, i32, i32) {
    %c0_i32 = arith.constant 0 : i32
    %c0_i32_0 = arith.constant 0 : i32
    return %arg0, %arg1, %c0_i32 : i32, i32, i32
  }
  func.func @transform_4(%arg0: i32, %arg1: i32) -> (i32, i32, i32) {
    %c2_i32 = arith.constant 2 : i32
    %0 = arith.muli %arg0, %c2_i32 : i32
    %1 = arith.addi %0, %arg1 : i32
    %c0_i32 = arith.constant 0 : i32
    %c0_i32_0 = arith.constant 0 : i32
    %c0_i32_1 = arith.constant 0 : i32
    return %1, %c0_i32, %c0_i32_0 : i32, i32, i32
  }
}

module attributes {stable_mosaic.version = 11 : i64} {
  func.func @kernel(%arg0: i32, %arg1: i32, %arg2: memref<1x256x384xbf16, #tpu.memory_space<vmem>>, %arg3: memref<1x384x128xbf16, #tpu.memory_space<vmem>>, %arg4: memref<1x128xf32, #tpu.memory_space<vmem>>, %arg5: memref<1x256x128xbf16, #tpu.memory_space<vmem>>, %arg6: memref<1x2x128xf32, #tpu.memory_space<vmem>>) attributes {dimension_semantics = [#tpu.dimension_semantics<parallel>, #tpu.dimension_semantics<parallel>], iteration_bounds = array<i64: 1, 2>, scalar_prefetch = 0 : i64, scratch_operands = 0 : i64, tpu.core_type = #tpu.core_type<tc>, window_params = [{transform_indices = @transform_0, window_bounds = array<i64: 1, 256, 384>}, {transform_indices = @transform_1, window_bounds = array<i64: 1, 384, 128>}, {pipeline_mode = #tpu.pipeline_mode<synchronous>, transform_indices = @transform_2, window_bounds = array<i64: 1, 128>}, {transform_indices = @transform_3, window_bounds = array<i64: 1, 256, 128>}, {transform_indices = @transform_4, window_bounds = array<i64: 1, 2, 128>}]} {
    %c0 = arith.constant 0 : index
    %c0_0 = arith.constant 0 : index
    %c0_1 = arith.constant 0 : index
    %0 = vector.load %arg2[%c0, %c0_0, %c0_1] : memref<1x256x384xbf16, #tpu.memory_space<vmem>>, vector<1x256x384xbf16>
    %1 = vector.shape_cast %0 : vector<1x256x384xbf16> to vector<256x384xbf16>
    %c0_2 = arith.constant 0 : index
    %c0_3 = arith.constant 0 : index
    %c0_4 = arith.constant 0 : index
    %2 = vector.load %arg3[%c0_2, %c0_3, %c0_4] : memref<1x384x128xbf16, #tpu.memory_space<vmem>>, vector<1x384x128xbf16>
    %3 = vector.shape_cast %2 : vector<1x384x128xbf16> to vector<384x128xbf16>
    %cst = arith.constant dense<0.000000e+00> : vector<256x128xf32>
    %4 = tpu.matmul %1, %3, %cst {dimension_numbers = #tpu.dot_dimension_numbers<[1], [0], [0], [1], [0, 0, 1, 1], [], []>} : vector<256x384xbf16>, vector<384x128xbf16>, vector<256x128xf32> -> vector<256x128xf32>
    %c0_5 = arith.constant 0 : index
    %c0_6 = arith.constant 0 : index
    %5 = vector.load %arg4[%c0_5, %c0_6] : memref<1x128xf32, #tpu.memory_space<vmem>>, vector<1x128xf32>
    %6 = vector.broadcast %5 : vector<1x128xf32> to vector<256x128xf32>
    %7 = arith.addf %4, %6 : vector<256x128xf32>
    %cst_7 = arith.constant 0.000000e+00 : f32
    %8 = vector.broadcast %cst_7 : f32 to vector<256x128xf32>
    %9 = arith.maximumf %7, %8 : vector<256x128xf32>
    %10 = arith.truncf %9 : vector<256x128xf32> to vector<256x128xbf16>
    %c0_8 = arith.constant 0 : index
    %c0_9 = arith.constant 0 : index
    %c0_10 = arith.constant 0 : index
    %11 = vector.load %arg5[%c0_8, %c0_9, %c0_10] : memref<1x256x128xbf16, #tpu.memory_space<vmem>>, vector<1x256x128xbf16>
    %12 = vector.shape_cast %11 : vector<1x256x128xbf16> to vector<256x128xbf16>
    %13 = vector.shape_cast %10 : vector<256x128xbf16> to vector<1x256x128xbf16>
    tpu.vector_store %arg5[%c0_8, %c0_9, %c0_10], %13 {strides = array<i32>} : memref<1x256x128xbf16, #tpu.memory_space<vmem>>, vector<1x256x128xbf16>,
    %cst_11 = arith.constant dense<0.000000e+00> : vector<128xf32>
    %14 = vector.multi_reduction <add>, %9, %cst_11 [0] : vector<256x128xf32> to vector<128xf32>
    %15 = vector.shape_cast %14 : vector<128xf32> to vector<1x128xf32>
    %c0_12 = arith.constant 0 : index
    %c0_13 = arith.constant 0 : index
    %c0_14 = arith.constant 0 : index
    %16 = vector.load %arg6[%c0_12, %c0_13, %c0_14] : memref<1x2x128xf32, #tpu.memory_space<vmem>>, vector<1x1x128xf32>
    %17 = vector.shape_cast %16 : vector<1x1x128xf32> to vector<1x128xf32>
    %18 = vector.shape_cast %15 : vector<1x128xf32> to vector<1x1x128xf32>
    tpu.vector_store %arg6[%c0_12, %c0_13, %c0_14], %18 {strides = array<i32>} : memref<1x2x128xf32, #tpu.memory_space<vmem>>, vector<1x1x128xf32>,
    %19 = arith.mulf %9, %9 : vector<256x128xf32>
    %cst_15 = arith.constant dense<0.000000e+00> : vector<128xf32>
    %20 = vector.multi_reduction <add>, %19, %cst_15 [0] : vector<256x128xf32> to vector<128xf32>
    %21 = vector.shape_cast %20 : vector<128xf32> to vector<1x128xf32>
    %c0_16 = arith.constant 0 : index
    %c1 = arith.constant 1 : index
    %c0_17 = arith.constant 0 : index
    %22 = vector.load %arg6[%c0_16, %c1, %c0_17] : memref<1x2x128xf32, #tpu.memory_space<vmem>>, vector<1x1x128xf32>
    %23 = vector.shape_cast %22 : vector<1x1x128xf32> to vector<1x128xf32>
    %24 = vector.shape_cast %21 : vector<1x128xf32> to vector<1x1x128xf32>
    tpu.vector_store %arg6[%c0_16, %c1, %c0_17], %24 {strides = array<i32>} : memref<1x2x128xf32, #tpu.memory_space<vmem>>, vector<1x1x128xf32>,
    return
  }
  func.func @transform_0(%arg0: i32, %arg1: i32) -> (i32, i32, i32) {
    %c0_i32 = arith.constant 0 : i32
    %c0_i32_0 = arith.constant 0 : i32
    return %arg0, %arg1, %c0_i32 : i32, i32, i32
  }
  func.func @transform_1(%arg0: i32, %arg1: i32) -> (i32, i32, i32) {
    %c0_i32 = arith.constant 0 : i32
    %c0_i32_0 = arith.constant 0 : i32
    %c0_i32_1 = arith.constant 0 : i32
    return %arg0, %c0_i32, %c0_i32_0 : i32, i32, i32
  }
  func.func @transform_2(%arg0: i32, %arg1: i32) -> (i32, i32) {
    %c0_i32 = arith.constant 0 : i32
    %c0_i32_0 = arith.constant 0 : i32
    %c0_i32_1 = arith.constant 0 : i32
    return %c0_i32, %c0_i32_0 : i32, i32
  }
  func.func @transform_3(%arg0: i32, %arg1: i32) -> (i32, i32, i32) {
    %c0_i32 = arith.constant 0 : i32
    %c0_i32_0 = arith.constant 0 : i32
    return %arg0, %arg1, %c0_i32 : i32, i32, i32
  }
  func.func @transform_4(%arg0: i32, %arg1: i32) -> (i32, i32, i32) {
    %c2_i32 = arith.constant 2 : i32
    %0 = arith.muli %arg0, %c2_i32 : i32
    %1 = arith.addi %0, %arg1 : i32
    %c0_i32 = arith.constant 0 : i32
    %c0_i32_0 = arith.constant 0 : i32
    %c0_i32_1 = arith.constant 0 : i32
    return %1, %c0_i32, %c0_i32_0 : i32, i32, i32
  }
}

module attributes {stable_mosaic.version = 11 : i64} {
  func.func @kernel(%arg0: i32, %arg1: memref<256x384xbf16, #tpu.memory_space<vmem>>, %arg2: memref<384x128xbf16, #tpu.memory_space<vmem>>, %arg3: memref<1x128xf32, #tpu.memory_space<vmem>>, %arg4: memref<256x128xf32, #tpu.memory_space<vmem>>) attributes {dimension_semantics = [#tpu.dimension_semantics<parallel>], iteration_bounds = array<i64: 2>, scalar_prefetch = 0 : i64, scratch_operands = 0 : i64, tpu.core_type = #tpu.core_type<tc>, window_params = [{transform_indices = @transform_0, window_bounds = array<i64: 256, 384>}, {pipeline_mode = #tpu.pipeline_mode<synchronous>, transform_indices = @transform_1, window_bounds = array<i64: 384, 128>}, {pipeline_mode = #tpu.pipeline_mode<synchronous>, transform_indices = @transform_2, window_bounds = array<i64: 1, 128>}, {transform_indices = @transform_3, window_bounds = array<i64: 256, 128>}]} {
    %c0 = arith.constant 0 : index
    %c0_0 = arith.constant 0 : index
    %0 = vector.load %arg1[%c0, %c0_0] : memref<256x384xbf16, #tpu.memory_space<vmem>>, vector<256x384xbf16>
    %c0_1 = arith.constant 0 : index
    %c0_2 = arith.constant 0 : index
    %1 = vector.load %arg2[%c0_1, %c0_2] : memref<384x128xbf16, #tpu.memory_space<vmem>>, vector<384x128xbf16>
    %cst = arith.constant dense<0.000000e+00> : vector<256x128xf32>
    %2 = tpu.matmul %0, %1, %cst {dimension_numbers = #tpu.dot_dimension_numbers<[1], [0], [0], [1], [0, 0, 1, 1], [], []>} : vector<256x384xbf16>, vector<384x128xbf16>, vector<256x128xf32> -> vector<256x128xf32>
    %c0_3 = arith.constant 0 : index
    %c0_4 = arith.constant 0 : index
    %3 = vector.load %arg3[%c0_3, %c0_4] : memref<1x128xf32, #tpu.memory_space<vmem>>, vector<1x128xf32>
    %4 = vector.broadcast %3 : vector<1x128xf32> to vector<256x128xf32>
    %5 = arith.addf %2, %4 : vector<256x128xf32>
    %cst_5 = arith.constant 0.000000e+00 : f32
    %6 = vector.broadcast %cst_5 : f32 to vector<256x128xf32>
    %7 = arith.subf %6, %5 : vector<256x128xf32>
    %8 = math.exp %7 : vector<256x128xf32>
    %cst_6 = arith.constant 1.000000e+00 : f32
    %9 = vector.broadcast %cst_6 : f32 to vector<256x128xf32>
    %10 = arith.addf %9, %8 : vector<256x128xf32>
    %cst_7 = arith.constant 1.000000e+00 : f32
    %11 = vector.broadcast %cst_7 : f32 to vector<256x128xf32>
    %12 = arith.divf %11, %10 : vector<256x128xf32>
    %c0_8 = arith.constant 0 : index
    %c0_9 = arith.constant 0 : index
    %13 = vector.load %arg4[%c0_8, %c0_9] : memref<256x128xf32, #tpu.memory_space<vmem>>, vector<256x128xf32>
    tpu.vector_store %arg4[%c0_8, %c0_9], %12 {strides = array<i32>} : memref<256x128xf32, #tpu.memory_space<vmem>>, vector<256x128xf32>,
    return
  }
  func.func @transform_0(%arg0: i32) -> (i32, i32) {
    %c0_i32 = arith.constant 0 : i32
    %c0_i32_0 = arith.constant 0 : i32
    return %arg0, %c0_i32 : i32, i32
  }
  func.func @transform_1(%arg0: i32) -> (i32, i32) {
    %c0_i32 = arith.constant 0 : i32
    %c0_i32_0 = arith.constant 0 : i32
    %c0_i32_1 = arith.constant 0 : i32
    return %c0_i32, %c0_i32_0 : i32, i32
  }
  func.func @transform_2(%arg0: i32) -> (i32, i32) {
    %c0_i32 = arith.constant 0 : i32
    %c0_i32_0 = arith.constant 0 : i32
    %c0_i32_1 = arith.constant 0 : i32
    return %c0_i32, %c0_i32_0 : i32, i32
  }
  func.func @transform_3(%arg0: i32) -> (i32, i32) {
    %c0_i32 = arith.constant 0 : i32
    %c0_i32_0 = arith.constant 0 : i32
    return %arg0, %c0_i32 : i32, i32
  }
}

</mosaic_0001>

<llo_original>
// kernel: forward.17
$region0: #{forward.17}
  #allocation0 [shape = 'u32[]', space=smem, size = 0x4, offset = 0x4, fixed_abs, tag = 'smem constant byte address 0x4 - core index']
  #allocation1 [shape = 'u32[144,128]{1,0:T(1,128)}', space=vmem, size = 0x12000, scoped, tag = 'internal scratch']
  %s0 = inlined_call_operand.vmem [shape: bf16[1,512,128], index: 0, kind: input, shape index: {}]
  %s1 = inlined_call_operand.vmem [shape: bf16[1,128,128], index: 1, kind: input, shape index: {}]
  %s2 = inlined_call_operand.vmem [shape: f32[1,128], index: 2, kind: input, shape index: {}]
  %s3 = inlined_call_operand.vmem [shape: bf16[1,512,128], index: 3, kind: output, shape index: {0}]
  %s4 = inlined_call_operand.vmem [shape: f32[2,2,128], index: 4, kind: output, shape index: {1}]
  %5 = xla_tuple %s3, %s4
  %s6 = sld [smem:[#allocation0]]
  $region53: #{forward.17} parent=0
    _
  %s8 = ssub.s32 1, %s6
  %s9 = scalar_select 0, %s8, %s6
  loop: start=0, step=1, limit=4
  $region2: #{forward.17} parent=0 // loop_pre_header
    _
  $region3: #{forward.17} parent=0 // loop_header
    %s11 = sphi 0, %s15
    %p12 = scmp.ge.s32.totalorder %s11, 4
    %s18 = sphi 0, %s30
    %s19 = sphi 0, %s26
    %s20 = sphi 0, %s18
    %s21 = sphi 0, %s19
    %s22 = sphi 0, %s20
    %s23 = sphi 0, %s21
    %s35 = sphi 0, %s37
    %s38 = sphi 0, %s35
    %s39 = sphi 0, %s38
    %s55 = sphi 0, %s39
    %s61 = sphi 0, %s63
    %s64 = sphi 0, %s61
    %s65 = sphi 0, %s64
    %s81 = sphi 0, %s65
    %s85 = sphi 0, %s85
    %s87 = sphi 0, %s85
    %s88 = sphi 0, %s87
    %s102 = sphi 0, %s88
    %s110 = sphi 0, %s112
    %s113 = sphi 0, %s110
    %s114 = sphi 0, %s113
    %s130 = sphi 0, %s114
    %s140 = sphi 0, %s142
    %s143 = sphi 0, %s140
    %s144 = sphi 0, %s143
    %s160 = sphi 0, %s144
  $region4: #{forward.17} parent=0 // loop_header_branch
    %14 = sbr.rel (%p12) target = $region8
  $region5: #{forward.17} parent=0 // loop_body
    %s16 = ssub.s32 %s11, 1
    %s17 = ssub.s32 %s11, 2
    %s24 = sadd.s32 1, %s19
    %p25 = scmp.ge.s32.totalorder %s24, 2
    %s26 = scalar_select %p25, 0, %s24
    %s27 = sadd.s32 1, %s18
    %s28 = scalar_select %p25, %s27, %s18
    %p29 = scmp.ge.s32.totalorder %s28, 1
    %s30 = scalar_select %p29, 0, %s28
    %s31 = ssub.s32 %s18, %s30
    %s32 = ssub.s32 %s19, %s26
    %s33 = sor.u32 %s31, %s32
    %p34 = scmp.eq.s32.totalorder %s33, 0
    %s36 = sadd.s32 %s35, 1
    %s37 = scalar_select %p34, %s35, %s36
    %p40 = pneg %p34
    %p41 = scmp.eq.s32.totalorder %s11, 1
    %p42 = por %p40, %p41
    %p43 = scmp.ne.s32.totalorder %s35, %s38
    %p44 = scmp.eq.s32.totalorder %s11, 0
    %p45 = por %p43, %p44
    %p46 = scmp.ne.s32.totalorder %s35, %s38
    %p47 = scmp.eq.s32.totalorder %s16, 1
    %p48 = por %p46, %p47
    %p49 = scmp.ne.s32.totalorder %s38, %s39
    %p50 = scmp.eq.s32.totalorder %s16, 0
    %p51 = por %p49, %p50
    %p52 = scmp.ne.s32.totalorder %s38, %s39
    %p53 = scmp.eq.s32.totalorder %s17, 1
    %p54 = por %p52, %p53
    %p56 = scmp.ne.s32.totalorder %s39, %s55
    %p57 = scmp.eq.s32.totalorder %s17, 0
    %p58 = por %p56, %p57
    %s59 = ssub.s32 %s18, %s30
    %p60 = scmp.eq.s32.totalorder %s59, 0
    %s62 = sadd.s32 %s61, 1
    %s63 = scalar_select %p60, %s61, %s62
    %p66 = pneg %p60
    %p67 = scmp.eq.s32.totalorder %s11, 1
    %p68 = por %p66, %p67
    %p69 = scmp.ne.s32.totalorder %s61, %s64
    %p70 = scmp.eq.s32.totalorder %s11, 0
    %p71 = por %p69, %p70
    %p72 = scmp.ne.s32.totalorder %s61, %s64
    %p73 = scmp.eq.s32.totalorder %s16, 1
    %p74 = por %p72, %p73
    %p75 = scmp.ne.s32.totalorder %s64, %s65
    %p76 = scmp.eq.s32.totalorder %s16, 0
    %p77 = por %p75, %p76
    %p78 = scmp.ne.s32.totalorder %s64, %s65
    %p79 = scmp.eq.s32.totalorder %s17, 1
    %p80 = por %p78, %p79
    %p82 = scmp.ne.s32.totalorder %s65, %s81
    %p83 = scmp.eq.s32.totalorder %s17, 0
    %p84 = por %p82, %p83
    %s86 = sadd.s32 %s85, 1
    %p89 = scmp.eq.s32.totalorder %s11, 1
    %p90 = scmp.ne.s32.totalorder %s85, %s87
    %p91 = scmp.eq.s32.totalorder %s11, 0
    %p92 = por %p90, %p91
    %p93 = scmp.ne.s32.totalorder %s85, %s87
    %p94 = scmp.eq.s32.totalorder %s16, 1
    %p95 = por %p93, %p94
    %p96 = scmp.ne.s32.totalorder %s87, %s88
    %p97 = scmp.eq.s32.totalorder %s16, 0
    %p98 = por %p96, %p97
    %p99 = scmp.ne.s32.totalorder %s87, %s88
    %p100 = scmp.eq.s32.totalorder %s17, 1
    %p101 = por %p99, %p100
    %p103 = scmp.ne.s32.totalorder %s88, %s102
    %p104 = scmp.eq.s32.totalorder %s17, 0
    %p105 = por %p103, %p104
    %s106 = ssub.s32 %s18, %s30
    %s107 = ssub.s32 %s19, %s26
    %s108 = sor.u32 %s106, %s107
    %p109 = scmp.eq.s32.totalorder %s108, 0
    %s111 = sadd.s32 %s110, 1
    %s112 = scalar_select %p109, %s110, %s111
    %p115 = pneg %p109
    %p116 = scmp.eq.s32.totalorder %s11, 1
    %p117 = por %p115, %p116
    %p118 = scmp.ne.s32.totalorder %s110, %s113
    %p119 = scmp.eq.s32.totalorder %s11, 0
    %p120 = por %p118, %p119
    %p121 = scmp.ne.s32.totalorder %s110, %s113
    %p122 = scmp.eq.s32.totalorder %s16, 1
    %p123 = por %p121, %p122
    %p124 = scmp.ne.s32.totalorder %s113, %s114
    %p125 = scmp.eq.s32.totalorder %s16, 0
    %p126 = por %p124, %p125
    %p127 = scmp.ne.s32.totalorder %s113, %s114
    %p128 = scmp.eq.s32.totalorder %s17, 1
    %p129 = por %p127, %p128
    %p131 = scmp.ne.s32.totalorder %s114, %s130
    %p132 = scmp.eq.s32.totalorder %s17, 0
    %p133 = por %p131, %p132
    %s134 = smul.u32 %s18, 2
    %s135 = sadd.s32 %s134, %s19
    %s136 = smul.u32 %s30, 2
    %s137 = sadd.s32 %s136, %s26
    %s138 = ssub.s32 %s135, %s137
    %p139 = scmp.eq.s32.totalorder %s138, 0
    %s141 = sadd.s32 %s140, 1
    %s142 = scalar_select %p139, %s140, %s141
    %p145 = pneg %p139
    %p146 = scmp.eq.s32.totalorder %s11, 1
    %p147 = por %p145, %p146
    %p148 = scmp.ne.s32.totalorder %s140, %s143
    %p149 = scmp.eq.s32.totalorder %s11, 0
    %p150 = por %p148, %p149
    %p151 = scmp.ne.s32.totalorder %s140, %s143
    %p152 = scmp.eq.s32.totalorder %s16, 1
    %p153 = por %p151, %p152
    %p154 = scmp.ne.s32.totalorder %s143, %s144
    %p155 = scmp.eq.s32.totalorder %s16, 0
    %p156 = por %p154, %p155
    %p157 = scmp.ne.s32.totalorder %s143, %s144
    %p158 = scmp.eq.s32.totalorder %s17, 1
    %p159 = por %p157, %p158
    %p161 = scmp.ne.s32.totalorder %s144, %s160
    %p162 = scmp.eq.s32.totalorder %s17, 0
    %p163 = por %p161, %p162
    %p164 = scmp.le.s32.totalorder 1, %s11
    %p165 = scmp.lt.s32.totalorder %s11, 3
    %p166 = pnand %p164, %p165
    %p167 = pneg %p166
    // Predicated region
    $region9: #{forward.17} parent=5 // pred_check
      _
    $region10: #{forward.17} parent=5 // pred_check_branch
      %169 = sbr.rel (%p166) target = $region12
    $region11: #{forward.17} parent=5 // pred_region
      %s170 = ssub.s32 %s11, 1
      // Predicated region
      $region13: #{forward.17} parent=11 // pred_check
        %p171 = pneg %p77
      $region14: #{forward.17} parent=11 // pred_check_branch
        %173 = sbr.rel (%p171) target = $region16
      $region15: #{forward.17} parent=11 // pred_region
        %p174 = scmp.lt.s32.totalorder %s20, 0
        %s175 = scalar_select %p174, %s20, 0
        %s176 = smul.addr %s175, 16
        %s177 = smul.addr %s176, 4
        %s178 = scalar_lea.vmem %s1, %s177
      $region16: #{forward.17} parent=11 // pred_fallthru
        _
      // Predicated region
      $region17: #{forward.17} parent=11 // pred_check
        %p179 = pneg %p98
      $region18: #{forward.17} parent=11 // pred_check_branch
        %181 = sbr.rel (%p179) target = $region20
      $region19: #{forward.17} parent=11 // pred_region
        _
      $region20: #{forward.17} parent=11 // pred_fallthru
        _
    $region12: #{forward.17} parent=5 // pred_fallthru
      _
    %p182 = scmp.lt.s32.totalorder %s11, 2
    // Predicated region
    $region21: #{forward.17} parent=5 // pred_check
      %p183 = pneg %p182
    $region22: #{forward.17} parent=5 // pred_check_branch
      %185 = sbr.rel (%p183) target = $region24
    $region23: #{forward.17} parent=5 // pred_region
      // Predicated region
      $region25: #{forward.17} parent=23 // pred_check
        %p186 = pneg %p45
      $region26: #{forward.17} parent=23 // pred_check_branch
        %188 = sbr.rel (%p186) target = $region28
      $region27: #{forward.17} parent=23 // pred_region
        %s189 = smul.u32 32, %s19
        %p190 = scmp.lt.s32.totalorder %s18, 0
        %s191 = scalar_select %p190, %s18, 0
        %p192 = scmp.lt.s32.totalorder %s189, 63
        %s193 = scalar_select %p192, %s189, 63
        %s194 = smul.addr %s191, 64
        %s195 = sadd.s32 %s193, %s194
        %s196 = smul.addr %s195, 4
        %s197 = scalar_lea.vmem %s0, %s196
        %s198 = smul.u32 32, %s19
      $region28: #{forward.17} parent=23 // pred_fallthru
        _
    $region24: #{forward.17} parent=5 // pred_fallthru
      _
    %p199 = scmp.le.s32.totalorder 1, %s11
    %p200 = scmp.lt.s32.totalorder %s11, 3
    %p201 = pnand %p199, %p200
    %p202 = pneg %p201
    // Predicated region
    $region29: #{forward.17} parent=5 // pred_check
      _
    $region30: #{forward.17} parent=5 // pred_check_branch
      %204 = sbr.rel (%p201) target = $region32
    $region31: #{forward.17} parent=5 // pred_region
      %s205 = ssub.s32 %s11, 1
      %s206 = smul.u32 32, %s21
      %p207 = scmp.lt.s32.totalorder %s20, 0
      %s208 = scalar_select %p207, %s20, 0
      %p209 = scmp.lt.s32.totalorder %s206, 63
      %s210 = scalar_select %p209, %s206, 63
      %s211 = smul.addr %s208, 64
      %s212 = sadd.s32 %s210, %s211
      %s213 = smul.addr %s212, 4
      %s214 = scalar_lea.vmem %s0, %s213
      %p215 = pneg %p51
      %p216 = pneg %p48
      %p217 = scmp.lt.s32.totalorder %s20, 0
      %s218 = scalar_select %p217, %s20, 0
      %s219 = smul.addr %s218, 16
      %s220 = smul.addr %s219, 4
      %s221 = scalar_lea.vmem %s1, %s220
      %p222 = pneg %p77
      %p223 = pneg %p74
      %p224 = pneg %p98
      %p225 = pneg %p95
      %p226 = pneg %p126
      %p227 = pneg %p123
      %s228 = smul.u32 32, %s21
      %p229 = scmp.lt.s32.totalorder %s20, 0
      %s230 = scalar_select %p229, %s20, 0
      %p231 = scmp.lt.s32.totalorder %s228, 63
      %s232 = scalar_select %p231, %s228, 63
      %s233 = smul.addr %s230, 64
      %s234 = sadd.s32 %s232, %s233
      %s235 = smul.addr %s234, 4
      %s236 = scalar_lea.vmem %s3, %s235
      %p237 = pneg %p156
      %p238 = pneg %p153
      %s239 = smul.u32 %s20, 2
      %s240 = sadd.s32 %s239, %s21
      %p241 = scmp.lt.s32.totalorder %s240, 1
      %s242 = scalar_select %p241, %s240, 1
      %s243 = smul.addr %s242, 2
      %s244 = scalar_lea.vmem %s4, %s243
      %s245 = smul.u32 32, %s21
      %p246 = scmp.lt.s32.totalorder %s20, 0
      %s247 = scalar_select %p246, %s20, 0
      %p248 = scmp.lt.s32.totalorder %s245, 63
      %s249 = scalar_select %p248, %s245, 63
      %s250 = smul.addr %s247, 64
      %s251 = sadd.s32 %s249, %s250
      %s252 = smul.addr %s251, 4
      %s253 = scalar_lea.vmem %s0, %s252
      %s254 = smul.u32 32, %s21
      %p255 = scmp.lt.s32.totalorder %s20, 0
      %s256 = scalar_select %p255, %s20, 0
      %s257 = smul.addr %s256, 16
      %s258 = smul.addr %s257, 4
      %s259 = scalar_lea.vmem %s1, %s258
      %s260 = smul.u32 32, %s21
      %p261 = scmp.lt.s32.totalorder %s20, 0
      %s262 = scalar_select %p261, %s20, 0
      %p263 = scmp.lt.s32.totalorder %s260, 63
      %s264 = scalar_select %p263, %s260, 63
      %s265 = smul.addr %s262, 64
      %s266 = sadd.s32 %s264, %s265
      %s267 = smul.addr %s266, 4
      %s268 = scalar_lea.vmem %s3, %s267
      %s269 = smul.u32 32, %s21
      %s270 = smul.u32 %s20, 2
      %s271 = sadd.s32 %s270, %s21
      %p272 = scmp.lt.s32.totalorder %s271, 1
      %s273 = scalar_select %p272, %s271, 1
      %s274 = smul.addr %s273, 2
      %s275 = scalar_lea.vmem %s4, %s274
      %s276 = smul.u32 %s20, 2
      %s277 = sadd.s32 %s276, %s21
      %v279 = vld [vmem:[%s253] sm:$0xf]
      %v280 = vld [vmem:[%s253 + $0x4] sm:$0xf]
      %v281 = vld [vmem:[%s253 + $0x8] sm:$0xf]
      %v282 = vld [vmem:[%s253 + $0xc] sm:$0xf]
      %v283 = vld [vmem:[%s253 + $0x10] sm:$0xf]
      %v284 = vld [vmem:[%s253 + $0x14] sm:$0xf]
      %v285 = vld [vmem:[%s253 + $0x18] sm:$0xf]
      %v286 = vld [vmem:[%s253 + $0x1c] sm:$0xf]
      %v287 = vld [vmem:[%s253 + $0x20] sm:$0xf]
      %v288 = vld [vmem:[%s253 + $0x24] sm:$0xf]
      %v289 = vld [vmem:[%s253 + $0x28] sm:$0xf]
      %v290 = vld [vmem:[%s253 + $0x2c] sm:$0xf]
      %v291 = vld [vmem:[%s253 + $0x30] sm:$0xf]
      %v292 = vld [vmem:[%s253 + $0x34] sm:$0xf]
      %v293 = vld [vmem:[%s253 + $0x38] sm:$0xf]
      %v294 = vld [vmem:[%s253 + $0x3c] sm:$0xf]
      %v295 = vld [vmem:[%s253 + $0x40] sm:$0xf]
      %v296 = vld [vmem:[%s253 + $0x44] sm:$0xf]
      %v297 = vld [vmem:[%s253 + $0x48] sm:$0xf]
      %v298 = vld [vmem:[%s253 + $0x4c] sm:$0xf]
      %v299 = vld [vmem:[%s253 + $0x50] sm:$0xf]
      %v300 = vld [vmem:[%s253 + $0x54] sm:$0xf]
      %v301 = vld [vmem:[%s253 + $0x58] sm:$0xf]
      %v302 = vld [vmem:[%s253 + $0x5c] sm:$0xf]
      %v303 = vld [vmem:[%s253 + $0x60] sm:$0xf]
      %v304 = vld [vmem:[%s253 + $0x64] sm:$0xf]
      %v305 = vld [vmem:[%s253 + $0x68] sm:$0xf]
      %v306 = vld [vmem:[%s253 + $0x6c] sm:$0xf]
      %v307 = vld [vmem:[%s253 + $0x70] sm:$0xf]
      %v308 = vld [vmem:[%s253 + $0x74] sm:$0xf]
      %v309 = vld [vmem:[%s253 + $0x78] sm:$0xf]
      %v310 = vld [vmem:[%s253 + $0x7c] sm:$0xf]
      %v311 = vld [vmem:[%s259] sm:$0xf]
      %v312 = vld [vmem:[%s259 + $0x4] sm:$0xf]
      %v313 = vld [vmem:[%s259 + $0x8] sm:$0xf]
      %v314 = vld [vmem:[%s259 + $0xc] sm:$0xf]
      %v315 = vld [vmem:[%s259 + $0x10] sm:$0xf]
      %v316 = vld [vmem:[%s259 + $0x14] sm:$0xf]
      %v317 = vld [vmem:[%s259 + $0x18] sm:$0xf]
      %v318 = vld [vmem:[%s259 + $0x1c] sm:$0xf]
      %v319 = vld [vmem:[%s259 + $0x20] sm:$0xf]
      %v320 = vld [vmem:[%s259 + $0x24] sm:$0xf]
      %v321 = vld [vmem:[%s259 + $0x28] sm:$0xf]
      %v322 = vld [vmem:[%s259 + $0x2c] sm:$0xf]
      %v323 = vld [vmem:[%s259 + $0x30] sm:$0xf]
      %v324 = vld [vmem:[%s259 + $0x34] sm:$0xf]
      %v325 = vld [vmem:[%s259 + $0x38] sm:$0xf]
      %v326 = vld [vmem:[%s259 + $0x3c] sm:$0xf]
      %v327 = vld [vmem:[%s2] sm:$0x1]
      %v329 = vlaneseq
      %v330 = vshrl.u32 %v329, 7
      %v331 = vsub.s32 0, %v330
      %v332 = vrot.slane %v327, %v331
      %v366 = vunpack.c.l.b16 %v279
      %v367 = vunpack.c.l.b16 %v280
      %v368 = vunpack.c.l.b16 %v281
      %v369 = vunpack.c.l.b16 %v282
      %v370 = vunpack.c.l.b16 %v283
      %v371 = vunpack.c.l.b16 %v284
      %v372 = vunpack.c.l.b16 %v285
      %v373 = vunpack.c.l.b16 %v286
      %v374 = vunpack.c.l.b16 %v287
      %v375 = vunpack.c.l.b16 %v288
      %v376 = vunpack.c.l.b16 %v289
      %v377 = vunpack.c.l.b16 %v290
      %v378 = vunpack.c.l.b16 %v291
      %v379 = vunpack.c.l.b16 %v292
      %v380 = vunpack.c.l.b16 %v293
      %v381 = vunpack.c.l.b16 %v294
      %v382 = vunpack.c.l.b16 %v295
      %v383 = vunpack.c.l.b16 %v296
      %v384 = vunpack.c.l.b16 %v297
      %v385 = vunpack.c.l.b16 %v298
      %v386 = vunpack.c.l.b16 %v299
      %v387 = vunpack.c.l.b16 %v300
      %v388 = vunpack.c.l.b16 %v301
      %v389 = vunpack.c.l.b16 %v302
      %v390 = vunpack.c.l.b16 %v303
      %v391 = vunpack.c.l.b16 %v304
      %v392 = vunpack.c.l.b16 %v305
      %v393 = vunpack.c.l.b16 %v306
      %v394 = vunpack.c.l.b16 %v307
      %v395 = vunpack.c.l.b16 %v308
      %v396 = vunpack.c.l.b16 %v309
      %v397 = vunpack.c.l.b16 %v310
      %v398 = vpack.c.b16 %v367, %v366
      %v399 = vpack.c.b16 %v369, %v368
      %v400 = vpack.c.b16 %v371, %v370
      %v401 = vpack.c.b16 %v373, %v372
      %v402 = vpack.c.b16 %v375, %v374
      %v403 = vpack.c.b16 %v377, %v376
      %v404 = vpack.c.b16 %v379, %v378
      %v405 = vpack.c.b16 %v381, %v380
      %v406 = vpack.c.b16 %v383, %v382
      %v407 = vpack.c.b16 %v385, %v384
      %v408 = vpack.c.b16 %v387, %v386
      %v409 = vpack.c.b16 %v389, %v388
      %v410 = vpack.c.b16 %v391, %v390
      %v411 = vpack.c.b16 %v393, %v392
      %v412 = vpack.c.b16 %v395, %v394
      %v413 = vpack.c.b16 %v397, %v396
      %v446 = vunpack.c.l.b16 %v311
      %v447 = vunpack.c.l.b16 %v312
      %v448 = vunpack.c.l.b16 %v313
      %v449 = vunpack.c.l.b16 %v314
      %v450 = vunpack.c.l.b16 %v315
      %v451 = vunpack.c.l.b16 %v316
      %v452 = vunpack.c.l.b16 %v317
      %v453 = vunpack.c.l.b16 %v318
      %v454 = vunpack.c.l.b16 %v319
      %v455 = vunpack.c.l.b16 %v320
      %v456 = vunpack.c.l.b16 %v321
      %v457 = vunpack.c.l.b16 %v322
      %v458 = vunpack.c.l.b16 %v323
      %v459 = vunpack.c.l.b16 %v324
      %v460 = vunpack.c.l.b16 %v325
      %v461 = vunpack.c.l.b16 %v326
      %v462 = vpack.c.b16 %v447, %v446
      %v463 = vpack.c.b16 %v449, %v448
      %v464 = vpack.c.b16 %v451, %v450
      %v465 = vpack.c.b16 %v453, %v452
      %v466 = vpack.c.b16 %v455, %v454
      %v467 = vpack.c.b16 %v457, %v456
      %v468 = vpack.c.b16 %v459, %v458
      %v469 = vpack.c.b16 %v461, %v460
      %478 = vmatprep.subr.bf16.mxu0 0
      %479 = vmatpush1.bf16.msra.mxu0 %v462
      %480 = vmatprep.subr.bf16.mxu0 0
      %481 = vmatpush1.bf16.msra.mxu0 %v463
      %482 = vmatprep.subr.bf16.mxu0 0
      %483 = vmatpush1.bf16.msra.mxu0 %v464
      %484 = vmatprep.subr.bf16.mxu0 0
      %485 = vmatpush1.bf16.msra.mxu0 %v465
      %486 = vmatprep.subr.bf16.mxu0 0
      %487 = vmatpush1.bf16.msra.mxu0 %v466
      %488 = vmatprep.subr.bf16.mxu0 0
      %489 = vmatpush1.bf16.msra.mxu0 %v467
      %490 = vmatprep.subr.bf16.mxu0 0
      %491 = vmatpush1.bf16.msra.mxu0 %v468
      %492 = vmatprep.subr.bf16.mxu0 0
      %493 = vmatpush1.bf16.msra.mxu0 %v469
      %494 = vmatprep.subr.bf16.mxu0 0
      %495 = vmatpush1.bf16.msra.mxu0 0
      %496 = vmatprep.subr.bf16.mxu0 0
      %497 = vmatpush1.bf16.msra.mxu0 0
      %498 = vmatprep.subr.bf16.mxu0 0
      %499 = vmatpush1.bf16.msra.mxu0 0
      %500 = vmatprep.subr.bf16.mxu0 0
      %501 = vmatpush1.bf16.msra.mxu0 0
      %502 = vmatprep.subr.bf16.mxu0 0
      %503 = vmatpush1.bf16.msra.mxu0 0
      %504 = vmatprep.subr.bf16.mxu0 0
      %505 = vmatpush1.bf16.msra.mxu0 0
      %506 = vmatprep.subr.bf16.mxu0 0
      %507 = vmatpush1.bf16.msra.mxu0 0
      %508 = vmatprep.subr.bf16.mxu0 0
      %509 = vmatpush1.bf16.msra.mxu0 0
      %510 = vmatprep.mubr.bf16.mxu0 0
      %511 = vmatmul.mubr.bf16.gmra.mrb[0].mxu0 %v398
      %v512 = vpop.f32.mrb[0].mxu0
      %v513 = vadd.f32 %v332, %v512
      %v514 = vpop.f32.mrb[0].mxu0
      %v515 = vpop.f32.mrb[0].mxu0
      %v516 = vadd.f32 %v332, %v515
      %v517 = vpop.f32.mrb[0].mxu0
      %518 = vmatprep.mubr.bf16.mxu0 0
      %519 = vmatmul.mubr.bf16.gmra.mrb[0].mxu0 %v399
      %v520 = vpop.f32.mrb[0].mxu0
      %v521 = vadd.f32 %v332, %v520
      %v522 = vpop.f32.mrb[0].mxu0
      %v523 = vpop.f32.mrb[0].mxu0
      %v524 = vadd.f32 %v332, %v523
      %v525 = vpop.f32.mrb[0].mxu0
      %526 = vmatprep.mubr.bf16.mxu0 0
      %527 = vmatmul.mubr.bf16.gmra.mrb[0].mxu0 %v400
      %v528 = vpop.f32.mrb[0].mxu0
      %v529 = vadd.f32 %v332, %v528
      %v530 = vpop.f32.mrb[0].mxu0
      %v531 = vpop.f32.mrb[0].mxu0
      %v532 = vadd.f32 %v332, %v531
      %v533 = vpop.f32.mrb[0].mxu0
      %534 = vmatprep.mubr.bf16.mxu0 0
      %535 = vmatmul.mubr.bf16.gmra.mrb[0].mxu0 %v401
      %v536 = vpop.f32.mrb[0].mxu0
      %v537 = vadd.f32 %v332, %v536
      %v538 = vpop.f32.mrb[0].mxu0
      %v539 = vpop.f32.mrb[0].mxu0
      %v540 = vadd.f32 %v332, %v539
      %v541 = vpop.f32.mrb[0].mxu0
      %542 = vmatprep.mubr.bf16.mxu0 0
      %543 = vmatmul.mubr.bf16.gmra.mrb[0].mxu0 %v402
      %v544 = vpop.f32.mrb[0].mxu0
      %v545 = vadd.f32 %v332, %v544
      %v546 = vpop.f32.mrb[0].mxu0
      %v547 = vpop.f32.mrb[0].mxu0
      %v548 = vadd.f32 %v332, %v547
      %v549 = vpop.f32.mrb[0].mxu0
      %550 = vmatprep.mubr.bf16.mxu0 0
      %551 = vmatmul.mubr.bf16.gmra.mrb[0].mxu0 %v403
      %v552 = vpop.f32.mrb[0].mxu0
      %v553 = vadd.f32 %v332, %v552
      %v554 = vpop.f32.mrb[0].mxu0
      %v555 = vpop.f32.mrb[0].mxu0
      %v556 = vadd.f32 %v332, %v555
      %v557 = vpop.f32.mrb[0].mxu0
      %558 = vmatprep.mubr.bf16.mxu0 0
      %559 = vmatmul.mubr.bf16.gmra.mrb[0].mxu0 %v404
      %v560 = vpop.f32.mrb[0].mxu0
      %v561 = vadd.f32 %v332, %v560
      %v562 = vpop.f32.mrb[0].mxu0
      %v563 = vpop.f32.mrb[0].mxu0
      %v564 = vadd.f32 %v332, %v563
      %v565 = vpop.f32.mrb[0].mxu0
      %566 = vmatprep.mubr.bf16.mxu0 0
      %567 = vmatmul.mubr.bf16.gmra.mrb[0].mxu0 %v405
      %v568 = vpop.f32.mrb[0].mxu0
      %v569 = vadd.f32 %v332, %v568
      %v570 = vpop.f32.mrb[0].mxu0
      %v571 = vpop.f32.mrb[0].mxu0
      %v572 = vadd.f32 %v332, %v571
      %v573 = vpop.f32.mrb[0].mxu0
      %574 = vmatprep.mubr.bf16.mxu0 0
      %575 = vmatmul.mubr.bf16.gmra.mrb[0].mxu0 %v406
      %v576 = vpop.f32.mrb[0].mxu0
      %v577 = vadd.f32 %v332, %v576
      %v578 = vpop.f32.mrb[0].mxu0
      %v579 = vpop.f32.mrb[0].mxu0
      %v580 = vadd.f32 %v332, %v579
      %v581 = vpop.f32.mrb[0].mxu0
      %582 = vmatprep.mubr.bf16.mxu0 0
      %583 = vmatmul.mubr.bf16.gmra.mrb[0].mxu0 %v407
      %v584 = vpop.f32.mrb[0].mxu0
      %v585 = vadd.f32 %v332, %v584
      %v586 = vpop.f32.mrb[0].mxu0
      %v587 = vpop.f32.mrb[0].mxu0
      %v588 = vadd.f32 %v332, %v587
      %v589 = vpop.f32.mrb[0].mxu0
      %590 = vmatprep.mubr.bf16.mxu0 0
      %591 = vmatmul.mubr.bf16.gmra.mrb[0].mxu0 %v408
      %v592 = vpop.f32.mrb[0].mxu0
      %v593 = vadd.f32 %v332, %v592
      %v594 = vpop.f32.mrb[0].mxu0
      %v595 = vpop.f32.mrb[0].mxu0
      %v596 = vadd.f32 %v332, %v595
      %v597 = vpop.f32.mrb[0].mxu0
      %598 = vmatprep.mubr.bf16.mxu0 0
      %599 = vmatmul.mubr.bf16.gmra.mrb[0].mxu0 %v409
      %v600 = vpop.f32.mrb[0].mxu0
      %v601 = vadd.f32 %v332, %v600
      %v602 = vpop.f32.mrb[0].mxu0
      %v603 = vpop.f32.mrb[0].mxu0
      %v604 = vadd.f32 %v332, %v603
      %v605 = vpop.f32.mrb[0].mxu0
      %606 = vmatprep.mubr.bf16.mxu0 0
      %607 = vmatmul.mubr.bf16.gmra.mrb[0].mxu0 %v410
      %v608 = vpop.f32.mrb[0].mxu0
      %v609 = vadd.f32 %v332, %v608
      %v610 = vpop.f32.mrb[0].mxu0
      %v611 = vpop.f32.mrb[0].mxu0
      %v612 = vadd.f32 %v332, %v611
      %v613 = vpop.f32.mrb[0].mxu0
      %614 = vmatprep.mubr.bf16.mxu0 0
      %615 = vmatmul.mubr.bf16.gmra.mrb[0].mxu0 %v411
      %v616 = vpop.f32.mrb[0].mxu0
      %v617 = vadd.f32 %v332, %v616
      %v618 = vpop.f32.mrb[0].mxu0
      %v619 = vpop.f32.mrb[0].mxu0
      %v620 = vadd.f32 %v332, %v619
      %v621 = vpop.f32.mrb[0].mxu0
      %622 = vmatprep.mubr.bf16.mxu0 0
      %623 = vmatmul.mubr.bf16.gmra.mrb[0].mxu0 %v412
      %v624 = vpop.f32.mrb[0].mxu0
      %v625 = vadd.f32 %v332, %v624
      %v626 = vpop.f32.mrb[0].mxu0
      %v627 = vpop.f32.mrb[0].mxu0
      %v628 = vadd.f32 %v332, %v627
      %v629 = vpop.f32.mrb[0].mxu0
      %630 = vmatprep.mubr.bf16.mxu0 0
      %631 = vmatmul.mubr.bf16.gmra.mrb[0].mxu0 %v413
      %v632 = vpop.f32.mrb[0].mxu0
      %v633 = vadd.f32 %v332, %v632
      %v634 = vpop.f32.mrb[0].mxu0
      %v635 = vpop.f32.mrb[0].mxu0
      %v636 = vadd.f32 %v332, %v635
      %v637 = vpop.f32.mrb[0].mxu0
      %638 = vdwg.mxu0
      %v639 = vmax.f32 %v513, 0.0
      %v640 = vmax.f32 %v516, 0.0
      %v641 = vmax.f32 %v521, 0.0
      %v642 = vmax.f32 %v524, 0.0
      %v643 = vmax.f32 %v529, 0.0
      %v644 = vmax.f32 %v532, 0.0
      %v645 = vmax.f32 %v537, 0.0
      %v646 = vmax.f32 %v540, 0.0
      %v647 = vmax.f32 %v545, 0.0
      %v648 = vmax.f32 %v548, 0.0
      %v649 = vmax.f32 %v553, 0.0
      %v650 = vmax.f32 %v556, 0.0
      %v651 = vmax.f32 %v561, 0.0
      %v652 = vmax.f32 %v564, 0.0
      %v653 = vmax.f32 %v569, 0.0
      %v654 = vmax.f32 %v572, 0.0
      %v655 = vmax.f32 %v577, 0.0
      %v656 = vmax.f32 %v580, 0.0
      %v657 = vmax.f32 %v585, 0.0
      %v658 = vmax.f32 %v588, 0.0
      %v659 = vmax.f32 %v593, 0.0
      %v660 = vmax.f32 %v596, 0.0
      %v661 = vmax.f32 %v601, 0.0
      %v662 = vmax.f32 %v604, 0.0
      %v663 = vmax.f32 %v609, 0.0
      %v664 = vmax.f32 %v612, 0.0
      %v665 = vmax.f32 %v617, 0.0
      %v666 = vmax.f32 %v620, 0.0
      %v667 = vmax.f32 %v625, 0.0
      %v668 = vmax.f32 %v628, 0.0
      %v669 = vmax.f32 %v633, 0.0
      %v670 = vmax.f32 %v636, 0.0
      %v671 = vpack.c.bf16 %v640, %v639
      %v672 = vpack.c.bf16 %v642, %v641
      %v673 = vpack.c.bf16 %v644, %v643
      %v674 = vpack.c.bf16 %v646, %v645
      %v675 = vpack.c.bf16 %v648, %v647
      %v676 = vpack.c.bf16 %v650, %v649
      %v677 = vpack.c.bf16 %v652, %v651
      %v678 = vpack.c.bf16 %v654, %v653
      %v679 = vpack.c.bf16 %v656, %v655
      %v680 = vpack.c.bf16 %v658, %v657
      %v681 = vpack.c.bf16 %v660, %v659
      %v682 = vpack.c.bf16 %v662, %v661
      %v683 = vpack.c.bf16 %v664, %v663
      %v684 = vpack.c.bf16 %v666, %v665
      %v685 = vpack.c.bf16 %v668, %v667
      %v686 = vpack.c.bf16 %v670, %v669
      %v703 = vunpack.c.l.b16 %v671
      %v704 = vunpack.c.h.b16 %v671
      %v705 = vunpack.c.l.b16 %v672
      %v706 = vunpack.c.h.b16 %v672
      %v707 = vunpack.c.l.b16 %v673
      %v708 = vunpack.c.h.b16 %v673
      %v709 = vunpack.c.l.b16 %v674
      %v710 = vunpack.c.h.b16 %v674
      %v711 = vunpack.c.l.b16 %v675
      %v712 = vunpack.c.h.b16 %v675
      %v713 = vunpack.c.l.b16 %v676
      %v714 = vunpack.c.h.b16 %v676
      %v715 = vunpack.c.l.b16 %v677
      %v716 = vunpack.c.h.b16 %v677
      %v717 = vunpack.c.l.b16 %v678
      %v718 = vunpack.c.h.b16 %v678
      %v719 = vunpack.c.l.b16 %v679
      %v720 = vunpack.c.h.b16 %v679
      %v721 = vunpack.c.l.b16 %v680
      %v722 = vunpack.c.h.b16 %v680
      %v723 = vunpack.c.l.b16 %v681
      %v724 = vunpack.c.h.b16 %v681
      %v725 = vunpack.c.l.b16 %v682
      %v726 = vunpack.c.h.b16 %v682
      %v727 = vunpack.c.l.b16 %v683
      %v728 = vunpack.c.h.b16 %v683
      %v729 = vunpack.c.l.b16 %v684
      %v730 = vunpack.c.h.b16 %v684
      %v731 = vunpack.c.l.b16 %v685
      %v732 = vunpack.c.h.b16 %v685
      %v733 = vunpack.c.l.b16 %v686
      %v734 = vunpack.c.h.b16 %v686
      %v735 = vpack.c.b16 %v703, %v703
      %v736 = vpack.c.b16 %v704, %v704
      %v737 = vpack.c.b16 %v705, %v705
      %v738 = vpack.c.b16 %v706, %v706
      %v739 = vpack.c.b16 %v707, %v707
      %v740 = vpack.c.b16 %v708, %v708
      %v741 = vpack.c.b16 %v709, %v709
      %v742 = vpack.c.b16 %v710, %v710
      %v743 = vpack.c.b16 %v711, %v711
      %v744 = vpack.c.b16 %v712, %v712
      %v745 = vpack.c.b16 %v713, %v713
      %v746 = vpack.c.b16 %v714, %v714
      %v747 = vpack.c.b16 %v715, %v715
      %v748 = vpack.c.b16 %v716, %v716
      %v749 = vpack.c.b16 %v717, %v717
      %v750 = vpack.c.b16 %v718, %v718
      %v751 = vpack.c.b16 %v719, %v719
      %v752 = vpack.c.b16 %v720, %v720
      %v753 = vpack.c.b16 %v721, %v721
      %v754 = vpack.c.b16 %v722, %v722
      %v755 = vpack.c.b16 %v723, %v723
      %v756 = vpack.c.b16 %v724, %v724
      %v757 = vpack.c.b16 %v725, %v725
      %v758 = vpack.c.b16 %v726, %v726
      %v759 = vpack.c.b16 %v727, %v727
      %v760 = vpack.c.b16 %v728, %v728
      %v761 = vpack.c.b16 %v729, %v729
      %v762 = vpack.c.b16 %v730, %v730
      %v763 = vpack.c.b16 %v731, %v731
      %v764 = vpack.c.b16 %v732, %v732
      %v765 = vpack.c.b16 %v733, %v733
      %v766 = vpack.c.b16 %v734, %v734
      %799 = vst [vmem:[%s268] sm:$0xf] %v735
      %800 = vst [vmem:[%s268 + $0x4] sm:$0xf] %v736
      %801 = vst [vmem:[%s268 + $0x8] sm:$0xf] %v737
      %802 = vst [vmem:[%s268 + $0xc] sm:$0xf] %v738
      %803 = vst [vmem:[%s268 + $0x10] sm:$0xf] %v739
      %804 = vst [vmem:[%s268 + $0x14] sm:$0xf] %v740
      %805 = vst [vmem:[%s268 + $0x18] sm:$0xf] %v741
      %806 = vst [vmem:[%s268 + $0x1c] sm:$0xf] %v742
      %807 = vst [vmem:[%s268 + $0x20] sm:$0xf] %v743
      %808 = vst [vmem:[%s268 + $0x24] sm:$0xf] %v744
      %809 = vst [vmem:[%s268 + $0x28] sm:$0xf] %v745
      %810 = vst [vmem:[%s268 + $0x2c] sm:$0xf] %v746
      %811 = vst [vmem:[%s268 + $0x30] sm:$0xf] %v747
      %812 = vst [vmem:[%s268 + $0x34] sm:$0xf] %v748
      %813 = vst [vmem:[%s268 + $0x38] sm:$0xf] %v749
      %814 = vst [vmem:[%s268 + $0x3c] sm:$0xf] %v750
      %815 = vst [vmem:[%s268 + $0x40] sm:$0xf] %v751
      %816 = vst [vmem:[%s268 + $0x44] sm:$0xf] %v752
      %817 = vst [vmem:[%s268 + $0x48] sm:$0xf] %v753
      %818 = vst [vmem:[%s268 + $0x4c] sm:$0xf] %v754
      %819 = vst [vmem:[%s268 + $0x50] sm:$0xf] %v755
      %820 = vst [vmem:[%s268 + $0x54] sm:$0xf] %v756
      %821 = vst [vmem:[%s268 + $0x58] sm:$0xf] %v757
      %822 = vst [vmem:[%s268 + $0x5c] sm:$0xf] %v758
      %823 = vst [vmem:[%s268 + $0x60] sm:$0xf] %v759
      %824 = vst [vmem:[%s268 + $0x64] sm:$0xf] %v760
      %825 = vst [vmem:[%s268 + $0x68] sm:$0xf] %v761
      %826 = vst [vmem:[%s268 + $0x6c] sm:$0xf] %v762
      %827 = vst [vmem:[%s268 + $0x70] sm:$0xf] %v763
      %828 = vst [vmem:[%s268 + $0x74] sm:$0xf] %v764
      %829 = vst [vmem:[%s268 + $0x78] sm:$0xf] %v765
      %830 = vst [vmem:[%s268 + $0x7c] sm:$0xf] %v766
      %v831 = vadd.f32 %v639, %v640
      %v832 = vadd.f32 %v831, %v641
      %v833 = vadd.f32 %v832, %v642
      %v834 = vadd.f32 %v833, %v643
      %v835 = vadd.f32 %v834, %v644
      %v836 = vadd.f32 %v835, %v645
      %v837 = vadd.f32 %v836, %v646
      %v838 = vadd.f32 %v837, %v647
      %v839 = vadd.f32 %v838, %v648
      %v840 = vadd.f32 %v839, %v649
      %v841 = vadd.f32 %v840, %v650
      %v842 = vadd.f32 %v841, %v651
      %v843 = vadd.f32 %v842, %v652
      %v844 = vadd.f32 %v843, %v653
      %v845 = vadd.f32 %v844, %v654
      %v846 = vadd.f32 %v845, %v655
      %v847 = vadd.f32 %v846, %v656
      %v848 = vadd.f32 %v847, %v657
      %v849 = vadd.f32 %v848, %v658
      %v850 = vadd.f32 %v849, %v659
      %v851 = vadd.f32 %v850, %v660
      %v852 = vadd.f32 %v851, %v661
      %v853 = vadd.f32 %v852, %v662
      %v854 = vadd.f32 %v853, %v663
      %v855 = vadd.f32 %v854, %v664
      %v856 = vadd.f32 %v855, %v665
      %v857 = vadd.f32 %v856, %v666
      %v858 = vadd.f32 %v857, %v667
      %v859 = vadd.f32 %v858, %v668
      %v860 = vadd.f32 %v859, %v669
      %v861 = vadd.f32 %v860, %v670
      %v862 = vrot.slane %v861, 4
      %v863 = vadd.f32 %v861, %v862
      %v864 = vrot.slane %v863, 2
      %v865 = vadd.f32 %v863, %v864
      %v866 = vrot.slane %v865, 1
      %v867 = vadd.f32 %v865, %v866
      %868 = vst [vmem:[%s275] sm:$0x1] %v867
      %v869 = vmul.f32 %v639, %v639
      %v870 = vmul.f32 %v640, %v640
      %v871 = vmul.f32 %v641, %v641
      %v872 = vmul.f32 %v642, %v642
      %v873 = vmul.f32 %v643, %v643
      %v874 = vmul.f32 %v644, %v644
      %v875 = vmul.f32 %v645, %v645
      %v876 = vmul.f32 %v646, %v646
      %v877 = vmul.f32 %v647, %v647
      %v878 = vmul.f32 %v648, %v648
      %v879 = vmul.f32 %v649, %v649
      %v880 = vmul.f32 %v650, %v650
      %v881 = vmul.f32 %v651, %v651
      %v882 = vmul.f32 %v652, %v652
      %v883 = vmul.f32 %v653, %v653
      %v884 = vmul.f32 %v654, %v654
      %v885 = vmul.f32 %v655, %v655
      %v886 = vmul.f32 %v656, %v656
      %v887 = vmul.f32 %v657, %v657
      %v888 = vmul.f32 %v658, %v658
      %v889 = vmul.f32 %v659, %v659
      %v890 = vmul.f32 %v660, %v660
      %v891 = vmul.f32 %v661, %v661
      %v892 = vmul.f32 %v662, %v662
      %v893 = vmul.f32 %v663, %v663
      %v894 = vmul.f32 %v664, %v664
      %v895 = vmul.f32 %v665, %v665
      %v896 = vmul.f32 %v666, %v666
      %v897 = vmul.f32 %v667, %v667
      %v898 = vmul.f32 %v668, %v668
      %v899 = vmul.f32 %v669, %v669
      %v900 = vmul.f32 %v670, %v670
      %v901 = vadd.f32 %v869, %v870
      %v902 = vadd.f32 %v901, %v871
      %v903 = vadd.f32 %v902, %v872
      %v904 = vadd.f32 %v903, %v873
      %v905 = vadd.f32 %v904, %v874
      %v906 = vadd.f32 %v905, %v875
      %v907 = vadd.f32 %v906, %v876
      %v908 = vadd.f32 %v907, %v877
      %v909 = vadd.f32 %v908, %v878
      %v910 = vadd.f32 %v909, %v879
      %v911 = vadd.f32 %v910, %v880
      %v912 = vadd.f32 %v911, %v881
      %v913 = vadd.f32 %v912, %v882
      %v914 = vadd.f32 %v913, %v883
      %v915 = vadd.f32 %v914, %v884
      %v916 = vadd.f32 %v915, %v885
      %v917 = vadd.f32 %v916, %v886
      %v918 = vadd.f32 %v917, %v887
      %v919 = vadd.f32 %v918, %v888
      %v920 = vadd.f32 %v919, %v889
      %v921 = vadd.f32 %v920, %v890
      %v922 = vadd.f32 %v921, %v891
      %v923 = vadd.f32 %v922, %v892
      %v924 = vadd.f32 %v923, %v893
      %v925 = vadd.f32 %v924, %v894
      %v926 = vadd.f32 %v925, %v895
      %v927 = vadd.f32 %v926, %v896
      %v928 = vadd.f32 %v927, %v897
      %v929 = vadd.f32 %v928, %v898
      %v930 = vadd.f32 %v929, %v899
      %v931 = vadd.f32 %v930, %v900
      %v932 = vrot.slane %v931, 4
      %v933 = vadd.f32 %v931, %v932
      %v934 = vrot.slane %v933, 2
      %v935 = vadd.f32 %v933, %v934
      %v936 = vrot.slane %v935, 1
      %v937 = vadd.f32 %v935, %v936
      %938 = vst [vmem:[%s275 + $0x1] sm:$0x1] %v937
      %s939 = smul.u32 32, %s21
      %p940 = scmp.lt.s32.totalorder %s20, 0
      %s941 = scalar_select %p940, %s20, 0
      %p942 = scmp.lt.s32.totalorder %s939, 63
      %s943 = scalar_select %p942, %s939, 63
      %s944 = smul.addr %s941, 64
      %s945 = sadd.s32 %s943, %s944
      %s946 = smul.addr %s945, 4
      %s947 = scalar_lea.vmem %s3, %s946
      %s948 = smul.u32 %s20, 2
      %s949 = sadd.s32 %s948, %s21
      %p950 = scmp.lt.s32.totalorder %s949, 1
      %s951 = scalar_select %p950, %s949, 1
      %s952 = smul.addr %s951, 2
      %s953 = scalar_lea.vmem %s4, %s952
      // Predicated region
      $region33: #{forward.17} parent=31 // pred_check
        %p954 = pneg %p123
      $region34: #{forward.17} parent=31 // pred_check_branch
        %956 = sbr.rel (%p954) target = $region36
      $region35: #{forward.17} parent=31 // pred_region
        %s957 = smul.u32 32, %s21
      $region36: #{forward.17} parent=31 // pred_fallthru
        _
      // Predicated region
      $region37: #{forward.17} parent=31 // pred_check
        %p958 = pneg %p153
      $region38: #{forward.17} parent=31 // pred_check_branch
        %960 = sbr.rel (%p958) target = $region40
      $region39: #{forward.17} parent=31 // pred_region
        %s961 = smul.u32 %s20, 2
        %s962 = sadd.s32 %s961, %s21
      $region40: #{forward.17} parent=31 // pred_fallthru
        _
    $region32: #{forward.17} parent=5 // pred_fallthru
      _
    %p963 = scmp.le.s32.totalorder 2, %s11
    // Predicated region
    $region41: #{forward.17} parent=5 // pred_check
      %p964 = pneg %p963
    $region42: #{forward.17} parent=5 // pred_check_branch
      %966 = sbr.rel (%p964) target = $region44
    $region43: #{forward.17} parent=5 // pred_region
      %s967 = ssub.s32 %s11, 2
      // Predicated region
      $region45: #{forward.17} parent=43 // pred_check
        %p968 = pneg %p129
      $region46: #{forward.17} parent=43 // pred_check_branch
        %970 = sbr.rel (%p968) target = $region48
      $region47: #{forward.17} parent=43 // pred_region
        %s971 = smul.u32 32, %s23
        %p972 = scmp.lt.s32.totalorder %s22, 0
        %s973 = scalar_select %p972, %s22, 0
        %p974 = scmp.lt.s32.totalorder %s971, 63
        %s975 = scalar_select %p974, %s971, 63
        %s976 = smul.addr %s973, 64
        %s977 = sadd.s32 %s975, %s976
        %s978 = smul.addr %s977, 4
        %s979 = scalar_lea.vmem %s3, %s978
      $region48: #{forward.17} parent=43 // pred_fallthru
        _
      // Predicated region
      $region49: #{forward.17} parent=43 // pred_check
        %p980 = pneg %p159
      $region50: #{forward.17} parent=43 // pred_check_branch
        %982 = sbr.rel (%p980) target = $region52
      $region51: #{forward.17} parent=43 // pred_region
        %s983 = smul.u32 %s22, 2
        %s984 = sadd.s32 %s983, %s23
        %p985 = scmp.lt.s32.totalorder %s984, 1
        %s986 = scalar_select %p985, %s984, 1
        %s987 = smul.addr %s986, 2
        %s988 = scalar_lea.vmem %s4, %s987
      $region52: #{forward.17} parent=43 // pred_fallthru
        _
    $region44: #{forward.17} parent=5 // pred_fallthru
      _
  $region6: #{forward.17} parent=0 // loop_footer
    %s15 = sadd.s32 1, %s11
  $region7: #{forward.17} parent=0 // loop_footer_branch
    %10 = sbr.rel target = $region3
  $region8: #{forward.17} parent=0 // loop_exit
    _

// kernel: forward.18
$region0: #{forward.18}
  #allocation0 [shape = 'u32[]', space=smem, size = 0x4, offset = 0x4, fixed_abs, tag = 'smem constant byte address 0x4 - core index']
  #allocation1 [shape = 'u32[144,128]{1,0:T(1,128)}', space=vmem, size = 0x12000, scoped, tag = 'internal scratch']
  %s0 = inlined_call_operand.vmem [shape: bf16[1,128,384], index: 0, kind: input, shape index: {}]
  %s1 = inlined_call_operand.vmem [shape: bf16[1,384,128], index: 1, kind: input, shape index: {}]
  %s2 = inlined_call_operand.vmem [shape: f32[1,128], index: 2, kind: input, shape index: {}]
  %s3 = inlined_call_operand.vmem [shape: bf16[1,128,128], index: 3, kind: output, shape index: {0}]
  %s4 = inlined_call_operand.vmem [shape: f32[2,2,128], index: 4, kind: output, shape index: {1}]
  %5 = xla_tuple %s3, %s4
  %s6 = sld [smem:[#allocation0]]
  $region53: #{forward.18} parent=0
    _
  %s8 = ssub.s32 1, %s6
  %s9 = scalar_select 0, %s8, %s6
  loop: start=0, step=1, limit=4
  $region2: #{forward.18} parent=0 // loop_pre_header
    _
  $region3: #{forward.18} parent=0 // loop_header
    %s11 = sphi 0, %s15
    %p12 = scmp.ge.s32.totalorder %s11, 4
    %s18 = sphi 0, %s30
    %s19 = sphi 0, %s26
    %s20 = sphi 0, %s18
    %s21 = sphi 0, %s19
    %s22 = sphi 0, %s20
    %s23 = sphi 0, %s21
    %s35 = sphi 0, %s37
    %s38 = sphi 0, %s35
    %s39 = sphi 0, %s38
    %s55 = sphi 0, %s39
    %s61 = sphi 0, %s63
    %s64 = sphi 0, %s61
    %s65 = sphi 0, %s64
    %s81 = sphi 0, %s65
    %s85 = sphi 0, %s85
    %s87 = sphi 0, %s85
    %s88 = sphi 0, %s87
    %s102 = sphi 0, %s88
    %s110 = sphi 0, %s112
    %s113 = sphi 0, %s110
    %s114 = sphi 0, %s113
    %s130 = sphi 0, %s114
    %s140 = sphi 0, %s142
    %s143 = sphi 0, %s140
    %s144 = sphi 0, %s143
    %s160 = sphi 0, %s144
  $region4: #{forward.18} parent=0 // loop_header_branch
    %14 = sbr.rel (%p12) target = $region8
  $region5: #{forward.18} parent=0 // loop_body
    %s16 = ssub.s32 %s11, 1
    %s17 = ssub.s32 %s11, 2
    %s24 = sadd.s32 1, %s19
    %p25 = scmp.ge.s32.totalorder %s24, 2
    %s26 = scalar_select %p25, 0, %s24
    %s27 = sadd.s32 1, %s18
    %s28 = scalar_select %p25, %s27, %s18
    %p29 = scmp.ge.s32.totalorder %s28, 1
    %s30 = scalar_select %p29, 0, %s28
    %s31 = ssub.s32 %s18, %s30
    %s32 = ssub.s32 %s19, %s26
    %s33 = sor.u32 %s31, %s32
    %p34 = scmp.eq.s32.totalorder %s33, 0
    %s36 = sadd.s32 %s35, 1
    %s37 = scalar_select %p34, %s35, %s36
    %p40 = pneg %p34
    %p41 = scmp.eq.s32.totalorder %s11, 1
    %p42 = por %p40, %p41
    %p43 = scmp.ne.s32.totalorder %s35, %s38
    %p44 = scmp.eq.s32.totalorder %s11, 0
    %p45 = por %p43, %p44
    %p46 = scmp.ne.s32.totalorder %s35, %s38
    %p47 = scmp.eq.s32.totalorder %s16, 1
    %p48 = por %p46, %p47
    %p49 = scmp.ne.s32.totalorder %s38, %s39
    %p50 = scmp.eq.s32.totalorder %s16, 0
    %p51 = por %p49, %p50
    %p52 = scmp.ne.s32.totalorder %s38, %s39
    %p53 = scmp.eq.s32.totalorder %s17, 1
    %p54 = por %p52, %p53
    %p56 = scmp.ne.s32.totalorder %s39, %s55
    %p57 = scmp.eq.s32.totalorder %s17, 0
    %p58 = por %p56, %p57
    %s59 = ssub.s32 %s18, %s30
    %p60 = scmp.eq.s32.totalorder %s59, 0
    %s62 = sadd.s32 %s61, 1
    %s63 = scalar_select %p60, %s61, %s62
    %p66 = pneg %p60
    %p67 = scmp.eq.s32.totalorder %s11, 1
    %p68 = por %p66, %p67
    %p69 = scmp.ne.s32.totalorder %s61, %s64
    %p70 = scmp.eq.s32.totalorder %s11, 0
    %p71 = por %p69, %p70
    %p72 = scmp.ne.s32.totalorder %s61, %s64
    %p73 = scmp.eq.s32.totalorder %s16, 1
    %p74 = por %p72, %p73
    %p75 = scmp.ne.s32.totalorder %s64, %s65
    %p76 = scmp.eq.s32.totalorder %s16, 0
    %p77 = por %p75, %p76
    %p78 = scmp.ne.s32.totalorder %s64, %s65
    %p79 = scmp.eq.s32.totalorder %s17, 1
    %p80 = por %p78, %p79
    %p82 = scmp.ne.s32.totalorder %s65, %s81
    %p83 = scmp.eq.s32.totalorder %s17, 0
    %p84 = por %p82, %p83
    %s86 = sadd.s32 %s85, 1
    %p89 = scmp.eq.s32.totalorder %s11, 1
    %p90 = scmp.ne.s32.totalorder %s85, %s87
    %p91 = scmp.eq.s32.totalorder %s11, 0
    %p92 = por %p90, %p91
    %p93 = scmp.ne.s32.totalorder %s85, %s87
    %p94 = scmp.eq.s32.totalorder %s16, 1
    %p95 = por %p93, %p94
    %p96 = scmp.ne.s32.totalorder %s87, %s88
    %p97 = scmp.eq.s32.totalorder %s16, 0
    %p98 = por %p96, %p97
    %p99 = scmp.ne.s32.totalorder %s87, %s88
    %p100 = scmp.eq.s32.totalorder %s17, 1
    %p101 = por %p99, %p100
    %p103 = scmp.ne.s32.totalorder %s88, %s102
    %p104 = scmp.eq.s32.totalorder %s17, 0
    %p105 = por %p103, %p104
    %s106 = ssub.s32 %s18, %s30
    %s107 = ssub.s32 %s19, %s26
    %s108 = sor.u32 %s106, %s107
    %p109 = scmp.eq.s32.totalorder %s108, 0
    %s111 = sadd.s32 %s110, 1
    %s112 = scalar_select %p109, %s110, %s111
    %p115 = pneg %p109
    %p116 = scmp.eq.s32.totalorder %s11, 1
    %p117 = por %p115, %p116
    %p118 = scmp.ne.s32.totalorder %s110, %s113
    %p119 = scmp.eq.s32.totalorder %s11, 0
    %p120 = por %p118, %p119
    %p121 = scmp.ne.s32.totalorder %s110, %s113
    %p122 = scmp.eq.s32.totalorder %s16, 1
    %p123 = por %p121, %p122
    %p124 = scmp.ne.s32.totalorder %s113, %s114
    %p125 = scmp.eq.s32.totalorder %s16, 0
    %p126 = por %p124, %p125
    %p127 = scmp.ne.s32.totalorder %s113, %s114
    %p128 = scmp.eq.s32.totalorder %s17, 1
    %p129 = por %p127, %p128
    %p131 = scmp.ne.s32.totalorder %s114, %s130
    %p132 = scmp.eq.s32.totalorder %s17, 0
    %p133 = por %p131, %p132
    %s134 = smul.u32 %s18, 2
    %s135 = sadd.s32 %s134, %s19
    %s136 = smul.u32 %s30, 2
    %s137 = sadd.s32 %s136, %s26
    %s138 = ssub.s32 %s135, %s137
    %p139 = scmp.eq.s32.totalorder %s138, 0
    %s141 = sadd.s32 %s140, 1
    %s142 = scalar_select %p139, %s140, %s141
    %p145 = pneg %p139
    %p146 = scmp.eq.s32.totalorder %s11, 1
    %p147 = por %p145, %p146
    %p148 = scmp.ne.s32.totalorder %s140, %s143
    %p149 = scmp.eq.s32.totalorder %s11, 0
    %p150 = por %p148, %p149
    %p151 = scmp.ne.s32.totalorder %s140, %s143
    %p152 = scmp.eq.s32.totalorder %s16, 1
    %p153 = por %p151, %p152
    %p154 = scmp.ne.s32.totalorder %s143, %s144
    %p155 = scmp.eq.s32.totalorder %s16, 0
    %p156 = por %p154, %p155
    %p157 = scmp.ne.s32.totalorder %s143, %s144
    %p158 = scmp.eq.s32.totalorder %s17, 1
    %p159 = por %p157, %p158
    %p161 = scmp.ne.s32.totalorder %s144, %s160
    %p162 = scmp.eq.s32.totalorder %s17, 0
    %p163 = por %p161, %p162
    %p164 = scmp.le.s32.totalorder 1, %s11
    %p165 = scmp.lt.s32.totalorder %s11, 3
    %p166 = pnand %p164, %p165
    %p167 = pneg %p166
    // Predicated region
    $region9: #{forward.18} parent=5 // pred_check
      _
    $region10: #{forward.18} parent=5 // pred_check_branch
      %169 = sbr.rel (%p166) target = $region12
    $region11: #{forward.18} parent=5 // pred_region
      %s170 = ssub.s32 %s11, 1
      // Predicated region
      $region13: #{forward.18} parent=11 // pred_check
        %p171 = pneg %p77
      $region14: #{forward.18} parent=11 // pred_check_branch
        %173 = sbr.rel (%p171) target = $region16
      $region15: #{forward.18} parent=11 // pred_region
        %p174 = scmp.lt.s32.totalorder %s20, 0
        %s175 = scalar_select %p174, %s20, 0
        %s176 = smul.addr %s175, 48
        %s177 = smul.addr %s176, 4
        %s178 = scalar_lea.vmem %s1, %s177
      $region16: #{forward.18} parent=11 // pred_fallthru
        _
      // Predicated region
      $region17: #{forward.18} parent=11 // pred_check
        %p179 = pneg %p98
      $region18: #{forward.18} parent=11 // pred_check_branch
        %181 = sbr.rel (%p179) target = $region20
      $region19: #{forward.18} parent=11 // pred_region
        _
      $region20: #{forward.18} parent=11 // pred_fallthru
        _
    $region12: #{forward.18} parent=5 // pred_fallthru
      _
    %p182 = scmp.lt.s32.totalorder %s11, 2
    // Predicated region
    $region21: #{forward.18} parent=5 // pred_check
      %p183 = pneg %p182
    $region22: #{forward.18} parent=5 // pred_check_branch
      %185 = sbr.rel (%p183) target = $region24
    $region23: #{forward.18} parent=5 // pred_region
      // Predicated region
      $region25: #{forward.18} parent=23 // pred_check
        %p186 = pneg %p45
      $region26: #{forward.18} parent=23 // pred_check_branch
        %188 = sbr.rel (%p186) target = $region28
      $region27: #{forward.18} parent=23 // pred_region
        %s189 = smul.u32 8, %s19
        %p190 = scmp.lt.s32.totalorder %s18, 0
        %s191 = scalar_select %p190, %s18, 0
        %p192 = scmp.lt.s32.totalorder %s189, 15
        %s193 = scalar_select %p192, %s189, 15
        %s194 = smul.addr %s193, 3
        %s195 = smul.addr %s191, 48
        %s196 = sadd.s32 %s194, %s195
        %s197 = smul.addr %s196, 4
        %s198 = scalar_lea.vmem %s0, %s197
        %s199 = smul.u32 8, %s19
      $region28: #{forward.18} parent=23 // pred_fallthru
        _
    $region24: #{forward.18} parent=5 // pred_fallthru
      _
    %p200 = scmp.le.s32.totalorder 1, %s11
    %p201 = scmp.lt.s32.totalorder %s11, 3
    %p202 = pnand %p200, %p201
    %p203 = pneg %p202
    // Predicated region
    $region29: #{forward.18} parent=5 // pred_check
      _
    $region30: #{forward.18} parent=5 // pred_check_branch
      %205 = sbr.rel (%p202) target = $region32
    $region31: #{forward.18} parent=5 // pred_region
      %s206 = ssub.s32 %s11, 1
      %s207 = smul.u32 8, %s21
      %p208 = scmp.lt.s32.totalorder %s20, 0
      %s209 = scalar_select %p208, %s20, 0
      %p210 = scmp.lt.s32.totalorder %s207, 15
      %s211 = scalar_select %p210, %s207, 15
      %s212 = smul.addr %s211, 3
      %s213 = smul.addr %s209, 48
      %s214 = sadd.s32 %s212, %s213
      %s215 = smul.addr %s214, 4
      %s216 = scalar_lea.vmem %s0, %s215
      %p217 = pneg %p51
      %p218 = pneg %p48
      %p219 = scmp.lt.s32.totalorder %s20, 0
      %s220 = scalar_select %p219, %s20, 0
      %s221 = smul.addr %s220, 48
      %s222 = smul.addr %s221, 4
      %s223 = scalar_lea.vmem %s1, %s222
      %p224 = pneg %p77
      %p225 = pneg %p74
      %p226 = pneg %p98
      %p227 = pneg %p95
      %p228 = pneg %p126
      %p229 = pneg %p123
      %s230 = smul.u32 8, %s21
      %p231 = scmp.lt.s32.totalorder %s20, 0
      %s232 = scalar_select %p231, %s20, 0
      %p233 = scmp.lt.s32.totalorder %s230, 15
      %s234 = scalar_select %p233, %s230, 15
      %s235 = smul.addr %s232, 16
      %s236 = sadd.s32 %s234, %s235
      %s237 = smul.addr %s236, 4
      %s238 = scalar_lea.vmem %s3, %s237
      %p239 = pneg %p156
      %p240 = pneg %p153
      %s241 = smul.u32 %s20, 2
      %s242 = sadd.s32 %s241, %s21
      %p243 = scmp.lt.s32.totalorder %s242, 1
      %s244 = scalar_select %p243, %s242, 1
      %s245 = smul.addr %s244, 2
      %s246 = scalar_lea.vmem %s4, %s245
      %s247 = smul.u32 8, %s21
      %p248 = scmp.lt.s32.totalorder %s20, 0
      %s249 = scalar_select %p248, %s20, 0
      %p250 = scmp.lt.s32.totalorder %s247, 15
      %s251 = scalar_select %p250, %s247, 15
      %s252 = smul.addr %s251, 3
      %s253 = smul.addr %s249, 48
      %s254 = sadd.s32 %s252, %s253
      %s255 = smul.addr %s254, 4
      %s256 = scalar_lea.vmem %s0, %s255
      %s257 = smul.u32 8, %s21
      %p258 = scmp.lt.s32.totalorder %s20, 0
      %s259 = scalar_select %p258, %s20, 0
      %s260 = smul.addr %s259, 48
      %s261 = smul.addr %s260, 4
      %s262 = scalar_lea.vmem %s1, %s261
      %s263 = smul.u32 8, %s21
      %p264 = scmp.lt.s32.totalorder %s20, 0
      %s265 = scalar_select %p264, %s20, 0
      %p266 = scmp.lt.s32.totalorder %s263, 15
      %s267 = scalar_select %p266, %s263, 15
      %s268 = smul.addr %s265, 16
      %s269 = sadd.s32 %s267, %s268
      %s270 = smul.addr %s269, 4
      %s271 = scalar_lea.vmem %s3, %s270
      %s272 = smul.u32 8, %s21
      %s273 = smul.u32 %s20, 2
      %s274 = sadd.s32 %s273, %s21
      %p275 = scmp.lt.s32.totalorder %s274, 1
      %s276 = scalar_select %p275, %s274, 1
      %s277 = smul.addr %s276, 2
      %s278 = scalar_lea.vmem %s4, %s277
      %s279 = smul.u32 %s20, 2
      %s280 = sadd.s32 %s279, %s21
      %v282 = vld [vmem:[%s256] sm:$0xff]
      %v283 = vld [vmem:[%s256 + $0x8] sm:$0xf]
      %v284 = vld [vmem:[%s256 + $0xc] sm:$0xff]
      %v285 = vld [vmem:[%s256 + $0x14] sm:$0xf]
      %v286 = vld [vmem:[%s256 + $0x18] sm:$0xff]
      %v287 = vld [vmem:[%s256 + $0x20] sm:$0xf]
      %v288 = vld [vmem:[%s256 + $0x24] sm:$0xff]
      %v289 = vld [vmem:[%s256 + $0x2c] sm:$0xf]
      %v290 = vld [vmem:[%s256 + $0x30] sm:$0xff]
      %v291 = vld [vmem:[%s256 + $0x38] sm:$0xf]
      %v292 = vld [vmem:[%s256 + $0x3c] sm:$0xff]
      %v293 = vld [vmem:[%s256 + $0x44] sm:$0xf]
      %v294 = vld [vmem:[%s256 + $0x48] sm:$0xff]
      %v295 = vld [vmem:[%s256 + $0x50] sm:$0xf]
      %v296 = vld [vmem:[%s256 + $0x54] sm:$0xff]
      %v297 = vld [vmem:[%s256 + $0x5c] sm:$0xf]
      %v298 = vld [vmem:[%s262] sm:$0xf]
      %v299 = vld [vmem:[%s262 + $0x4] sm:$0xf]
      %v300 = vld [vmem:[%s262 + $0x8] sm:$0xf]
      %v301 = vld [vmem:[%s262 + $0xc] sm:$0xf]
      %v302 = vld [vmem:[%s262 + $0x10] sm:$0xf]
      %v303 = vld [vmem:[%s262 + $0x14] sm:$0xf]
      %v304 = vld [vmem:[%s262 + $0x18] sm:$0xf]
      %v305 = vld [vmem:[%s262 + $0x1c] sm:$0xf]
      %v306 = vld [vmem:[%s262 + $0x20] sm:$0xf]
      %v307 = vld [vmem:[%s262 + $0x24] sm:$0xf]
      %v308 = vld [vmem:[%s262 + $0x28] sm:$0xf]
      %v309 = vld [vmem:[%s262 + $0x2c] sm:$0xf]
      %v310 = vld [vmem:[%s262 + $0x30] sm:$0xf]
      %v311 = vld [vmem:[%s262 + $0x34] sm:$0xf]
      %v312 = vld [vmem:[%s262 + $0x38] sm:$0xf]
      %v313 = vld [vmem:[%s262 + $0x3c] sm:$0xf]
      %v314 = vld [vmem:[%s262 + $0x40] sm:$0xf]
      %v315 = vld [vmem:[%s262 + $0x44] sm:$0xf]
      %v316 = vld [vmem:[%s262 + $0x48] sm:$0xf]
      %v317 = vld [vmem:[%s262 + $0x4c] sm:$0xf]
      %v318 = vld [vmem:[%s262 + $0x50] sm:$0xf]
      %v319 = vld [vmem:[%s262 + $0x54] sm:$0xf]
      %v320 = vld [vmem:[%s262 + $0x58] sm:$0xf]
      %v321 = vld [vmem:[%s262 + $0x5c] sm:$0xf]
      %v322 = vld [vmem:[%s262 + $0x60] sm:$0xf]
      %v323 = vld [vmem:[%s262 + $0x64] sm:$0xf]
      %v324 = vld [vmem:[%s262 + $0x68] sm:$0xf]
      %v325 = vld [vmem:[%s262 + $0x6c] sm:$0xf]
      %v326 = vld [vmem:[%s262 + $0x70] sm:$0xf]
      %v327 = vld [vmem:[%s262 + $0x74] sm:$0xf]
      %v328 = vld [vmem:[%s262 + $0x78] sm:$0xf]
      %v329 = vld [vmem:[%s262 + $0x7c] sm:$0xf]
      %v330 = vld [vmem:[%s262 + $0x80] sm:$0xf]
      %v331 = vld [vmem:[%s262 + $0x84] sm:$0xf]
      %v332 = vld [vmem:[%s262 + $0x88] sm:$0xf]
      %v333 = vld [vmem:[%s262 + $0x8c] sm:$0xf]
      %v334 = vld [vmem:[%s262 + $0x90] sm:$0xf]
      %v335 = vld [vmem:[%s262 + $0x94] sm:$0xf]
      %v336 = vld [vmem:[%s262 + $0x98] sm:$0xf]
      %v337 = vld [vmem:[%s262 + $0x9c] sm:$0xf]
      %v338 = vld [vmem:[%s262 + $0xa0] sm:$0xf]
      %v339 = vld [vmem:[%s262 + $0xa4] sm:$0xf]
      %v340 = vld [vmem:[%s262 + $0xa8] sm:$0xf]
      %v341 = vld [vmem:[%s262 + $0xac] sm:$0xf]
      %v342 = vld [vmem:[%s262 + $0xb0] sm:$0xf]
      %v343 = vld [vmem:[%s262 + $0xb4] sm:$0xf]
      %v344 = vld [vmem:[%s262 + $0xb8] sm:$0xf]
      %v345 = vld [vmem:[%s262 + $0xbc] sm:$0xf]
      %v346 = vld [vmem:[%s2] sm:$0x1]
      %v348 = vlaneseq
      %v349 = vshrl.u32 %v348, 7
      %v350 = vsub.s32 0, %v349
      %v351 = vrot.slane %v346, %v350
      %v369 = vunpack.c.l.b16 %v282
      %v370 = vunpack.c.h.b16 %v282
      %v371 = vunpack.c.l.b16 %v283
      %v372 = vunpack.c.l.b16 %v284
      %v373 = vunpack.c.h.b16 %v284
      %v374 = vunpack.c.l.b16 %v285
      %v375 = vunpack.c.l.b16 %v286
      %v376 = vunpack.c.h.b16 %v286
      %v377 = vunpack.c.l.b16 %v287
      %v378 = vunpack.c.l.b16 %v288
      %v379 = vunpack.c.h.b16 %v288
      %v380 = vunpack.c.l.b16 %v289
      %v381 = vunpack.c.l.b16 %v290
      %v382 = vunpack.c.h.b16 %v290
      %v383 = vunpack.c.l.b16 %v291
      %v384 = vunpack.c.l.b16 %v292
      %v385 = vunpack.c.h.b16 %v292
      %v386 = vunpack.c.l.b16 %v293
      %v387 = vunpack.c.l.b16 %v294
      %v388 = vunpack.c.h.b16 %v294
      %v389 = vunpack.c.l.b16 %v295
      %v390 = vunpack.c.l.b16 %v296
      %v391 = vunpack.c.h.b16 %v296
      %v392 = vunpack.c.l.b16 %v297
      %v393 = vpack.c.b16 %v372, %v369
      %v394 = vpack.c.b16 %v373, %v370
      %v395 = vpack.c.b16 %v374, %v371
      %v396 = vpack.c.b16 %v378, %v375
      %v397 = vpack.c.b16 %v379, %v376
      %v398 = vpack.c.b16 %v380, %v377
      %v399 = vpack.c.b16 %v384, %v381
      %v400 = vpack.c.b16 %v385, %v382
      %v401 = vpack.c.b16 %v386, %v383
      %v402 = vpack.c.b16 %v390, %v387
      %v403 = vpack.c.b16 %v391, %v388
      %v404 = vpack.c.b16 %v392, %v389
      %v465 = vunpack.c.l.b16 %v298
      %v466 = vunpack.c.l.b16 %v299
      %v467 = vunpack.c.l.b16 %v300
      %v468 = vunpack.c.l.b16 %v301
      %v469 = vunpack.c.l.b16 %v302
      %v470 = vunpack.c.l.b16 %v303
      %v471 = vunpack.c.l.b16 %v304
      %v472 = vunpack.c.l.b16 %v305
      %v473 = vunpack.c.l.b16 %v306
      %v474 = vunpack.c.l.b16 %v307
      %v475 = vunpack.c.l.b16 %v308
      %v476 = vunpack.c.l.b16 %v309
      %v477 = vunpack.c.l.b16 %v310
      %v478 = vunpack.c.l.b16 %v311
      %v479 = vunpack.c.l.b16 %v312
      %v480 = vunpack.c.l.b16 %v313
      %v481 = vunpack.c.l.b16 %v314
      %v482 = vunpack.c.l.b16 %v315
      %v483 = vunpack.c.l.b16 %v316
      %v484 = vunpack.c.l.b16 %v317
      %v485 = vunpack.c.l.b16 %v318
      %v486 = vunpack.c.l.b16 %v319
      %v487 = vunpack.c.l.b16 %v320
      %v488 = vunpack.c.l.b16 %v321
      %v489 = vunpack.c.l.b16 %v322
      %v490 = vunpack.c.l.b16 %v323
      %v491 = vunpack.c.l.b16 %v324
      %v492 = vunpack.c.l.b16 %v325
      %v493 = vunpack.c.l.b16 %v326
      %v494 = vunpack.c.l.b16 %v327
      %v495 = vunpack.c.l.b16 %v328
      %v496 = vunpack.c.l.b16 %v329
      %v497 = vunpack.c.l.b16 %v330
      %v498 = vunpack.c.l.b16 %v331
      %v499 = vunpack.c.l.b16 %v332
      %v500 = vunpack.c.l.b16 %v333
      %v501 = vunpack.c.l.b16 %v334
      %v502 = vunpack.c.l.b16 %v335
      %v503 = vunpack.c.l.b16 %v336
      %v504 = vunpack.c.l.b16 %v337
      %v505 = vunpack.c.l.b16 %v338
      %v506 = vunpack.c.l.b16 %v339
      %v507 = vunpack.c.l.b16 %v340
      %v508 = vunpack.c.l.b16 %v341
      %v509 = vunpack.c.l.b16 %v342
      %v510 = vunpack.c.l.b16 %v343
      %v511 = vunpack.c.l.b16 %v344
      %v512 = vunpack.c.l.b16 %v345
      %v513 = vpack.c.b16 %v466, %v465
      %v514 = vpack.c.b16 %v468, %v467
      %v515 = vpack.c.b16 %v470, %v469
      %v516 = vpack.c.b16 %v472, %v471
      %v517 = vpack.c.b16 %v474, %v473
      %v518 = vpack.c.b16 %v476, %v475
      %v519 = vpack.c.b16 %v478, %v477
      %v520 = vpack.c.b16 %v480, %v479
      %v521 = vpack.c.b16 %v482, %v481
      %v522 = vpack.c.b16 %v484, %v483
      %v523 = vpack.c.b16 %v486, %v485
      %v524 = vpack.c.b16 %v488, %v487
      %v525 = vpack.c.b16 %v490, %v489
      %v526 = vpack.c.b16 %v492, %v491
      %v527 = vpack.c.b16 %v494, %v493
      %v528 = vpack.c.b16 %v496, %v495
      %v529 = vpack.c.b16 %v498, %v497
      %v530 = vpack.c.b16 %v500, %v499
      %v531 = vpack.c.b16 %v502, %v501
      %v532 = vpack.c.b16 %v504, %v503
      %v533 = vpack.c.b16 %v506, %v505
      %v534 = vpack.c.b16 %v508, %v507
      %v535 = vpack.c.b16 %v510, %v509
      %v536 = vpack.c.b16 %v512, %v511
      %561 = vmatprep.subr.bf16.mxu0 0
      %562 = vmatpush1.bf16.msra.mxu0 %v513
      %563 = vmatprep.subr.bf16.mxu0 0
      %564 = vmatpush1.bf16.msra.mxu0 %v514
      %565 = vmatprep.subr.bf16.mxu0 0
      %566 = vmatpush1.bf16.msra.mxu0 %v515
      %567 = vmatprep.subr.bf16.mxu0 0
      %568 = vmatpush1.bf16.msra.mxu0 %v516
      %569 = vmatprep.subr.bf16.mxu0 0
      %570 = vmatpush1.bf16.msra.mxu0 %v517
      %571 = vmatprep.subr.bf16.mxu0 0
      %572 = vmatpush1.bf16.msra.mxu0 %v518
      %573 = vmatprep.subr.bf16.mxu0 0
      %574 = vmatpush1.bf16.msra.mxu0 %v519
      %575 = vmatprep.subr.bf16.mxu0 0
      %576 = vmatpush1.bf16.msra.mxu0 %v520
      %577 = vmatprep.subr.bf16.mxu0 0
      %578 = vmatpush1.bf16.msra.mxu0 %v521
      %579 = vmatprep.subr.bf16.mxu0 0
      %580 = vmatpush1.bf16.msra.mxu0 %v522
      %581 = vmatprep.subr.bf16.mxu0 0
      %582 = vmatpush1.bf16.msra.mxu0 %v523
      %583 = vmatprep.subr.bf16.mxu0 0
      %584 = vmatpush1.bf16.msra.mxu0 %v524
      %585 = vmatprep.subr.bf16.mxu0 0
      %586 = vmatpush1.bf16.msra.mxu0 %v525
      %587 = vmatprep.subr.bf16.mxu0 0
      %588 = vmatpush1.bf16.msra.mxu0 %v526
      %589 = vmatprep.subr.bf16.mxu0 0
      %590 = vmatpush1.bf16.msra.mxu0 %v527
      %591 = vmatprep.subr.bf16.mxu0 0
      %592 = vmatpush1.bf16.msra.mxu0 %v528
      %593 = vmatprep.mubr.bf16.mxu0 %v394
      %594 = vmatmul.mubr.bf16.gmra.mrb[0].mxu0 %v393
      %v595 = vpop.f32.mrb[0].mxu0
      %v596 = vadd.f32 %v351, %v595
      %v597 = vpop.f32.mrb[0].mxu0
      %v598 = vpop.f32.mrb[0].mxu0
      %v599 = vadd.f32 %v351, %v598
      %v600 = vpop.f32.mrb[0].mxu0
      %601 = vmatprep.mubr.bf16.mxu0 %v397
      %602 = vmatmul.mubr.bf16.gmra.mrb[0].mxu0 %v396
      %v603 = vpop.f32.mrb[0].mxu0
      %v604 = vadd.f32 %v351, %v603
      %v605 = vpop.f32.mrb[0].mxu0
      %v606 = vpop.f32.mrb[0].mxu0
      %v607 = vadd.f32 %v351, %v606
      %v608 = vpop.f32.mrb[0].mxu0
      %609 = vmatprep.mubr.bf16.mxu0 %v400
      %610 = vmatmul.mubr.bf16.gmra.mrb[0].mxu0 %v399
      %v611 = vpop.f32.mrb[0].mxu0
      %v612 = vadd.f32 %v351, %v611
      %v613 = vpop.f32.mrb[0].mxu0
      %v614 = vpop.f32.mrb[0].mxu0
      %v615 = vadd.f32 %v351, %v614
      %v616 = vpop.f32.mrb[0].mxu0
      %617 = vmatprep.mubr.bf16.mxu0 %v403
      %618 = vmatmul.mubr.bf16.gmra.mrb[0].mxu0 %v402
      %v619 = vpop.f32.mrb[0].mxu0
      %v620 = vadd.f32 %v351, %v619
      %v621 = vpop.f32.mrb[0].mxu0
      %v622 = vpop.f32.mrb[0].mxu0
      %v623 = vadd.f32 %v351, %v622
      %v624 = vpop.f32.mrb[0].mxu0
      %625 = vdwg.mxu0
      %626 = vmatprep.subr.bf16.mxu0 0
      %627 = vmatpush1.bf16.msra.mxu0 %v529
      %628 = vmatprep.subr.bf16.mxu0 0
      %629 = vmatpush1.bf16.msra.mxu0 %v530
      %630 = vmatprep.subr.bf16.mxu0 0
      %631 = vmatpush1.bf16.msra.mxu0 %v531
      %632 = vmatprep.subr.bf16.mxu0 0
      %633 = vmatpush1.bf16.msra.mxu0 %v532
      %634 = vmatprep.subr.bf16.mxu0 0
      %635 = vmatpush1.bf16.msra.mxu0 %v533
      %636 = vmatprep.subr.bf16.mxu0 0
      %637 = vmatpush1.bf16.msra.mxu0 %v534
      %638 = vmatprep.subr.bf16.mxu0 0
      %639 = vmatpush1.bf16.msra.mxu0 %v535
      %640 = vmatprep.subr.bf16.mxu0 0
      %641 = vmatpush1.bf16.msra.mxu0 %v536
      %642 = vmatprep.subr.bf16.mxu0 0
      %643 = vmatpush1.bf16.msra.mxu0 0
      %644 = vmatprep.subr.bf16.mxu0 0
      %645 = vmatpush1.bf16.msra.mxu0 0
      %646 = vmatprep.subr.bf16.mxu0 0
      %647 = vmatpush1.bf16.msra.mxu0 0
      %648 = vmatprep.subr.bf16.mxu0 0
      %649 = vmatpush1.bf16.msra.mxu0 0
      %650 = vmatprep.subr.bf16.mxu0 0
      %651 = vmatpush1.bf16.msra.mxu0 0
      %652 = vmatprep.subr.bf16.mxu0 0
      %653 = vmatpush1.bf16.msra.mxu0 0
      %654 = vmatprep.subr.bf16.mxu0 0
      %655 = vmatpush1.bf16.msra.mxu0 0
      %656 = vmatprep.subr.bf16.mxu0 0
      %657 = vmatpush1.bf16.msra.mxu0 0
      %658 = vmatprep.mubr.bf16.mxu0 0
      %659 = vmatmul.mubr.bf16.gmra.mrb[0].mxu0 %v395
      %v660 = vpop.f32.mrb[0].mxu0
      %v661 = vadd.f32 %v596, %v660
      %v662 = vpop.f32.mrb[0].mxu0
      %v663 = vpop.f32.mrb[0].mxu0
      %v664 = vadd.f32 %v599, %v663
      %v665 = vpop.f32.mrb[0].mxu0
      %666 = vmatprep.mubr.bf16.mxu0 0
      %667 = vmatmul.mubr.bf16.gmra.mrb[0].mxu0 %v398
      %v668 = vpop.f32.mrb[0].mxu0
      %v669 = vadd.f32 %v604, %v668
      %v670 = vpop.f32.mrb[0].mxu0
      %v671 = vpop.f32.mrb[0].mxu0
      %v672 = vadd.f32 %v607, %v671
      %v673 = vpop.f32.mrb[0].mxu0
      %674 = vmatprep.mubr.bf16.mxu0 0
      %675 = vmatmul.mubr.bf16.gmra.mrb[0].mxu0 %v401
      %v676 = vpop.f32.mrb[0].mxu0
      %v677 = vadd.f32 %v612, %v676
      %v678 = vpop.f32.mrb[0].mxu0
      %v679 = vpop.f32.mrb[0].mxu0
      %v680 = vadd.f32 %v615, %v679
      %v681 = vpop.f32.mrb[0].mxu0
      %682 = vmatprep.mubr.bf16.mxu0 0
      %683 = vmatmul.mubr.bf16.gmra.mrb[0].mxu0 %v404
      %v684 = vpop.f32.mrb[0].mxu0
      %v685 = vadd.f32 %v620, %v684
      %v686 = vpop.f32.mrb[0].mxu0
      %v687 = vpop.f32.mrb[0].mxu0
      %v688 = vadd.f32 %v623, %v687
      %v689 = vpop.f32.mrb[0].mxu0
      %690 = vdwg.mxu0
      %v691 = vmax.f32 %v661, 0.0
      %v692 = vmax.f32 %v664, 0.0
      %v693 = vmax.f32 %v669, 0.0
      %v694 = vmax.f32 %v672, 0.0
      %v695 = vmax.f32 %v677, 0.0
      %v696 = vmax.f32 %v680, 0.0
      %v697 = vmax.f32 %v685, 0.0
      %v698 = vmax.f32 %v688, 0.0
      %v699 = vpack.c.bf16 %v692, %v691
      %v700 = vpack.c.bf16 %v694, %v693
      %v701 = vpack.c.bf16 %v696, %v695
      %v702 = vpack.c.bf16 %v698, %v697
      %v707 = vunpack.c.l.b16 %v699
      %v708 = vunpack.c.h.b16 %v699
      %v709 = vunpack.c.l.b16 %v700
      %v710 = vunpack.c.h.b16 %v700
      %v711 = vunpack.c.l.b16 %v701
      %v712 = vunpack.c.h.b16 %v701
      %v713 = vunpack.c.l.b16 %v702
      %v714 = vunpack.c.h.b16 %v702
      %v715 = vpack.c.b16 %v707, %v707
      %v716 = vpack.c.b16 %v708, %v708
      %v717 = vpack.c.b16 %v709, %v709
      %v718 = vpack.c.b16 %v710, %v710
      %v719 = vpack.c.b16 %v711, %v711
      %v720 = vpack.c.b16 %v712, %v712
      %v721 = vpack.c.b16 %v713, %v713
      %v722 = vpack.c.b16 %v714, %v714
      %731 = vst [vmem:[%s271] sm:$0xf] %v715
      %732 = vst [vmem:[%s271 + $0x4] sm:$0xf] %v716
      %733 = vst [vmem:[%s271 + $0x8] sm:$0xf] %v717
      %734 = vst [vmem:[%s271 + $0xc] sm:$0xf] %v718
      %735 = vst [vmem:[%s271 + $0x10] sm:$0xf] %v719
      %736 = vst [vmem:[%s271 + $0x14] sm:$0xf] %v720
      %737 = vst [vmem:[%s271 + $0x18] sm:$0xf] %v721
      %738 = vst [vmem:[%s271 + $0x1c] sm:$0xf] %v722
      %v739 = vadd.f32 %v691, %v692
      %v740 = vadd.f32 %v739, %v693
      %v741 = vadd.f32 %v740, %v694
      %v742 = vadd.f32 %v741, %v695
      %v743 = vadd.f32 %v742, %v696
      %v744 = vadd.f32 %v743, %v697
      %v745 = vadd.f32 %v744, %v698
      %v746 = vrot.slane %v745, 4
      %v747 = vadd.f32 %v745, %v746
      %v748 = vrot.slane %v747, 2
      %v749 = vadd.f32 %v747, %v748
      %v750 = vrot.slane %v749, 1
      %v751 = vadd.f32 %v749, %v750
      %752 = vst [vmem:[%s278] sm:$0x1] %v751
      %v753 = vmul.f32 %v691, %v691
      %v754 = vmul.f32 %v692, %v692
      %v755 = vmul.f32 %v693, %v693
      %v756 = vmul.f32 %v694, %v694
      %v757 = vmul.f32 %v695, %v695
      %v758 = vmul.f32 %v696, %v696
      %v759 = vmul.f32 %v697, %v697
      %v760 = vmul.f32 %v698, %v698
      %v761 = vadd.f32 %v753, %v754
      %v762 = vadd.f32 %v761, %v755
      %v763 = vadd.f32 %v762, %v756
      %v764 = vadd.f32 %v763, %v757
      %v765 = vadd.f32 %v764, %v758
      %v766 = vadd.f32 %v765, %v759
      %v767 = vadd.f32 %v766, %v760
      %v768 = vrot.slane %v767, 4
      %v769 = vadd.f32 %v767, %v768
      %v770 = vrot.slane %v769, 2
      %v771 = vadd.f32 %v769, %v770
      %v772 = vrot.slane %v771, 1
      %v773 = vadd.f32 %v771, %v772
      %774 = vst [vmem:[%s278 + $0x1] sm:$0x1] %v773
      %s775 = smul.u32 8, %s21
      %p776 = scmp.lt.s32.totalorder %s20, 0
      %s777 = scalar_select %p776, %s20, 0
      %p778 = scmp.lt.s32.totalorder %s775, 15
      %s779 = scalar_select %p778, %s775, 15
      %s780 = smul.addr %s777, 16
      %s781 = sadd.s32 %s779, %s780
      %s782 = smul.addr %s781, 4
      %s783 = scalar_lea.vmem %s3, %s782
      %s784 = smul.u32 %s20, 2
      %s785 = sadd.s32 %s784, %s21
      %p786 = scmp.lt.s32.totalorder %s785, 1
      %s787 = scalar_select %p786, %s785, 1
      %s788 = smul.addr %s787, 2
      %s789 = scalar_lea.vmem %s4, %s788
      // Predicated region
      $region33: #{forward.18} parent=31 // pred_check
        %p790 = pneg %p123
      $region34: #{forward.18} parent=31 // pred_check_branch
        %792 = sbr.rel (%p790) target = $region36
      $region35: #{forward.18} parent=31 // pred_region
        %s793 = smul.u32 8, %s21
      $region36: #{forward.18} parent=31 // pred_fallthru
        _
      // Predicated region
      $region37: #{forward.18} parent=31 // pred_check
        %p794 = pneg %p153
      $region38: #{forward.18} parent=31 // pred_check_branch
        %796 = sbr.rel (%p794) target = $region40
      $region39: #{forward.18} parent=31 // pred_region
        %s797 = smul.u32 %s20, 2
        %s798 = sadd.s32 %s797, %s21
      $region40: #{forward.18} parent=31 // pred_fallthru
        _
    $region32: #{forward.18} parent=5 // pred_fallthru
      _
    %p799 = scmp.le.s32.totalorder 2, %s11
    // Predicated region
    $region41: #{forward.18} parent=5 // pred_check
      %p800 = pneg %p799
    $region42: #{forward.18} parent=5 // pred_check_branch
      %802 = sbr.rel (%p800) target = $region44
    $region43: #{forward.18} parent=5 // pred_region
      %s803 = ssub.s32 %s11, 2
      // Predicated region
      $region45: #{forward.18} parent=43 // pred_check
        %p804 = pneg %p129
      $region46: #{forward.18} parent=43 // pred_check_branch
        %806 = sbr.rel (%p804) target = $region48
      $region47: #{forward.18} parent=43 // pred_region
        %s807 = smul.u32 8, %s23
        %p808 = scmp.lt.s32.totalorder %s22, 0
        %s809 = scalar_select %p808, %s22, 0
        %p810 = scmp.lt.s32.totalorder %s807, 15
        %s811 = scalar_select %p810, %s807, 15
        %s812 = smul.addr %s809, 16
        %s813 = sadd.s32 %s811, %s812
        %s814 = smul.addr %s813, 4
        %s815 = scalar_lea.vmem %s3, %s814
      $region48: #{forward.18} parent=43 // pred_fallthru
        _
      // Predicated region
      $region49: #{forward.18} parent=43 // pred_check
        %p816 = pneg %p159
      $region50: #{forward.18} parent=43 // pred_check_branch
        %818 = sbr.rel (%p816) target = $region52
      $region51: #{forward.18} parent=43 // pred_region
        %s819 = smul.u32 %s22, 2
        %s820 = sadd.s32 %s819, %s23
        %p821 = scmp.lt.s32.totalorder %s820, 1
        %s822 = scalar_select %p821, %s820, 1
        %s823 = smul.addr %s822, 2
        %s824 = scalar_lea.vmem %s4, %s823
      $region52: #{forward.18} parent=43 // pred_fallthru
        _
    $region44: #{forward.18} parent=5 // pred_fallthru
      _
  $region6: #{forward.18} parent=0 // loop_footer
    %s15 = sadd.s32 1, %s11
  $region7: #{forward.18} parent=0 // loop_footer_branch
    %10 = sbr.rel target = $region3
  $region8: #{forward.18} parent=0 // loop_exit
    _

// kernel: forward.19
$region0: #{forward.19}
  #allocation0 [shape = 'u32[]', space=smem, size = 0x4, offset = 0x4, fixed_abs, tag = 'smem constant byte address 0x4 - core index']
  #allocation1 [shape = 'u32[144,128]{1,0:T(1,128)}', space=vmem, size = 0x12000, scoped, tag = 'internal scratch']
  %s0 = inlined_call_operand.vmem [shape: bf16[1,128,640], index: 0, kind: input, shape index: {}]
  %s1 = inlined_call_operand.vmem [shape: bf16[1,640,128], index: 1, kind: input, shape index: {}]
  %s2 = inlined_call_operand.vmem [shape: f32[1,128], index: 2, kind: input, shape index: {}]
  %s3 = inlined_call_operand.vmem [shape: bf16[1,128,128], index: 3, kind: output, shape index: {0}]
  %s4 = inlined_call_operand.vmem [shape: f32[2,2,128], index: 4, kind: output, shape index: {1}]
  %5 = xla_tuple %s3, %s4
  %s6 = sld [smem:[#allocation0]]
  $region53: #{forward.19} parent=0
    _
  %s8 = ssub.s32 1, %s6
  %s9 = scalar_select 0, %s8, %s6
  loop: start=0, step=1, limit=4
  $region2: #{forward.19} parent=0 // loop_pre_header
    _
  $region3: #{forward.19} parent=0 // loop_header
    %s11 = sphi 0, %s15
    %p12 = scmp.ge.s32.totalorder %s11, 4
    %s18 = sphi 0, %s30
    %s19 = sphi 0, %s26
    %s20 = sphi 0, %s18
    %s21 = sphi 0, %s19
    %s22 = sphi 0, %s20
    %s23 = sphi 0, %s21
    %s35 = sphi 0, %s37
    %s38 = sphi 0, %s35
    %s39 = sphi 0, %s38
    %s55 = sphi 0, %s39
    %s61 = sphi 0, %s63
    %s64 = sphi 0, %s61
    %s65 = sphi 0, %s64
    %s81 = sphi 0, %s65
    %s85 = sphi 0, %s85
    %s87 = sphi 0, %s85
    %s88 = sphi 0, %s87
    %s102 = sphi 0, %s88
    %s110 = sphi 0, %s112
    %s113 = sphi 0, %s110
    %s114 = sphi 0, %s113
    %s130 = sphi 0, %s114
    %s140 = sphi 0, %s142
    %s143 = sphi 0, %s140
    %s144 = sphi 0, %s143
    %s160 = sphi 0, %s144
  $region4: #{forward.19} parent=0 // loop_header_branch
    %14 = sbr.rel (%p12) target = $region8
  $region5: #{forward.19} parent=0 // loop_body
    %s16 = ssub.s32 %s11, 1
    %s17 = ssub.s32 %s11, 2
    %s24 = sadd.s32 1, %s19
    %p25 = scmp.ge.s32.totalorder %s24, 2
    %s26 = scalar_select %p25, 0, %s24
    %s27 = sadd.s32 1, %s18
    %s28 = scalar_select %p25, %s27, %s18
    %p29 = scmp.ge.s32.totalorder %s28, 1
    %s30 = scalar_select %p29, 0, %s28
    %s31 = ssub.s32 %s18, %s30
    %s32 = ssub.s32 %s19, %s26
    %s33 = sor.u32 %s31, %s32
    %p34 = scmp.eq.s32.totalorder %s33, 0
    %s36 = sadd.s32 %s35, 1
    %s37 = scalar_select %p34, %s35, %s36
    %p40 = pneg %p34
    %p41 = scmp.eq.s32.totalorder %s11, 1
    %p42 = por %p40, %p41
    %p43 = scmp.ne.s32.totalorder %s35, %s38
    %p44 = scmp.eq.s32.totalorder %s11, 0
    %p45 = por %p43, %p44
    %p46 = scmp.ne.s32.totalorder %s35, %s38
    %p47 = scmp.eq.s32.totalorder %s16, 1
    %p48 = por %p46, %p47
    %p49 = scmp.ne.s32.totalorder %s38, %s39
    %p50 = scmp.eq.s32.totalorder %s16, 0
    %p51 = por %p49, %p50
    %p52 = scmp.ne.s32.totalorder %s38, %s39
    %p53 = scmp.eq.s32.totalorder %s17, 1
    %p54 = por %p52, %p53
    %p56 = scmp.ne.s32.totalorder %s39, %s55
    %p57 = scmp.eq.s32.totalorder %s17, 0
    %p58 = por %p56, %p57
    %s59 = ssub.s32 %s18, %s30
    %p60 = scmp.eq.s32.totalorder %s59, 0
    %s62 = sadd.s32 %s61, 1
    %s63 = scalar_select %p60, %s61, %s62
    %p66 = pneg %p60
    %p67 = scmp.eq.s32.totalorder %s11, 1
    %p68 = por %p66, %p67
    %p69 = scmp.ne.s32.totalorder %s61, %s64
    %p70 = scmp.eq.s32.totalorder %s11, 0
    %p71 = por %p69, %p70
    %p72 = scmp.ne.s32.totalorder %s61, %s64
    %p73 = scmp.eq.s32.totalorder %s16, 1
    %p74 = por %p72, %p73
    %p75 = scmp.ne.s32.totalorder %s64, %s65
    %p76 = scmp.eq.s32.totalorder %s16, 0
    %p77 = por %p75, %p76
    %p78 = scmp.ne.s32.totalorder %s64, %s65
    %p79 = scmp.eq.s32.totalorder %s17, 1
    %p80 = por %p78, %p79
    %p82 = scmp.ne.s32.totalorder %s65, %s81
    %p83 = scmp.eq.s32.totalorder %s17, 0
    %p84 = por %p82, %p83
    %s86 = sadd.s32 %s85, 1
    %p89 = scmp.eq.s32.totalorder %s11, 1
    %p90 = scmp.ne.s32.totalorder %s85, %s87
    %p91 = scmp.eq.s32.totalorder %s11, 0
    %p92 = por %p90, %p91
    %p93 = scmp.ne.s32.totalorder %s85, %s87
    %p94 = scmp.eq.s32.totalorder %s16, 1
    %p95 = por %p93, %p94
    %p96 = scmp.ne.s32.totalorder %s87, %s88
    %p97 = scmp.eq.s32.totalorder %s16, 0
    %p98 = por %p96, %p97
    %p99 = scmp.ne.s32.totalorder %s87, %s88
    %p100 = scmp.eq.s32.totalorder %s17, 1
    %p101 = por %p99, %p100
    %p103 = scmp.ne.s32.totalorder %s88, %s102
    %p104 = scmp.eq.s32.totalorder %s17, 0
    %p105 = por %p103, %p104
    %s106 = ssub.s32 %s18, %s30
    %s107 = ssub.s32 %s19, %s26
    %s108 = sor.u32 %s106, %s107
    %p109 = scmp.eq.s32.totalorder %s108, 0
    %s111 = sadd.s32 %s110, 1
    %s112 = scalar_select %p109, %s110, %s111
    %p115 = pneg %p109
    %p116 = scmp.eq.s32.totalorder %s11, 1
    %p117 = por %p115, %p116
    %p118 = scmp.ne.s32.totalorder %s110, %s113
    %p119 = scmp.eq.s32.totalorder %s11, 0
    %p120 = por %p118, %p119
    %p121 = scmp.ne.s32.totalorder %s110, %s113
    %p122 = scmp.eq.s32.totalorder %s16, 1
    %p123 = por %p121, %p122
    %p124 = scmp.ne.s32.totalorder %s113, %s114
    %p125 = scmp.eq.s32.totalorder %s16, 0
    %p126 = por %p124, %p125
    %p127 = scmp.ne.s32.totalorder %s113, %s114
    %p128 = scmp.eq.s32.totalorder %s17, 1
    %p129 = por %p127, %p128
    %p131 = scmp.ne.s32.totalorder %s114, %s130
    %p132 = scmp.eq.s32.totalorder %s17, 0
    %p133 = por %p131, %p132
    %s134 = smul.u32 %s18, 2
    %s135 = sadd.s32 %s134, %s19
    %s136 = smul.u32 %s30, 2
    %s137 = sadd.s32 %s136, %s26
    %s138 = ssub.s32 %s135, %s137
    %p139 = scmp.eq.s32.totalorder %s138, 0
    %s141 = sadd.s32 %s140, 1
    %s142 = scalar_select %p139, %s140, %s141
    %p145 = pneg %p139
    %p146 = scmp.eq.s32.totalorder %s11, 1
    %p147 = por %p145, %p146
    %p148 = scmp.ne.s32.totalorder %s140, %s143
    %p149 = scmp.eq.s32.totalorder %s11, 0
    %p150 = por %p148, %p149
    %p151 = scmp.ne.s32.totalorder %s140, %s143
    %p152 = scmp.eq.s32.totalorder %s16, 1
    %p153 = por %p151, %p152
    %p154 = scmp.ne.s32.totalorder %s143, %s144
    %p155 = scmp.eq.s32.totalorder %s16, 0
    %p156 = por %p154, %p155
    %p157 = scmp.ne.s32.totalorder %s143, %s144
    %p158 = scmp.eq.s32.totalorder %s17, 1
    %p159 = por %p157, %p158
    %p161 = scmp.ne.s32.totalorder %s144, %s160
    %p162 = scmp.eq.s32.totalorder %s17, 0
    %p163 = por %p161, %p162
    %p164 = scmp.le.s32.totalorder 1, %s11
    %p165 = scmp.lt.s32.totalorder %s11, 3
    %p166 = pnand %p164, %p165
    %p167 = pneg %p166
    // Predicated region
    $region9: #{forward.19} parent=5 // pred_check
      _
    $region10: #{forward.19} parent=5 // pred_check_branch
      %169 = sbr.rel (%p166) target = $region12
    $region11: #{forward.19} parent=5 // pred_region
      %s170 = ssub.s32 %s11, 1
      // Predicated region
      $region13: #{forward.19} parent=11 // pred_check
        %p171 = pneg %p77
      $region14: #{forward.19} parent=11 // pred_check_branch
        %173 = sbr.rel (%p171) target = $region16
      $region15: #{forward.19} parent=11 // pred_region
        %p174 = scmp.lt.s32.totalorder %s20, 0
        %s175 = scalar_select %p174, %s20, 0
        %s176 = smul.addr %s175, 80
        %s177 = smul.addr %s176, 4
        %s178 = scalar_lea.vmem %s1, %s177
      $region16: #{forward.19} parent=11 // pred_fallthru
        _
      // Predicated region
      $region17: #{forward.19} parent=11 // pred_check
        %p179 = pneg %p98
      $region18: #{forward.19} parent=11 // pred_check_branch
        %181 = sbr.rel (%p179) target = $region20
      $region19: #{forward.19} parent=11 // pred_region
        _
      $region20: #{forward.19} parent=11 // pred_fallthru
        _
    $region12: #{forward.19} parent=5 // pred_fallthru
      _
    %p182 = scmp.lt.s32.totalorder %s11, 2
    // Predicated region
    $region21: #{forward.19} parent=5 // pred_check
      %p183 = pneg %p182
    $region22: #{forward.19} parent=5 // pred_check_branch
      %185 = sbr.rel (%p183) target = $region24
    $region23: #{forward.19} parent=5 // pred_region
      // Predicated region
      $region25: #{forward.19} parent=23 // pred_check
        %p186 = pneg %p45
      $region26: #{forward.19} parent=23 // pred_check_branch
        %188 = sbr.rel (%p186) target = $region28
      $region27: #{forward.19} parent=23 // pred_region
        %s189 = smul.u32 8, %s19
        %p190 = scmp.lt.s32.totalorder %s18, 0
        %s191 = scalar_select %p190, %s18, 0
        %p192 = scmp.lt.s32.totalorder %s189, 15
        %s193 = scalar_select %p192, %s189, 15
        %s194 = smul.addr %s193, 5
        %s195 = smul.addr %s191, 80
        %s196 = sadd.s32 %s194, %s195
        %s197 = smul.addr %s196, 4
        %s198 = scalar_lea.vmem %s0, %s197
        %s199 = smul.u32 8, %s19
      $region28: #{forward.19} parent=23 // pred_fallthru
        _
    $region24: #{forward.19} parent=5 // pred_fallthru
      _
    %p200 = scmp.le.s32.totalorder 1, %s11
    %p201 = scmp.lt.s32.totalorder %s11, 3
    %p202 = pnand %p200, %p201
    %p203 = pneg %p202
    // Predicated region
    $region29: #{forward.19} parent=5 // pred_check
      _
    $region30: #{forward.19} parent=5 // pred_check_branch
      %205 = sbr.rel (%p202) target = $region32
    $region31: #{forward.19} parent=5 // pred_region
      %s206 = ssub.s32 %s11, 1
      %s207 = smul.u32 8, %s21
      %p208 = scmp.lt.s32.totalorder %s20, 0
      %s209 = scalar_select %p208, %s20, 0
      %p210 = scmp.lt.s32.totalorder %s207, 15
      %s211 = scalar_select %p210, %s207, 15
      %s212 = smul.addr %s211, 5
      %s213 = smul.addr %s209, 80
      %s214 = sadd.s32 %s212, %s213
      %s215 = smul.addr %s214, 4
      %s216 = scalar_lea.vmem %s0, %s215
      %p217 = pneg %p51
      %p218 = pneg %p48
      %p219 = scmp.lt.s32.totalorder %s20, 0
      %s220 = scalar_select %p219, %s20, 0
      %s221 = smul.addr %s220, 80
      %s222 = smul.addr %s221, 4
      %s223 = scalar_lea.vmem %s1, %s222
      %p224 = pneg %p77
      %p225 = pneg %p74
      %p226 = pneg %p98
      %p227 = pneg %p95
      %p228 = pneg %p126
      %p229 = pneg %p123
      %s230 = smul.u32 8, %s21
      %p231 = scmp.lt.s32.totalorder %s20, 0
      %s232 = scalar_select %p231, %s20, 0
      %p233 = scmp.lt.s32.totalorder %s230, 15
      %s234 = scalar_select %p233, %s230, 15
      %s235 = smul.addr %s232, 16
      %s236 = sadd.s32 %s234, %s235
      %s237 = smul.addr %s236, 4
      %s238 = scalar_lea.vmem %s3, %s237
      %p239 = pneg %p156
      %p240 = pneg %p153
      %s241 = smul.u32 %s20, 2
      %s242 = sadd.s32 %s241, %s21
      %p243 = scmp.lt.s32.totalorder %s242, 1
      %s244 = scalar_select %p243, %s242, 1
      %s245 = smul.addr %s244, 2
      %s246 = scalar_lea.vmem %s4, %s245
      %s247 = smul.u32 8, %s21
      %p248 = scmp.lt.s32.totalorder %s20, 0
      %s249 = scalar_select %p248, %s20, 0
      %p250 = scmp.lt.s32.totalorder %s247, 15
      %s251 = scalar_select %p250, %s247, 15
      %s252 = smul.addr %s251, 5
      %s253 = smul.addr %s249, 80
      %s254 = sadd.s32 %s252, %s253
      %s255 = smul.addr %s254, 4
      %s256 = scalar_lea.vmem %s0, %s255
      %s257 = smul.u32 8, %s21
      %p258 = scmp.lt.s32.totalorder %s20, 0
      %s259 = scalar_select %p258, %s20, 0
      %s260 = smul.addr %s259, 80
      %s261 = smul.addr %s260, 4
      %s262 = scalar_lea.vmem %s1, %s261
      %s263 = smul.u32 8, %s21
      %p264 = scmp.lt.s32.totalorder %s20, 0
      %s265 = scalar_select %p264, %s20, 0
      %p266 = scmp.lt.s32.totalorder %s263, 15
      %s267 = scalar_select %p266, %s263, 15
      %s268 = smul.addr %s265, 16
      %s269 = sadd.s32 %s267, %s268
      %s270 = smul.addr %s269, 4
      %s271 = scalar_lea.vmem %s3, %s270
      %s272 = smul.u32 8, %s21
      %s273 = smul.u32 %s20, 2
      %s274 = sadd.s32 %s273, %s21
      %p275 = scmp.lt.s32.totalorder %s274, 1
      %s276 = scalar_select %p275, %s274, 1
      %s277 = smul.addr %s276, 2
      %s278 = scalar_lea.vmem %s4, %s277
      %s279 = smul.u32 %s20, 2
      %s280 = sadd.s32 %s279, %s21
      %v282 = vld [vmem:[%s256] sm:$0xff]
      %v283 = vld [vmem:[%s256 + $0x8] sm:$0xff]
      %v284 = vld [vmem:[%s256 + $0x10] sm:$0xf]
      %v285 = vld [vmem:[%s256 + $0x14] sm:$0xff]
      %v286 = vld [vmem:[%s256 + $0x1c] sm:$0xff]
      %v287 = vld [vmem:[%s256 + $0x24] sm:$0xf]
      %v288 = vld [vmem:[%s256 + $0x28] sm:$0xff]
      %v289 = vld [vmem:[%s256 + $0x30] sm:$0xff]
      %v290 = vld [vmem:[%s256 + $0x38] sm:$0xf]
      %v291 = vld [vmem:[%s256 + $0x3c] sm:$0xff]
      %v292 = vld [vmem:[%s256 + $0x44] sm:$0xff]
      %v293 = vld [vmem:[%s256 + $0x4c] sm:$0xf]
      %v294 = vld [vmem:[%s256 + $0x50] sm:$0xff]
      %v295 = vld [vmem:[%s256 + $0x58] sm:$0xff]
      %v296 = vld [vmem:[%s256 + $0x60] sm:$0xf]
      %v297 = vld [vmem:[%s256 + $0x64] sm:$0xff]
      %v298 = vld [vmem:[%s256 + $0x6c] sm:$0xff]
      %v299 = vld [vmem:[%s256 + $0x74] sm:$0xf]
      %v300 = vld [vmem:[%s256 + $0x78] sm:$0xff]
      %v301 = vld [vmem:[%s256 + $0x80] sm:$0xff]
      %v302 = vld [vmem:[%s256 + $0x88] sm:$0xf]
      %v303 = vld [vmem:[%s256 + $0x8c] sm:$0xff]
      %v304 = vld [vmem:[%s256 + $0x94] sm:$0xff]
      %v305 = vld [vmem:[%s256 + $0x9c] sm:$0xf]
      %v306 = vld [vmem:[%s262] sm:$0xf]
      %v307 = vld [vmem:[%s262 + $0x4] sm:$0xf]
      %v308 = vld [vmem:[%s262 + $0x8] sm:$0xf]
      %v309 = vld [vmem:[%s262 + $0xc] sm:$0xf]
      %v310 = vld [vmem:[%s262 + $0x10] sm:$0xf]
      %v311 = vld [vmem:[%s262 + $0x14] sm:$0xf]
      %v312 = vld [vmem:[%s262 + $0x18] sm:$0xf]
      %v313 = vld [vmem:[%s262 + $0x1c] sm:$0xf]
      %v314 = vld [vmem:[%s262 + $0x20] sm:$0xf]
      %v315 = vld [vmem:[%s262 + $0x24] sm:$0xf]
      %v316 = vld [vmem:[%s262 + $0x28] sm:$0xf]
      %v317 = vld [vmem:[%s262 + $0x2c] sm:$0xf]
      %v318 = vld [vmem:[%s262 + $0x30] sm:$0xf]
      %v319 = vld [vmem:[%s262 + $0x34] sm:$0xf]
      %v320 = vld [vmem:[%s262 + $0x38] sm:$0xf]
      %v321 = vld [vmem:[%s262 + $0x3c] sm:$0xf]
      %v322 = vld [vmem:[%s262 + $0x40] sm:$0xf]
      %v323 = vld [vmem:[%s262 + $0x44] sm:$0xf]
      %v324 = vld [vmem:[%s262 + $0x48] sm:$0xf]
      %v325 = vld [vmem:[%s262 + $0x4c] sm:$0xf]
      %v326 = vld [vmem:[%s262 + $0x50] sm:$0xf]
      %v327 = vld [vmem:[%s262 + $0x54] sm:$0xf]
      %v328 = vld [vmem:[%s262 + $0x58] sm:$0xf]
      %v329 = vld [vmem:[%s262 + $0x5c] sm:$0xf]
      %v330 = vld [vmem:[%s262 + $0x60] sm:$0xf]
      %v331 = vld [vmem:[%s262 + $0x64] sm:$0xf]
      %v332 = vld [vmem:[%s262 + $0x68] sm:$0xf]
      %v333 = vld [vmem:[%s262 + $0x6c] sm:$0xf]
      %v334 = vld [vmem:[%s262 + $0x70] sm:$0xf]
      %v335 = vld [vmem:[%s262 + $0x74] sm:$0xf]
      %v336 = vld [vmem:[%s262 + $0x78] sm:$0xf]
      %v337 = vld [vmem:[%s262 + $0x7c] sm:$0xf]
      %v338 = vld [vmem:[%s262 + $0x80] sm:$0xf]
      %v339 = vld [vmem:[%s262 + $0x84] sm:$0xf]
      %v340 = vld [vmem:[%s262 + $0x88] sm:$0xf]
      %v341 = vld [vmem:[%s262 + $0x8c] sm:$0xf]
      %v342 = vld [vmem:[%s262 + $0x90] sm:$0xf]
      %v343 = vld [vmem:[%s262 + $0x94] sm:$0xf]
      %v344 = vld [vmem:[%s262 + $0x98] sm:$0xf]
      %v345 = vld [vmem:[%s262 + $0x9c] sm:$0xf]
      %v346 = vld [vmem:[%s262 + $0xa0] sm:$0xf]
      %v347 = vld [vmem:[%s262 + $0xa4] sm:$0xf]
      %v348 = vld [vmem:[%s262 + $0xa8] sm:$0xf]
      %v349 = vld [vmem:[%s262 + $0xac] sm:$0xf]
      %v350 = vld [vmem:[%s262 + $0xb0] sm:$0xf]
      %v351 = vld [vmem:[%s262 + $0xb4] sm:$0xf]
      %v352 = vld [vmem:[%s262 + $0xb8] sm:$0xf]
      %v353 = vld [vmem:[%s262 + $0xbc] sm:$0xf]
      %v354 = vld [vmem:[%s262 + $0xc0] sm:$0xf]
      %v355 = vld [vmem:[%s262 + $0xc4] sm:$0xf]
      %v356 = vld [vmem:[%s262 + $0xc8] sm:$0xf]
      %v357 = vld [vmem:[%s262 + $0xcc] sm:$0xf]
      %v358 = vld [vmem:[%s262 + $0xd0] sm:$0xf]
      %v359 = vld [vmem:[%s262 + $0xd4] sm:$0xf]
      %v360 = vld [vmem:[%s262 + $0xd8] sm:$0xf]
      %v361 = vld [vmem:[%s262 + $0xdc] sm:$0xf]
      %v362 = vld [vmem:[%s262 + $0xe0] sm:$0xf]
      %v363 = vld [vmem:[%s262 + $0xe4] sm:$0xf]
      %v364 = vld [vmem:[%s262 + $0xe8] sm:$0xf]
      %v365 = vld [vmem:[%s262 + $0xec] sm:$0xf]
      %v366 = vld [vmem:[%s262 + $0xf0] sm:$0xf]
      %v367 = vld [vmem:[%s262 + $0xf4] sm:$0xf]
      %v368 = vld [vmem:[%s262 + $0xf8] sm:$0xf]
      %v369 = vld [vmem:[%s262 + $0xfc] sm:$0xf]
      %v370 = vld [vmem:[%s262 + $0x100] sm:$0xf]
      %v371 = vld [vmem:[%s262 + $0x104] sm:$0xf]
      %v372 = vld [vmem:[%s262 + $0x108] sm:$0xf]
      %v373 = vld [vmem:[%s262 + $0x10c] sm:$0xf]
      %v374 = vld [vmem:[%s262 + $0x110] sm:$0xf]
      %v375 = vld [vmem:[%s262 + $0x114] sm:$0xf]
      %v376 = vld [vmem:[%s262 + $0x118] sm:$0xf]
      %v377 = vld [vmem:[%s262 + $0x11c] sm:$0xf]
      %v378 = vld [vmem:[%s262 + $0x120] sm:$0xf]
      %v379 = vld [vmem:[%s262 + $0x124] sm:$0xf]
      %v380 = vld [vmem:[%s262 + $0x128] sm:$0xf]
      %v381 = vld [vmem:[%s262 + $0x12c] sm:$0xf]
      %v382 = vld [vmem:[%s262 + $0x130] sm:$0xf]
      %v383 = vld [vmem:[%s262 + $0x134] sm:$0xf]
      %v384 = vld [vmem:[%s262 + $0x138] sm:$0xf]
      %v385 = vld [vmem:[%s262 + $0x13c] sm:$0xf]
      %v386 = vld [vmem:[%s2] sm:$0x1]
      %v388 = vlaneseq
      %v389 = vshrl.u32 %v388, 7
      %v390 = vsub.s32 0, %v389
      %v391 = vrot.slane %v386, %v390
      %v417 = vunpack.c.l.b16 %v282
      %v418 = vunpack.c.h.b16 %v282
      %v419 = vunpack.c.l.b16 %v283
      %v420 = vunpack.c.h.b16 %v283
      %v421 = vunpack.c.l.b16 %v284
      %v422 = vunpack.c.l.b16 %v285
      %v423 = vunpack.c.h.b16 %v285
      %v424 = vunpack.c.l.b16 %v286
      %v425 = vunpack.c.h.b16 %v286
      %v426 = vunpack.c.l.b16 %v287
      %v427 = vunpack.c.l.b16 %v288
      %v428 = vunpack.c.h.b16 %v288
      %v429 = vunpack.c.l.b16 %v289
      %v430 = vunpack.c.h.b16 %v289
      %v431 = vunpack.c.l.b16 %v290
      %v432 = vunpack.c.l.b16 %v291
      %v433 = vunpack.c.h.b16 %v291
      %v434 = vunpack.c.l.b16 %v292
      %v435 = vunpack.c.h.b16 %v292
      %v436 = vunpack.c.l.b16 %v293
      %v437 = vunpack.c.l.b16 %v294
      %v438 = vunpack.c.h.b16 %v294
      %v439 = vunpack.c.l.b16 %v295
      %v440 = vunpack.c.h.b16 %v295
      %v441 = vunpack.c.l.b16 %v296
      %v442 = vunpack.c.l.b16 %v297
      %v443 = vunpack.c.h.b16 %v297
      %v444 = vunpack.c.l.b16 %v298
      %v445 = vunpack.c.h.b16 %v298
      %v446 = vunpack.c.l.b16 %v299
      %v447 = vunpack.c.l.b16 %v300
      %v448 = vunpack.c.h.b16 %v300
      %v449 = vunpack.c.l.b16 %v301
      %v450 = vunpack.c.h.b16 %v301
      %v451 = vunpack.c.l.b16 %v302
      %v452 = vunpack.c.l.b16 %v303
      %v453 = vunpack.c.h.b16 %v303
      %v454 = vunpack.c.l.b16 %v304
      %v455 = vunpack.c.h.b16 %v304
      %v456 = vunpack.c.l.b16 %v305
      %v457 = vpack.c.b16 %v422, %v417
      %v458 = vpack.c.b16 %v423, %v418
      %v459 = vpack.c.b16 %v424, %v419
      %v460 = vpack.c.b16 %v425, %v420
      %v461 = vpack.c.b16 %v426, %v421
      %v462 = vpack.c.b16 %v432, %v427
      %v463 = vpack.c.b16 %v433, %v428
      %v464 = vpack.c.b16 %v434, %v429
      %v465 = vpack.c.b16 %v435, %v430
      %v466 = vpack.c.b16 %v436, %v431
      %v467 = vpack.c.b16 %v442, %v437
      %v468 = vpack.c.b16 %v443, %v438
      %v469 = vpack.c.b16 %v444, %v439
      %v470 = vpack.c.b16 %v445, %v440
      %v471 = vpack.c.b16 %v446, %v441
      %v472 = vpack.c.b16 %v452, %v447
      %v473 = vpack.c.b16 %v453, %v448
      %v474 = vpack.c.b16 %v454, %v449
      %v475 = vpack.c.b16 %v455, %v450
      %v476 = vpack.c.b16 %v456, %v451
      %v577 = vunpack.c.l.b16 %v306
      %v578 = vunpack.c.l.b16 %v307
      %v579 = vunpack.c.l.b16 %v308
      %v580 = vunpack.c.l.b16 %v309
      %v581 = vunpack.c.l.b16 %v310
      %v582 = vunpack.c.l.b16 %v311
      %v583 = vunpack.c.l.b16 %v312
      %v584 = vunpack.c.l.b16 %v313
      %v585 = vunpack.c.l.b16 %v314
      %v586 = vunpack.c.l.b16 %v315
      %v587 = vunpack.c.l.b16 %v316
      %v588 = vunpack.c.l.b16 %v317
      %v589 = vunpack.c.l.b16 %v318
      %v590 = vunpack.c.l.b16 %v319
      %v591 = vunpack.c.l.b16 %v320
      %v592 = vunpack.c.l.b16 %v321
      %v593 = vunpack.c.l.b16 %v322
      %v594 = vunpack.c.l.b16 %v323
      %v595 = vunpack.c.l.b16 %v324
      %v596 = vunpack.c.l.b16 %v325
      %v597 = vunpack.c.l.b16 %v326
      %v598 = vunpack.c.l.b16 %v327
      %v599 = vunpack.c.l.b16 %v328
      %v600 = vunpack.c.l.b16 %v329
      %v601 = vunpack.c.l.b16 %v330
      %v602 = vunpack.c.l.b16 %v331
      %v603 = vunpack.c.l.b16 %v332
      %v604 = vunpack.c.l.b16 %v333
      %v605 = vunpack.c.l.b16 %v334
      %v606 = vunpack.c.l.b16 %v335
      %v607 = vunpack.c.l.b16 %v336
      %v608 = vunpack.c.l.b16 %v337
      %v609 = vunpack.c.l.b16 %v338
      %v610 = vunpack.c.l.b16 %v339
      %v611 = vunpack.c.l.b16 %v340
      %v612 = vunpack.c.l.b16 %v341
      %v613 = vunpack.c.l.b16 %v342
      %v614 = vunpack.c.l.b16 %v343
      %v615 = vunpack.c.l.b16 %v344
      %v616 = vunpack.c.l.b16 %v345
      %v617 = vunpack.c.l.b16 %v346
      %v618 = vunpack.c.l.b16 %v347
      %v619 = vunpack.c.l.b16 %v348
      %v620 = vunpack.c.l.b16 %v349
      %v621 = vunpack.c.l.b16 %v350
      %v622 = vunpack.c.l.b16 %v351
      %v623 = vunpack.c.l.b16 %v352
      %v624 = vunpack.c.l.b16 %v353
      %v625 = vunpack.c.l.b16 %v354
      %v626 = vunpack.c.l.b16 %v355
      %v627 = vunpack.c.l.b16 %v356
      %v628 = vunpack.c.l.b16 %v357
      %v629 = vunpack.c.l.b16 %v358
      %v630 = vunpack.c.l.b16 %v359
      %v631 = vunpack.c.l.b16 %v360
      %v632 = vunpack.c.l.b16 %v361
      %v633 = vunpack.c.l.b16 %v362
      %v634 = vunpack.c.l.b16 %v363
      %v635 = vunpack.c.l.b16 %v364
      %v636 = vunpack.c.l.b16 %v365
      %v637 = vunpack.c.l.b16 %v366
      %v638 = vunpack.c.l.b16 %v367
      %v639 = vunpack.c.l.b16 %v368
      %v640 = vunpack.c.l.b16 %v369
      %v641 = vunpack.c.l.b16 %v370
      %v642 = vunpack.c.l.b16 %v371
      %v643 = vunpack.c.l.b16 %v372
      %v644 = vunpack.c.l.b16 %v373
      %v645 = vunpack.c.l.b16 %v374
      %v646 = vunpack.c.l.b16 %v375
      %v647 = vunpack.c.l.b16 %v376
      %v648 = vunpack.c.l.b16 %v377
      %v649 = vunpack.c.l.b16 %v378
      %v650 = vunpack.c.l.b16 %v379
      %v651 = vunpack.c.l.b16 %v380
      %v652 = vunpack.c.l.b16 %v381
      %v653 = vunpack.c.l.b16 %v382
      %v654 = vunpack.c.l.b16 %v383
      %v655 = vunpack.c.l.b16 %v384
      %v656 = vunpack.c.l.b16 %v385
      %v657 = vpack.c.b16 %v578, %v577
      %v658 = vpack.c.b16 %v580, %v579
      %v659 = vpack.c.b16 %v582, %v581
      %v660 = vpack.c.b16 %v584, %v583
      %v661 = vpack.c.b16 %v586, %v585
      %v662 = vpack.c.b16 %v588, %v587
      %v663 = vpack.c.b16 %v590, %v589
      %v664 = vpack.c.b16 %v592, %v591
      %v665 = vpack.c.b16 %v594, %v593
      %v666 = vpack.c.b16 %v596, %v595
      %v667 = vpack.c.b16 %v598, %v597
      %v668 = vpack.c.b16 %v600, %v599
      %v669 = vpack.c.b16 %v602, %v601
      %v670 = vpack.c.b16 %v604, %v603
      %v671 = vpack.c.b16 %v606, %v605
      %v672 = vpack.c.b16 %v608, %v607
      %v673 = vpack.c.b16 %v610, %v609
      %v674 = vpack.c.b16 %v612, %v611
      %v675 = vpack.c.b16 %v614, %v613
      %v676 = vpack.c.b16 %v616, %v615
      %v677 = vpack.c.b16 %v618, %v617
      %v678 = vpack.c.b16 %v620, %v619
      %v679 = vpack.c.b16 %v622, %v621
      %v680 = vpack.c.b16 %v624, %v623
      %v681 = vpack.c.b16 %v626, %v625
      %v682 = vpack.c.b16 %v628, %v627
      %v683 = vpack.c.b16 %v630, %v629
      %v684 = vpack.c.b16 %v632, %v631
      %v685 = vpack.c.b16 %v634, %v633
      %v686 = vpack.c.b16 %v636, %v635
      %v687 = vpack.c.b16 %v638, %v637
      %v688 = vpack.c.b16 %v640, %v639
      %v689 = vpack.c.b16 %v642, %v641
      %v690 = vpack.c.b16 %v644, %v643
      %v691 = vpack.c.b16 %v646, %v645
      %v692 = vpack.c.b16 %v648, %v647
      %v693 = vpack.c.b16 %v650, %v649
      %v694 = vpack.c.b16 %v652, %v651
      %v695 = vpack.c.b16 %v654, %v653
      %v696 = vpack.c.b16 %v656, %v655
      %737 = vmatprep.subr.bf16.mxu0 0
      %738 = vmatpush1.bf16.msra.mxu0 %v657
      %739 = vmatprep.subr.bf16.mxu0 0
      %740 = vmatpush1.bf16.msra.mxu0 %v658
      %741 = vmatprep.subr.bf16.mxu0 0
      %742 = vmatpush1.bf16.msra.mxu0 %v659
      %743 = vmatprep.subr.bf16.mxu0 0
      %744 = vmatpush1.bf16.msra.mxu0 %v660
      %745 = vmatprep.subr.bf16.mxu0 0
      %746 = vmatpush1.bf16.msra.mxu0 %v661
      %747 = vmatprep.subr.bf16.mxu0 0
      %748 = vmatpush1.bf16.msra.mxu0 %v662
      %749 = vmatprep.subr.bf16.mxu0 0
      %750 = vmatpush1.bf16.msra.mxu0 %v663
      %751 = vmatprep.subr.bf16.mxu0 0
      %752 = vmatpush1.bf16.msra.mxu0 %v664
      %753 = vmatprep.subr.bf16.mxu0 0
      %754 = vmatpush1.bf16.msra.mxu0 %v665
      %755 = vmatprep.subr.bf16.mxu0 0
      %756 = vmatpush1.bf16.msra.mxu0 %v666
      %757 = vmatprep.subr.bf16.mxu0 0
      %758 = vmatpush1.bf16.msra.mxu0 %v667
      %759 = vmatprep.subr.bf16.mxu0 0
      %760 = vmatpush1.bf16.msra.mxu0 %v668
      %761 = vmatprep.subr.bf16.mxu0 0
      %762 = vmatpush1.bf16.msra.mxu0 %v669
      %763 = vmatprep.subr.bf16.mxu0 0
      %764 = vmatpush1.bf16.msra.mxu0 %v670
      %765 = vmatprep.subr.bf16.mxu0 0
      %766 = vmatpush1.bf16.msra.mxu0 %v671
      %767 = vmatprep.subr.bf16.mxu0 0
      %768 = vmatpush1.bf16.msra.mxu0 %v672
      %769 = vmatprep.mubr.bf16.mxu0 %v458
      %770 = vmatmul.mubr.bf16.gmra.mrb[0].mxu0 %v457
      %v771 = vpop.f32.mrb[0].mxu0
      %v772 = vadd.f32 %v391, %v771
      %v773 = vpop.f32.mrb[0].mxu0
      %v774 = vpop.f32.mrb[0].mxu0
      %v775 = vadd.f32 %v391, %v774
      %v776 = vpop.f32.mrb[0].mxu0
      %777 = vmatprep.mubr.bf16.mxu0 %v463
      %778 = vmatmul.mubr.bf16.gmra.mrb[0].mxu0 %v462
      %v779 = vpop.f32.mrb[0].mxu0
      %v780 = vadd.f32 %v391, %v779
      %v781 = vpop.f32.mrb[0].mxu0
      %v782 = vpop.f32.mrb[0].mxu0
      %v783 = vadd.f32 %v391, %v782
      %v784 = vpop.f32.mrb[0].mxu0
      %785 = vmatprep.mubr.bf16.mxu0 %v468
      %786 = vmatmul.mubr.bf16.gmra.mrb[0].mxu0 %v467
      %v787 = vpop.f32.mrb[0].mxu0
      %v788 = vadd.f32 %v391, %v787
      %v789 = vpop.f32.mrb[0].mxu0
      %v790 = vpop.f32.mrb[0].mxu0
      %v791 = vadd.f32 %v391, %v790
      %v792 = vpop.f32.mrb[0].mxu0
      %793 = vmatprep.mubr.bf16.mxu0 %v473
      %794 = vmatmul.mubr.bf16.gmra.mrb[0].mxu0 %v472
      %v795 = vpop.f32.mrb[0].mxu0
      %v796 = vadd.f32 %v391, %v795
      %v797 = vpop.f32.mrb[0].mxu0
      %v798 = vpop.f32.mrb[0].mxu0
      %v799 = vadd.f32 %v391, %v798
      %v800 = vpop.f32.mrb[0].mxu0
      %801 = vdwg.mxu0
      %802 = vmatprep.subr.bf16.mxu0 0
      %803 = vmatpush1.bf16.msra.mxu0 %v673
      %804 = vmatprep.subr.bf16.mxu0 0
      %805 = vmatpush1.bf16.msra.mxu0 %v674
      %806 = vmatprep.subr.bf16.mxu0 0
      %807 = vmatpush1.bf16.msra.mxu0 %v675
      %808 = vmatprep.subr.bf16.mxu0 0
      %809 = vmatpush1.bf16.msra.mxu0 %v676
      %810 = vmatprep.subr.bf16.mxu0 0
      %811 = vmatpush1.bf16.msra.mxu0 %v677
      %812 = vmatprep.subr.bf16.mxu0 0
      %813 = vmatpush1.bf16.msra.mxu0 %v678
      %814 = vmatprep.subr.bf16.mxu0 0
      %815 = vmatpush1.bf16.msra.mxu0 %v679
      %816 = vmatprep.subr.bf16.mxu0 0
      %817 = vmatpush1.bf16.msra.mxu0 %v680
      %818 = vmatprep.subr.bf16.mxu0 0
      %819 = vmatpush1.bf16.msra.mxu0 %v681
      %820 = vmatprep.subr.bf16.mxu0 0
      %821 = vmatpush1.bf16.msra.mxu0 %v682
      %822 = vmatprep.subr.bf16.mxu0 0
      %823 = vmatpush1.bf16.msra.mxu0 %v683
      %824 = vmatprep.subr.bf16.mxu0 0
      %825 = vmatpush1.bf16.msra.mxu0 %v684
      %826 = vmatprep.subr.bf16.mxu0 0
      %827 = vmatpush1.bf16.msra.mxu0 %v685
      %828 = vmatprep.subr.bf16.mxu0 0
      %829 = vmatpush1.bf16.msra.mxu0 %v686
      %830 = vmatprep.subr.bf16.mxu0 0
      %831 = vmatpush1.bf16.msra.mxu0 %v687
      %832 = vmatprep.subr.bf16.mxu0 0
      %833 = vmatpush1.bf16.msra.mxu0 %v688
      %834 = vmatprep.mubr.bf16.mxu0 %v460
      %835 = vmatmul.mubr.bf16.gmra.mrb[0].mxu0 %v459
      %v836 = vpop.f32.mrb[0].mxu0
      %v837 = vadd.f32 %v772, %v836
      %v838 = vpop.f32.mrb[0].mxu0
      %v839 = vpop.f32.mrb[0].mxu0
      %v840 = vadd.f32 %v775, %v839
      %v841 = vpop.f32.mrb[0].mxu0
      %842 = vmatprep.mubr.bf16.mxu0 %v465
      %843 = vmatmul.mubr.bf16.gmra.mrb[0].mxu0 %v464
      %v844 = vpop.f32.mrb[0].mxu0
      %v845 = vadd.f32 %v780, %v844
      %v846 = vpop.f32.mrb[0].mxu0
      %v847 = vpop.f32.mrb[0].mxu0
      %v848 = vadd.f32 %v783, %v847
      %v849 = vpop.f32.mrb[0].mxu0
      %850 = vmatprep.mubr.bf16.mxu0 %v470
      %851 = vmatmul.mubr.bf16.gmra.mrb[0].mxu0 %v469
      %v852 = vpop.f32.mrb[0].mxu0
      %v853 = vadd.f32 %v788, %v852
      %v854 = vpop.f32.mrb[0].mxu0
      %v855 = vpop.f32.mrb[0].mxu0
      %v856 = vadd.f32 %v791, %v855
      %v857 = vpop.f32.mrb[0].mxu0
      %858 = vmatprep.mubr.bf16.mxu0 %v475
      %859 = vmatmul.mubr.bf16.gmra.mrb[0].mxu0 %v474
      %v860 = vpop.f32.mrb[0].mxu0
      %v861 = vadd.f32 %v796, %v860
      %v862 = vpop.f32.mrb[0].mxu0
      %v863 = vpop.f32.mrb[0].mxu0
      %v864 = vadd.f32 %v799, %v863
      %v865 = vpop.f32.mrb[0].mxu0
      %866 = vdwg.mxu0
      %867 = vmatprep.subr.bf16.mxu0 0
      %868 = vmatpush1.bf16.msra.mxu0 %v689
      %869 = vmatprep.subr.bf16.mxu0 0
      %870 = vmatpush1.bf16.msra.mxu0 %v690
      %871 = vmatprep.subr.bf16.mxu0 0
      %872 = vmatpush1.bf16.msra.mxu0 %v691
      %873 = vmatprep.subr.bf16.mxu0 0
      %874 = vmatpush1.bf16.msra.mxu0 %v692
      %875 = vmatprep.subr.bf16.mxu0 0
      %876 = vmatpush1.bf16.msra.mxu0 %v693
      %877 = vmatprep.subr.bf16.mxu0 0
      %878 = vmatpush1.bf16.msra.mxu0 %v694
      %879 = vmatprep.subr.bf16.mxu0 0
      %880 = vmatpush1.bf16.msra.mxu0 %v695
      %881 = vmatprep.subr.bf16.mxu0 0
      %882 = vmatpush1.bf16.msra.mxu0 %v696
      %883 = vmatprep.subr.bf16.mxu0 0
      %884 = vmatpush1.bf16.msra.mxu0 0
      %885 = vmatprep.subr.bf16.mxu0 0
      %886 = vmatpush1.bf16.msra.mxu0 0
      %887 = vmatprep.subr.bf16.mxu0 0
      %888 = vmatpush1.bf16.msra.mxu0 0
      %889 = vmatprep.subr.bf16.mxu0 0
      %890 = vmatpush1.bf16.msra.mxu0 0
      %891 = vmatprep.subr.bf16.mxu0 0
      %892 = vmatpush1.bf16.msra.mxu0 0
      %893 = vmatprep.subr.bf16.mxu0 0
      %894 = vmatpush1.bf16.msra.mxu0 0
      %895 = vmatprep.subr.bf16.mxu0 0
      %896 = vmatpush1.bf16.msra.mxu0 0
      %897 = vmatprep.subr.bf16.mxu0 0
      %898 = vmatpush1.bf16.msra.mxu0 0
      %899 = vmatprep.mubr.bf16.mxu0 0
      %900 = vmatmul.mubr.bf16.gmra.mrb[0].mxu0 %v461
      %v901 = vpop.f32.mrb[0].mxu0
      %v902 = vadd.f32 %v837, %v901
      %v903 = vpop.f32.mrb[0].mxu0
      %v904 = vpop.f32.mrb[0].mxu0
      %v905 = vadd.f32 %v840, %v904
      %v906 = vpop.f32.mrb[0].mxu0
      %907 = vmatprep.mubr.bf16.mxu0 0
      %908 = vmatmul.mubr.bf16.gmra.mrb[0].mxu0 %v466
      %v909 = vpop.f32.mrb[0].mxu0
      %v910 = vadd.f32 %v845, %v909
      %v911 = vpop.f32.mrb[0].mxu0
      %v912 = vpop.f32.mrb[0].mxu0
      %v913 = vadd.f32 %v848, %v912
      %v914 = vpop.f32.mrb[0].mxu0
      %915 = vmatprep.mubr.bf16.mxu0 0
      %916 = vmatmul.mubr.bf16.gmra.mrb[0].mxu0 %v471
      %v917 = vpop.f32.mrb[0].mxu0
      %v918 = vadd.f32 %v853, %v917
      %v919 = vpop.f32.mrb[0].mxu0
      %v920 = vpop.f32.mrb[0].mxu0
      %v921 = vadd.f32 %v856, %v920
      %v922 = vpop.f32.mrb[0].mxu0
      %923 = vmatprep.mubr.bf16.mxu0 0
      %924 = vmatmul.mubr.bf16.gmra.mrb[0].mxu0 %v476
      %v925 = vpop.f32.mrb[0].mxu0
      %v926 = vadd.f32 %v861, %v925
      %v927 = vpop.f32.mrb[0].mxu0
      %v928 = vpop.f32.mrb[0].mxu0
      %v929 = vadd.f32 %v864, %v928
      %v930 = vpop.f32.mrb[0].mxu0
      %931 = vdwg.mxu0
      %v932 = vmax.f32 %v902, 0.0
      %v933 = vmax.f32 %v905, 0.0
      %v934 = vmax.f32 %v910, 0.0
      %v935 = vmax.f32 %v913, 0.0
      %v936 = vmax.f32 %v918, 0.0
      %v937 = vmax.f32 %v921, 0.0
      %v938 = vmax.f32 %v926, 0.0
      %v939 = vmax.f32 %v929, 0.0
      %v940 = vpack.c.bf16 %v933, %v932
      %v941 = vpack.c.bf16 %v935, %v934
      %v942 = vpack.c.bf16 %v937, %v936
      %v943 = vpack.c.bf16 %v939, %v938
      %v948 = vunpack.c.l.b16 %v940
      %v949 = vunpack.c.h.b16 %v940
      %v950 = vunpack.c.l.b16 %v941
      %v951 = vunpack.c.h.b16 %v941
      %v952 = vunpack.c.l.b16 %v942
      %v953 = vunpack.c.h.b16 %v942
      %v954 = vunpack.c.l.b16 %v943
      %v955 = vunpack.c.h.b16 %v943
      %v956 = vpack.c.b16 %v948, %v948
      %v957 = vpack.c.b16 %v949, %v949
      %v958 = vpack.c.b16 %v950, %v950
      %v959 = vpack.c.b16 %v951, %v951
      %v960 = vpack.c.b16 %v952, %v952
      %v961 = vpack.c.b16 %v953, %v953
      %v962 = vpack.c.b16 %v954, %v954
      %v963 = vpack.c.b16 %v955, %v955
      %972 = vst [vmem:[%s271] sm:$0xf] %v956
      %973 = vst [vmem:[%s271 + $0x4] sm:$0xf] %v957
      %974 = vst [vmem:[%s271 + $0x8] sm:$0xf] %v958
      %975 = vst [vmem:[%s271 + $0xc] sm:$0xf] %v959
      %976 = vst [vmem:[%s271 + $0x10] sm:$0xf] %v960
      %977 = vst [vmem:[%s271 + $0x14] sm:$0xf] %v961
      %978 = vst [vmem:[%s271 + $0x18] sm:$0xf] %v962
      %979 = vst [vmem:[%s271 + $0x1c] sm:$0xf] %v963
      %v980 = vadd.f32 %v932, %v933
      %v981 = vadd.f32 %v980, %v934
      %v982 = vadd.f32 %v981, %v935
      %v983 = vadd.f32 %v982, %v936
      %v984 = vadd.f32 %v983, %v937
      %v985 = vadd.f32 %v984, %v938
      %v986 = vadd.f32 %v985, %v939
      %v987 = vrot.slane %v986, 4
      %v988 = vadd.f32 %v986, %v987
      %v989 = vrot.slane %v988, 2
      %v990 = vadd.f32 %v988, %v989
      %v991 = vrot.slane %v990, 1
      %v992 = vadd.f32 %v990, %v991
      %993 = vst [vmem:[%s278] sm:$0x1] %v992
      %v994 = vmul.f32 %v932, %v932
      %v995 = vmul.f32 %v933, %v933
      %v996 = vmul.f32 %v934, %v934
      %v997 = vmul.f32 %v935, %v935
      %v998 = vmul.f32 %v936, %v936
      %v999 = vmul.f32 %v937, %v937
      %v1000 = vmul.f32 %v938, %v938
      %v1001 = vmul.f32 %v939, %v939
      %v1002 = vadd.f32 %v994, %v995
      %v1003 = vadd.f32 %v1002, %v996
      %v1004 = vadd.f32 %v1003, %v997
      %v1005 = vadd.f32 %v1004, %v998
      %v1006 = vadd.f32 %v1005, %v999
      %v1007 = vadd.f32 %v1006, %v1000
      %v1008 = vadd.f32 %v1007, %v1001
      %v1009 = vrot.slane %v1008, 4
      %v1010 = vadd.f32 %v1008, %v1009
      %v1011 = vrot.slane %v1010, 2
      %v1012 = vadd.f32 %v1010, %v1011
      %v1013 = vrot.slane %v1012, 1
      %v1014 = vadd.f32 %v1012, %v1013
      %1015 = vst [vmem:[%s278 + $0x1] sm:$0x1] %v1014
      %s1016 = smul.u32 8, %s21
      %p1017 = scmp.lt.s32.totalorder %s20, 0
      %s1018 = scalar_select %p1017, %s20, 0
      %p1019 = scmp.lt.s32.totalorder %s1016, 15
      %s1020 = scalar_select %p1019, %s1016, 15
      %s1021 = smul.addr %s1018, 16
      %s1022 = sadd.s32 %s1020, %s1021
      %s1023 = smul.addr %s1022, 4
      %s1024 = scalar_lea.vmem %s3, %s1023
      %s1025 = smul.u32 %s20, 2
      %s1026 = sadd.s32 %s1025, %s21
      %p1027 = scmp.lt.s32.totalorder %s1026, 1
      %s1028 = scalar_select %p1027, %s1026, 1
      %s1029 = smul.addr %s1028, 2
      %s1030 = scalar_lea.vmem %s4, %s1029
      // Predicated region
      $region33: #{forward.19} parent=31 // pred_check
        %p1031 = pneg %p123
      $region34: #{forward.19} parent=31 // pred_check_branch
        %1033 = sbr.rel (%p1031) target = $region36
      $region35: #{forward.19} parent=31 // pred_region
        %s1034 = smul.u32 8, %s21
      $region36: #{forward.19} parent=31 // pred_fallthru
        _
      // Predicated region
      $region37: #{forward.19} parent=31 // pred_check
        %p1035 = pneg %p153
      $region38: #{forward.19} parent=31 // pred_check_branch
        %1037 = sbr.rel (%p1035) target = $region40
      $region39: #{forward.19} parent=31 // pred_region
        %s1038 = smul.u32 %s20, 2
        %s1039 = sadd.s32 %s1038, %s21
      $region40: #{forward.19} parent=31 // pred_fallthru
        _
    $region32: #{forward.19} parent=5 // pred_fallthru
      _
    %p1040 = scmp.le.s32.totalorder 2, %s11
    // Predicated region
    $region41: #{forward.19} parent=5 // pred_check
      %p1041 = pneg %p1040
    $region42: #{forward.19} parent=5 // pred_check_branch
      %1043 = sbr.rel (%p1041) target = $region44
    $region43: #{forward.19} parent=5 // pred_region
      %s1044 = ssub.s32 %s11, 2
      // Predicated region
      $region45: #{forward.19} parent=43 // pred_check
        %p1045 = pneg %p129
      $region46: #{forward.19} parent=43 // pred_check_branch
        %1047 = sbr.rel (%p1045) target = $region48
      $region47: #{forward.19} parent=43 // pred_region
        %s1048 = smul.u32 8, %s23
        %p1049 = scmp.lt.s32.totalorder %s22, 0
        %s1050 = scalar_select %p1049, %s22, 0
        %p1051 = scmp.lt.s32.totalorder %s1048, 15
        %s1052 = scalar_select %p1051, %s1048, 15
        %s1053 = smul.addr %s1050, 16
        %s1054 = sadd.s32 %s1052, %s1053
        %s1055 = smul.addr %s1054, 4
        %s1056 = scalar_lea.vmem %s3, %s1055
      $region48: #{forward.19} parent=43 // pred_fallthru
        _
      // Predicated region
      $region49: #{forward.19} parent=43 // pred_check
        %p1057 = pneg %p159
      $region50: #{forward.19} parent=43 // pred_check_branch
        %1059 = sbr.rel (%p1057) target = $region52
      $region51: #{forward.19} parent=43 // pred_region
        %s1060 = smul.u32 %s22, 2
        %s1061 = sadd.s32 %s1060, %s23
        %p1062 = scmp.lt.s32.totalorder %s1061, 1
        %s1063 = scalar_select %p1062, %s1061, 1
        %s1064 = smul.addr %s1063, 2
        %s1065 = scalar_lea.vmem %s4, %s1064
      $region52: #{forward.19} parent=43 // pred_fallthru
        _
    $region44: #{forward.19} parent=5 // pred_fallthru
      _
  $region6: #{forward.19} parent=0 // loop_footer
    %s15 = sadd.s32 1, %s11
  $region7: #{forward.19} parent=0 // loop_footer_branch
    %10 = sbr.rel target = $region3
  $region8: #{forward.19} parent=0 // loop_exit
    _

// kernel: forward.20
$region0: #{forward.20}
  #allocation0 [shape = 'u32[]', space=smem, size = 0x4, offset = 0x4, fixed_abs, tag = 'smem constant byte address 0x4 - core index']
  #allocation1 [shape = 'u32[144,128]{1,0:T(1,128)}', space=vmem, size = 0x12000, scoped, tag = 'internal scratch']
  %s0 = inlined_call_operand.vmem [shape: bf16[1,32,640], index: 0, kind: input, shape index: {}]
  %s1 = inlined_call_operand.vmem [shape: bf16[1,640,128], index: 1, kind: input, shape index: {}]
  %s2 = inlined_call_operand.vmem [shape: f32[1,128], index: 2, kind: input, shape index: {}]
  %s3 = inlined_call_operand.vmem [shape: bf16[1,32,128], index: 3, kind: output, shape index: {0}]
  %s4 = inlined_call_operand.vmem [shape: f32[2,2,128], index: 4, kind: output, shape index: {1}]
  %5 = xla_tuple %s3, %s4
  %s6 = sld [smem:[#allocation0]]
  $region53: #{forward.20} parent=0
    _
  %s8 = ssub.s32 1, %s6
  %s9 = scalar_select 0, %s8, %s6
  loop: start=0, step=1, limit=4
  $region2: #{forward.20} parent=0 // loop_pre_header
    _
  $region3: #{forward.20} parent=0 // loop_header
    %s11 = sphi 0, %s15
    %p12 = scmp.ge.s32.totalorder %s11, 4
    %s18 = sphi 0, %s30
    %s19 = sphi 0, %s26
    %s20 = sphi 0, %s18
    %s21 = sphi 0, %s19
    %s22 = sphi 0, %s20
    %s23 = sphi 0, %s21
    %s35 = sphi 0, %s37
    %s38 = sphi 0, %s35
    %s39 = sphi 0, %s38
    %s55 = sphi 0, %s39
    %s61 = sphi 0, %s63
    %s64 = sphi 0, %s61
    %s65 = sphi 0, %s64
    %s81 = sphi 0, %s65
    %s85 = sphi 0, %s85
    %s87 = sphi 0, %s85
    %s88 = sphi 0, %s87
    %s102 = sphi 0, %s88
    %s110 = sphi 0, %s112
    %s113 = sphi 0, %s110
    %s114 = sphi 0, %s113
    %s130 = sphi 0, %s114
    %s140 = sphi 0, %s142
    %s143 = sphi 0, %s140
    %s144 = sphi 0, %s143
    %s160 = sphi 0, %s144
  $region4: #{forward.20} parent=0 // loop_header_branch
    %14 = sbr.rel (%p12) target = $region8
  $region5: #{forward.20} parent=0 // loop_body
    %s16 = ssub.s32 %s11, 1
    %s17 = ssub.s32 %s11, 2
    %s24 = sadd.s32 1, %s19
    %p25 = scmp.ge.s32.totalorder %s24, 2
    %s26 = scalar_select %p25, 0, %s24
    %s27 = sadd.s32 1, %s18
    %s28 = scalar_select %p25, %s27, %s18
    %p29 = scmp.ge.s32.totalorder %s28, 1
    %s30 = scalar_select %p29, 0, %s28
    %s31 = ssub.s32 %s18, %s30
    %s32 = ssub.s32 %s19, %s26
    %s33 = sor.u32 %s31, %s32
    %p34 = scmp.eq.s32.totalorder %s33, 0
    %s36 = sadd.s32 %s35, 1
    %s37 = scalar_select %p34, %s35, %s36
    %p40 = pneg %p34
    %p41 = scmp.eq.s32.totalorder %s11, 1
    %p42 = por %p40, %p41
    %p43 = scmp.ne.s32.totalorder %s35, %s38
    %p44 = scmp.eq.s32.totalorder %s11, 0
    %p45 = por %p43, %p44
    %p46 = scmp.ne.s32.totalorder %s35, %s38
    %p47 = scmp.eq.s32.totalorder %s16, 1
    %p48 = por %p46, %p47
    %p49 = scmp.ne.s32.totalorder %s38, %s39
    %p50 = scmp.eq.s32.totalorder %s16, 0
    %p51 = por %p49, %p50
    %p52 = scmp.ne.s32.totalorder %s38, %s39
    %p53 = scmp.eq.s32.totalorder %s17, 1
    %p54 = por %p52, %p53
    %p56 = scmp.ne.s32.totalorder %s39, %s55
    %p57 = scmp.eq.s32.totalorder %s17, 0
    %p58 = por %p56, %p57
    %s59 = ssub.s32 %s18, %s30
    %p60 = scmp.eq.s32.totalorder %s59, 0
    %s62 = sadd.s32 %s61, 1
    %s63 = scalar_select %p60, %s61, %s62
    %p66 = pneg %p60
    %p67 = scmp.eq.s32.totalorder %s11, 1
    %p68 = por %p66, %p67
    %p69 = scmp.ne.s32.totalorder %s61, %s64
    %p70 = scmp.eq.s32.totalorder %s11, 0
    %p71 = por %p69, %p70
    %p72 = scmp.ne.s32.totalorder %s61, %s64
    %p73 = scmp.eq.s32.totalorder %s16, 1
    %p74 = por %p72, %p73
    %p75 = scmp.ne.s32.totalorder %s64, %s65
    %p76 = scmp.eq.s32.totalorder %s16, 0
    %p77 = por %p75, %p76
    %p78 = scmp.ne.s32.totalorder %s64, %s65
    %p79 = scmp.eq.s32.totalorder %s17, 1
    %p80 = por %p78, %p79
    %p82 = scmp.ne.s32.totalorder %s65, %s81
    %p83 = scmp.eq.s32.totalorder %s17, 0
    %p84 = por %p82, %p83
    %s86 = sadd.s32 %s85, 1
    %p89 = scmp.eq.s32.totalorder %s11, 1
    %p90 = scmp.ne.s32.totalorder %s85, %s87
    %p91 = scmp.eq.s32.totalorder %s11, 0
    %p92 = por %p90, %p91
    %p93 = scmp.ne.s32.totalorder %s85, %s87
    %p94 = scmp.eq.s32.totalorder %s16, 1
    %p95 = por %p93, %p94
    %p96 = scmp.ne.s32.totalorder %s87, %s88
    %p97 = scmp.eq.s32.totalorder %s16, 0
    %p98 = por %p96, %p97
    %p99 = scmp.ne.s32.totalorder %s87, %s88
    %p100 = scmp.eq.s32.totalorder %s17, 1
    %p101 = por %p99, %p100
    %p103 = scmp.ne.s32.totalorder %s88, %s102
    %p104 = scmp.eq.s32.totalorder %s17, 0
    %p105 = por %p103, %p104
    %s106 = ssub.s32 %s18, %s30
    %s107 = ssub.s32 %s19, %s26
    %s108 = sor.u32 %s106, %s107
    %p109 = scmp.eq.s32.totalorder %s108, 0
    %s111 = sadd.s32 %s110, 1
    %s112 = scalar_select %p109, %s110, %s111
    %p115 = pneg %p109
    %p116 = scmp.eq.s32.totalorder %s11, 1
    %p117 = por %p115, %p116
    %p118 = scmp.ne.s32.totalorder %s110, %s113
    %p119 = scmp.eq.s32.totalorder %s11, 0
    %p120 = por %p118, %p119
    %p121 = scmp.ne.s32.totalorder %s110, %s113
    %p122 = scmp.eq.s32.totalorder %s16, 1
    %p123 = por %p121, %p122
    %p124 = scmp.ne.s32.totalorder %s113, %s114
    %p125 = scmp.eq.s32.totalorder %s16, 0
    %p126 = por %p124, %p125
    %p127 = scmp.ne.s32.totalorder %s113, %s114
    %p128 = scmp.eq.s32.totalorder %s17, 1
    %p129 = por %p127, %p128
    %p131 = scmp.ne.s32.totalorder %s114, %s130
    %p132 = scmp.eq.s32.totalorder %s17, 0
    %p133 = por %p131, %p132
    %s134 = smul.u32 %s18, 2
    %s135 = sadd.s32 %s134, %s19
    %s136 = smul.u32 %s30, 2
    %s137 = sadd.s32 %s136, %s26
    %s138 = ssub.s32 %s135, %s137
    %p139 = scmp.eq.s32.totalorder %s138, 0
    %s141 = sadd.s32 %s140, 1
    %s142 = scalar_select %p139, %s140, %s141
    %p145 = pneg %p139
    %p146 = scmp.eq.s32.totalorder %s11, 1
    %p147 = por %p145, %p146
    %p148 = scmp.ne.s32.totalorder %s140, %s143
    %p149 = scmp.eq.s32.totalorder %s11, 0
    %p150 = por %p148, %p149
    %p151 = scmp.ne.s32.totalorder %s140, %s143
    %p152 = scmp.eq.s32.totalorder %s16, 1
    %p153 = por %p151, %p152
    %p154 = scmp.ne.s32.totalorder %s143, %s144
    %p155 = scmp.eq.s32.totalorder %s16, 0
    %p156 = por %p154, %p155
    %p157 = scmp.ne.s32.totalorder %s143, %s144
    %p158 = scmp.eq.s32.totalorder %s17, 1
    %p159 = por %p157, %p158
    %p161 = scmp.ne.s32.totalorder %s144, %s160
    %p162 = scmp.eq.s32.totalorder %s17, 0
    %p163 = por %p161, %p162
    %p164 = scmp.le.s32.totalorder 1, %s11
    %p165 = scmp.lt.s32.totalorder %s11, 3
    %p166 = pnand %p164, %p165
    %p167 = pneg %p166
    // Predicated region
    $region9: #{forward.20} parent=5 // pred_check
      _
    $region10: #{forward.20} parent=5 // pred_check_branch
      %169 = sbr.rel (%p166) target = $region12
    $region11: #{forward.20} parent=5 // pred_region
      %s170 = ssub.s32 %s11, 1
      // Predicated region
      $region13: #{forward.20} parent=11 // pred_check
        %p171 = pneg %p77
      $region14: #{forward.20} parent=11 // pred_check_branch
        %173 = sbr.rel (%p171) target = $region16
      $region15: #{forward.20} parent=11 // pred_region
        %p174 = scmp.lt.s32.totalorder %s20, 0
        %s175 = scalar_select %p174, %s20, 0
        %s176 = smul.addr %s175, 80
        %s177 = smul.addr %s176, 4
        %s178 = scalar_lea.vmem %s1, %s177
      $region16: #{forward.20} parent=11 // pred_fallthru
        _
      // Predicated region
      $region17: #{forward.20} parent=11 // pred_check
        %p179 = pneg %p98
      $region18: #{forward.20} parent=11 // pred_check_branch
        %181 = sbr.rel (%p179) target = $region20
      $region19: #{forward.20} parent=11 // pred_region
        _
      $region20: #{forward.20} parent=11 // pred_fallthru
        _
    $region12: #{forward.20} parent=5 // pred_fallthru
      _
    %p182 = scmp.lt.s32.totalorder %s11, 2
    // Predicated region
    $region21: #{forward.20} parent=5 // pred_check
      %p183 = pneg %p182
    $region22: #{forward.20} parent=5 // pred_check_branch
      %185 = sbr.rel (%p183) target = $region24
    $region23: #{forward.20} parent=5 // pred_region
      // Predicated region
      $region25: #{forward.20} parent=23 // pred_check
        %p186 = pneg %p45
      $region26: #{forward.20} parent=23 // pred_check_branch
        %188 = sbr.rel (%p186) target = $region28
      $region27: #{forward.20} parent=23 // pred_region
        %s189 = smul.u32 2, %s19
        %p190 = scmp.lt.s32.totalorder %s18, 0
        %s191 = scalar_select %p190, %s18, 0
        %p192 = scmp.lt.s32.totalorder %s189, 3
        %s193 = scalar_select %p192, %s189, 3
        %s194 = smul.addr %s193, 5
        %s195 = smul.addr %s191, 20
        %s196 = sadd.s32 %s194, %s195
        %s197 = smul.addr %s196, 4
        %s198 = scalar_lea.vmem %s0, %s197
        %s199 = smul.u32 2, %s19
      $region28: #{forward.20} parent=23 // pred_fallthru
        _
    $region24: #{forward.20} parent=5 // pred_fallthru
      _
    %p200 = scmp.le.s32.totalorder 1, %s11
    %p201 = scmp.lt.s32.totalorder %s11, 3
    %p202 = pnand %p200, %p201
    %p203 = pneg %p202
    // Predicated region
    $region29: #{forward.20} parent=5 // pred_check
      _
    $region30: #{forward.20} parent=5 // pred_check_branch
      %205 = sbr.rel (%p202) target = $region32
    $region31: #{forward.20} parent=5 // pred_region
      %s206 = ssub.s32 %s11, 1
      %s207 = smul.u32 2, %s21
      %p208 = scmp.lt.s32.totalorder %s20, 0
      %s209 = scalar_select %p208, %s20, 0
      %p210 = scmp.lt.s32.totalorder %s207, 3
      %s211 = scalar_select %p210, %s207, 3
      %s212 = smul.addr %s211, 5
      %s213 = smul.addr %s209, 20
      %s214 = sadd.s32 %s212, %s213
      %s215 = smul.addr %s214, 4
      %s216 = scalar_lea.vmem %s0, %s215
      %p217 = pneg %p51
      %p218 = pneg %p48
      %p219 = scmp.lt.s32.totalorder %s20, 0
      %s220 = scalar_select %p219, %s20, 0
      %s221 = smul.addr %s220, 80
      %s222 = smul.addr %s221, 4
      %s223 = scalar_lea.vmem %s1, %s222
      %p224 = pneg %p77
      %p225 = pneg %p74
      %p226 = pneg %p98
      %p227 = pneg %p95
      %p228 = pneg %p126
      %p229 = pneg %p123
      %s230 = smul.u32 2, %s21
      %p231 = scmp.lt.s32.totalorder %s20, 0
      %s232 = scalar_select %p231, %s20, 0
      %p233 = scmp.lt.s32.totalorder %s230, 3
      %s234 = scalar_select %p233, %s230, 3
      %s235 = smul.addr %s232, 4
      %s236 = sadd.s32 %s234, %s235
      %s237 = smul.addr %s236, 4
      %s238 = scalar_lea.vmem %s3, %s237
      %p239 = pneg %p156
      %p240 = pneg %p153
      %s241 = smul.u32 %s20, 2
      %s242 = sadd.s32 %s241, %s21
      %p243 = scmp.lt.s32.totalorder %s242, 1
      %s244 = scalar_select %p243, %s242, 1
      %s245 = smul.addr %s244, 2
      %s246 = scalar_lea.vmem %s4, %s245
      %s247 = smul.u32 2, %s21
      %p248 = scmp.lt.s32.totalorder %s20, 0
      %s249 = scalar_select %p248, %s20, 0
      %p250 = scmp.lt.s32.totalorder %s247, 3
      %s251 = scalar_select %p250, %s247, 3
      %s252 = smul.addr %s251, 5
      %s253 = smul.addr %s249, 20
      %s254 = sadd.s32 %s252, %s253
      %s255 = smul.addr %s254, 4
      %s256 = scalar_lea.vmem %s0, %s255
      %s257 = smul.u32 2, %s21
      %p258 = scmp.lt.s32.totalorder %s20, 0
      %s259 = scalar_select %p258, %s20, 0
      %s260 = smul.addr %s259, 80
      %s261 = smul.addr %s260, 4
      %s262 = scalar_lea.vmem %s1, %s261
      %s263 = smul.u32 2, %s21
      %p264 = scmp.lt.s32.totalorder %s20, 0
      %s265 = scalar_select %p264, %s20, 0
      %p266 = scmp.lt.s32.totalorder %s263, 3
      %s267 = scalar_select %p266, %s263, 3
      %s268 = smul.addr %s265, 4
      %s269 = sadd.s32 %s267, %s268
      %s270 = smul.addr %s269, 4
      %s271 = scalar_lea.vmem %s3, %s270
      %s272 = smul.u32 2, %s21
      %s273 = smul.u32 %s20, 2
      %s274 = sadd.s32 %s273, %s21
      %p275 = scmp.lt.s32.totalorder %s274, 1
      %s276 = scalar_select %p275, %s274, 1
      %s277 = smul.addr %s276, 2
      %s278 = scalar_lea.vmem %s4, %s277
      %s279 = smul.u32 %s20, 2
      %s280 = sadd.s32 %s279, %s21
      %v282 = vld [vmem:[%s256] sm:$0xff]
      %v283 = vld [vmem:[%s256 + $0x8] sm:$0xff]
      %v284 = vld [vmem:[%s256 + $0x10] sm:$0xf]
      %v285 = vld [vmem:[%s256 + $0x14] sm:$0xff]
      %v286 = vld [vmem:[%s256 + $0x1c] sm:$0xff]
      %v287 = vld [vmem:[%s256 + $0x24] sm:$0xf]
      %v288 = vld [vmem:[%s262] sm:$0xf]
      %v289 = vld [vmem:[%s262 + $0x4] sm:$0xf]
      %v290 = vld [vmem:[%s262 + $0x8] sm:$0xf]
      %v291 = vld [vmem:[%s262 + $0xc] sm:$0xf]
      %v292 = vld [vmem:[%s262 + $0x10] sm:$0xf]
      %v293 = vld [vmem:[%s262 + $0x14] sm:$0xf]
      %v294 = vld [vmem:[%s262 + $0x18] sm:$0xf]
      %v295 = vld [vmem:[%s262 + $0x1c] sm:$0xf]
      %v296 = vld [vmem:[%s262 + $0x20] sm:$0xf]
      %v297 = vld [vmem:[%s262 + $0x24] sm:$0xf]
      %v298 = vld [vmem:[%s262 + $0x28] sm:$0xf]
      %v299 = vld [vmem:[%s262 + $0x2c] sm:$0xf]
      %v300 = vld [vmem:[%s262 + $0x30] sm:$0xf]
      %v301 = vld [vmem:[%s262 + $0x34] sm:$0xf]
      %v302 = vld [vmem:[%s262 + $0x38] sm:$0xf]
      %v303 = vld [vmem:[%s262 + $0x3c] sm:$0xf]
      %v304 = vld [vmem:[%s262 + $0x40] sm:$0xf]
      %v305 = vld [vmem:[%s262 + $0x44] sm:$0xf]
      %v306 = vld [vmem:[%s262 + $0x48] sm:$0xf]
      %v307 = vld [vmem:[%s262 + $0x4c] sm:$0xf]
      %v308 = vld [vmem:[%s262 + $0x50] sm:$0xf]
      %v309 = vld [vmem:[%s262 + $0x54] sm:$0xf]
      %v310 = vld [vmem:[%s262 + $0x58] sm:$0xf]
      %v311 = vld [vmem:[%s262 + $0x5c] sm:$0xf]
      %v312 = vld [vmem:[%s262 + $0x60] sm:$0xf]
      %v313 = vld [vmem:[%s262 + $0x64] sm:$0xf]
      %v314 = vld [vmem:[%s262 + $0x68] sm:$0xf]
      %v315 = vld [vmem:[%s262 + $0x6c] sm:$0xf]
      %v316 = vld [vmem:[%s262 + $0x70] sm:$0xf]
      %v317 = vld [vmem:[%s262 + $0x74] sm:$0xf]
      %v318 = vld [vmem:[%s262 + $0x78] sm:$0xf]
      %v319 = vld [vmem:[%s262 + $0x7c] sm:$0xf]
      %v320 = vld [vmem:[%s262 + $0x80] sm:$0xf]
      %v321 = vld [vmem:[%s262 + $0x84] sm:$0xf]
      %v322 = vld [vmem:[%s262 + $0x88] sm:$0xf]
      %v323 = vld [vmem:[%s262 + $0x8c] sm:$0xf]
      %v324 = vld [vmem:[%s262 + $0x90] sm:$0xf]
      %v325 = vld [vmem:[%s262 + $0x94] sm:$0xf]
      %v326 = vld [vmem:[%s262 + $0x98] sm:$0xf]
      %v327 = vld [vmem:[%s262 + $0x9c] sm:$0xf]
      %v328 = vld [vmem:[%s262 + $0xa0] sm:$0xf]
      %v329 = vld [vmem:[%s262 + $0xa4] sm:$0xf]
      %v330 = vld [vmem:[%s262 + $0xa8] sm:$0xf]
      %v331 = vld [vmem:[%s262 + $0xac] sm:$0xf]
      %v332 = vld [vmem:[%s262 + $0xb0] sm:$0xf]
      %v333 = vld [vmem:[%s262 + $0xb4] sm:$0xf]
      %v334 = vld [vmem:[%s262 + $0xb8] sm:$0xf]
      %v335 = vld [vmem:[%s262 + $0xbc] sm:$0xf]
      %v336 = vld [vmem:[%s262 + $0xc0] sm:$0xf]
      %v337 = vld [vmem:[%s262 + $0xc4] sm:$0xf]
      %v338 = vld [vmem:[%s262 + $0xc8] sm:$0xf]
      %v339 = vld [vmem:[%s262 + $0xcc] sm:$0xf]
      %v340 = vld [vmem:[%s262 + $0xd0] sm:$0xf]
      %v341 = vld [vmem:[%s262 + $0xd4] sm:$0xf]
      %v342 = vld [vmem:[%s262 + $0xd8] sm:$0xf]
      %v343 = vld [vmem:[%s262 + $0xdc] sm:$0xf]
      %v344 = vld [vmem:[%s262 + $0xe0] sm:$0xf]
      %v345 = vld [vmem:[%s262 + $0xe4] sm:$0xf]
      %v346 = vld [vmem:[%s262 + $0xe8] sm:$0xf]
      %v347 = vld [vmem:[%s262 + $0xec] sm:$0xf]
      %v348 = vld [vmem:[%s262 + $0xf0] sm:$0xf]
      %v349 = vld [vmem:[%s262 + $0xf4] sm:$0xf]
      %v350 = vld [vmem:[%s262 + $0xf8] sm:$0xf]
      %v351 = vld [vmem:[%s262 + $0xfc] sm:$0xf]
      %v352 = vld [vmem:[%s262 + $0x100] sm:$0xf]
      %v353 = vld [vmem:[%s262 + $0x104] sm:$0xf]
      %v354 = vld [vmem:[%s262 + $0x108] sm:$0xf]
      %v355 = vld [vmem:[%s262 + $0x10c] sm:$0xf]
      %v356 = vld [vmem:[%s262 + $0x110] sm:$0xf]
      %v357 = vld [vmem:[%s262 + $0x114] sm:$0xf]
      %v358 = vld [vmem:[%s262 + $0x118] sm:$0xf]
      %v359 = vld [vmem:[%s262 + $0x11c] sm:$0xf]
      %v360 = vld [vmem:[%s262 + $0x120] sm:$0xf]
      %v361 = vld [vmem:[%s262 + $0x124] sm:$0xf]
      %v362 = vld [vmem:[%s262 + $0x128] sm:$0xf]
      %v363 = vld [vmem:[%s262 + $0x12c] sm:$0xf]
      %v364 = vld [vmem:[%s262 + $0x130] sm:$0xf]
      %v365 = vld [vmem:[%s262 + $0x134] sm:$0xf]
      %v366 = vld [vmem:[%s262 + $0x138] sm:$0xf]
      %v367 = vld [vmem:[%s262 + $0x13c] sm:$0xf]
      %v368 = vld [vmem:[%s2] sm:$0x1]
      %v370 = vlaneseq
      %v371 = vshrl.u32 %v370, 7
      %v372 = vsub.s32 0, %v371
      %v373 = vrot.slane %v368, %v372
      %v381 = vunpack.c.l.b16 %v282
      %v382 = vunpack.c.h.b16 %v282
      %v383 = vunpack.c.l.b16 %v283
      %v384 = vunpack.c.h.b16 %v283
      %v385 = vunpack.c.l.b16 %v284
      %v386 = vunpack.c.l.b16 %v285
      %v387 = vunpack.c.h.b16 %v285
      %v388 = vunpack.c.l.b16 %v286
      %v389 = vunpack.c.h.b16 %v286
      %v390 = vunpack.c.l.b16 %v287
      %v391 = vpack.c.b16 %v386, %v381
      %v392 = vpack.c.b16 %v387, %v382
      %v393 = vpack.c.b16 %v388, %v383
      %v394 = vpack.c.b16 %v389, %v384
      %v395 = vpack.c.b16 %v390, %v385
      %v481 = vunpack.c.l.b16 %v288
      %v482 = vunpack.c.l.b16 %v289
      %v483 = vunpack.c.l.b16 %v290
      %v484 = vunpack.c.l.b16 %v291
      %v485 = vunpack.c.l.b16 %v292
      %v486 = vunpack.c.l.b16 %v293
      %v487 = vunpack.c.l.b16 %v294
      %v488 = vunpack.c.l.b16 %v295
      %v489 = vunpack.c.l.b16 %v296
      %v490 = vunpack.c.l.b16 %v297
      %v491 = vunpack.c.l.b16 %v298
      %v492 = vunpack.c.l.b16 %v299
      %v493 = vunpack.c.l.b16 %v300
      %v494 = vunpack.c.l.b16 %v301
      %v495 = vunpack.c.l.b16 %v302
      %v496 = vunpack.c.l.b16 %v303
      %v497 = vunpack.c.l.b16 %v304
      %v498 = vunpack.c.l.b16 %v305
      %v499 = vunpack.c.l.b16 %v306
      %v500 = vunpack.c.l.b16 %v307
      %v501 = vunpack.c.l.b16 %v308
      %v502 = vunpack.c.l.b16 %v309
      %v503 = vunpack.c.l.b16 %v310
      %v504 = vunpack.c.l.b16 %v311
      %v505 = vunpack.c.l.b16 %v312
      %v506 = vunpack.c.l.b16 %v313
      %v507 = vunpack.c.l.b16 %v314
      %v508 = vunpack.c.l.b16 %v315
      %v509 = vunpack.c.l.b16 %v316
      %v510 = vunpack.c.l.b16 %v317
      %v511 = vunpack.c.l.b16 %v318
      %v512 = vunpack.c.l.b16 %v319
      %v513 = vunpack.c.l.b16 %v320
      %v514 = vunpack.c.l.b16 %v321
      %v515 = vunpack.c.l.b16 %v322
      %v516 = vunpack.c.l.b16 %v323
      %v517 = vunpack.c.l.b16 %v324
      %v518 = vunpack.c.l.b16 %v325
      %v519 = vunpack.c.l.b16 %v326
      %v520 = vunpack.c.l.b16 %v327
      %v521 = vunpack.c.l.b16 %v328
      %v522 = vunpack.c.l.b16 %v329
      %v523 = vunpack.c.l.b16 %v330
      %v524 = vunpack.c.l.b16 %v331
      %v525 = vunpack.c.l.b16 %v332
      %v526 = vunpack.c.l.b16 %v333
      %v527 = vunpack.c.l.b16 %v334
      %v528 = vunpack.c.l.b16 %v335
      %v529 = vunpack.c.l.b16 %v336
      %v530 = vunpack.c.l.b16 %v337
      %v531 = vunpack.c.l.b16 %v338
      %v532 = vunpack.c.l.b16 %v339
      %v533 = vunpack.c.l.b16 %v340
      %v534 = vunpack.c.l.b16 %v341
      %v535 = vunpack.c.l.b16 %v342
      %v536 = vunpack.c.l.b16 %v343
      %v537 = vunpack.c.l.b16 %v344
      %v538 = vunpack.c.l.b16 %v345
      %v539 = vunpack.c.l.b16 %v346
      %v540 = vunpack.c.l.b16 %v347
      %v541 = vunpack.c.l.b16 %v348
      %v542 = vunpack.c.l.b16 %v349
      %v543 = vunpack.c.l.b16 %v350
      %v544 = vunpack.c.l.b16 %v351
      %v545 = vunpack.c.l.b16 %v352
      %v546 = vunpack.c.l.b16 %v353
      %v547 = vunpack.c.l.b16 %v354
      %v548 = vunpack.c.l.b16 %v355
      %v549 = vunpack.c.l.b16 %v356
      %v550 = vunpack.c.l.b16 %v357
      %v551 = vunpack.c.l.b16 %v358
      %v552 = vunpack.c.l.b16 %v359
      %v553 = vunpack.c.l.b16 %v360
      %v554 = vunpack.c.l.b16 %v361
      %v555 = vunpack.c.l.b16 %v362
      %v556 = vunpack.c.l.b16 %v363
      %v557 = vunpack.c.l.b16 %v364
      %v558 = vunpack.c.l.b16 %v365
      %v559 = vunpack.c.l.b16 %v366
      %v560 = vunpack.c.l.b16 %v367
      %v561 = vpack.c.b16 %v482, %v481
      %v562 = vpack.c.b16 %v484, %v483
      %v563 = vpack.c.b16 %v486, %v485
      %v564 = vpack.c.b16 %v488, %v487
      %v565 = vpack.c.b16 %v490, %v489
      %v566 = vpack.c.b16 %v492, %v491
      %v567 = vpack.c.b16 %v494, %v493
      %v568 = vpack.c.b16 %v496, %v495
      %v569 = vpack.c.b16 %v498, %v497
      %v570 = vpack.c.b16 %v500, %v499
      %v571 = vpack.c.b16 %v502, %v501
      %v572 = vpack.c.b16 %v504, %v503
      %v573 = vpack.c.b16 %v506, %v505
      %v574 = vpack.c.b16 %v508, %v507
      %v575 = vpack.c.b16 %v510, %v509
      %v576 = vpack.c.b16 %v512, %v511
      %v577 = vpack.c.b16 %v514, %v513
      %v578 = vpack.c.b16 %v516, %v515
      %v579 = vpack.c.b16 %v518, %v517
      %v580 = vpack.c.b16 %v520, %v519
      %v581 = vpack.c.b16 %v522, %v521
      %v582 = vpack.c.b16 %v524, %v523
      %v583 = vpack.c.b16 %v526, %v525
      %v584 = vpack.c.b16 %v528, %v527
      %v585 = vpack.c.b16 %v530, %v529
      %v586 = vpack.c.b16 %v532, %v531
      %v587 = vpack.c.b16 %v534, %v533
      %v588 = vpack.c.b16 %v536, %v535
      %v589 = vpack.c.b16 %v538, %v537
      %v590 = vpack.c.b16 %v540, %v539
      %v591 = vpack.c.b16 %v542, %v541
      %v592 = vpack.c.b16 %v544, %v543
      %v593 = vpack.c.b16 %v546, %v545
      %v594 = vpack.c.b16 %v548, %v547
      %v595 = vpack.c.b16 %v550, %v549
      %v596 = vpack.c.b16 %v552, %v551
      %v597 = vpack.c.b16 %v554, %v553
      %v598 = vpack.c.b16 %v556, %v555
      %v599 = vpack.c.b16 %v558, %v557
      %v600 = vpack.c.b16 %v560, %v559
      %641 = vmatprep.subr.bf16.mxu0 0
      %642 = vmatpush1.bf16.msra.mxu0 %v561
      %643 = vmatprep.subr.bf16.mxu0 0
      %644 = vmatpush1.bf16.msra.mxu0 %v562
      %645 = vmatprep.subr.bf16.mxu0 0
      %646 = vmatpush1.bf16.msra.mxu0 %v563
      %647 = vmatprep.subr.bf16.mxu0 0
      %648 = vmatpush1.bf16.msra.mxu0 %v564
      %649 = vmatprep.subr.bf16.mxu0 0
      %650 = vmatpush1.bf16.msra.mxu0 %v565
      %651 = vmatprep.subr.bf16.mxu0 0
      %652 = vmatpush1.bf16.msra.mxu0 %v566
      %653 = vmatprep.subr.bf16.mxu0 0
      %654 = vmatpush1.bf16.msra.mxu0 %v567
      %655 = vmatprep.subr.bf16.mxu0 0
      %656 = vmatpush1.bf16.msra.mxu0 %v568
      %657 = vmatprep.subr.bf16.mxu0 0
      %658 = vmatpush1.bf16.msra.mxu0 %v569
      %659 = vmatprep.subr.bf16.mxu0 0
      %660 = vmatpush1.bf16.msra.mxu0 %v570
      %661 = vmatprep.subr.bf16.mxu0 0
      %662 = vmatpush1.bf16.msra.mxu0 %v571
      %663 = vmatprep.subr.bf16.mxu0 0
      %664 = vmatpush1.bf16.msra.mxu0 %v572
      %665 = vmatprep.subr.bf16.mxu0 0
      %666 = vmatpush1.bf16.msra.mxu0 %v573
      %667 = vmatprep.subr.bf16.mxu0 0
      %668 = vmatpush1.bf16.msra.mxu0 %v574
      %669 = vmatprep.subr.bf16.mxu0 0
      %670 = vmatpush1.bf16.msra.mxu0 %v575
      %671 = vmatprep.subr.bf16.mxu0 0
      %672 = vmatpush1.bf16.msra.mxu0 %v576
      %673 = vmatprep.mubr.bf16.mxu0 %v392
      %674 = vmatmul.mubr.bf16.gmra.mrb[0].mxu0 %v391
      %v675 = vpop.f32.mrb[0].mxu0
      %v676 = vadd.f32 %v373, %v675
      %v677 = vpop.f32.mrb[0].mxu0
      %v678 = vpop.f32.mrb[0].mxu0
      %v679 = vadd.f32 %v373, %v678
      %v680 = vpop.f32.mrb[0].mxu0
      %681 = vdwg.mxu0
      %682 = vmatprep.subr.bf16.mxu0 0
      %683 = vmatpush1.bf16.msra.mxu0 %v577
      %684 = vmatprep.subr.bf16.mxu0 0
      %685 = vmatpush1.bf16.msra.mxu0 %v578
      %686 = vmatprep.subr.bf16.mxu0 0
      %687 = vmatpush1.bf16.msra.mxu0 %v579
      %688 = vmatprep.subr.bf16.mxu0 0
      %689 = vmatpush1.bf16.msra.mxu0 %v580
      %690 = vmatprep.subr.bf16.mxu0 0
      %691 = vmatpush1.bf16.msra.mxu0 %v581
      %692 = vmatprep.subr.bf16.mxu0 0
      %693 = vmatpush1.bf16.msra.mxu0 %v582
      %694 = vmatprep.subr.bf16.mxu0 0
      %695 = vmatpush1.bf16.msra.mxu0 %v583
      %696 = vmatprep.subr.bf16.mxu0 0
      %697 = vmatpush1.bf16.msra.mxu0 %v584
      %698 = vmatprep.subr.bf16.mxu0 0
      %699 = vmatpush1.bf16.msra.mxu0 %v585
      %700 = vmatprep.subr.bf16.mxu0 0
      %701 = vmatpush1.bf16.msra.mxu0 %v586
      %702 = vmatprep.subr.bf16.mxu0 0
      %703 = vmatpush1.bf16.msra.mxu0 %v587
      %704 = vmatprep.subr.bf16.mxu0 0
      %705 = vmatpush1.bf16.msra.mxu0 %v588
      %706 = vmatprep.subr.bf16.mxu0 0
      %707 = vmatpush1.bf16.msra.mxu0 %v589
      %708 = vmatprep.subr.bf16.mxu0 0
      %709 = vmatpush1.bf16.msra.mxu0 %v590
      %710 = vmatprep.subr.bf16.mxu0 0
      %711 = vmatpush1.bf16.msra.mxu0 %v591
      %712 = vmatprep.subr.bf16.mxu0 0
      %713 = vmatpush1.bf16.msra.mxu0 %v592
      %714 = vmatprep.mubr.bf16.mxu0 %v394
      %715 = vmatmul.mubr.bf16.gmra.mrb[0].mxu0 %v393
      %v716 = vpop.f32.mrb[0].mxu0
      %v717 = vadd.f32 %v676, %v716
      %v718 = vpop.f32.mrb[0].mxu0
      %v719 = vpop.f32.mrb[0].mxu0
      %v720 = vadd.f32 %v679, %v719
      %v721 = vpop.f32.mrb[0].mxu0
      %722 = vdwg.mxu0
      %723 = vmatprep.subr.bf16.mxu0 0
      %724 = vmatpush1.bf16.msra.mxu0 %v593
      %725 = vmatprep.subr.bf16.mxu0 0
      %726 = vmatpush1.bf16.msra.mxu0 %v594
      %727 = vmatprep.subr.bf16.mxu0 0
      %728 = vmatpush1.bf16.msra.mxu0 %v595
      %729 = vmatprep.subr.bf16.mxu0 0
      %730 = vmatpush1.bf16.msra.mxu0 %v596
      %731 = vmatprep.subr.bf16.mxu0 0
      %732 = vmatpush1.bf16.msra.mxu0 %v597
      %733 = vmatprep.subr.bf16.mxu0 0
      %734 = vmatpush1.bf16.msra.mxu0 %v598
      %735 = vmatprep.subr.bf16.mxu0 0
      %736 = vmatpush1.bf16.msra.mxu0 %v599
      %737 = vmatprep.subr.bf16.mxu0 0
      %738 = vmatpush1.bf16.msra.mxu0 %v600
      %739 = vmatprep.subr.bf16.mxu0 0
      %740 = vmatpush1.bf16.msra.mxu0 0
      %741 = vmatprep.subr.bf16.mxu0 0
      %742 = vmatpush1.bf16.msra.mxu0 0
      %743 = vmatprep.subr.bf16.mxu0 0
      %744 = vmatpush1.bf16.msra.mxu0 0
      %745 = vmatprep.subr.bf16.mxu0 0
      %746 = vmatpush1.bf16.msra.mxu0 0
      %747 = vmatprep.subr.bf16.mxu0 0
      %748 = vmatpush1.bf16.msra.mxu0 0
      %749 = vmatprep.subr.bf16.mxu0 0
      %750 = vmatpush1.bf16.msra.mxu0 0
      %751 = vmatprep.subr.bf16.mxu0 0
      %752 = vmatpush1.bf16.msra.mxu0 0
      %753 = vmatprep.subr.bf16.mxu0 0
      %754 = vmatpush1.bf16.msra.mxu0 0
      %755 = vmatprep.mubr.bf16.mxu0 0
      %756 = vmatmul.mubr.bf16.gmra.mrb[0].mxu0 %v395
      %v757 = vpop.f32.mrb[0].mxu0
      %v758 = vadd.f32 %v717, %v757
      %v759 = vpop.f32.mrb[0].mxu0
      %v760 = vpop.f32.mrb[0].mxu0
      %v761 = vadd.f32 %v720, %v760
      %v762 = vpop.f32.mrb[0].mxu0
      %763 = vdwg.mxu0
      %v764 = vmax.f32 %v758, 0.0
      %v765 = vmax.f32 %v761, 0.0
      %v766 = vpack.c.bf16 %v765, %v764
      %v768 = vunpack.c.l.b16 %v766
      %v769 = vunpack.c.h.b16 %v766
      %v770 = vpack.c.b16 %v768, %v768
      %v771 = vpack.c.b16 %v769, %v769
      %774 = vst [vmem:[%s271] sm:$0xf] %v770
      %775 = vst [vmem:[%s271 + $0x4] sm:$0xf] %v771
      %v776 = vadd.f32 %v764, %v765
      %v777 = vrot.slane %v776, 4
      %v778 = vadd.f32 %v776, %v777
      %v779 = vrot.slane %v778, 2
      %v780 = vadd.f32 %v778, %v779
      %v781 = vrot.slane %v780, 1
      %v782 = vadd.f32 %v780, %v781
      %783 = vst [vmem:[%s278] sm:$0x1] %v782
      %v784 = vmul.f32 %v764, %v764
      %v785 = vmul.f32 %v765, %v765
      %v786 = vadd.f32 %v784, %v785
      %v787 = vrot.slane %v786, 4
      %v788 = vadd.f32 %v786, %v787
      %v789 = vrot.slane %v788, 2
      %v790 = vadd.f32 %v788, %v789
      %v791 = vrot.slane %v790, 1
      %v792 = vadd.f32 %v790, %v791
      %793 = vst [vmem:[%s278 + $0x1] sm:$0x1] %v792
      %s794 = smul.u32 2, %s21
      %p795 = scmp.lt.s32.totalorder %s20, 0
      %s796 = scalar_select %p795, %s20, 0
      %p797 = scmp.lt.s32.totalorder %s794, 3
      %s798 = scalar_select %p797, %s794, 3
      %s799 = smul.addr %s796, 4
      %s800 = sadd.s32 %s798, %s799
      %s801 = smul.addr %s800, 4
      %s802 = scalar_lea.vmem %s3, %s801
      %s803 = smul.u32 %s20, 2
      %s804 = sadd.s32 %s803, %s21
      %p805 = scmp.lt.s32.totalorder %s804, 1
      %s806 = scalar_select %p805, %s804, 1
      %s807 = smul.addr %s806, 2
      %s808 = scalar_lea.vmem %s4, %s807
      // Predicated region
      $region33: #{forward.20} parent=31 // pred_check
        %p809 = pneg %p123
      $region34: #{forward.20} parent=31 // pred_check_branch
        %811 = sbr.rel (%p809) target = $region36
      $region35: #{forward.20} parent=31 // pred_region
        %s812 = smul.u32 2, %s21
      $region36: #{forward.20} parent=31 // pred_fallthru
        _
      // Predicated region
      $region37: #{forward.20} parent=31 // pred_check
        %p813 = pneg %p153
      $region38: #{forward.20} parent=31 // pred_check_branch
        %815 = sbr.rel (%p813) target = $region40
      $region39: #{forward.20} parent=31 // pred_region
        %s816 = smul.u32 %s20, 2
        %s817 = sadd.s32 %s816, %s21
      $region40: #{forward.20} parent=31 // pred_fallthru
        _
    $region32: #{forward.20} parent=5 // pred_fallthru
      _
    %p818 = scmp.le.s32.totalorder 2, %s11
    // Predicated region
    $region41: #{forward.20} parent=5 // pred_check
      %p819 = pneg %p818
    $region42: #{forward.20} parent=5 // pred_check_branch
      %821 = sbr.rel (%p819) target = $region44
    $region43: #{forward.20} parent=5 // pred_region
      %s822 = ssub.s32 %s11, 2
      // Predicated region
      $region45: #{forward.20} parent=43 // pred_check
        %p823 = pneg %p129
      $region46: #{forward.20} parent=43 // pred_check_branch
        %825 = sbr.rel (%p823) target = $region48
      $region47: #{forward.20} parent=43 // pred_region
        %s826 = smul.u32 2, %s23
        %p827 = scmp.lt.s32.totalorder %s22, 0
        %s828 = scalar_select %p827, %s22, 0
        %p829 = scmp.lt.s32.totalorder %s826, 3
        %s830 = scalar_select %p829, %s826, 3
        %s831 = smul.addr %s828, 4
        %s832 = sadd.s32 %s830, %s831
        %s833 = smul.addr %s832, 4
        %s834 = scalar_lea.vmem %s3, %s833
      $region48: #{forward.20} parent=43 // pred_fallthru
        _
      // Predicated region
      $region49: #{forward.20} parent=43 // pred_check
        %p835 = pneg %p159
      $region50: #{forward.20} parent=43 // pred_check_branch
        %837 = sbr.rel (%p835) target = $region52
      $region51: #{forward.20} parent=43 // pred_region
        %s838 = smul.u32 %s22, 2
        %s839 = sadd.s32 %s838, %s23
        %p840 = scmp.lt.s32.totalorder %s839, 1
        %s841 = scalar_select %p840, %s839, 1
        %s842 = smul.addr %s841, 2
        %s843 = scalar_lea.vmem %s4, %s842
      $region52: #{forward.20} parent=43 // pred_fallthru
        _
    $region44: #{forward.20} parent=5 // pred_fallthru
      _
  $region6: #{forward.20} parent=0 // loop_footer
    %s15 = sadd.s32 1, %s11
  $region7: #{forward.20} parent=0 // loop_footer_branch
    %10 = sbr.rel target = $region3
  $region8: #{forward.20} parent=0 // loop_exit
    _

// kernel: forward.21
$region0: #{forward.21}
  #allocation0 [shape = 'u32[]', space=smem, size = 0x4, offset = 0x4, fixed_abs, tag = 'smem constant byte address 0x4 - core index']
  #allocation1 [shape = 'u32[144,128]{1,0:T(1,128)}', space=vmem, size = 0x12000, scoped, tag = 'internal scratch']
  %s0 = inlined_call_operand.vmem [shape: bf16[1,32,1152], index: 0, kind: input, shape index: {}]
  %s1 = inlined_call_operand.vmem [shape: bf16[1,1152,128], index: 1, kind: input, shape index: {}]
  %s2 = inlined_call_operand.vmem [shape: f32[1,128], index: 2, kind: input, shape index: {}]
  %s3 = inlined_call_operand.vmem [shape: bf16[1,32,128], index: 3, kind: output, shape index: {0}]
  %s4 = inlined_call_operand.vmem [shape: f32[2,2,128], index: 4, kind: output, shape index: {1}]
  %5 = xla_tuple %s3, %s4
  %s6 = sld [smem:[#allocation0]]
  $region53: #{forward.21} parent=0
    _
  %s8 = ssub.s32 1, %s6
  %s9 = scalar_select 0, %s8, %s6
  loop: start=0, step=1, limit=4
  $region2: #{forward.21} parent=0 // loop_pre_header
    _
  $region3: #{forward.21} parent=0 // loop_header
    %s11 = sphi 0, %s15
    %p12 = scmp.ge.s32.totalorder %s11, 4
    %s18 = sphi 0, %s30
    %s19 = sphi 0, %s26
    %s20 = sphi 0, %s18
    %s21 = sphi 0, %s19
    %s22 = sphi 0, %s20
    %s23 = sphi 0, %s21
    %s35 = sphi 0, %s37
    %s38 = sphi 0, %s35
    %s39 = sphi 0, %s38
    %s55 = sphi 0, %s39
    %s61 = sphi 0, %s63
    %s64 = sphi 0, %s61
    %s65 = sphi 0, %s64
    %s81 = sphi 0, %s65
    %s85 = sphi 0, %s85
    %s87 = sphi 0, %s85
    %s88 = sphi 0, %s87
    %s102 = sphi 0, %s88
    %s110 = sphi 0, %s112
    %s113 = sphi 0, %s110
    %s114 = sphi 0, %s113
    %s130 = sphi 0, %s114
    %s140 = sphi 0, %s142
    %s143 = sphi 0, %s140
    %s144 = sphi 0, %s143
    %s160 = sphi 0, %s144
  $region4: #{forward.21} parent=0 // loop_header_branch
    %14 = sbr.rel (%p12) target = $region8
  $region5: #{forward.21} parent=0 // loop_body
    %s16 = ssub.s32 %s11, 1
    %s17 = ssub.s32 %s11, 2
    %s24 = sadd.s32 1, %s19
    %p25 = scmp.ge.s32.totalorder %s24, 2
    %s26 = scalar_select %p25, 0, %s24
    %s27 = sadd.s32 1, %s18
    %s28 = scalar_select %p25, %s27, %s18
    %p29 = scmp.ge.s32.totalorder %s28, 1
    %s30 = scalar_select %p29, 0, %s28
    %s31 = ssub.s32 %s18, %s30
    %s32 = ssub.s32 %s19, %s26
    %s33 = sor.u32 %s31, %s32
    %p34 = scmp.eq.s32.totalorder %s33, 0
    %s36 = sadd.s32 %s35, 1
    %s37 = scalar_select %p34, %s35, %s36
    %p40 = pneg %p34
    %p41 = scmp.eq.s32.totalorder %s11, 1
    %p42 = por %p40, %p41
    %p43 = scmp.ne.s32.totalorder %s35, %s38
    %p44 = scmp.eq.s32.totalorder %s11, 0
    %p45 = por %p43, %p44
    %p46 = scmp.ne.s32.totalorder %s35, %s38
    %p47 = scmp.eq.s32.totalorder %s16, 1
    %p48 = por %p46, %p47
    %p49 = scmp.ne.s32.totalorder %s38, %s39
    %p50 = scmp.eq.s32.totalorder %s16, 0
    %p51 = por %p49, %p50
    %p52 = scmp.ne.s32.totalorder %s38, %s39
    %p53 = scmp.eq.s32.totalorder %s17, 1
    %p54 = por %p52, %p53
    %p56 = scmp.ne.s32.totalorder %s39, %s55
    %p57 = scmp.eq.s32.totalorder %s17, 0
    %p58 = por %p56, %p57
    %s59 = ssub.s32 %s18, %s30
    %p60 = scmp.eq.s32.totalorder %s59, 0
    %s62 = sadd.s32 %s61, 1
    %s63 = scalar_select %p60, %s61, %s62
    %p66 = pneg %p60
    %p67 = scmp.eq.s32.totalorder %s11, 1
    %p68 = por %p66, %p67
    %p69 = scmp.ne.s32.totalorder %s61, %s64
    %p70 = scmp.eq.s32.totalorder %s11, 0
    %p71 = por %p69, %p70
    %p72 = scmp.ne.s32.totalorder %s61, %s64
    %p73 = scmp.eq.s32.totalorder %s16, 1
    %p74 = por %p72, %p73
    %p75 = scmp.ne.s32.totalorder %s64, %s65
    %p76 = scmp.eq.s32.totalorder %s16, 0
    %p77 = por %p75, %p76
    %p78 = scmp.ne.s32.totalorder %s64, %s65
    %p79 = scmp.eq.s32.totalorder %s17, 1
    %p80 = por %p78, %p79
    %p82 = scmp.ne.s32.totalorder %s65, %s81
    %p83 = scmp.eq.s32.totalorder %s17, 0
    %p84 = por %p82, %p83
    %s86 = sadd.s32 %s85, 1
    %p89 = scmp.eq.s32.totalorder %s11, 1
    %p90 = scmp.ne.s32.totalorder %s85, %s87
    %p91 = scmp.eq.s32.totalorder %s11, 0
    %p92 = por %p90, %p91
    %p93 = scmp.ne.s32.totalorder %s85, %s87
    %p94 = scmp.eq.s32.totalorder %s16, 1
    %p95 = por %p93, %p94
    %p96 = scmp.ne.s32.totalorder %s87, %s88
    %p97 = scmp.eq.s32.totalorder %s16, 0
    %p98 = por %p96, %p97
    %p99 = scmp.ne.s32.totalorder %s87, %s88
    %p100 = scmp.eq.s32.totalorder %s17, 1
    %p101 = por %p99, %p100
    %p103 = scmp.ne.s32.totalorder %s88, %s102
    %p104 = scmp.eq.s32.totalorder %s17, 0
    %p105 = por %p103, %p104
    %s106 = ssub.s32 %s18, %s30
    %s107 = ssub.s32 %s19, %s26
    %s108 = sor.u32 %s106, %s107
    %p109 = scmp.eq.s32.totalorder %s108, 0
    %s111 = sadd.s32 %s110, 1
    %s112 = scalar_select %p109, %s110, %s111
    %p115 = pneg %p109
    %p116 = scmp.eq.s32.totalorder %s11, 1
    %p117 = por %p115, %p116
    %p118 = scmp.ne.s32.totalorder %s110, %s113
    %p119 = scmp.eq.s32.totalorder %s11, 0
    %p120 = por %p118, %p119
    %p121 = scmp.ne.s32.totalorder %s110, %s113
    %p122 = scmp.eq.s32.totalorder %s16, 1
    %p123 = por %p121, %p122
    %p124 = scmp.ne.s32.totalorder %s113, %s114
    %p125 = scmp.eq.s32.totalorder %s16, 0
    %p126 = por %p124, %p125
    %p127 = scmp.ne.s32.totalorder %s113, %s114
    %p128 = scmp.eq.s32.totalorder %s17, 1
    %p129 = por %p127, %p128
    %p131 = scmp.ne.s32.totalorder %s114, %s130
    %p132 = scmp.eq.s32.totalorder %s17, 0
    %p133 = por %p131, %p132
    %s134 = smul.u32 %s18, 2
    %s135 = sadd.s32 %s134, %s19
    %s136 = smul.u32 %s30, 2
    %s137 = sadd.s32 %s136, %s26
    %s138 = ssub.s32 %s135, %s137
    %p139 = scmp.eq.s32.totalorder %s138, 0
    %s141 = sadd.s32 %s140, 1
    %s142 = scalar_select %p139, %s140, %s141
    %p145 = pneg %p139
    %p146 = scmp.eq.s32.totalorder %s11, 1
    %p147 = por %p145, %p146
    %p148 = scmp.ne.s32.totalorder %s140, %s143
    %p149 = scmp.eq.s32.totalorder %s11, 0
    %p150 = por %p148, %p149
    %p151 = scmp.ne.s32.totalorder %s140, %s143
    %p152 = scmp.eq.s32.totalorder %s16, 1
    %p153 = por %p151, %p152
    %p154 = scmp.ne.s32.totalorder %s143, %s144
    %p155 = scmp.eq.s32.totalorder %s16, 0
    %p156 = por %p154, %p155
    %p157 = scmp.ne.s32.totalorder %s143, %s144
    %p158 = scmp.eq.s32.totalorder %s17, 1
    %p159 = por %p157, %p158
    %p161 = scmp.ne.s32.totalorder %s144, %s160
    %p162 = scmp.eq.s32.totalorder %s17, 0
    %p163 = por %p161, %p162
    %p164 = scmp.le.s32.totalorder 1, %s11
    %p165 = scmp.lt.s32.totalorder %s11, 3
    %p166 = pnand %p164, %p165
    %p167 = pneg %p166
    // Predicated region
    $region9: #{forward.21} parent=5 // pred_check
      _
    $region10: #{forward.21} parent=5 // pred_check_branch
      %169 = sbr.rel (%p166) target = $region12
    $region11: #{forward.21} parent=5 // pred_region
      %s170 = ssub.s32 %s11, 1
      // Predicated region
      $region13: #{forward.21} parent=11 // pred_check
        %p171 = pneg %p77
      $region14: #{forward.21} parent=11 // pred_check_branch
        %173 = sbr.rel (%p171) target = $region16
      $region15: #{forward.21} parent=11 // pred_region
        %p174 = scmp.lt.s32.totalorder %s20, 0
        %s175 = scalar_select %p174, %s20, 0
        %s176 = smul.addr %s175, 144
        %s177 = smul.addr %s176, 4
        %s178 = scalar_lea.vmem %s1, %s177
      $region16: #{forward.21} parent=11 // pred_fallthru
        _
      // Predicated region
      $region17: #{forward.21} parent=11 // pred_check
        %p179 = pneg %p98
      $region18: #{forward.21} parent=11 // pred_check_branch
        %181 = sbr.rel (%p179) target = $region20
      $region19: #{forward.21} parent=11 // pred_region
        _
      $region20: #{forward.21} parent=11 // pred_fallthru
        _
    $region12: #{forward.21} parent=5 // pred_fallthru
      _
    %p182 = scmp.lt.s32.totalorder %s11, 2
    // Predicated region
    $region21: #{forward.21} parent=5 // pred_check
      %p183 = pneg %p182
    $region22: #{forward.21} parent=5 // pred_check_branch
      %185 = sbr.rel (%p183) target = $region24
    $region23: #{forward.21} parent=5 // pred_region
      // Predicated region
      $region25: #{forward.21} parent=23 // pred_check
        %p186 = pneg %p45
      $region26: #{forward.21} parent=23 // pred_check_branch
        %188 = sbr.rel (%p186) target = $region28
      $region27: #{forward.21} parent=23 // pred_region
        %s189 = smul.u32 2, %s19
        %p190 = scmp.lt.s32.totalorder %s18, 0
        %s191 = scalar_select %p190, %s18, 0
        %p192 = scmp.lt.s32.totalorder %s189, 3
        %s193 = scalar_select %p192, %s189, 3
        %s194 = smul.addr %s193, 9
        %s195 = smul.addr %s191, 36
        %s196 = sadd.s32 %s194, %s195
        %s197 = smul.addr %s196, 4
        %s198 = scalar_lea.vmem %s0, %s197
        %s199 = smul.u32 2, %s19
      $region28: #{forward.21} parent=23 // pred_fallthru
        _
    $region24: #{forward.21} parent=5 // pred_fallthru
      _
    %p200 = scmp.le.s32.totalorder 1, %s11
    %p201 = scmp.lt.s32.totalorder %s11, 3
    %p202 = pnand %p200, %p201
    %p203 = pneg %p202
    // Predicated region
    $region29: #{forward.21} parent=5 // pred_check
      _
    $region30: #{forward.21} parent=5 // pred_check_branch
      %205 = sbr.rel (%p202) target = $region32
    $region31: #{forward.21} parent=5 // pred_region
      %s206 = ssub.s32 %s11, 1
      %s207 = smul.u32 2, %s21
      %p208 = scmp.lt.s32.totalorder %s20, 0
      %s209 = scalar_select %p208, %s20, 0
      %p210 = scmp.lt.s32.totalorder %s207, 3
      %s211 = scalar_select %p210, %s207, 3
      %s212 = smul.addr %s211, 9
      %s213 = smul.addr %s209, 36
      %s214 = sadd.s32 %s212, %s213
      %s215 = smul.addr %s214, 4
      %s216 = scalar_lea.vmem %s0, %s215
      %p217 = pneg %p51
      %p218 = pneg %p48
      %p219 = scmp.lt.s32.totalorder %s20, 0
      %s220 = scalar_select %p219, %s20, 0
      %s221 = smul.addr %s220, 144
      %s222 = smul.addr %s221, 4
      %s223 = scalar_lea.vmem %s1, %s222
      %p224 = pneg %p77
      %p225 = pneg %p74
      %p226 = pneg %p98
      %p227 = pneg %p95
      %p228 = pneg %p126
      %p229 = pneg %p123
      %s230 = smul.u32 2, %s21
      %p231 = scmp.lt.s32.totalorder %s20, 0
      %s232 = scalar_select %p231, %s20, 0
      %p233 = scmp.lt.s32.totalorder %s230, 3
      %s234 = scalar_select %p233, %s230, 3
      %s235 = smul.addr %s232, 4
      %s236 = sadd.s32 %s234, %s235
      %s237 = smul.addr %s236, 4
      %s238 = scalar_lea.vmem %s3, %s237
      %p239 = pneg %p156
      %p240 = pneg %p153
      %s241 = smul.u32 %s20, 2
      %s242 = sadd.s32 %s241, %s21
      %p243 = scmp.lt.s32.totalorder %s242, 1
      %s244 = scalar_select %p243, %s242, 1
      %s245 = smul.addr %s244, 2
      %s246 = scalar_lea.vmem %s4, %s245
      %s247 = smul.u32 2, %s21
      %p248 = scmp.lt.s32.totalorder %s20, 0
      %s249 = scalar_select %p248, %s20, 0
      %p250 = scmp.lt.s32.totalorder %s247, 3
      %s251 = scalar_select %p250, %s247, 3
      %s252 = smul.addr %s251, 9
      %s253 = smul.addr %s249, 36
      %s254 = sadd.s32 %s252, %s253
      %s255 = smul.addr %s254, 4
      %s256 = scalar_lea.vmem %s0, %s255
      %s257 = smul.u32 2, %s21
      %p258 = scmp.lt.s32.totalorder %s20, 0
      %s259 = scalar_select %p258, %s20, 0
      %s260 = smul.addr %s259, 144
      %s261 = smul.addr %s260, 4
      %s262 = scalar_lea.vmem %s1, %s261
      %s263 = smul.u32 2, %s21
      %p264 = scmp.lt.s32.totalorder %s20, 0
      %s265 = scalar_select %p264, %s20, 0
      %p266 = scmp.lt.s32.totalorder %s263, 3
      %s267 = scalar_select %p266, %s263, 3
      %s268 = smul.addr %s265, 4
      %s269 = sadd.s32 %s267, %s268
      %s270 = smul.addr %s269, 4
      %s271 = scalar_lea.vmem %s3, %s270
      %s272 = smul.u32 2, %s21
      %s273 = smul.u32 %s20, 2
      %s274 = sadd.s32 %s273, %s21
      %p275 = scmp.lt.s32.totalorder %s274, 1
      %s276 = scalar_select %p275, %s274, 1
      %s277 = smul.addr %s276, 2
      %s278 = scalar_lea.vmem %s4, %s277
      %s279 = smul.u32 %s20, 2
      %s280 = sadd.s32 %s279, %s21
      %v282 = vld [vmem:[%s256] sm:$0xff]
      %v283 = vld [vmem:[%s256 + $0x8] sm:$0xff]
      %v284 = vld [vmem:[%s256 + $0x10] sm:$0xff]
      %v285 = vld [vmem:[%s256 + $0x18] sm:$0xff]
      %v286 = vld [vmem:[%s256 + $0x20] sm:$0xf]
      %v287 = vld [vmem:[%s256 + $0x24] sm:$0xff]
      %v288 = vld [vmem:[%s256 + $0x2c] sm:$0xff]
      %v289 = vld [vmem:[%s256 + $0x34] sm:$0xff]
      %v290 = vld [vmem:[%s256 + $0x3c] sm:$0xff]
      %v291 = vld [vmem:[%s256 + $0x44] sm:$0xf]
      %v292 = vld [vmem:[%s262] sm:$0xf]
      %v293 = vld [vmem:[%s262 + $0x4] sm:$0xf]
      %v294 = vld [vmem:[%s262 + $0x8] sm:$0xf]
      %v295 = vld [vmem:[%s262 + $0xc] sm:$0xf]
      %v296 = vld [vmem:[%s262 + $0x10] sm:$0xf]
      %v297 = vld [vmem:[%s262 + $0x14] sm:$0xf]
      %v298 = vld [vmem:[%s262 + $0x18] sm:$0xf]
      %v299 = vld [vmem:[%s262 + $0x1c] sm:$0xf]
      %v300 = vld [vmem:[%s262 + $0x20] sm:$0xf]
      %v301 = vld [vmem:[%s262 + $0x24] sm:$0xf]
      %v302 = vld [vmem:[%s262 + $0x28] sm:$0xf]
      %v303 = vld [vmem:[%s262 + $0x2c] sm:$0xf]
      %v304 = vld [vmem:[%s262 + $0x30] sm:$0xf]
      %v305 = vld [vmem:[%s262 + $0x34] sm:$0xf]
      %v306 = vld [vmem:[%s262 + $0x38] sm:$0xf]
      %v307 = vld [vmem:[%s262 + $0x3c] sm:$0xf]
      %v308 = vld [vmem:[%s262 + $0x40] sm:$0xf]
      %v309 = vld [vmem:[%s262 + $0x44] sm:$0xf]
      %v310 = vld [vmem:[%s262 + $0x48] sm:$0xf]
      %v311 = vld [vmem:[%s262 + $0x4c] sm:$0xf]
      %v312 = vld [vmem:[%s262 + $0x50] sm:$0xf]
      %v313 = vld [vmem:[%s262 + $0x54] sm:$0xf]
      %v314 = vld [vmem:[%s262 + $0x58] sm:$0xf]
      %v315 = vld [vmem:[%s262 + $0x5c] sm:$0xf]
      %v316 = vld [vmem:[%s262 + $0x60] sm:$0xf]
      %v317 = vld [vmem:[%s262 + $0x64] sm:$0xf]
      %v318 = vld [vmem:[%s262 + $0x68] sm:$0xf]
      %v319 = vld [vmem:[%s262 + $0x6c] sm:$0xf]
      %v320 = vld [vmem:[%s262 + $0x70] sm:$0xf]
      %v321 = vld [vmem:[%s262 + $0x74] sm:$0xf]
      %v322 = vld [vmem:[%s262 + $0x78] sm:$0xf]
      %v323 = vld [vmem:[%s262 + $0x7c] sm:$0xf]
      %v324 = vld [vmem:[%s262 + $0x80] sm:$0xf]
      %v325 = vld [vmem:[%s262 + $0x84] sm:$0xf]
      %v326 = vld [vmem:[%s262 + $0x88] sm:$0xf]
      %v327 = vld [vmem:[%s262 + $0x8c] sm:$0xf]
      %v328 = vld [vmem:[%s262 + $0x90] sm:$0xf]
      %v329 = vld [vmem:[%s262 + $0x94] sm:$0xf]
      %v330 = vld [vmem:[%s262 + $0x98] sm:$0xf]
      %v331 = vld [vmem:[%s262 + $0x9c] sm:$0xf]
      %v332 = vld [vmem:[%s262 + $0xa0] sm:$0xf]
      %v333 = vld [vmem:[%s262 + $0xa4] sm:$0xf]
      %v334 = vld [vmem:[%s262 + $0xa8] sm:$0xf]
      %v335 = vld [vmem:[%s262 + $0xac] sm:$0xf]
      %v336 = vld [vmem:[%s262 + $0xb0] sm:$0xf]
      %v337 = vld [vmem:[%s262 + $0xb4] sm:$0xf]
      %v338 = vld [vmem:[%s262 + $0xb8] sm:$0xf]
      %v339 = vld [vmem:[%s262 + $0xbc] sm:$0xf]
      %v340 = vld [vmem:[%s262 + $0xc0] sm:$0xf]
      %v341 = vld [vmem:[%s262 + $0xc4] sm:$0xf]
      %v342 = vld [vmem:[%s262 + $0xc8] sm:$0xf]
      %v343 = vld [vmem:[%s262 + $0xcc] sm:$0xf]
      %v344 = vld [vmem:[%s262 + $0xd0] sm:$0xf]
      %v345 = vld [vmem:[%s262 + $0xd4] sm:$0xf]
      %v346 = vld [vmem:[%s262 + $0xd8] sm:$0xf]
      %v347 = vld [vmem:[%s262 + $0xdc] sm:$0xf]
      %v348 = vld [vmem:[%s262 + $0xe0] sm:$0xf]
      %v349 = vld [vmem:[%s262 + $0xe4] sm:$0xf]
      %v350 = vld [vmem:[%s262 + $0xe8] sm:$0xf]
      %v351 = vld [vmem:[%s262 + $0xec] sm:$0xf]
      %v352 = vld [vmem:[%s262 + $0xf0] sm:$0xf]
      %v353 = vld [vmem:[%s262 + $0xf4] sm:$0xf]
      %v354 = vld [vmem:[%s262 + $0xf8] sm:$0xf]
      %v355 = vld [vmem:[%s262 + $0xfc] sm:$0xf]
      %v356 = vld [vmem:[%s262 + $0x100] sm:$0xf]
      %v357 = vld [vmem:[%s262 + $0x104] sm:$0xf]
      %v358 = vld [vmem:[%s262 + $0x108] sm:$0xf]
      %v359 = vld [vmem:[%s262 + $0x10c] sm:$0xf]
      %v360 = vld [vmem:[%s262 + $0x110] sm:$0xf]
      %v361 = vld [vmem:[%s262 + $0x114] sm:$0xf]
      %v362 = vld [vmem:[%s262 + $0x118] sm:$0xf]
      %v363 = vld [vmem:[%s262 + $0x11c] sm:$0xf]
      %v364 = vld [vmem:[%s262 + $0x120] sm:$0xf]
      %v365 = vld [vmem:[%s262 + $0x124] sm:$0xf]
      %v366 = vld [vmem:[%s262 + $0x128] sm:$0xf]
      %v367 = vld [vmem:[%s262 + $0x12c] sm:$0xf]
      %v368 = vld [vmem:[%s262 + $0x130] sm:$0xf]
      %v369 = vld [vmem:[%s262 + $0x134] sm:$0xf]
      %v370 = vld [vmem:[%s262 + $0x138] sm:$0xf]
      %v371 = vld [vmem:[%s262 + $0x13c] sm:$0xf]
      %v372 = vld [vmem:[%s262 + $0x140] sm:$0xf]
      %v373 = vld [vmem:[%s262 + $0x144] sm:$0xf]
      %v374 = vld [vmem:[%s262 + $0x148] sm:$0xf]
      %v375 = vld [vmem:[%s262 + $0x14c] sm:$0xf]
      %v376 = vld [vmem:[%s262 + $0x150] sm:$0xf]
      %v377 = vld [vmem:[%s262 + $0x154] sm:$0xf]
      %v378 = vld [vmem:[%s262 + $0x158] sm:$0xf]
      %v379 = vld [vmem:[%s262 + $0x15c] sm:$0xf]
      %v380 = vld [vmem:[%s262 + $0x160] sm:$0xf]
      %v381 = vld [vmem:[%s262 + $0x164] sm:$0xf]
      %v382 = vld [vmem:[%s262 + $0x168] sm:$0xf]
      %v383 = vld [vmem:[%s262 + $0x16c] sm:$0xf]
      %v384 = vld [vmem:[%s262 + $0x170] sm:$0xf]
      %v385 = vld [vmem:[%s262 + $0x174] sm:$0xf]
      %v386 = vld [vmem:[%s262 + $0x178] sm:$0xf]
      %v387 = vld [vmem:[%s262 + $0x17c] sm:$0xf]
      %v388 = vld [vmem:[%s262 + $0x180] sm:$0xf]
      %v389 = vld [vmem:[%s262 + $0x184] sm:$0xf]
      %v390 = vld [vmem:[%s262 + $0x188] sm:$0xf]
      %v391 = vld [vmem:[%s262 + $0x18c] sm:$0xf]
      %v392 = vld [vmem:[%s262 + $0x190] sm:$0xf]
      %v393 = vld [vmem:[%s262 + $0x194] sm:$0xf]
      %v394 = vld [vmem:[%s262 + $0x198] sm:$0xf]
      %v395 = vld [vmem:[%s262 + $0x19c] sm:$0xf]
      %v396 = vld [vmem:[%s262 + $0x1a0] sm:$0xf]
      %v397 = vld [vmem:[%s262 + $0x1a4] sm:$0xf]
      %v398 = vld [vmem:[%s262 + $0x1a8] sm:$0xf]
      %v399 = vld [vmem:[%s262 + $0x1ac] sm:$0xf]
      %v400 = vld [vmem:[%s262 + $0x1b0] sm:$0xf]
      %v401 = vld [vmem:[%s262 + $0x1b4] sm:$0xf]
      %v402 = vld [vmem:[%s262 + $0x1b8] sm:$0xf]
      %v403 = vld [vmem:[%s262 + $0x1bc] sm:$0xf]
      %v404 = vld [vmem:[%s262 + $0x1c0] sm:$0xf]
      %v405 = vld [vmem:[%s262 + $0x1c4] sm:$0xf]
      %v406 = vld [vmem:[%s262 + $0x1c8] sm:$0xf]
      %v407 = vld [vmem:[%s262 + $0x1cc] sm:$0xf]
      %v408 = vld [vmem:[%s262 + $0x1d0] sm:$0xf]
      %v409 = vld [vmem:[%s262 + $0x1d4] sm:$0xf]
      %v410 = vld [vmem:[%s262 + $0x1d8] sm:$0xf]
      %v411 = vld [vmem:[%s262 + $0x1dc] sm:$0xf]
      %v412 = vld [vmem:[%s262 + $0x1e0] sm:$0xf]
      %v413 = vld [vmem:[%s262 + $0x1e4] sm:$0xf]
      %v414 = vld [vmem:[%s262 + $0x1e8] sm:$0xf]
      %v415 = vld [vmem:[%s262 + $0x1ec] sm:$0xf]
      %v416 = vld [vmem:[%s262 + $0x1f0] sm:$0xf]
      %v417 = vld [vmem:[%s262 + $0x1f4] sm:$0xf]
      %v418 = vld [vmem:[%s262 + $0x1f8] sm:$0xf]
      %v419 = vld [vmem:[%s262 + $0x1fc] sm:$0xf]
      %v420 = vld [vmem:[%s262 + $0x200] sm:$0xf]
      %v421 = vld [vmem:[%s262 + $0x204] sm:$0xf]
      %v422 = vld [vmem:[%s262 + $0x208] sm:$0xf]
      %v423 = vld [vmem:[%s262 + $0x20c] sm:$0xf]
      %v424 = vld [vmem:[%s262 + $0x210] sm:$0xf]
      %v425 = vld [vmem:[%s262 + $0x214] sm:$0xf]
      %v426 = vld [vmem:[%s262 + $0x218] sm:$0xf]
      %v427 = vld [vmem:[%s262 + $0x21c] sm:$0xf]
      %v428 = vld [vmem:[%s262 + $0x220] sm:$0xf]
      %v429 = vld [vmem:[%s262 + $0x224] sm:$0xf]
      %v430 = vld [vmem:[%s262 + $0x228] sm:$0xf]
      %v431 = vld [vmem:[%s262 + $0x22c] sm:$0xf]
      %v432 = vld [vmem:[%s262 + $0x230] sm:$0xf]
      %v433 = vld [vmem:[%s262 + $0x234] sm:$0xf]
      %v434 = vld [vmem:[%s262 + $0x238] sm:$0xf]
      %v435 = vld [vmem:[%s262 + $0x23c] sm:$0xf]
      %v436 = vld [vmem:[%s2] sm:$0x1]
      %v438 = vlaneseq
      %v439 = vshrl.u32 %v438, 7
      %v440 = vsub.s32 0, %v439
      %v441 = vrot.slane %v436, %v440
      %v453 = vunpack.c.l.b16 %v282
      %v454 = vunpack.c.h.b16 %v282
      %v455 = vunpack.c.l.b16 %v283
      %v456 = vunpack.c.h.b16 %v283
      %v457 = vunpack.c.l.b16 %v284
      %v458 = vunpack.c.h.b16 %v284
      %v459 = vunpack.c.l.b16 %v285
      %v460 = vunpack.c.h.b16 %v285
      %v461 = vunpack.c.l.b16 %v286
      %v462 = vunpack.c.l.b16 %v287
      %v463 = vunpack.c.h.b16 %v287
      %v464 = vunpack.c.l.b16 %v288
      %v465 = vunpack.c.h.b16 %v288
      %v466 = vunpack.c.l.b16 %v289
      %v467 = vunpack.c.h.b16 %v289
      %v468 = vunpack.c.l.b16 %v290
      %v469 = vunpack.c.h.b16 %v290
      %v470 = vunpack.c.l.b16 %v291
      %v471 = vpack.c.b16 %v462, %v453
      %v472 = vpack.c.b16 %v463, %v454
      %v473 = vpack.c.b16 %v464, %v455
      %v474 = vpack.c.b16 %v465, %v456
      %v475 = vpack.c.b16 %v466, %v457
      %v476 = vpack.c.b16 %v467, %v458
      %v477 = vpack.c.b16 %v468, %v459
      %v478 = vpack.c.b16 %v469, %v460
      %v479 = vpack.c.b16 %v470, %v461
      %v633 = vunpack.c.l.b16 %v292
      %v634 = vunpack.c.l.b16 %v293
      %v635 = vunpack.c.l.b16 %v294
      %v636 = vunpack.c.l.b16 %v295
      %v637 = vunpack.c.l.b16 %v296
      %v638 = vunpack.c.l.b16 %v297
      %v639 = vunpack.c.l.b16 %v298
      %v640 = vunpack.c.l.b16 %v299
      %v641 = vunpack.c.l.b16 %v300
      %v642 = vunpack.c.l.b16 %v301
      %v643 = vunpack.c.l.b16 %v302
      %v644 = vunpack.c.l.b16 %v303
      %v645 = vunpack.c.l.b16 %v304
      %v646 = vunpack.c.l.b16 %v305
      %v647 = vunpack.c.l.b16 %v306
      %v648 = vunpack.c.l.b16 %v307
      %v649 = vunpack.c.l.b16 %v308
      %v650 = vunpack.c.l.b16 %v309
      %v651 = vunpack.c.l.b16 %v310
      %v652 = vunpack.c.l.b16 %v311
      %v653 = vunpack.c.l.b16 %v312
      %v654 = vunpack.c.l.b16 %v313
      %v655 = vunpack.c.l.b16 %v314
      %v656 = vunpack.c.l.b16 %v315
      %v657 = vunpack.c.l.b16 %v316
      %v658 = vunpack.c.l.b16 %v317
      %v659 = vunpack.c.l.b16 %v318
      %v660 = vunpack.c.l.b16 %v319
      %v661 = vunpack.c.l.b16 %v320
      %v662 = vunpack.c.l.b16 %v321
      %v663 = vunpack.c.l.b16 %v322
      %v664 = vunpack.c.l.b16 %v323
      %v665 = vunpack.c.l.b16 %v324
      %v666 = vunpack.c.l.b16 %v325
      %v667 = vunpack.c.l.b16 %v326
      %v668 = vunpack.c.l.b16 %v327
      %v669 = vunpack.c.l.b16 %v328
      %v670 = vunpack.c.l.b16 %v329
      %v671 = vunpack.c.l.b16 %v330
      %v672 = vunpack.c.l.b16 %v331
      %v673 = vunpack.c.l.b16 %v332
      %v674 = vunpack.c.l.b16 %v333
      %v675 = vunpack.c.l.b16 %v334
      %v676 = vunpack.c.l.b16 %v335
      %v677 = vunpack.c.l.b16 %v336
      %v678 = vunpack.c.l.b16 %v337
      %v679 = vunpack.c.l.b16 %v338
      %v680 = vunpack.c.l.b16 %v339
      %v681 = vunpack.c.l.b16 %v340
      %v682 = vunpack.c.l.b16 %v341
      %v683 = vunpack.c.l.b16 %v342
      %v684 = vunpack.c.l.b16 %v343
      %v685 = vunpack.c.l.b16 %v344
      %v686 = vunpack.c.l.b16 %v345
      %v687 = vunpack.c.l.b16 %v346
      %v688 = vunpack.c.l.b16 %v347
      %v689 = vunpack.c.l.b16 %v348
      %v690 = vunpack.c.l.b16 %v349
      %v691 = vunpack.c.l.b16 %v350
      %v692 = vunpack.c.l.b16 %v351
      %v693 = vunpack.c.l.b16 %v352
      %v694 = vunpack.c.l.b16 %v353
      %v695 = vunpack.c.l.b16 %v354
      %v696 = vunpack.c.l.b16 %v355
      %v697 = vunpack.c.l.b16 %v356
      %v698 = vunpack.c.l.b16 %v357
      %v699 = vunpack.c.l.b16 %v358
      %v700 = vunpack.c.l.b16 %v359
      %v701 = vunpack.c.l.b16 %v360
      %v702 = vunpack.c.l.b16 %v361
      %v703 = vunpack.c.l.b16 %v362
      %v704 = vunpack.c.l.b16 %v363
      %v705 = vunpack.c.l.b16 %v364
      %v706 = vunpack.c.l.b16 %v365
      %v707 = vunpack.c.l.b16 %v366
      %v708 = vunpack.c.l.b16 %v367
      %v709 = vunpack.c.l.b16 %v368
      %v710 = vunpack.c.l.b16 %v369
      %v711 = vunpack.c.l.b16 %v370
      %v712 = vunpack.c.l.b16 %v371
      %v713 = vunpack.c.l.b16 %v372
      %v714 = vunpack.c.l.b16 %v373
      %v715 = vunpack.c.l.b16 %v374
      %v716 = vunpack.c.l.b16 %v375
      %v717 = vunpack.c.l.b16 %v376
      %v718 = vunpack.c.l.b16 %v377
      %v719 = vunpack.c.l.b16 %v378
      %v720 = vunpack.c.l.b16 %v379
      %v721 = vunpack.c.l.b16 %v380
      %v722 = vunpack.c.l.b16 %v381
      %v723 = vunpack.c.l.b16 %v382
      %v724 = vunpack.c.l.b16 %v383
      %v725 = vunpack.c.l.b16 %v384
      %v726 = vunpack.c.l.b16 %v385
      %v727 = vunpack.c.l.b16 %v386
      %v728 = vunpack.c.l.b16 %v387
      %v729 = vunpack.c.l.b16 %v388
      %v730 = vunpack.c.l.b16 %v389
      %v731 = vunpack.c.l.b16 %v390
      %v732 = vunpack.c.l.b16 %v391
      %v733 = vunpack.c.l.b16 %v392
      %v734 = vunpack.c.l.b16 %v393
      %v735 = vunpack.c.l.b16 %v394
      %v736 = vunpack.c.l.b16 %v395
      %v737 = vunpack.c.l.b16 %v396
      %v738 = vunpack.c.l.b16 %v397
      %v739 = vunpack.c.l.b16 %v398
      %v740 = vunpack.c.l.b16 %v399
      %v741 = vunpack.c.l.b16 %v400
      %v742 = vunpack.c.l.b16 %v401
      %v743 = vunpack.c.l.b16 %v402
      %v744 = vunpack.c.l.b16 %v403
      %v745 = vunpack.c.l.b16 %v404
      %v746 = vunpack.c.l.b16 %v405
      %v747 = vunpack.c.l.b16 %v406
      %v748 = vunpack.c.l.b16 %v407
      %v749 = vunpack.c.l.b16 %v408
      %v750 = vunpack.c.l.b16 %v409
      %v751 = vunpack.c.l.b16 %v410
      %v752 = vunpack.c.l.b16 %v411
      %v753 = vunpack.c.l.b16 %v412
      %v754 = vunpack.c.l.b16 %v413
      %v755 = vunpack.c.l.b16 %v414
      %v756 = vunpack.c.l.b16 %v415
      %v757 = vunpack.c.l.b16 %v416
      %v758 = vunpack.c.l.b16 %v417
      %v759 = vunpack.c.l.b16 %v418
      %v760 = vunpack.c.l.b16 %v419
      %v761 = vunpack.c.l.b16 %v420
      %v762 = vunpack.c.l.b16 %v421
      %v763 = vunpack.c.l.b16 %v422
      %v764 = vunpack.c.l.b16 %v423
      %v765 = vunpack.c.l.b16 %v424
      %v766 = vunpack.c.l.b16 %v425
      %v767 = vunpack.c.l.b16 %v426
      %v768 = vunpack.c.l.b16 %v427
      %v769 = vunpack.c.l.b16 %v428
      %v770 = vunpack.c.l.b16 %v429
      %v771 = vunpack.c.l.b16 %v430
      %v772 = vunpack.c.l.b16 %v431
      %v773 = vunpack.c.l.b16 %v432
      %v774 = vunpack.c.l.b16 %v433
      %v775 = vunpack.c.l.b16 %v434
      %v776 = vunpack.c.l.b16 %v435
      %v777 = vpack.c.b16 %v634, %v633
      %v778 = vpack.c.b16 %v636, %v635
      %v779 = vpack.c.b16 %v638, %v637
      %v780 = vpack.c.b16 %v640, %v639
      %v781 = vpack.c.b16 %v642, %v641
      %v782 = vpack.c.b16 %v644, %v643
      %v783 = vpack.c.b16 %v646, %v645
      %v784 = vpack.c.b16 %v648, %v647
      %v785 = vpack.c.b16 %v650, %v649
      %v786 = vpack.c.b16 %v652, %v651
      %v787 = vpack.c.b16 %v654, %v653
      %v788 = vpack.c.b16 %v656, %v655
      %v789 = vpack.c.b16 %v658, %v657
      %v790 = vpack.c.b16 %v660, %v659
      %v791 = vpack.c.b16 %v662, %v661
      %v792 = vpack.c.b16 %v664, %v663
      %v793 = vpack.c.b16 %v666, %v665
      %v794 = vpack.c.b16 %v668, %v667
      %v795 = vpack.c.b16 %v670, %v669
      %v796 = vpack.c.b16 %v672, %v671
      %v797 = vpack.c.b16 %v674, %v673
      %v798 = vpack.c.b16 %v676, %v675
      %v799 = vpack.c.b16 %v678, %v677
      %v800 = vpack.c.b16 %v680, %v679
      %v801 = vpack.c.b16 %v682, %v681
      %v802 = vpack.c.b16 %v684, %v683
      %v803 = vpack.c.b16 %v686, %v685
      %v804 = vpack.c.b16 %v688, %v687
      %v805 = vpack.c.b16 %v690, %v689
      %v806 = vpack.c.b16 %v692, %v691
      %v807 = vpack.c.b16 %v694, %v693
      %v808 = vpack.c.b16 %v696, %v695
      %v809 = vpack.c.b16 %v698, %v697
      %v810 = vpack.c.b16 %v700, %v699
      %v811 = vpack.c.b16 %v702, %v701
      %v812 = vpack.c.b16 %v704, %v703
      %v813 = vpack.c.b16 %v706, %v705
      %v814 = vpack.c.b16 %v708, %v707
      %v815 = vpack.c.b16 %v710, %v709
      %v816 = vpack.c.b16 %v712, %v711
      %v817 = vpack.c.b16 %v714, %v713
      %v818 = vpack.c.b16 %v716, %v715
      %v819 = vpack.c.b16 %v718, %v717
      %v820 = vpack.c.b16 %v720, %v719
      %v821 = vpack.c.b16 %v722, %v721
      %v822 = vpack.c.b16 %v724, %v723
      %v823 = vpack.c.b16 %v726, %v725
      %v824 = vpack.c.b16 %v728, %v727
      %v825 = vpack.c.b16 %v730, %v729
      %v826 = vpack.c.b16 %v732, %v731
      %v827 = vpack.c.b16 %v734, %v733
      %v828 = vpack.c.b16 %v736, %v735
      %v829 = vpack.c.b16 %v738, %v737
      %v830 = vpack.c.b16 %v740, %v739
      %v831 = vpack.c.b16 %v742, %v741
      %v832 = vpack.c.b16 %v744, %v743
      %v833 = vpack.c.b16 %v746, %v745
      %v834 = vpack.c.b16 %v748, %v747
      %v835 = vpack.c.b16 %v750, %v749
      %v836 = vpack.c.b16 %v752, %v751
      %v837 = vpack.c.b16 %v754, %v753
      %v838 = vpack.c.b16 %v756, %v755
      %v839 = vpack.c.b16 %v758, %v757
      %v840 = vpack.c.b16 %v760, %v759
      %v841 = vpack.c.b16 %v762, %v761
      %v842 = vpack.c.b16 %v764, %v763
      %v843 = vpack.c.b16 %v766, %v765
      %v844 = vpack.c.b16 %v768, %v767
      %v845 = vpack.c.b16 %v770, %v769
      %v846 = vpack.c.b16 %v772, %v771
      %v847 = vpack.c.b16 %v774, %v773
      %v848 = vpack.c.b16 %v776, %v775
      %921 = vmatprep.subr.bf16.mxu0 0
      %922 = vmatpush1.bf16.msra.mxu0 %v777
      %923 = vmatprep.subr.bf16.mxu0 0
      %924 = vmatpush1.bf16.msra.mxu0 %v778
      %925 = vmatprep.subr.bf16.mxu0 0
      %926 = vmatpush1.bf16.msra.mxu0 %v779
      %927 = vmatprep.subr.bf16.mxu0 0
      %928 = vmatpush1.bf16.msra.mxu0 %v780
      %929 = vmatprep.subr.bf16.mxu0 0
      %930 = vmatpush1.bf16.msra.mxu0 %v781
      %931 = vmatprep.subr.bf16.mxu0 0
      %932 = vmatpush1.bf16.msra.mxu0 %v782
      %933 = vmatprep.subr.bf16.mxu0 0
      %934 = vmatpush1.bf16.msra.mxu0 %v783
      %935 = vmatprep.subr.bf16.mxu0 0
      %936 = vmatpush1.bf16.msra.mxu0 %v784
      %937 = vmatprep.subr.bf16.mxu0 0
      %938 = vmatpush1.bf16.msra.mxu0 %v785
      %939 = vmatprep.subr.bf16.mxu0 0
      %940 = vmatpush1.bf16.msra.mxu0 %v786
      %941 = vmatprep.subr.bf16.mxu0 0
      %942 = vmatpush1.bf16.msra.mxu0 %v787
      %943 = vmatprep.subr.bf16.mxu0 0
      %944 = vmatpush1.bf16.msra.mxu0 %v788
      %945 = vmatprep.subr.bf16.mxu0 0
      %946 = vmatpush1.bf16.msra.mxu0 %v789
      %947 = vmatprep.subr.bf16.mxu0 0
      %948 = vmatpush1.bf16.msra.mxu0 %v790
      %949 = vmatprep.subr.bf16.mxu0 0
      %950 = vmatpush1.bf16.msra.mxu0 %v791
      %951 = vmatprep.subr.bf16.mxu0 0
      %952 = vmatpush1.bf16.msra.mxu0 %v792
      %953 = vmatprep.mubr.bf16.mxu0 %v472
      %954 = vmatmul.mubr.bf16.gmra.mrb[0].mxu0 %v471
      %v955 = vpop.f32.mrb[0].mxu0
      %v956 = vadd.f32 %v441, %v955
      %v957 = vpop.f32.mrb[0].mxu0
      %v958 = vpop.f32.mrb[0].mxu0
      %v959 = vadd.f32 %v441, %v958
      %v960 = vpop.f32.mrb[0].mxu0
      %961 = vdwg.mxu0
      %962 = vmatprep.subr.bf16.mxu0 0
      %963 = vmatpush1.bf16.msra.mxu0 %v793
      %964 = vmatprep.subr.bf16.mxu0 0
      %965 = vmatpush1.bf16.msra.mxu0 %v794
      %966 = vmatprep.subr.bf16.mxu0 0
      %967 = vmatpush1.bf16.msra.mxu0 %v795
      %968 = vmatprep.subr.bf16.mxu0 0
      %969 = vmatpush1.bf16.msra.mxu0 %v796
      %970 = vmatprep.subr.bf16.mxu0 0
      %971 = vmatpush1.bf16.msra.mxu0 %v797
      %972 = vmatprep.subr.bf16.mxu0 0
      %973 = vmatpush1.bf16.msra.mxu0 %v798
      %974 = vmatprep.subr.bf16.mxu0 0
      %975 = vmatpush1.bf16.msra.mxu0 %v799
      %976 = vmatprep.subr.bf16.mxu0 0
      %977 = vmatpush1.bf16.msra.mxu0 %v800
      %978 = vmatprep.subr.bf16.mxu0 0
      %979 = vmatpush1.bf16.msra.mxu0 %v801
      %980 = vmatprep.subr.bf16.mxu0 0
      %981 = vmatpush1.bf16.msra.mxu0 %v802
      %982 = vmatprep.subr.bf16.mxu0 0
      %983 = vmatpush1.bf16.msra.mxu0 %v803
      %984 = vmatprep.subr.bf16.mxu0 0
      %985 = vmatpush1.bf16.msra.mxu0 %v804
      %986 = vmatprep.subr.bf16.mxu0 0
      %987 = vmatpush1.bf16.msra.mxu0 %v805
      %988 = vmatprep.subr.bf16.mxu0 0
      %989 = vmatpush1.bf16.msra.mxu0 %v806
      %990 = vmatprep.subr.bf16.mxu0 0
      %991 = vmatpush1.bf16.msra.mxu0 %v807
      %992 = vmatprep.subr.bf16.mxu0 0
      %993 = vmatpush1.bf16.msra.mxu0 %v808
      %994 = vmatprep.mubr.bf16.mxu0 %v474
      %995 = vmatmul.mubr.bf16.gmra.mrb[0].mxu0 %v473
      %v996 = vpop.f32.mrb[0].mxu0
      %v997 = vadd.f32 %v956, %v996
      %v998 = vpop.f32.mrb[0].mxu0
      %v999 = vpop.f32.mrb[0].mxu0
      %v1000 = vadd.f32 %v959, %v999
      %v1001 = vpop.f32.mrb[0].mxu0
      %1002 = vdwg.mxu0
      %1003 = vmatprep.subr.bf16.mxu0 0
      %1004 = vmatpush1.bf16.msra.mxu0 %v809
      %1005 = vmatprep.subr.bf16.mxu0 0
      %1006 = vmatpush1.bf16.msra.mxu0 %v810
      %1007 = vmatprep.subr.bf16.mxu0 0
      %1008 = vmatpush1.bf16.msra.mxu0 %v811
      %1009 = vmatprep.subr.bf16.mxu0 0
      %1010 = vmatpush1.bf16.msra.mxu0 %v812
      %1011 = vmatprep.subr.bf16.mxu0 0
      %1012 = vmatpush1.bf16.msra.mxu0 %v813
      %1013 = vmatprep.subr.bf16.mxu0 0
      %1014 = vmatpush1.bf16.msra.mxu0 %v814
      %1015 = vmatprep.subr.bf16.mxu0 0
      %1016 = vmatpush1.bf16.msra.mxu0 %v815
      %1017 = vmatprep.subr.bf16.mxu0 0
      %1018 = vmatpush1.bf16.msra.mxu0 %v816
      %1019 = vmatprep.subr.bf16.mxu0 0
      %1020 = vmatpush1.bf16.msra.mxu0 %v817
      %1021 = vmatprep.subr.bf16.mxu0 0
      %1022 = vmatpush1.bf16.msra.mxu0 %v818
      %1023 = vmatprep.subr.bf16.mxu0 0
      %1024 = vmatpush1.bf16.msra.mxu0 %v819
      %1025 = vmatprep.subr.bf16.mxu0 0
      %1026 = vmatpush1.bf16.msra.mxu0 %v820
      %1027 = vmatprep.subr.bf16.mxu0 0
      %1028 = vmatpush1.bf16.msra.mxu0 %v821
      %1029 = vmatprep.subr.bf16.mxu0 0
      %1030 = vmatpush1.bf16.msra.mxu0 %v822
      %1031 = vmatprep.subr.bf16.mxu0 0
      %1032 = vmatpush1.bf16.msra.mxu0 %v823
      %1033 = vmatprep.subr.bf16.mxu0 0
      %1034 = vmatpush1.bf16.msra.mxu0 %v824
      %1035 = vmatprep.mubr.bf16.mxu0 %v476
      %1036 = vmatmul.mubr.bf16.gmra.mrb[0].mxu0 %v475
      %v1037 = vpop.f32.mrb[0].mxu0
      %v1038 = vadd.f32 %v997, %v1037
      %v1039 = vpop.f32.mrb[0].mxu0
      %v1040 = vpop.f32.mrb[0].mxu0
      %v1041 = vadd.f32 %v1000, %v1040
      %v1042 = vpop.f32.mrb[0].mxu0
      %1043 = vdwg.mxu0
      %1044 = vmatprep.subr.bf16.mxu0 0
      %1045 = vmatpush1.bf16.msra.mxu0 %v825
      %1046 = vmatprep.subr.bf16.mxu0 0
      %1047 = vmatpush1.bf16.msra.mxu0 %v826
      %1048 = vmatprep.subr.bf16.mxu0 0
      %1049 = vmatpush1.bf16.msra.mxu0 %v827
      %1050 = vmatprep.subr.bf16.mxu0 0
      %1051 = vmatpush1.bf16.msra.mxu0 %v828
      %1052 = vmatprep.subr.bf16.mxu0 0
      %1053 = vmatpush1.bf16.msra.mxu0 %v829
      %1054 = vmatprep.subr.bf16.mxu0 0
      %1055 = vmatpush1.bf16.msra.mxu0 %v830
      %1056 = vmatprep.subr.bf16.mxu0 0
      %1057 = vmatpush1.bf16.msra.mxu0 %v831
      %1058 = vmatprep.subr.bf16.mxu0 0
      %1059 = vmatpush1.bf16.msra.mxu0 %v832
      %1060 = vmatprep.subr.bf16.mxu0 0
      %1061 = vmatpush1.bf16.msra.mxu0 %v833
      %1062 = vmatprep.subr.bf16.mxu0 0
      %1063 = vmatpush1.bf16.msra.mxu0 %v834
      %1064 = vmatprep.subr.bf16.mxu0 0
      %1065 = vmatpush1.bf16.msra.mxu0 %v835
      %1066 = vmatprep.subr.bf16.mxu0 0
      %1067 = vmatpush1.bf16.msra.mxu0 %v836
      %1068 = vmatprep.subr.bf16.mxu0 0
      %1069 = vmatpush1.bf16.msra.mxu0 %v837
      %1070 = vmatprep.subr.bf16.mxu0 0
      %1071 = vmatpush1.bf16.msra.mxu0 %v838
      %1072 = vmatprep.subr.bf16.mxu0 0
      %1073 = vmatpush1.bf16.msra.mxu0 %v839
      %1074 = vmatprep.subr.bf16.mxu0 0
      %1075 = vmatpush1.bf16.msra.mxu0 %v840
      %1076 = vmatprep.mubr.bf16.mxu0 %v478
      %1077 = vmatmul.mubr.bf16.gmra.mrb[0].mxu0 %v477
      %v1078 = vpop.f32.mrb[0].mxu0
      %v1079 = vadd.f32 %v1038, %v1078
      %v1080 = vpop.f32.mrb[0].mxu0
      %v1081 = vpop.f32.mrb[0].mxu0
      %v1082 = vadd.f32 %v1041, %v1081
      %v1083 = vpop.f32.mrb[0].mxu0
      %1084 = vdwg.mxu0
      %1085 = vmatprep.subr.bf16.mxu0 0
      %1086 = vmatpush1.bf16.msra.mxu0 %v841
      %1087 = vmatprep.subr.bf16.mxu0 0
      %1088 = vmatpush1.bf16.msra.mxu0 %v842
      %1089 = vmatprep.subr.bf16.mxu0 0
      %1090 = vmatpush1.bf16.msra.mxu0 %v843
      %1091 = vmatprep.subr.bf16.mxu0 0
      %1092 = vmatpush1.bf16.msra.mxu0 %v844
      %1093 = vmatprep.subr.bf16.mxu0 0
      %1094 = vmatpush1.bf16.msra.mxu0 %v845
      %1095 = vmatprep.subr.bf16.mxu0 0
      %1096 = vmatpush1.bf16.msra.mxu0 %v846
      %1097 = vmatprep.subr.bf16.mxu0 0
      %1098 = vmatpush1.bf16.msra.mxu0 %v847
      %1099 = vmatprep.subr.bf16.mxu0 0
      %1100 = vmatpush1.bf16.msra.mxu0 %v848
      %1101 = vmatprep.subr.bf16.mxu0 0
      %1102 = vmatpush1.bf16.msra.mxu0 0
      %1103 = vmatprep.subr.bf16.mxu0 0
      %1104 = vmatpush1.bf16.msra.mxu0 0
      %1105 = vmatprep.subr.bf16.mxu0 0
      %1106 = vmatpush1.bf16.msra.mxu0 0
      %1107 = vmatprep.subr.bf16.mxu0 0
      %1108 = vmatpush1.bf16.msra.mxu0 0
      %1109 = vmatprep.subr.bf16.mxu0 0
      %1110 = vmatpush1.bf16.msra.mxu0 0
      %1111 = vmatprep.subr.bf16.mxu0 0
      %1112 = vmatpush1.bf16.msra.mxu0 0
      %1113 = vmatprep.subr.bf16.mxu0 0
      %1114 = vmatpush1.bf16.msra.mxu0 0
      %1115 = vmatprep.subr.bf16.mxu0 0
      %1116 = vmatpush1.bf16.msra.mxu0 0
      %1117 = vmatprep.mubr.bf16.mxu0 0
      %1118 = vmatmul.mubr.bf16.gmra.mrb[0].mxu0 %v479
      %v1119 = vpop.f32.mrb[0].mxu0
      %v1120 = vadd.f32 %v1079, %v1119
      %v1121 = vpop.f32.mrb[0].mxu0
      %v1122 = vpop.f32.mrb[0].mxu0
      %v1123 = vadd.f32 %v1082, %v1122
      %v1124 = vpop.f32.mrb[0].mxu0
      %1125 = vdwg.mxu0
      %v1126 = vmax.f32 %v1120, 0.0
      %v1127 = vmax.f32 %v1123, 0.0
      %v1128 = vpack.c.bf16 %v1127, %v1126
      %v1130 = vunpack.c.l.b16 %v1128
      %v1131 = vunpack.c.h.b16 %v1128
      %v1132 = vpack.c.b16 %v1130, %v1130
      %v1133 = vpack.c.b16 %v1131, %v1131
      %1136 = vst [vmem:[%s271] sm:$0xf] %v1132
      %1137 = vst [vmem:[%s271 + $0x4] sm:$0xf] %v1133
      %v1138 = vadd.f32 %v1126, %v1127
      %v1139 = vrot.slane %v1138, 4
      %v1140 = vadd.f32 %v1138, %v1139
      %v1141 = vrot.slane %v1140, 2
      %v1142 = vadd.f32 %v1140, %v1141
      %v1143 = vrot.slane %v1142, 1
      %v1144 = vadd.f32 %v1142, %v1143
      %1145 = vst [vmem:[%s278] sm:$0x1] %v1144
      %v1146 = vmul.f32 %v1126, %v1126
      %v1147 = vmul.f32 %v1127, %v1127
      %v1148 = vadd.f32 %v1146, %v1147
      %v1149 = vrot.slane %v1148, 4
      %v1150 = vadd.f32 %v1148, %v1149
      %v1151 = vrot.slane %v1150, 2
      %v1152 = vadd.f32 %v1150, %v1151
      %v1153 = vrot.slane %v1152, 1
      %v1154 = vadd.f32 %v1152, %v1153
      %1155 = vst [vmem:[%s278 + $0x1] sm:$0x1] %v1154
      %s1156 = smul.u32 2, %s21
      %p1157 = scmp.lt.s32.totalorder %s20, 0
      %s1158 = scalar_select %p1157, %s20, 0
      %p1159 = scmp.lt.s32.totalorder %s1156, 3
      %s1160 = scalar_select %p1159, %s1156, 3
      %s1161 = smul.addr %s1158, 4
      %s1162 = sadd.s32 %s1160, %s1161
      %s1163 = smul.addr %s1162, 4
      %s1164 = scalar_lea.vmem %s3, %s1163
      %s1165 = smul.u32 %s20, 2
      %s1166 = sadd.s32 %s1165, %s21
      %p1167 = scmp.lt.s32.totalorder %s1166, 1
      %s1168 = scalar_select %p1167, %s1166, 1
      %s1169 = smul.addr %s1168, 2
      %s1170 = scalar_lea.vmem %s4, %s1169
      // Predicated region
      $region33: #{forward.21} parent=31 // pred_check
        %p1171 = pneg %p123
      $region34: #{forward.21} parent=31 // pred_check_branch
        %1173 = sbr.rel (%p1171) target = $region36
      $region35: #{forward.21} parent=31 // pred_region
        %s1174 = smul.u32 2, %s21
      $region36: #{forward.21} parent=31 // pred_fallthru
        _
      // Predicated region
      $region37: #{forward.21} parent=31 // pred_check
        %p1175 = pneg %p153
      $region38: #{forward.21} parent=31 // pred_check_branch
        %1177 = sbr.rel (%p1175) target = $region40
      $region39: #{forward.21} parent=31 // pred_region
        %s1178 = smul.u32 %s20, 2
        %s1179 = sadd.s32 %s1178, %s21
      $region40: #{forward.21} parent=31 // pred_fallthru
        _
    $region32: #{forward.21} parent=5 // pred_fallthru
      _
    %p1180 = scmp.le.s32.totalorder 2, %s11
    // Predicated region
    $region41: #{forward.21} parent=5 // pred_check
      %p1181 = pneg %p1180
    $region42: #{forward.21} parent=5 // pred_check_branch
      %1183 = sbr.rel (%p1181) target = $region44
    $region43: #{forward.21} parent=5 // pred_region
      %s1184 = ssub.s32 %s11, 2
      // Predicated region
      $region45: #{forward.21} parent=43 // pred_check
        %p1185 = pneg %p129
      $region46: #{forward.21} parent=43 // pred_check_branch
        %1187 = sbr.rel (%p1185) target = $region48
      $region47: #{forward.21} parent=43 // pred_region
        %s1188 = smul.u32 2, %s23
        %p1189 = scmp.lt.s32.totalorder %s22, 0
        %s1190 = scalar_select %p1189, %s22, 0
        %p1191 = scmp.lt.s32.totalorder %s1188, 3
        %s1192 = scalar_select %p1191, %s1188, 3
        %s1193 = smul.addr %s1190, 4
        %s1194 = sadd.s32 %s1192, %s1193
        %s1195 = smul.addr %s1194, 4
        %s1196 = scalar_lea.vmem %s3, %s1195
      $region48: #{forward.21} parent=43 // pred_fallthru
        _
      // Predicated region
      $region49: #{forward.21} parent=43 // pred_check
        %p1197 = pneg %p159
      $region50: #{forward.21} parent=43 // pred_check_branch
        %1199 = sbr.rel (%p1197) target = $region52
      $region51: #{forward.21} parent=43 // pred_region
        %s1200 = smul.u32 %s22, 2
        %s1201 = sadd.s32 %s1200, %s23
        %p1202 = scmp.lt.s32.totalorder %s1201, 1
        %s1203 = scalar_select %p1202, %s1201, 1
        %s1204 = smul.addr %s1203, 2
        %s1205 = scalar_lea.vmem %s4, %s1204
      $region52: #{forward.21} parent=43 // pred_fallthru
        _
    $region44: #{forward.21} parent=5 // pred_fallthru
      _
  $region6: #{forward.21} parent=0 // loop_footer
    %s15 = sadd.s32 1, %s11
  $region7: #{forward.21} parent=0 // loop_footer_branch
    %10 = sbr.rel target = $region3
  $region8: #{forward.21} parent=0 // loop_exit
    _

// kernel: forward.29
$region0: #{forward.29}
  #allocation0 [shape = 'u32[]', space=smem, size = 0x4, offset = 0x4, fixed_abs, tag = 'smem constant byte address 0x4 - core index']
  #allocation1 [shape = 'u32[144,128]{1,0:T(1,128)}', space=vmem, size = 0x12000, scoped, tag = 'internal scratch']
  %s0 = inlined_call_operand.vmem [shape: bf16[4,32,512], index: 0, kind: input, shape index: {}]
  %s1 = inlined_call_operand.vmem [shape: bf16[4,512,128], index: 1, kind: input, shape index: {}]
  %s2 = inlined_call_operand.vmem [shape: f32[1,128], index: 2, kind: input, shape index: {}]
  %s3 = inlined_call_operand.vmem [shape: bf16[4,32,128], index: 3, kind: output, shape index: {0}]
  %s4 = inlined_call_operand.vmem [shape: f32[8,2,128], index: 4, kind: output, shape index: {1}]
  %5 = xla_tuple %s3, %s4
  %s6 = sld [smem:[#allocation0]]
  $region53: #{forward.29} parent=0
    _
  %s8 = ssub.s32 1, %s6
  %s9 = scalar_select 0, %s8, %s6
  loop: start=0, step=1, limit=10
  $region2: #{forward.29} parent=0 // loop_pre_header
    _
  $region3: #{forward.29} parent=0 // loop_header
    %s11 = sphi 0, %s15
    %p12 = scmp.ge.s32.totalorder %s11, 10
    %s18 = sphi 0, %s30
    %s19 = sphi 0, %s26
    %s20 = sphi 0, %s18
    %s21 = sphi 0, %s19
    %s22 = sphi 0, %s20
    %s23 = sphi 0, %s21
    %s35 = sphi 0, %s37
    %s38 = sphi 0, %s35
    %s39 = sphi 0, %s38
    %s55 = sphi 0, %s39
    %s61 = sphi 0, %s63
    %s64 = sphi 0, %s61
    %s65 = sphi 0, %s64
    %s81 = sphi 0, %s65
    %s85 = sphi 0, %s85
    %s87 = sphi 0, %s85
    %s88 = sphi 0, %s87
    %s102 = sphi 0, %s88
    %s110 = sphi 0, %s112
    %s113 = sphi 0, %s110
    %s114 = sphi 0, %s113
    %s130 = sphi 0, %s114
    %s140 = sphi 0, %s142
    %s143 = sphi 0, %s140
    %s144 = sphi 0, %s143
    %s160 = sphi 0, %s144
  $region4: #{forward.29} parent=0 // loop_header_branch
    %14 = sbr.rel (%p12) target = $region8
  $region5: #{forward.29} parent=0 // loop_body
    %s16 = ssub.s32 %s11, 1
    %s17 = ssub.s32 %s11, 2
    %s24 = sadd.s32 1, %s19
    %p25 = scmp.ge.s32.totalorder %s24, 2
    %s26 = scalar_select %p25, 0, %s24
    %s27 = sadd.s32 1, %s18
    %s28 = scalar_select %p25, %s27, %s18
    %p29 = scmp.ge.s32.totalorder %s28, 4
    %s30 = scalar_select %p29, 0, %s28
    %s31 = ssub.s32 %s18, %s30
    %s32 = ssub.s32 %s19, %s26
    %s33 = sor.u32 %s31, %s32
    %p34 = scmp.eq.s32.totalorder %s33, 0
    %s36 = sadd.s32 %s35, 1
    %s37 = scalar_select %p34, %s35, %s36
    %p40 = pneg %p34
    %p41 = scmp.eq.s32.totalorder %s11, 7
    %p42 = por %p40, %p41
    %p43 = scmp.ne.s32.totalorder %s35, %s38
    %p44 = scmp.eq.s32.totalorder %s11, 0
    %p45 = por %p43, %p44
    %p46 = scmp.ne.s32.totalorder %s35, %s38
    %p47 = scmp.eq.s32.totalorder %s16, 7
    %p48 = por %p46, %p47
    %p49 = scmp.ne.s32.totalorder %s38, %s39
    %p50 = scmp.eq.s32.totalorder %s16, 0
    %p51 = por %p49, %p50
    %p52 = scmp.ne.s32.totalorder %s38, %s39
    %p53 = scmp.eq.s32.totalorder %s17, 7
    %p54 = por %p52, %p53
    %p56 = scmp.ne.s32.totalorder %s39, %s55
    %p57 = scmp.eq.s32.totalorder %s17, 0
    %p58 = por %p56, %p57
    %s59 = ssub.s32 %s18, %s30
    %p60 = scmp.eq.s32.totalorder %s59, 0
    %s62 = sadd.s32 %s61, 1
    %s63 = scalar_select %p60, %s61, %s62
    %p66 = pneg %p60
    %p67 = scmp.eq.s32.totalorder %s11, 7
    %p68 = por %p66, %p67
    %p69 = scmp.ne.s32.totalorder %s61, %s64
    %p70 = scmp.eq.s32.totalorder %s11, 0
    %p71 = por %p69, %p70
    %p72 = scmp.ne.s32.totalorder %s61, %s64
    %p73 = scmp.eq.s32.totalorder %s16, 7
    %p74 = por %p72, %p73
    %p75 = scmp.ne.s32.totalorder %s64, %s65
    %p76 = scmp.eq.s32.totalorder %s16, 0
    %p77 = por %p75, %p76
    %p78 = scmp.ne.s32.totalorder %s64, %s65
    %p79 = scmp.eq.s32.totalorder %s17, 7
    %p80 = por %p78, %p79
    %p82 = scmp.ne.s32.totalorder %s65, %s81
    %p83 = scmp.eq.s32.totalorder %s17, 0
    %p84 = por %p82, %p83
    %s86 = sadd.s32 %s85, 1
    %p89 = scmp.eq.s32.totalorder %s11, 7
    %p90 = scmp.ne.s32.totalorder %s85, %s87
    %p91 = scmp.eq.s32.totalorder %s11, 0
    %p92 = por %p90, %p91
    %p93 = scmp.ne.s32.totalorder %s85, %s87
    %p94 = scmp.eq.s32.totalorder %s16, 7
    %p95 = por %p93, %p94
    %p96 = scmp.ne.s32.totalorder %s87, %s88
    %p97 = scmp.eq.s32.totalorder %s16, 0
    %p98 = por %p96, %p97
    %p99 = scmp.ne.s32.totalorder %s87, %s88
    %p100 = scmp.eq.s32.totalorder %s17, 7
    %p101 = por %p99, %p100
    %p103 = scmp.ne.s32.totalorder %s88, %s102
    %p104 = scmp.eq.s32.totalorder %s17, 0
    %p105 = por %p103, %p104
    %s106 = ssub.s32 %s18, %s30
    %s107 = ssub.s32 %s19, %s26
    %s108 = sor.u32 %s106, %s107
    %p109 = scmp.eq.s32.totalorder %s108, 0
    %s111 = sadd.s32 %s110, 1
    %s112 = scalar_select %p109, %s110, %s111
    %p115 = pneg %p109
    %p116 = scmp.eq.s32.totalorder %s11, 7
    %p117 = por %p115, %p116
    %p118 = scmp.ne.s32.totalorder %s110, %s113
    %p119 = scmp.eq.s32.totalorder %s11, 0
    %p120 = por %p118, %p119
    %p121 = scmp.ne.s32.totalorder %s110, %s113
    %p122 = scmp.eq.s32.totalorder %s16, 7
    %p123 = por %p121, %p122
    %p124 = scmp.ne.s32.totalorder %s113, %s114
    %p125 = scmp.eq.s32.totalorder %s16, 0
    %p126 = por %p124, %p125
    %p127 = scmp.ne.s32.totalorder %s113, %s114
    %p128 = scmp.eq.s32.totalorder %s17, 7
    %p129 = por %p127, %p128
    %p131 = scmp.ne.s32.totalorder %s114, %s130
    %p132 = scmp.eq.s32.totalorder %s17, 0
    %p133 = por %p131, %p132
    %s134 = smul.u32 %s18, 2
    %s135 = sadd.s32 %s134, %s19
    %s136 = smul.u32 %s30, 2
    %s137 = sadd.s32 %s136, %s26
    %s138 = ssub.s32 %s135, %s137
    %p139 = scmp.eq.s32.totalorder %s138, 0
    %s141 = sadd.s32 %s140, 1
    %s142 = scalar_select %p139, %s140, %s141
    %p145 = pneg %p139
    %p146 = scmp.eq.s32.totalorder %s11, 7
    %p147 = por %p145, %p146
    %p148 = scmp.ne.s32.totalorder %s140, %s143
    %p149 = scmp.eq.s32.totalorder %s11, 0
    %p150 = por %p148, %p149
    %p151 = scmp.ne.s32.totalorder %s140, %s143
    %p152 = scmp.eq.s32.totalorder %s16, 7
    %p153 = por %p151, %p152
    %p154 = scmp.ne.s32.totalorder %s143, %s144
    %p155 = scmp.eq.s32.totalorder %s16, 0
    %p156 = por %p154, %p155
    %p157 = scmp.ne.s32.totalorder %s143, %s144
    %p158 = scmp.eq.s32.totalorder %s17, 7
    %p159 = por %p157, %p158
    %p161 = scmp.ne.s32.totalorder %s144, %s160
    %p162 = scmp.eq.s32.totalorder %s17, 0
    %p163 = por %p161, %p162
    %p164 = scmp.le.s32.totalorder 1, %s11
    %p165 = scmp.lt.s32.totalorder %s11, 9
    %p166 = pnand %p164, %p165
    %p167 = pneg %p166
    // Predicated region
    $region9: #{forward.29} parent=5 // pred_check
      _
    $region10: #{forward.29} parent=5 // pred_check_branch
      %169 = sbr.rel (%p166) target = $region12
    $region11: #{forward.29} parent=5 // pred_region
      %s170 = ssub.s32 %s11, 1
      // Predicated region
      $region13: #{forward.29} parent=11 // pred_check
        %p171 = pneg %p98
      $region14: #{forward.29} parent=11 // pred_check_branch
        %173 = sbr.rel (%p171) target = $region16
      $region15: #{forward.29} parent=11 // pred_region
        _
      $region16: #{forward.29} parent=11 // pred_fallthru
        _
    $region12: #{forward.29} parent=5 // pred_fallthru
      _
    %p174 = scmp.lt.s32.totalorder %s11, 8
    // Predicated region
    $region17: #{forward.29} parent=5 // pred_check
      %p175 = pneg %p174
    $region18: #{forward.29} parent=5 // pred_check_branch
      %177 = sbr.rel (%p175) target = $region20
    $region19: #{forward.29} parent=5 // pred_region
      // Predicated region
      $region21: #{forward.29} parent=19 // pred_check
        %p178 = pneg %p45
      $region22: #{forward.29} parent=19 // pred_check_branch
        %180 = sbr.rel (%p178) target = $region24
      $region23: #{forward.29} parent=19 // pred_region
        %s181 = smul.u32 2, %s19
        %p182 = scmp.lt.s32.totalorder %s18, 3
        %s183 = scalar_select %p182, %s18, 3
        %p184 = scmp.lt.s32.totalorder %s181, 3
        %s185 = scalar_select %p184, %s181, 3
        %s186 = smul.addr %s185, 4
        %s187 = smul.addr %s183, 16
        %s188 = sadd.s32 %s186, %s187
        %s189 = smul.addr %s188, 4
        %s190 = scalar_lea.vmem %s0, %s189
        %s191 = smul.u32 2, %s19
      $region24: #{forward.29} parent=19 // pred_fallthru
        _
      // Predicated region
      $region25: #{forward.29} parent=19 // pred_check
        %p192 = pneg %p71
      $region26: #{forward.29} parent=19 // pred_check_branch
        %194 = sbr.rel (%p192) target = $region28
      $region27: #{forward.29} parent=19 // pred_region
        %p195 = scmp.lt.s32.totalorder %s18, 3
        %s196 = scalar_select %p195, %s18, 3
        %s197 = smul.addr %s196, 64
        %s198 = smul.addr %s197, 4
        %s199 = scalar_lea.vmem %s1, %s198
      $region28: #{forward.29} parent=19 // pred_fallthru
        _
    $region20: #{forward.29} parent=5 // pred_fallthru
      _
    %p200 = scmp.le.s32.totalorder 1, %s11
    %p201 = scmp.lt.s32.totalorder %s11, 9
    %p202 = pnand %p200, %p201
    %p203 = pneg %p202
    // Predicated region
    $region29: #{forward.29} parent=5 // pred_check
      _
    $region30: #{forward.29} parent=5 // pred_check_branch
      %205 = sbr.rel (%p202) target = $region32
    $region31: #{forward.29} parent=5 // pred_region
      %s206 = ssub.s32 %s11, 1
      %s207 = smul.u32 2, %s21
      %p208 = scmp.lt.s32.totalorder %s20, 3
      %s209 = scalar_select %p208, %s20, 3
      %p210 = scmp.lt.s32.totalorder %s207, 3
      %s211 = scalar_select %p210, %s207, 3
      %s212 = smul.addr %s211, 4
      %s213 = smul.addr %s209, 16
      %s214 = sadd.s32 %s212, %s213
      %s215 = smul.addr %s214, 4
      %s216 = scalar_lea.vmem %s0, %s215
      %p217 = pneg %p51
      %p218 = pneg %p48
      %p219 = scmp.lt.s32.totalorder %s20, 3
      %s220 = scalar_select %p219, %s20, 3
      %s221 = smul.addr %s220, 64
      %s222 = smul.addr %s221, 4
      %s223 = scalar_lea.vmem %s1, %s222
      %p224 = pneg %p77
      %p225 = pneg %p74
      %p226 = pneg %p98
      %p227 = pneg %p95
      %p228 = pneg %p126
      %p229 = pneg %p123
      %s230 = smul.u32 2, %s21
      %p231 = scmp.lt.s32.totalorder %s20, 3
      %s232 = scalar_select %p231, %s20, 3
      %p233 = scmp.lt.s32.totalorder %s230, 3
      %s234 = scalar_select %p233, %s230, 3
      %s235 = smul.addr %s232, 4
      %s236 = sadd.s32 %s234, %s235
      %s237 = smul.addr %s236, 4
      %s238 = scalar_lea.vmem %s3, %s237
      %p239 = pneg %p156
      %p240 = pneg %p153
      %s241 = smul.u32 %s20, 2
      %s242 = sadd.s32 %s241, %s21
      %p243 = scmp.lt.s32.totalorder %s242, 7
      %s244 = scalar_select %p243, %s242, 7
      %s245 = smul.addr %s244, 2
      %s246 = scalar_lea.vmem %s4, %s245
      %s247 = smul.u32 2, %s21
      %p248 = scmp.lt.s32.totalorder %s20, 3
      %s249 = scalar_select %p248, %s20, 3
      %p250 = scmp.lt.s32.totalorder %s247, 3
      %s251 = scalar_select %p250, %s247, 3
      %s252 = smul.addr %s251, 4
      %s253 = smul.addr %s249, 16
      %s254 = sadd.s32 %s252, %s253
      %s255 = smul.addr %s254, 4
      %s256 = scalar_lea.vmem %s0, %s255
      %s257 = smul.u32 2, %s21
      %p258 = scmp.lt.s32.totalorder %s20, 3
      %s259 = scalar_select %p258, %s20, 3
      %s260 = smul.addr %s259, 64
      %s261 = smul.addr %s260, 4
      %s262 = scalar_lea.vmem %s1, %s261
      %s263 = smul.u32 2, %s21
      %p264 = scmp.lt.s32.totalorder %s20, 3
      %s265 = scalar_select %p264, %s20, 3
      %p266 = scmp.lt.s32.totalorder %s263, 3
      %s267 = scalar_select %p266, %s263, 3
      %s268 = smul.addr %s265, 4
      %s269 = sadd.s32 %s267, %s268
      %s270 = smul.addr %s269, 4
      %s271 = scalar_lea.vmem %s3, %s270
      %s272 = smul.u32 2, %s21
      %s273 = smul.u32 %s20, 2
      %s274 = sadd.s32 %s273, %s21
      %p275 = scmp.lt.s32.totalorder %s274, 7
      %s276 = scalar_select %p275, %s274, 7
      %s277 = smul.addr %s276, 2
      %s278 = scalar_lea.vmem %s4, %s277
      %s279 = smul.u32 %s20, 2
      %s280 = sadd.s32 %s279, %s21
      %v282 = vld [vmem:[%s256] sm:$0xff]
      %v283 = vld [vmem:[%s256 + $0x8] sm:$0xff]
      %v284 = vld [vmem:[%s256 + $0x10] sm:$0xff]
      %v285 = vld [vmem:[%s256 + $0x18] sm:$0xff]
      %v286 = vld [vmem:[%s262] sm:$0xf]
      %v287 = vld [vmem:[%s262 + $0x4] sm:$0xf]
      %v288 = vld [vmem:[%s262 + $0x8] sm:$0xf]
      %v289 = vld [vmem:[%s262 + $0xc] sm:$0xf]
      %v290 = vld [vmem:[%s262 + $0x10] sm:$0xf]
      %v291 = vld [vmem:[%s262 + $0x14] sm:$0xf]
      %v292 = vld [vmem:[%s262 + $0x18] sm:$0xf]
      %v293 = vld [vmem:[%s262 + $0x1c] sm:$0xf]
      %v294 = vld [vmem:[%s262 + $0x20] sm:$0xf]
      %v295 = vld [vmem:[%s262 + $0x24] sm:$0xf]
      %v296 = vld [vmem:[%s262 + $0x28] sm:$0xf]
      %v297 = vld [vmem:[%s262 + $0x2c] sm:$0xf]
      %v298 = vld [vmem:[%s262 + $0x30] sm:$0xf]
      %v299 = vld [vmem:[%s262 + $0x34] sm:$0xf]
      %v300 = vld [vmem:[%s262 + $0x38] sm:$0xf]
      %v301 = vld [vmem:[%s262 + $0x3c] sm:$0xf]
      %v302 = vld [vmem:[%s262 + $0x40] sm:$0xf]
      %v303 = vld [vmem:[%s262 + $0x44] sm:$0xf]
      %v304 = vld [vmem:[%s262 + $0x48] sm:$0xf]
      %v305 = vld [vmem:[%s262 + $0x4c] sm:$0xf]
      %v306 = vld [vmem:[%s262 + $0x50] sm:$0xf]
      %v307 = vld [vmem:[%s262 + $0x54] sm:$0xf]
      %v308 = vld [vmem:[%s262 + $0x58] sm:$0xf]
      %v309 = vld [vmem:[%s262 + $0x5c] sm:$0xf]
      %v310 = vld [vmem:[%s262 + $0x60] sm:$0xf]
      %v311 = vld [vmem:[%s262 + $0x64] sm:$0xf]
      %v312 = vld [vmem:[%s262 + $0x68] sm:$0xf]
      %v313 = vld [vmem:[%s262 + $0x6c] sm:$0xf]
      %v314 = vld [vmem:[%s262 + $0x70] sm:$0xf]
      %v315 = vld [vmem:[%s262 + $0x74] sm:$0xf]
      %v316 = vld [vmem:[%s262 + $0x78] sm:$0xf]
      %v317 = vld [vmem:[%s262 + $0x7c] sm:$0xf]
      %v318 = vld [vmem:[%s262 + $0x80] sm:$0xf]
      %v319 = vld [vmem:[%s262 + $0x84] sm:$0xf]
      %v320 = vld [vmem:[%s262 + $0x88] sm:$0xf]
      %v321 = vld [vmem:[%s262 + $0x8c] sm:$0xf]
      %v322 = vld [vmem:[%s262 + $0x90] sm:$0xf]
      %v323 = vld [vmem:[%s262 + $0x94] sm:$0xf]
      %v324 = vld [vmem:[%s262 + $0x98] sm:$0xf]
      %v325 = vld [vmem:[%s262 + $0x9c] sm:$0xf]
      %v326 = vld [vmem:[%s262 + $0xa0] sm:$0xf]
      %v327 = vld [vmem:[%s262 + $0xa4] sm:$0xf]
      %v328 = vld [vmem:[%s262 + $0xa8] sm:$0xf]
      %v329 = vld [vmem:[%s262 + $0xac] sm:$0xf]
      %v330 = vld [vmem:[%s262 + $0xb0] sm:$0xf]
      %v331 = vld [vmem:[%s262 + $0xb4] sm:$0xf]
      %v332 = vld [vmem:[%s262 + $0xb8] sm:$0xf]
      %v333 = vld [vmem:[%s262 + $0xbc] sm:$0xf]
      %v334 = vld [vmem:[%s262 + $0xc0] sm:$0xf]
      %v335 = vld [vmem:[%s262 + $0xc4] sm:$0xf]
      %v336 = vld [vmem:[%s262 + $0xc8] sm:$0xf]
      %v337 = vld [vmem:[%s262 + $0xcc] sm:$0xf]
      %v338 = vld [vmem:[%s262 + $0xd0] sm:$0xf]
      %v339 = vld [vmem:[%s262 + $0xd4] sm:$0xf]
      %v340 = vld [vmem:[%s262 + $0xd8] sm:$0xf]
      %v341 = vld [vmem:[%s262 + $0xdc] sm:$0xf]
      %v342 = vld [vmem:[%s262 + $0xe0] sm:$0xf]
      %v343 = vld [vmem:[%s262 + $0xe4] sm:$0xf]
      %v344 = vld [vmem:[%s262 + $0xe8] sm:$0xf]
      %v345 = vld [vmem:[%s262 + $0xec] sm:$0xf]
      %v346 = vld [vmem:[%s262 + $0xf0] sm:$0xf]
      %v347 = vld [vmem:[%s262 + $0xf4] sm:$0xf]
      %v348 = vld [vmem:[%s262 + $0xf8] sm:$0xf]
      %v349 = vld [vmem:[%s262 + $0xfc] sm:$0xf]
      %v350 = vld [vmem:[%s2] sm:$0x1]
      %v352 = vlaneseq
      %v353 = vshrl.u32 %v352, 7
      %v354 = vsub.s32 0, %v353
      %v355 = vrot.slane %v350, %v354
      %v361 = vunpack.c.l.b16 %v282
      %v362 = vunpack.c.h.b16 %v282
      %v363 = vunpack.c.l.b16 %v283
      %v364 = vunpack.c.h.b16 %v283
      %v365 = vunpack.c.l.b16 %v284
      %v366 = vunpack.c.h.b16 %v284
      %v367 = vunpack.c.l.b16 %v285
      %v368 = vunpack.c.h.b16 %v285
      %v369 = vpack.c.b16 %v365, %v361
      %v370 = vpack.c.b16 %v366, %v362
      %v371 = vpack.c.b16 %v367, %v363
      %v372 = vpack.c.b16 %v368, %v364
      %v441 = vunpack.c.l.b16 %v286
      %v442 = vunpack.c.l.b16 %v287
      %v443 = vunpack.c.l.b16 %v288
      %v444 = vunpack.c.l.b16 %v289
      %v445 = vunpack.c.l.b16 %v290
      %v446 = vunpack.c.l.b16 %v291
      %v447 = vunpack.c.l.b16 %v292
      %v448 = vunpack.c.l.b16 %v293
      %v449 = vunpack.c.l.b16 %v294
      %v450 = vunpack.c.l.b16 %v295
      %v451 = vunpack.c.l.b16 %v296
      %v452 = vunpack.c.l.b16 %v297
      %v453 = vunpack.c.l.b16 %v298
      %v454 = vunpack.c.l.b16 %v299
      %v455 = vunpack.c.l.b16 %v300
      %v456 = vunpack.c.l.b16 %v301
      %v457 = vunpack.c.l.b16 %v302
      %v458 = vunpack.c.l.b16 %v303
      %v459 = vunpack.c.l.b16 %v304
      %v460 = vunpack.c.l.b16 %v305
      %v461 = vunpack.c.l.b16 %v306
      %v462 = vunpack.c.l.b16 %v307
      %v463 = vunpack.c.l.b16 %v308
      %v464 = vunpack.c.l.b16 %v309
      %v465 = vunpack.c.l.b16 %v310
      %v466 = vunpack.c.l.b16 %v311
      %v467 = vunpack.c.l.b16 %v312
      %v468 = vunpack.c.l.b16 %v313
      %v469 = vunpack.c.l.b16 %v314
      %v470 = vunpack.c.l.b16 %v315
      %v471 = vunpack.c.l.b16 %v316
      %v472 = vunpack.c.l.b16 %v317
      %v473 = vunpack.c.l.b16 %v318
      %v474 = vunpack.c.l.b16 %v319
      %v475 = vunpack.c.l.b16 %v320
      %v476 = vunpack.c.l.b16 %v321
      %v477 = vunpack.c.l.b16 %v322
      %v478 = vunpack.c.l.b16 %v323
      %v479 = vunpack.c.l.b16 %v324
      %v480 = vunpack.c.l.b16 %v325
      %v481 = vunpack.c.l.b16 %v326
      %v482 = vunpack.c.l.b16 %v327
      %v483 = vunpack.c.l.b16 %v328
      %v484 = vunpack.c.l.b16 %v329
      %v485 = vunpack.c.l.b16 %v330
      %v486 = vunpack.c.l.b16 %v331
      %v487 = vunpack.c.l.b16 %v332
      %v488 = vunpack.c.l.b16 %v333
      %v489 = vunpack.c.l.b16 %v334
      %v490 = vunpack.c.l.b16 %v335
      %v491 = vunpack.c.l.b16 %v336
      %v492 = vunpack.c.l.b16 %v337
      %v493 = vunpack.c.l.b16 %v338
      %v494 = vunpack.c.l.b16 %v339
      %v495 = vunpack.c.l.b16 %v340
      %v496 = vunpack.c.l.b16 %v341
      %v497 = vunpack.c.l.b16 %v342
      %v498 = vunpack.c.l.b16 %v343
      %v499 = vunpack.c.l.b16 %v344
      %v500 = vunpack.c.l.b16 %v345
      %v501 = vunpack.c.l.b16 %v346
      %v502 = vunpack.c.l.b16 %v347
      %v503 = vunpack.c.l.b16 %v348
      %v504 = vunpack.c.l.b16 %v349
      %v505 = vpack.c.b16 %v442, %v441
      %v506 = vpack.c.b16 %v444, %v443
      %v507 = vpack.c.b16 %v446, %v445
      %v508 = vpack.c.b16 %v448, %v447
      %v509 = vpack.c.b16 %v450, %v449
      %v510 = vpack.c.b16 %v452, %v451
      %v511 = vpack.c.b16 %v454, %v453
      %v512 = vpack.c.b16 %v456, %v455
      %v513 = vpack.c.b16 %v458, %v457
      %v514 = vpack.c.b16 %v460, %v459
      %v515 = vpack.c.b16 %v462, %v461
      %v516 = vpack.c.b16 %v464, %v463
      %v517 = vpack.c.b16 %v466, %v465
      %v518 = vpack.c.b16 %v468, %v467
      %v519 = vpack.c.b16 %v470, %v469
      %v520 = vpack.c.b16 %v472, %v471
      %v521 = vpack.c.b16 %v474, %v473
      %v522 = vpack.c.b16 %v476, %v475
      %v523 = vpack.c.b16 %v478, %v477
      %v524 = vpack.c.b16 %v480, %v479
      %v525 = vpack.c.b16 %v482, %v481
      %v526 = vpack.c.b16 %v484, %v483
      %v527 = vpack.c.b16 %v486, %v485
      %v528 = vpack.c.b16 %v488, %v487
      %v529 = vpack.c.b16 %v490, %v489
      %v530 = vpack.c.b16 %v492, %v491
      %v531 = vpack.c.b16 %v494, %v493
      %v532 = vpack.c.b16 %v496, %v495
      %v533 = vpack.c.b16 %v498, %v497
      %v534 = vpack.c.b16 %v500, %v499
      %v535 = vpack.c.b16 %v502, %v501
      %v536 = vpack.c.b16 %v504, %v503
      %569 = vmatprep.subr.bf16.mxu0 0
      %570 = vmatpush1.bf16.msra.mxu0 %v505
      %571 = vmatprep.subr.bf16.mxu0 0
      %572 = vmatpush1.bf16.msra.mxu0 %v506
      %573 = vmatprep.subr.bf16.mxu0 0
      %574 = vmatpush1.bf16.msra.mxu0 %v507
      %575 = vmatprep.subr.bf16.mxu0 0
      %576 = vmatpush1.bf16.msra.mxu0 %v508
      %577 = vmatprep.subr.bf16.mxu0 0
      %578 = vmatpush1.bf16.msra.mxu0 %v509
      %579 = vmatprep.subr.bf16.mxu0 0
      %580 = vmatpush1.bf16.msra.mxu0 %v510
      %581 = vmatprep.subr.bf16.mxu0 0
      %582 = vmatpush1.bf16.msra.mxu0 %v511
      %583 = vmatprep.subr.bf16.mxu0 0
      %584 = vmatpush1.bf16.msra.mxu0 %v512
      %585 = vmatprep.subr.bf16.mxu0 0
      %586 = vmatpush1.bf16.msra.mxu0 %v513
      %587 = vmatprep.subr.bf16.mxu0 0
      %588 = vmatpush1.bf16.msra.mxu0 %v514
      %589 = vmatprep.subr.bf16.mxu0 0
      %590 = vmatpush1.bf16.msra.mxu0 %v515
      %591 = vmatprep.subr.bf16.mxu0 0
      %592 = vmatpush1.bf16.msra.mxu0 %v516
      %593 = vmatprep.subr.bf16.mxu0 0
      %594 = vmatpush1.bf16.msra.mxu0 %v517
      %595 = vmatprep.subr.bf16.mxu0 0
      %596 = vmatpush1.bf16.msra.mxu0 %v518
      %597 = vmatprep.subr.bf16.mxu0 0
      %598 = vmatpush1.bf16.msra.mxu0 %v519
      %599 = vmatprep.subr.bf16.mxu0 0
      %600 = vmatpush1.bf16.msra.mxu0 %v520
      %601 = vmatprep.mubr.bf16.mxu0 %v370
      %602 = vmatmul.mubr.bf16.gmra.mrb[0].mxu0 %v369
      %v603 = vpop.f32.mrb[0].mxu0
      %v604 = vadd.f32 %v355, %v603
      %v605 = vpop.f32.mrb[0].mxu0
      %v606 = vpop.f32.mrb[0].mxu0
      %v607 = vadd.f32 %v355, %v606
      %v608 = vpop.f32.mrb[0].mxu0
      %609 = vdwg.mxu0
      %610 = vmatprep.subr.bf16.mxu0 0
      %611 = vmatpush1.bf16.msra.mxu0 %v521
      %612 = vmatprep.subr.bf16.mxu0 0
      %613 = vmatpush1.bf16.msra.mxu0 %v522
      %614 = vmatprep.subr.bf16.mxu0 0
      %615 = vmatpush1.bf16.msra.mxu0 %v523
      %616 = vmatprep.subr.bf16.mxu0 0
      %617 = vmatpush1.bf16.msra.mxu0 %v524
      %618 = vmatprep.subr.bf16.mxu0 0
      %619 = vmatpush1.bf16.msra.mxu0 %v525
      %620 = vmatprep.subr.bf16.mxu0 0
      %621 = vmatpush1.bf16.msra.mxu0 %v526
      %622 = vmatprep.subr.bf16.mxu0 0
      %623 = vmatpush1.bf16.msra.mxu0 %v527
      %624 = vmatprep.subr.bf16.mxu0 0
      %625 = vmatpush1.bf16.msra.mxu0 %v528
      %626 = vmatprep.subr.bf16.mxu0 0
      %627 = vmatpush1.bf16.msra.mxu0 %v529
      %628 = vmatprep.subr.bf16.mxu0 0
      %629 = vmatpush1.bf16.msra.mxu0 %v530
      %630 = vmatprep.subr.bf16.mxu0 0
      %631 = vmatpush1.bf16.msra.mxu0 %v531
      %632 = vmatprep.subr.bf16.mxu0 0
      %633 = vmatpush1.bf16.msra.mxu0 %v532
      %634 = vmatprep.subr.bf16.mxu0 0
      %635 = vmatpush1.bf16.msra.mxu0 %v533
      %636 = vmatprep.subr.bf16.mxu0 0
      %637 = vmatpush1.bf16.msra.mxu0 %v534
      %638 = vmatprep.subr.bf16.mxu0 0
      %639 = vmatpush1.bf16.msra.mxu0 %v535
      %640 = vmatprep.subr.bf16.mxu0 0
      %641 = vmatpush1.bf16.msra.mxu0 %v536
      %642 = vmatprep.mubr.bf16.mxu0 %v372
      %643 = vmatmul.mubr.bf16.gmra.mrb[0].mxu0 %v371
      %v644 = vpop.f32.mrb[0].mxu0
      %v645 = vadd.f32 %v604, %v644
      %v646 = vpop.f32.mrb[0].mxu0
      %v647 = vpop.f32.mrb[0].mxu0
      %v648 = vadd.f32 %v607, %v647
      %v649 = vpop.f32.mrb[0].mxu0
      %650 = vdwg.mxu0
      %v651 = vmax.f32 %v645, 0.0
      %v652 = vmax.f32 %v648, 0.0
      %v653 = vpack.c.bf16 %v652, %v651
      %v655 = vunpack.c.l.b16 %v653
      %v656 = vunpack.c.h.b16 %v653
      %v657 = vpack.c.b16 %v655, %v655
      %v658 = vpack.c.b16 %v656, %v656
      %661 = vst [vmem:[%s271] sm:$0xf] %v657
      %662 = vst [vmem:[%s271 + $0x4] sm:$0xf] %v658
      %v663 = vadd.f32 %v651, %v652
      %v664 = vrot.slane %v663, 4
      %v665 = vadd.f32 %v663, %v664
      %v666 = vrot.slane %v665, 2
      %v667 = vadd.f32 %v665, %v666
      %v668 = vrot.slane %v667, 1
      %v669 = vadd.f32 %v667, %v668
      %670 = vst [vmem:[%s278] sm:$0x1] %v669
      %v671 = vmul.f32 %v651, %v651
      %v672 = vmul.f32 %v652, %v652
      %v673 = vadd.f32 %v671, %v672
      %v674 = vrot.slane %v673, 4
      %v675 = vadd.f32 %v673, %v674
      %v676 = vrot.slane %v675, 2
      %v677 = vadd.f32 %v675, %v676
      %v678 = vrot.slane %v677, 1
      %v679 = vadd.f32 %v677, %v678
      %680 = vst [vmem:[%s278 + $0x1] sm:$0x1] %v679
      %s681 = smul.u32 2, %s21
      %p682 = scmp.lt.s32.totalorder %s20, 3
      %s683 = scalar_select %p682, %s20, 3
      %p684 = scmp.lt.s32.totalorder %s681, 3
      %s685 = scalar_select %p684, %s681, 3
      %s686 = smul.addr %s683, 4
      %s687 = sadd.s32 %s685, %s686
      %s688 = smul.addr %s687, 4
      %s689 = scalar_lea.vmem %s3, %s688
      %s690 = smul.u32 %s20, 2
      %s691 = sadd.s32 %s690, %s21
      %p692 = scmp.lt.s32.totalorder %s691, 7
      %s693 = scalar_select %p692, %s691, 7
      %s694 = smul.addr %s693, 2
      %s695 = scalar_lea.vmem %s4, %s694
      // Predicated region
      $region33: #{forward.29} parent=31 // pred_check
        %p696 = pneg %p123
      $region34: #{forward.29} parent=31 // pred_check_branch
        %698 = sbr.rel (%p696) target = $region36
      $region35: #{forward.29} parent=31 // pred_region
        %s699 = smul.u32 2, %s21
      $region36: #{forward.29} parent=31 // pred_fallthru
        _
      // Predicated region
      $region37: #{forward.29} parent=31 // pred_check
        %p700 = pneg %p153
      $region38: #{forward.29} parent=31 // pred_check_branch
        %702 = sbr.rel (%p700) target = $region40
      $region39: #{forward.29} parent=31 // pred_region
        %s703 = smul.u32 %s20, 2
        %s704 = sadd.s32 %s703, %s21
      $region40: #{forward.29} parent=31 // pred_fallthru
        _
    $region32: #{forward.29} parent=5 // pred_fallthru
      _
    %p705 = scmp.le.s32.totalorder 2, %s11
    // Predicated region
    $region41: #{forward.29} parent=5 // pred_check
      %p706 = pneg %p705
    $region42: #{forward.29} parent=5 // pred_check_branch
      %708 = sbr.rel (%p706) target = $region44
    $region43: #{forward.29} parent=5 // pred_region
      %s709 = ssub.s32 %s11, 2
      // Predicated region
      $region45: #{forward.29} parent=43 // pred_check
        %p710 = pneg %p129
      $region46: #{forward.29} parent=43 // pred_check_branch
        %712 = sbr.rel (%p710) target = $region48
      $region47: #{forward.29} parent=43 // pred_region
        %s713 = smul.u32 2, %s23
        %p714 = scmp.lt.s32.totalorder %s22, 3
        %s715 = scalar_select %p714, %s22, 3
        %p716 = scmp.lt.s32.totalorder %s713, 3
        %s717 = scalar_select %p716, %s713, 3
        %s718 = smul.addr %s715, 4
        %s719 = sadd.s32 %s717, %s718
        %s720 = smul.addr %s719, 4
        %s721 = scalar_lea.vmem %s3, %s720
      $region48: #{forward.29} parent=43 // pred_fallthru
        _
      // Predicated region
      $region49: #{forward.29} parent=43 // pred_check
        %p722 = pneg %p159
      $region50: #{forward.29} parent=43 // pred_check_branch
        %724 = sbr.rel (%p722) target = $region52
      $region51: #{forward.29} parent=43 // pred_region
        %s725 = smul.u32 %s22, 2
        %s726 = sadd.s32 %s725, %s23
        %p727 = scmp.lt.s32.totalorder %s726, 7
        %s728 = scalar_select %p727, %s726, 7
        %s729 = smul.addr %s728, 2
        %s730 = scalar_lea.vmem %s4, %s729
      $region52: #{forward.29} parent=43 // pred_fallthru
        _
    $region44: #{forward.29} parent=5 // pred_fallthru
      _
  $region6: #{forward.29} parent=0 // loop_footer
    %s15 = sadd.s32 1, %s11
  $region7: #{forward.29} parent=0 // loop_footer_branch
    %10 = sbr.rel target = $region3
  $region8: #{forward.29} parent=0 // loop_exit
    _

// kernel: forward.31
$region0: #{forward.31}
  #allocation0 [shape = 'u32[]', space=smem, size = 0x4, offset = 0x4, fixed_abs, tag = 'smem constant byte address 0x4 - core index']
  #allocation1 [shape = 'u32[144,128]{1,0:T(1,128)}', space=vmem, size = 0x12000, scoped, tag = 'internal scratch']
  %s0 = inlined_call_operand.vmem [shape: bf16[4,128,256], index: 0, kind: input, shape index: {}]
  %s1 = inlined_call_operand.vmem [shape: bf16[4,256,128], index: 1, kind: input, shape index: {}]
  %s2 = inlined_call_operand.vmem [shape: f32[1,128], index: 2, kind: input, shape index: {}]
  %s3 = inlined_call_operand.vmem [shape: bf16[4,128,128], index: 3, kind: output, shape index: {0}]
  %s4 = inlined_call_operand.vmem [shape: f32[8,2,128], index: 4, kind: output, shape index: {1}]
  %5 = xla_tuple %s3, %s4
  %s6 = sld [smem:[#allocation0]]
  $region53: #{forward.31} parent=0
    _
  %s8 = ssub.s32 1, %s6
  %s9 = scalar_select 0, %s8, %s6
  loop: start=0, step=1, limit=10
  $region2: #{forward.31} parent=0 // loop_pre_header
    _
  $region3: #{forward.31} parent=0 // loop_header
    %s11 = sphi 0, %s15
    %p12 = scmp.ge.s32.totalorder %s11, 10
    %s18 = sphi 0, %s30
    %s19 = sphi 0, %s26
    %s20 = sphi 0, %s18
    %s21 = sphi 0, %s19
    %s22 = sphi 0, %s20
    %s23 = sphi 0, %s21
    %s35 = sphi 0, %s37
    %s38 = sphi 0, %s35
    %s39 = sphi 0, %s38
    %s55 = sphi 0, %s39
    %s61 = sphi 0, %s63
    %s64 = sphi 0, %s61
    %s65 = sphi 0, %s64
    %s81 = sphi 0, %s65
    %s85 = sphi 0, %s85
    %s87 = sphi 0, %s85
    %s88 = sphi 0, %s87
    %s102 = sphi 0, %s88
    %s110 = sphi 0, %s112
    %s113 = sphi 0, %s110
    %s114 = sphi 0, %s113
    %s130 = sphi 0, %s114
    %s140 = sphi 0, %s142
    %s143 = sphi 0, %s140
    %s144 = sphi 0, %s143
    %s160 = sphi 0, %s144
  $region4: #{forward.31} parent=0 // loop_header_branch
    %14 = sbr.rel (%p12) target = $region8
  $region5: #{forward.31} parent=0 // loop_body
    %s16 = ssub.s32 %s11, 1
    %s17 = ssub.s32 %s11, 2
    %s24 = sadd.s32 1, %s19
    %p25 = scmp.ge.s32.totalorder %s24, 2
    %s26 = scalar_select %p25, 0, %s24
    %s27 = sadd.s32 1, %s18
    %s28 = scalar_select %p25, %s27, %s18
    %p29 = scmp.ge.s32.totalorder %s28, 4
    %s30 = scalar_select %p29, 0, %s28
    %s31 = ssub.s32 %s18, %s30
    %s32 = ssub.s32 %s19, %s26
    %s33 = sor.u32 %s31, %s32
    %p34 = scmp.eq.s32.totalorder %s33, 0
    %s36 = sadd.s32 %s35, 1
    %s37 = scalar_select %p34, %s35, %s36
    %p40 = pneg %p34
    %p41 = scmp.eq.s32.totalorder %s11, 7
    %p42 = por %p40, %p41
    %p43 = scmp.ne.s32.totalorder %s35, %s38
    %p44 = scmp.eq.s32.totalorder %s11, 0
    %p45 = por %p43, %p44
    %p46 = scmp.ne.s32.totalorder %s35, %s38
    %p47 = scmp.eq.s32.totalorder %s16, 7
    %p48 = por %p46, %p47
    %p49 = scmp.ne.s32.totalorder %s38, %s39
    %p50 = scmp.eq.s32.totalorder %s16, 0
    %p51 = por %p49, %p50
    %p52 = scmp.ne.s32.totalorder %s38, %s39
    %p53 = scmp.eq.s32.totalorder %s17, 7
    %p54 = por %p52, %p53
    %p56 = scmp.ne.s32.totalorder %s39, %s55
    %p57 = scmp.eq.s32.totalorder %s17, 0
    %p58 = por %p56, %p57
    %s59 = ssub.s32 %s18, %s30
    %p60 = scmp.eq.s32.totalorder %s59, 0
    %s62 = sadd.s32 %s61, 1
    %s63 = scalar_select %p60, %s61, %s62
    %p66 = pneg %p60
    %p67 = scmp.eq.s32.totalorder %s11, 7
    %p68 = por %p66, %p67
    %p69 = scmp.ne.s32.totalorder %s61, %s64
    %p70 = scmp.eq.s32.totalorder %s11, 0
    %p71 = por %p69, %p70
    %p72 = scmp.ne.s32.totalorder %s61, %s64
    %p73 = scmp.eq.s32.totalorder %s16, 7
    %p74 = por %p72, %p73
    %p75 = scmp.ne.s32.totalorder %s64, %s65
    %p76 = scmp.eq.s32.totalorder %s16, 0
    %p77 = por %p75, %p76
    %p78 = scmp.ne.s32.totalorder %s64, %s65
    %p79 = scmp.eq.s32.totalorder %s17, 7
    %p80 = por %p78, %p79
    %p82 = scmp.ne.s32.totalorder %s65, %s81
    %p83 = scmp.eq.s32.totalorder %s17, 0
    %p84 = por %p82, %p83
    %s86 = sadd.s32 %s85, 1
    %p89 = scmp.eq.s32.totalorder %s11, 7
    %p90 = scmp.ne.s32.totalorder %s85, %s87
    %p91 = scmp.eq.s32.totalorder %s11, 0
    %p92 = por %p90, %p91
    %p93 = scmp.ne.s32.totalorder %s85, %s87
    %p94 = scmp.eq.s32.totalorder %s16, 7
    %p95 = por %p93, %p94
    %p96 = scmp.ne.s32.totalorder %s87, %s88
    %p97 = scmp.eq.s32.totalorder %s16, 0
    %p98 = por %p96, %p97
    %p99 = scmp.ne.s32.totalorder %s87, %s88
    %p100 = scmp.eq.s32.totalorder %s17, 7
    %p101 = por %p99, %p100
    %p103 = scmp.ne.s32.totalorder %s88, %s102
    %p104 = scmp.eq.s32.totalorder %s17, 0
    %p105 = por %p103, %p104
    %s106 = ssub.s32 %s18, %s30
    %s107 = ssub.s32 %s19, %s26
    %s108 = sor.u32 %s106, %s107
    %p109 = scmp.eq.s32.totalorder %s108, 0
    %s111 = sadd.s32 %s110, 1
    %s112 = scalar_select %p109, %s110, %s111
    %p115 = pneg %p109
    %p116 = scmp.eq.s32.totalorder %s11, 7
    %p117 = por %p115, %p116
    %p118 = scmp.ne.s32.totalorder %s110, %s113
    %p119 = scmp.eq.s32.totalorder %s11, 0
    %p120 = por %p118, %p119
    %p121 = scmp.ne.s32.totalorder %s110, %s113
    %p122 = scmp.eq.s32.totalorder %s16, 7
    %p123 = por %p121, %p122
    %p124 = scmp.ne.s32.totalorder %s113, %s114
    %p125 = scmp.eq.s32.totalorder %s16, 0
    %p126 = por %p124, %p125
    %p127 = scmp.ne.s32.totalorder %s113, %s114
    %p128 = scmp.eq.s32.totalorder %s17, 7
    %p129 = por %p127, %p128
    %p131 = scmp.ne.s32.totalorder %s114, %s130
    %p132 = scmp.eq.s32.totalorder %s17, 0
    %p133 = por %p131, %p132
    %s134 = smul.u32 %s18, 2
    %s135 = sadd.s32 %s134, %s19
    %s136 = smul.u32 %s30, 2
    %s137 = sadd.s32 %s136, %s26
    %s138 = ssub.s32 %s135, %s137
    %p139 = scmp.eq.s32.totalorder %s138, 0
    %s141 = sadd.s32 %s140, 1
    %s142 = scalar_select %p139, %s140, %s141
    %p145 = pneg %p139
    %p146 = scmp.eq.s32.totalorder %s11, 7
    %p147 = por %p145, %p146
    %p148 = scmp.ne.s32.totalorder %s140, %s143
    %p149 = scmp.eq.s32.totalorder %s11, 0
    %p150 = por %p148, %p149
    %p151 = scmp.ne.s32.totalorder %s140, %s143
    %p152 = scmp.eq.s32.totalorder %s16, 7
    %p153 = por %p151, %p152
    %p154 = scmp.ne.s32.totalorder %s143, %s144
    %p155 = scmp.eq.s32.totalorder %s16, 0
    %p156 = por %p154, %p155
    %p157 = scmp.ne.s32.totalorder %s143, %s144
    %p158 = scmp.eq.s32.totalorder %s17, 7
    %p159 = por %p157, %p158
    %p161 = scmp.ne.s32.totalorder %s144, %s160
    %p162 = scmp.eq.s32.totalorder %s17, 0
    %p163 = por %p161, %p162
    %p164 = scmp.le.s32.totalorder 1, %s11
    %p165 = scmp.lt.s32.totalorder %s11, 9
    %p166 = pnand %p164, %p165
    %p167 = pneg %p166
    // Predicated region
    $region9: #{forward.31} parent=5 // pred_check
      _
    $region10: #{forward.31} parent=5 // pred_check_branch
      %169 = sbr.rel (%p166) target = $region12
    $region11: #{forward.31} parent=5 // pred_region
      %s170 = ssub.s32 %s11, 1
      // Predicated region
      $region13: #{forward.31} parent=11 // pred_check
        %p171 = pneg %p98
      $region14: #{forward.31} parent=11 // pred_check_branch
        %173 = sbr.rel (%p171) target = $region16
      $region15: #{forward.31} parent=11 // pred_region
        _
      $region16: #{forward.31} parent=11 // pred_fallthru
        _
    $region12: #{forward.31} parent=5 // pred_fallthru
      _
    %p174 = scmp.lt.s32.totalorder %s11, 8
    // Predicated region
    $region17: #{forward.31} parent=5 // pred_check
      %p175 = pneg %p174
    $region18: #{forward.31} parent=5 // pred_check_branch
      %177 = sbr.rel (%p175) target = $region20
    $region19: #{forward.31} parent=5 // pred_region
      // Predicated region
      $region21: #{forward.31} parent=19 // pred_check
        %p178 = pneg %p45
      $region22: #{forward.31} parent=19 // pred_check_branch
        %180 = sbr.rel (%p178) target = $region24
      $region23: #{forward.31} parent=19 // pred_region
        %s181 = smul.u32 8, %s19
        %p182 = scmp.lt.s32.totalorder %s18, 3
        %s183 = scalar_select %p182, %s18, 3
        %p184 = scmp.lt.s32.totalorder %s181, 15
        %s185 = scalar_select %p184, %s181, 15
        %s186 = smul.addr %s185, 2
        %s187 = smul.addr %s183, 32
        %s188 = sadd.s32 %s186, %s187
        %s189 = smul.addr %s188, 4
        %s190 = scalar_lea.vmem %s0, %s189
        %s191 = smul.u32 8, %s19
      $region24: #{forward.31} parent=19 // pred_fallthru
        _
      // Predicated region
      $region25: #{forward.31} parent=19 // pred_check
        %p192 = pneg %p71
      $region26: #{forward.31} parent=19 // pred_check_branch
        %194 = sbr.rel (%p192) target = $region28
      $region27: #{forward.31} parent=19 // pred_region
        %p195 = scmp.lt.s32.totalorder %s18, 3
        %s196 = scalar_select %p195, %s18, 3
        %s197 = smul.addr %s196, 32
        %s198 = smul.addr %s197, 4
        %s199 = scalar_lea.vmem %s1, %s198
      $region28: #{forward.31} parent=19 // pred_fallthru
        _
    $region20: #{forward.31} parent=5 // pred_fallthru
      _
    %p200 = scmp.le.s32.totalorder 1, %s11
    %p201 = scmp.lt.s32.totalorder %s11, 9
    %p202 = pnand %p200, %p201
    %p203 = pneg %p202
    // Predicated region
    $region29: #{forward.31} parent=5 // pred_check
      _
    $region30: #{forward.31} parent=5 // pred_check_branch
      %205 = sbr.rel (%p202) target = $region32
    $region31: #{forward.31} parent=5 // pred_region
      %s206 = ssub.s32 %s11, 1
      %s207 = smul.u32 8, %s21
      %p208 = scmp.lt.s32.totalorder %s20, 3
      %s209 = scalar_select %p208, %s20, 3
      %p210 = scmp.lt.s32.totalorder %s207, 15
      %s211 = scalar_select %p210, %s207, 15
      %s212 = smul.addr %s211, 2
      %s213 = smul.addr %s209, 32
      %s214 = sadd.s32 %s212, %s213
      %s215 = smul.addr %s214, 4
      %s216 = scalar_lea.vmem %s0, %s215
      %p217 = pneg %p51
      %p218 = pneg %p48
      %p219 = scmp.lt.s32.totalorder %s20, 3
      %s220 = scalar_select %p219, %s20, 3
      %s221 = smul.addr %s220, 32
      %s222 = smul.addr %s221, 4
      %s223 = scalar_lea.vmem %s1, %s222
      %p224 = pneg %p77
      %p225 = pneg %p74
      %p226 = pneg %p98
      %p227 = pneg %p95
      %p228 = pneg %p126
      %p229 = pneg %p123
      %s230 = smul.u32 8, %s21
      %p231 = scmp.lt.s32.totalorder %s20, 3
      %s232 = scalar_select %p231, %s20, 3
      %p233 = scmp.lt.s32.totalorder %s230, 15
      %s234 = scalar_select %p233, %s230, 15
      %s235 = smul.addr %s232, 16
      %s236 = sadd.s32 %s234, %s235
      %s237 = smul.addr %s236, 4
      %s238 = scalar_lea.vmem %s3, %s237
      %p239 = pneg %p156
      %p240 = pneg %p153
      %s241 = smul.u32 %s20, 2
      %s242 = sadd.s32 %s241, %s21
      %p243 = scmp.lt.s32.totalorder %s242, 7
      %s244 = scalar_select %p243, %s242, 7
      %s245 = smul.addr %s244, 2
      %s246 = scalar_lea.vmem %s4, %s245
      %s247 = smul.u32 8, %s21
      %p248 = scmp.lt.s32.totalorder %s20, 3
      %s249 = scalar_select %p248, %s20, 3
      %p250 = scmp.lt.s32.totalorder %s247, 15
      %s251 = scalar_select %p250, %s247, 15
      %s252 = smul.addr %s251, 2
      %s253 = smul.addr %s249, 32
      %s254 = sadd.s32 %s252, %s253
      %s255 = smul.addr %s254, 4
      %s256 = scalar_lea.vmem %s0, %s255
      %s257 = smul.u32 8, %s21
      %p258 = scmp.lt.s32.totalorder %s20, 3
      %s259 = scalar_select %p258, %s20, 3
      %s260 = smul.addr %s259, 32
      %s261 = smul.addr %s260, 4
      %s262 = scalar_lea.vmem %s1, %s261
      %s263 = smul.u32 8, %s21
      %p264 = scmp.lt.s32.totalorder %s20, 3
      %s265 = scalar_select %p264, %s20, 3
      %p266 = scmp.lt.s32.totalorder %s263, 15
      %s267 = scalar_select %p266, %s263, 15
      %s268 = smul.addr %s265, 16
      %s269 = sadd.s32 %s267, %s268
      %s270 = smul.addr %s269, 4
      %s271 = scalar_lea.vmem %s3, %s270
      %s272 = smul.u32 8, %s21
      %s273 = smul.u32 %s20, 2
      %s274 = sadd.s32 %s273, %s21
      %p275 = scmp.lt.s32.totalorder %s274, 7
      %s276 = scalar_select %p275, %s274, 7
      %s277 = smul.addr %s276, 2
      %s278 = scalar_lea.vmem %s4, %s277
      %s279 = smul.u32 %s20, 2
      %s280 = sadd.s32 %s279, %s21
      %v282 = vld [vmem:[%s256] sm:$0xff]
      %v283 = vld [vmem:[%s256 + $0x8] sm:$0xff]
      %v284 = vld [vmem:[%s256 + $0x10] sm:$0xff]
      %v285 = vld [vmem:[%s256 + $0x18] sm:$0xff]
      %v286 = vld [vmem:[%s256 + $0x20] sm:$0xff]
      %v287 = vld [vmem:[%s256 + $0x28] sm:$0xff]
      %v288 = vld [vmem:[%s256 + $0x30] sm:$0xff]
      %v289 = vld [vmem:[%s256 + $0x38] sm:$0xff]
      %v290 = vld [vmem:[%s262] sm:$0xf]
      %v291 = vld [vmem:[%s262 + $0x4] sm:$0xf]
      %v292 = vld [vmem:[%s262 + $0x8] sm:$0xf]
      %v293 = vld [vmem:[%s262 + $0xc] sm:$0xf]
      %v294 = vld [vmem:[%s262 + $0x10] sm:$0xf]
      %v295 = vld [vmem:[%s262 + $0x14] sm:$0xf]
      %v296 = vld [vmem:[%s262 + $0x18] sm:$0xf]
      %v297 = vld [vmem:[%s262 + $0x1c] sm:$0xf]
      %v298 = vld [vmem:[%s262 + $0x20] sm:$0xf]
      %v299 = vld [vmem:[%s262 + $0x24] sm:$0xf]
      %v300 = vld [vmem:[%s262 + $0x28] sm:$0xf]
      %v301 = vld [vmem:[%s262 + $0x2c] sm:$0xf]
      %v302 = vld [vmem:[%s262 + $0x30] sm:$0xf]
      %v303 = vld [vmem:[%s262 + $0x34] sm:$0xf]
      %v304 = vld [vmem:[%s262 + $0x38] sm:$0xf]
      %v305 = vld [vmem:[%s262 + $0x3c] sm:$0xf]
      %v306 = vld [vmem:[%s262 + $0x40] sm:$0xf]
      %v307 = vld [vmem:[%s262 + $0x44] sm:$0xf]
      %v308 = vld [vmem:[%s262 + $0x48] sm:$0xf]
      %v309 = vld [vmem:[%s262 + $0x4c] sm:$0xf]
      %v310 = vld [vmem:[%s262 + $0x50] sm:$0xf]
      %v311 = vld [vmem:[%s262 + $0x54] sm:$0xf]
      %v312 = vld [vmem:[%s262 + $0x58] sm:$0xf]
      %v313 = vld [vmem:[%s262 + $0x5c] sm:$0xf]
      %v314 = vld [vmem:[%s262 + $0x60] sm:$0xf]
      %v315 = vld [vmem:[%s262 + $0x64] sm:$0xf]
      %v316 = vld [vmem:[%s262 + $0x68] sm:$0xf]
      %v317 = vld [vmem:[%s262 + $0x6c] sm:$0xf]
      %v318 = vld [vmem:[%s262 + $0x70] sm:$0xf]
      %v319 = vld [vmem:[%s262 + $0x74] sm:$0xf]
      %v320 = vld [vmem:[%s262 + $0x78] sm:$0xf]
      %v321 = vld [vmem:[%s262 + $0x7c] sm:$0xf]
      %v322 = vld [vmem:[%s2] sm:$0x1]
      %v324 = vlaneseq
      %v325 = vshrl.u32 %v324, 7
      %v326 = vsub.s32 0, %v325
      %v327 = vrot.slane %v322, %v326
      %v337 = vunpack.c.l.b16 %v282
      %v338 = vunpack.c.h.b16 %v282
      %v339 = vunpack.c.l.b16 %v283
      %v340 = vunpack.c.h.b16 %v283
      %v341 = vunpack.c.l.b16 %v284
      %v342 = vunpack.c.h.b16 %v284
      %v343 = vunpack.c.l.b16 %v285
      %v344 = vunpack.c.h.b16 %v285
      %v345 = vunpack.c.l.b16 %v286
      %v346 = vunpack.c.h.b16 %v286
      %v347 = vunpack.c.l.b16 %v287
      %v348 = vunpack.c.h.b16 %v287
      %v349 = vunpack.c.l.b16 %v288
      %v350 = vunpack.c.h.b16 %v288
      %v351 = vunpack.c.l.b16 %v289
      %v352 = vunpack.c.h.b16 %v289
      %v353 = vpack.c.b16 %v339, %v337
      %v354 = vpack.c.b16 %v340, %v338
      %v355 = vpack.c.b16 %v343, %v341
      %v356 = vpack.c.b16 %v344, %v342
      %v357 = vpack.c.b16 %v347, %v345
      %v358 = vpack.c.b16 %v348, %v346
      %v359 = vpack.c.b16 %v351, %v349
      %v360 = vpack.c.b16 %v352, %v350
      %v401 = vunpack.c.l.b16 %v290
      %v402 = vunpack.c.l.b16 %v291
      %v403 = vunpack.c.l.b16 %v292
      %v404 = vunpack.c.l.b16 %v293
      %v405 = vunpack.c.l.b16 %v294
      %v406 = vunpack.c.l.b16 %v295
      %v407 = vunpack.c.l.b16 %v296
      %v408 = vunpack.c.l.b16 %v297
      %v409 = vunpack.c.l.b16 %v298
      %v410 = vunpack.c.l.b16 %v299
      %v411 = vunpack.c.l.b16 %v300
      %v412 = vunpack.c.l.b16 %v301
      %v413 = vunpack.c.l.b16 %v302
      %v414 = vunpack.c.l.b16 %v303
      %v415 = vunpack.c.l.b16 %v304
      %v416 = vunpack.c.l.b16 %v305
      %v417 = vunpack.c.l.b16 %v306
      %v418 = vunpack.c.l.b16 %v307
      %v419 = vunpack.c.l.b16 %v308
      %v420 = vunpack.c.l.b16 %v309
      %v421 = vunpack.c.l.b16 %v310
      %v422 = vunpack.c.l.b16 %v311
      %v423 = vunpack.c.l.b16 %v312
      %v424 = vunpack.c.l.b16 %v313
      %v425 = vunpack.c.l.b16 %v314
      %v426 = vunpack.c.l.b16 %v315
      %v427 = vunpack.c.l.b16 %v316
      %v428 = vunpack.c.l.b16 %v317
      %v429 = vunpack.c.l.b16 %v318
      %v430 = vunpack.c.l.b16 %v319
      %v431 = vunpack.c.l.b16 %v320
      %v432 = vunpack.c.l.b16 %v321
      %v433 = vpack.c.b16 %v402, %v401
      %v434 = vpack.c.b16 %v404, %v403
      %v435 = vpack.c.b16 %v406, %v405
      %v436 = vpack.c.b16 %v408, %v407
      %v437 = vpack.c.b16 %v410, %v409
      %v438 = vpack.c.b16 %v412, %v411
      %v439 = vpack.c.b16 %v414, %v413
      %v440 = vpack.c.b16 %v416, %v415
      %v441 = vpack.c.b16 %v418, %v417
      %v442 = vpack.c.b16 %v420, %v419
      %v443 = vpack.c.b16 %v422, %v421
      %v444 = vpack.c.b16 %v424, %v423
      %v445 = vpack.c.b16 %v426, %v425
      %v446 = vpack.c.b16 %v428, %v427
      %v447 = vpack.c.b16 %v430, %v429
      %v448 = vpack.c.b16 %v432, %v431
      %465 = vmatprep.subr.bf16.mxu0 0
      %466 = vmatpush1.bf16.msra.mxu0 %v433
      %467 = vmatprep.subr.bf16.mxu0 0
      %468 = vmatpush1.bf16.msra.mxu0 %v434
      %469 = vmatprep.subr.bf16.mxu0 0
      %470 = vmatpush1.bf16.msra.mxu0 %v435
      %471 = vmatprep.subr.bf16.mxu0 0
      %472 = vmatpush1.bf16.msra.mxu0 %v436
      %473 = vmatprep.subr.bf16.mxu0 0
      %474 = vmatpush1.bf16.msra.mxu0 %v437
      %475 = vmatprep.subr.bf16.mxu0 0
      %476 = vmatpush1.bf16.msra.mxu0 %v438
      %477 = vmatprep.subr.bf16.mxu0 0
      %478 = vmatpush1.bf16.msra.mxu0 %v439
      %479 = vmatprep.subr.bf16.mxu0 0
      %480 = vmatpush1.bf16.msra.mxu0 %v440
      %481 = vmatprep.subr.bf16.mxu0 0
      %482 = vmatpush1.bf16.msra.mxu0 %v441
      %483 = vmatprep.subr.bf16.mxu0 0
      %484 = vmatpush1.bf16.msra.mxu0 %v442
      %485 = vmatprep.subr.bf16.mxu0 0
      %486 = vmatpush1.bf16.msra.mxu0 %v443
      %487 = vmatprep.subr.bf16.mxu0 0
      %488 = vmatpush1.bf16.msra.mxu0 %v444
      %489 = vmatprep.subr.bf16.mxu0 0
      %490 = vmatpush1.bf16.msra.mxu0 %v445
      %491 = vmatprep.subr.bf16.mxu0 0
      %492 = vmatpush1.bf16.msra.mxu0 %v446
      %493 = vmatprep.subr.bf16.mxu0 0
      %494 = vmatpush1.bf16.msra.mxu0 %v447
      %495 = vmatprep.subr.bf16.mxu0 0
      %496 = vmatpush1.bf16.msra.mxu0 %v448
      %497 = vmatprep.mubr.bf16.mxu0 %v354
      %498 = vmatmul.mubr.bf16.gmra.mrb[0].mxu0 %v353
      %v499 = vpop.f32.mrb[0].mxu0
      %v500 = vadd.f32 %v327, %v499
      %v501 = vpop.f32.mrb[0].mxu0
      %v502 = vpop.f32.mrb[0].mxu0
      %v503 = vadd.f32 %v327, %v502
      %v504 = vpop.f32.mrb[0].mxu0
      %505 = vmatprep.mubr.bf16.mxu0 %v356
      %506 = vmatmul.mubr.bf16.gmra.mrb[0].mxu0 %v355
      %v507 = vpop.f32.mrb[0].mxu0
      %v508 = vadd.f32 %v327, %v507
      %v509 = vpop.f32.mrb[0].mxu0
      %v510 = vpop.f32.mrb[0].mxu0
      %v511 = vadd.f32 %v327, %v510
      %v512 = vpop.f32.mrb[0].mxu0
      %513 = vmatprep.mubr.bf16.mxu0 %v358
      %514 = vmatmul.mubr.bf16.gmra.mrb[0].mxu0 %v357
      %v515 = vpop.f32.mrb[0].mxu0
      %v516 = vadd.f32 %v327, %v515
      %v517 = vpop.f32.mrb[0].mxu0
      %v518 = vpop.f32.mrb[0].mxu0
      %v519 = vadd.f32 %v327, %v518
      %v520 = vpop.f32.mrb[0].mxu0
      %521 = vmatprep.mubr.bf16.mxu0 %v360
      %522 = vmatmul.mubr.bf16.gmra.mrb[0].mxu0 %v359
      %v523 = vpop.f32.mrb[0].mxu0
      %v524 = vadd.f32 %v327, %v523
      %v525 = vpop.f32.mrb[0].mxu0
      %v526 = vpop.f32.mrb[0].mxu0
      %v527 = vadd.f32 %v327, %v526
      %v528 = vpop.f32.mrb[0].mxu0
      %529 = vdwg.mxu0
      %v530 = vmax.f32 %v500, 0.0
      %v531 = vmax.f32 %v503, 0.0
      %v532 = vmax.f32 %v508, 0.0
      %v533 = vmax.f32 %v511, 0.0
      %v534 = vmax.f32 %v516, 0.0
      %v535 = vmax.f32 %v519, 0.0
      %v536 = vmax.f32 %v524, 0.0
      %v537 = vmax.f32 %v527, 0.0
      %v538 = vpack.c.bf16 %v531, %v530
      %v539 = vpack.c.bf16 %v533, %v532
      %v540 = vpack.c.bf16 %v535, %v534
      %v541 = vpack.c.bf16 %v537, %v536
      %v546 = vunpack.c.l.b16 %v538
      %v547 = vunpack.c.h.b16 %v538
      %v548 = vunpack.c.l.b16 %v539
      %v549 = vunpack.c.h.b16 %v539
      %v550 = vunpack.c.l.b16 %v540
      %v551 = vunpack.c.h.b16 %v540
      %v552 = vunpack.c.l.b16 %v541
      %v553 = vunpack.c.h.b16 %v541
      %v554 = vpack.c.b16 %v546, %v546
      %v555 = vpack.c.b16 %v547, %v547
      %v556 = vpack.c.b16 %v548, %v548
      %v557 = vpack.c.b16 %v549, %v549
      %v558 = vpack.c.b16 %v550, %v550
      %v559 = vpack.c.b16 %v551, %v551
      %v560 = vpack.c.b16 %v552, %v552
      %v561 = vpack.c.b16 %v553, %v553
      %570 = vst [vmem:[%s271] sm:$0xf] %v554
      %571 = vst [vmem:[%s271 + $0x4] sm:$0xf] %v555
      %572 = vst [vmem:[%s271 + $0x8] sm:$0xf] %v556
      %573 = vst [vmem:[%s271 + $0xc] sm:$0xf] %v557
      %574 = vst [vmem:[%s271 + $0x10] sm:$0xf] %v558
      %575 = vst [vmem:[%s271 + $0x14] sm:$0xf] %v559
      %576 = vst [vmem:[%s271 + $0x18] sm:$0xf] %v560
      %577 = vst [vmem:[%s271 + $0x1c] sm:$0xf] %v561
      %v578 = vadd.f32 %v530, %v531
      %v579 = vadd.f32 %v578, %v532
      %v580 = vadd.f32 %v579, %v533
      %v581 = vadd.f32 %v580, %v534
      %v582 = vadd.f32 %v581, %v535
      %v583 = vadd.f32 %v582, %v536
      %v584 = vadd.f32 %v583, %v537
      %v585 = vrot.slane %v584, 4
      %v586 = vadd.f32 %v584, %v585
      %v587 = vrot.slane %v586, 2
      %v588 = vadd.f32 %v586, %v587
      %v589 = vrot.slane %v588, 1
      %v590 = vadd.f32 %v588, %v589
      %591 = vst [vmem:[%s278] sm:$0x1] %v590
      %v592 = vmul.f32 %v530, %v530
      %v593 = vmul.f32 %v531, %v531
      %v594 = vmul.f32 %v532, %v532
      %v595 = vmul.f32 %v533, %v533
      %v596 = vmul.f32 %v534, %v534
      %v597 = vmul.f32 %v535, %v535
      %v598 = vmul.f32 %v536, %v536
      %v599 = vmul.f32 %v537, %v537
      %v600 = vadd.f32 %v592, %v593
      %v601 = vadd.f32 %v600, %v594
      %v602 = vadd.f32 %v601, %v595
      %v603 = vadd.f32 %v602, %v596
      %v604 = vadd.f32 %v603, %v597
      %v605 = vadd.f32 %v604, %v598
      %v606 = vadd.f32 %v605, %v599
      %v607 = vrot.slane %v606, 4
      %v608 = vadd.f32 %v606, %v607
      %v609 = vrot.slane %v608, 2
      %v610 = vadd.f32 %v608, %v609
      %v611 = vrot.slane %v610, 1
      %v612 = vadd.f32 %v610, %v611
      %613 = vst [vmem:[%s278 + $0x1] sm:$0x1] %v612
      %s614 = smul.u32 8, %s21
      %p615 = scmp.lt.s32.totalorder %s20, 3
      %s616 = scalar_select %p615, %s20, 3
      %p617 = scmp.lt.s32.totalorder %s614, 15
      %s618 = scalar_select %p617, %s614, 15
      %s619 = smul.addr %s616, 16
      %s620 = sadd.s32 %s618, %s619
      %s621 = smul.addr %s620, 4
      %s622 = scalar_lea.vmem %s3, %s621
      %s623 = smul.u32 %s20, 2
      %s624 = sadd.s32 %s623, %s21
      %p625 = scmp.lt.s32.totalorder %s624, 7
      %s626 = scalar_select %p625, %s624, 7
      %s627 = smul.addr %s626, 2
      %s628 = scalar_lea.vmem %s4, %s627
      // Predicated region
      $region33: #{forward.31} parent=31 // pred_check
        %p629 = pneg %p123
      $region34: #{forward.31} parent=31 // pred_check_branch
        %631 = sbr.rel (%p629) target = $region36
      $region35: #{forward.31} parent=31 // pred_region
        %s632 = smul.u32 8, %s21
      $region36: #{forward.31} parent=31 // pred_fallthru
        _
      // Predicated region
      $region37: #{forward.31} parent=31 // pred_check
        %p633 = pneg %p153
      $region38: #{forward.31} parent=31 // pred_check_branch
        %635 = sbr.rel (%p633) target = $region40
      $region39: #{forward.31} parent=31 // pred_region
        %s636 = smul.u32 %s20, 2
        %s637 = sadd.s32 %s636, %s21
      $region40: #{forward.31} parent=31 // pred_fallthru
        _
    $region32: #{forward.31} parent=5 // pred_fallthru
      _
    %p638 = scmp.le.s32.totalorder 2, %s11
    // Predicated region
    $region41: #{forward.31} parent=5 // pred_check
      %p639 = pneg %p638
    $region42: #{forward.31} parent=5 // pred_check_branch
      %641 = sbr.rel (%p639) target = $region44
    $region43: #{forward.31} parent=5 // pred_region
      %s642 = ssub.s32 %s11, 2
      // Predicated region
      $region45: #{forward.31} parent=43 // pred_check
        %p643 = pneg %p129
      $region46: #{forward.31} parent=43 // pred_check_branch
        %645 = sbr.rel (%p643) target = $region48
      $region47: #{forward.31} parent=43 // pred_region
        %s646 = smul.u32 8, %s23
        %p647 = scmp.lt.s32.totalorder %s22, 3
        %s648 = scalar_select %p647, %s22, 3
        %p649 = scmp.lt.s32.totalorder %s646, 15
        %s650 = scalar_select %p649, %s646, 15
        %s651 = smul.addr %s648, 16
        %s652 = sadd.s32 %s650, %s651
        %s653 = smul.addr %s652, 4
        %s654 = scalar_lea.vmem %s3, %s653
      $region48: #{forward.31} parent=43 // pred_fallthru
        _
      // Predicated region
      $region49: #{forward.31} parent=43 // pred_check
        %p655 = pneg %p159
      $region50: #{forward.31} parent=43 // pred_check_branch
        %657 = sbr.rel (%p655) target = $region52
      $region51: #{forward.31} parent=43 // pred_region
        %s658 = smul.u32 %s22, 2
        %s659 = sadd.s32 %s658, %s23
        %p660 = scmp.lt.s32.totalorder %s659, 7
        %s661 = scalar_select %p660, %s659, 7
        %s662 = smul.addr %s661, 2
        %s663 = scalar_lea.vmem %s4, %s662
      $region52: #{forward.31} parent=43 // pred_fallthru
        _
    $region44: #{forward.31} parent=5 // pred_fallthru
      _
  $region6: #{forward.31} parent=0 // loop_footer
    %s15 = sadd.s32 1, %s11
  $region7: #{forward.31} parent=0 // loop_footer_branch
    %10 = sbr.rel target = $region3
  $region8: #{forward.31} parent=0 // loop_exit
    _

// kernel: forward.32
$region0: #{forward.32}
  #allocation0 [shape = 'u32[]', space=smem, size = 0x4, offset = 0x4, fixed_abs, tag = 'smem constant byte address 0x4 - core index']
  #allocation1 [shape = 'u32[144,128]{1,0:T(1,128)}', space=vmem, size = 0x12000, scoped, tag = 'internal scratch']
  %s0 = inlined_call_operand.vmem [shape: bf16[1,512,384], index: 0, kind: input, shape index: {}]
  %s1 = inlined_call_operand.vmem [shape: bf16[1,384,128], index: 1, kind: input, shape index: {}]
  %s2 = inlined_call_operand.vmem [shape: f32[1,128], index: 2, kind: input, shape index: {}]
  %s3 = inlined_call_operand.vmem [shape: bf16[1,512,128], index: 3, kind: output, shape index: {0}]
  %s4 = inlined_call_operand.vmem [shape: f32[2,2,128], index: 4, kind: output, shape index: {1}]
  %5 = xla_tuple %s3, %s4
  %s6 = sld [smem:[#allocation0]]
  $region53: #{forward.32} parent=0
    _
  %s8 = ssub.s32 1, %s6
  %s9 = scalar_select 0, %s8, %s6
  loop: start=0, step=1, limit=4
  $region2: #{forward.32} parent=0 // loop_pre_header
    _
  $region3: #{forward.32} parent=0 // loop_header
    %s11 = sphi 0, %s15
    %p12 = scmp.ge.s32.totalorder %s11, 4
    %s18 = sphi 0, %s30
    %s19 = sphi 0, %s26
    %s20 = sphi 0, %s18
    %s21 = sphi 0, %s19
    %s22 = sphi 0, %s20
    %s23 = sphi 0, %s21
    %s35 = sphi 0, %s37
    %s38 = sphi 0, %s35
    %s39 = sphi 0, %s38
    %s55 = sphi 0, %s39
    %s61 = sphi 0, %s63
    %s64 = sphi 0, %s61
    %s65 = sphi 0, %s64
    %s81 = sphi 0, %s65
    %s85 = sphi 0, %s85
    %s87 = sphi 0, %s85
    %s88 = sphi 0, %s87
    %s102 = sphi 0, %s88
    %s110 = sphi 0, %s112
    %s113 = sphi 0, %s110
    %s114 = sphi 0, %s113
    %s130 = sphi 0, %s114
    %s140 = sphi 0, %s142
    %s143 = sphi 0, %s140
    %s144 = sphi 0, %s143
    %s160 = sphi 0, %s144
  $region4: #{forward.32} parent=0 // loop_header_branch
    %14 = sbr.rel (%p12) target = $region8
  $region5: #{forward.32} parent=0 // loop_body
    %s16 = ssub.s32 %s11, 1
    %s17 = ssub.s32 %s11, 2
    %s24 = sadd.s32 1, %s19
    %p25 = scmp.ge.s32.totalorder %s24, 2
    %s26 = scalar_select %p25, 0, %s24
    %s27 = sadd.s32 1, %s18
    %s28 = scalar_select %p25, %s27, %s18
    %p29 = scmp.ge.s32.totalorder %s28, 1
    %s30 = scalar_select %p29, 0, %s28
    %s31 = ssub.s32 %s18, %s30
    %s32 = ssub.s32 %s19, %s26
    %s33 = sor.u32 %s31, %s32
    %p34 = scmp.eq.s32.totalorder %s33, 0
    %s36 = sadd.s32 %s35, 1
    %s37 = scalar_select %p34, %s35, %s36
    %p40 = pneg %p34
    %p41 = scmp.eq.s32.totalorder %s11, 1
    %p42 = por %p40, %p41
    %p43 = scmp.ne.s32.totalorder %s35, %s38
    %p44 = scmp.eq.s32.totalorder %s11, 0
    %p45 = por %p43, %p44
    %p46 = scmp.ne.s32.totalorder %s35, %s38
    %p47 = scmp.eq.s32.totalorder %s16, 1
    %p48 = por %p46, %p47
    %p49 = scmp.ne.s32.totalorder %s38, %s39
    %p50 = scmp.eq.s32.totalorder %s16, 0
    %p51 = por %p49, %p50
    %p52 = scmp.ne.s32.totalorder %s38, %s39
    %p53 = scmp.eq.s32.totalorder %s17, 1
    %p54 = por %p52, %p53
    %p56 = scmp.ne.s32.totalorder %s39, %s55
    %p57 = scmp.eq.s32.totalorder %s17, 0
    %p58 = por %p56, %p57
    %s59 = ssub.s32 %s18, %s30
    %p60 = scmp.eq.s32.totalorder %s59, 0
    %s62 = sadd.s32 %s61, 1
    %s63 = scalar_select %p60, %s61, %s62
    %p66 = pneg %p60
    %p67 = scmp.eq.s32.totalorder %s11, 1
    %p68 = por %p66, %p67
    %p69 = scmp.ne.s32.totalorder %s61, %s64
    %p70 = scmp.eq.s32.totalorder %s11, 0
    %p71 = por %p69, %p70
    %p72 = scmp.ne.s32.totalorder %s61, %s64
    %p73 = scmp.eq.s32.totalorder %s16, 1
    %p74 = por %p72, %p73
    %p75 = scmp.ne.s32.totalorder %s64, %s65
    %p76 = scmp.eq.s32.totalorder %s16, 0
    %p77 = por %p75, %p76
    %p78 = scmp.ne.s32.totalorder %s64, %s65
    %p79 = scmp.eq.s32.totalorder %s17, 1
    %p80 = por %p78, %p79
    %p82 = scmp.ne.s32.totalorder %s65, %s81
    %p83 = scmp.eq.s32.totalorder %s17, 0
    %p84 = por %p82, %p83
    %s86 = sadd.s32 %s85, 1
    %p89 = scmp.eq.s32.totalorder %s11, 1
    %p90 = scmp.ne.s32.totalorder %s85, %s87
    %p91 = scmp.eq.s32.totalorder %s11, 0
    %p92 = por %p90, %p91
    %p93 = scmp.ne.s32.totalorder %s85, %s87
    %p94 = scmp.eq.s32.totalorder %s16, 1
    %p95 = por %p93, %p94
    %p96 = scmp.ne.s32.totalorder %s87, %s88
    %p97 = scmp.eq.s32.totalorder %s16, 0
    %p98 = por %p96, %p97
    %p99 = scmp.ne.s32.totalorder %s87, %s88
    %p100 = scmp.eq.s32.totalorder %s17, 1
    %p101 = por %p99, %p100
    %p103 = scmp.ne.s32.totalorder %s88, %s102
    %p104 = scmp.eq.s32.totalorder %s17, 0
    %p105 = por %p103, %p104
    %s106 = ssub.s32 %s18, %s30
    %s107 = ssub.s32 %s19, %s26
    %s108 = sor.u32 %s106, %s107
    %p109 = scmp.eq.s32.totalorder %s108, 0
    %s111 = sadd.s32 %s110, 1
    %s112 = scalar_select %p109, %s110, %s111
    %p115 = pneg %p109
    %p116 = scmp.eq.s32.totalorder %s11, 1
    %p117 = por %p115, %p116
    %p118 = scmp.ne.s32.totalorder %s110, %s113
    %p119 = scmp.eq.s32.totalorder %s11, 0
    %p120 = por %p118, %p119
    %p121 = scmp.ne.s32.totalorder %s110, %s113
    %p122 = scmp.eq.s32.totalorder %s16, 1
    %p123 = por %p121, %p122
    %p124 = scmp.ne.s32.totalorder %s113, %s114
    %p125 = scmp.eq.s32.totalorder %s16, 0
    %p126 = por %p124, %p125
    %p127 = scmp.ne.s32.totalorder %s113, %s114
    %p128 = scmp.eq.s32.totalorder %s17, 1
    %p129 = por %p127, %p128
    %p131 = scmp.ne.s32.totalorder %s114, %s130
    %p132 = scmp.eq.s32.totalorder %s17, 0
    %p133 = por %p131, %p132
    %s134 = smul.u32 %s18, 2
    %s135 = sadd.s32 %s134, %s19
    %s136 = smul.u32 %s30, 2
    %s137 = sadd.s32 %s136, %s26
    %s138 = ssub.s32 %s135, %s137
    %p139 = scmp.eq.s32.totalorder %s138, 0
    %s141 = sadd.s32 %s140, 1
    %s142 = scalar_select %p139, %s140, %s141
    %p145 = pneg %p139
    %p146 = scmp.eq.s32.totalorder %s11, 1
    %p147 = por %p145, %p146
    %p148 = scmp.ne.s32.totalorder %s140, %s143
    %p149 = scmp.eq.s32.totalorder %s11, 0
    %p150 = por %p148, %p149
    %p151 = scmp.ne.s32.totalorder %s140, %s143
    %p152 = scmp.eq.s32.totalorder %s16, 1
    %p153 = por %p151, %p152
    %p154 = scmp.ne.s32.totalorder %s143, %s144
    %p155 = scmp.eq.s32.totalorder %s16, 0
    %p156 = por %p154, %p155
    %p157 = scmp.ne.s32.totalorder %s143, %s144
    %p158 = scmp.eq.s32.totalorder %s17, 1
    %p159 = por %p157, %p158
    %p161 = scmp.ne.s32.totalorder %s144, %s160
    %p162 = scmp.eq.s32.totalorder %s17, 0
    %p163 = por %p161, %p162
    %p164 = scmp.le.s32.totalorder 1, %s11
    %p165 = scmp.lt.s32.totalorder %s11, 3
    %p166 = pnand %p164, %p165
    %p167 = pneg %p166
    // Predicated region
    $region9: #{forward.32} parent=5 // pred_check
      _
    $region10: #{forward.32} parent=5 // pred_check_branch
      %169 = sbr.rel (%p166) target = $region12
    $region11: #{forward.32} parent=5 // pred_region
      %s170 = ssub.s32 %s11, 1
      // Predicated region
      $region13: #{forward.32} parent=11 // pred_check
        %p171 = pneg %p77
      $region14: #{forward.32} parent=11 // pred_check_branch
        %173 = sbr.rel (%p171) target = $region16
      $region15: #{forward.32} parent=11 // pred_region
        %p174 = scmp.lt.s32.totalorder %s20, 0
        %s175 = scalar_select %p174, %s20, 0
        %s176 = smul.addr %s175, 48
        %s177 = smul.addr %s176, 4
        %s178 = scalar_lea.vmem %s1, %s177
      $region16: #{forward.32} parent=11 // pred_fallthru
        _
      // Predicated region
      $region17: #{forward.32} parent=11 // pred_check
        %p179 = pneg %p98
      $region18: #{forward.32} parent=11 // pred_check_branch
        %181 = sbr.rel (%p179) target = $region20
      $region19: #{forward.32} parent=11 // pred_region
        _
      $region20: #{forward.32} parent=11 // pred_fallthru
        _
    $region12: #{forward.32} parent=5 // pred_fallthru
      _
    %p182 = scmp.lt.s32.totalorder %s11, 2
    // Predicated region
    $region21: #{forward.32} parent=5 // pred_check
      %p183 = pneg %p182
    $region22: #{forward.32} parent=5 // pred_check_branch
      %185 = sbr.rel (%p183) target = $region24
    $region23: #{forward.32} parent=5 // pred_region
      // Predicated region
      $region25: #{forward.32} parent=23 // pred_check
        %p186 = pneg %p45
      $region26: #{forward.32} parent=23 // pred_check_branch
        %188 = sbr.rel (%p186) target = $region28
      $region27: #{forward.32} parent=23 // pred_region
        %s189 = smul.u32 32, %s19
        %p190 = scmp.lt.s32.totalorder %s18, 0
        %s191 = scalar_select %p190, %s18, 0
        %p192 = scmp.lt.s32.totalorder %s189, 63
        %s193 = scalar_select %p192, %s189, 63
        %s194 = smul.addr %s193, 3
        %s195 = smul.addr %s191, 192
        %s196 = sadd.s32 %s194, %s195
        %s197 = smul.addr %s196, 4
        %s198 = scalar_lea.vmem %s0, %s197
        %s199 = smul.u32 32, %s19
      $region28: #{forward.32} parent=23 // pred_fallthru
        _
    $region24: #{forward.32} parent=5 // pred_fallthru
      _
    %p200 = scmp.le.s32.totalorder 1, %s11
    %p201 = scmp.lt.s32.totalorder %s11, 3
    %p202 = pnand %p200, %p201
    %p203 = pneg %p202
    // Predicated region
    $region29: #{forward.32} parent=5 // pred_check
      _
    $region30: #{forward.32} parent=5 // pred_check_branch
      %205 = sbr.rel (%p202) target = $region32
    $region31: #{forward.32} parent=5 // pred_region
      %s206 = ssub.s32 %s11, 1
      %s207 = smul.u32 32, %s21
      %p208 = scmp.lt.s32.totalorder %s20, 0
      %s209 = scalar_select %p208, %s20, 0
      %p210 = scmp.lt.s32.totalorder %s207, 63
      %s211 = scalar_select %p210, %s207, 63
      %s212 = smul.addr %s211, 3
      %s213 = smul.addr %s209, 192
      %s214 = sadd.s32 %s212, %s213
      %s215 = smul.addr %s214, 4
      %s216 = scalar_lea.vmem %s0, %s215
      %p217 = pneg %p51
      %p218 = pneg %p48
      %p219 = scmp.lt.s32.totalorder %s20, 0
      %s220 = scalar_select %p219, %s20, 0
      %s221 = smul.addr %s220, 48
      %s222 = smul.addr %s221, 4
      %s223 = scalar_lea.vmem %s1, %s222
      %p224 = pneg %p77
      %p225 = pneg %p74
      %p226 = pneg %p98
      %p227 = pneg %p95
      %p228 = pneg %p126
      %p229 = pneg %p123
      %s230 = smul.u32 32, %s21
      %p231 = scmp.lt.s32.totalorder %s20, 0
      %s232 = scalar_select %p231, %s20, 0
      %p233 = scmp.lt.s32.totalorder %s230, 63
      %s234 = scalar_select %p233, %s230, 63
      %s235 = smul.addr %s232, 64
      %s236 = sadd.s32 %s234, %s235
      %s237 = smul.addr %s236, 4
      %s238 = scalar_lea.vmem %s3, %s237
      %p239 = pneg %p156
      %p240 = pneg %p153
      %s241 = smul.u32 %s20, 2
      %s242 = sadd.s32 %s241, %s21
      %p243 = scmp.lt.s32.totalorder %s242, 1
      %s244 = scalar_select %p243, %s242, 1
      %s245 = smul.addr %s244, 2
      %s246 = scalar_lea.vmem %s4, %s245
      %s247 = smul.u32 32, %s21
      %p248 = scmp.lt.s32.totalorder %s20, 0
      %s249 = scalar_select %p248, %s20, 0
      %p250 = scmp.lt.s32.totalorder %s247, 63
      %s251 = scalar_select %p250, %s247, 63
      %s252 = smul.addr %s251, 3
      %s253 = smul.addr %s249, 192
      %s254 = sadd.s32 %s252, %s253
      %s255 = smul.addr %s254, 4
      %s256 = scalar_lea.vmem %s0, %s255
      %s257 = smul.u32 32, %s21
      %p258 = scmp.lt.s32.totalorder %s20, 0
      %s259 = scalar_select %p258, %s20, 0
      %s260 = smul.addr %s259, 48
      %s261 = smul.addr %s260, 4
      %s262 = scalar_lea.vmem %s1, %s261
      %s263 = smul.u32 32, %s21
      %p264 = scmp.lt.s32.totalorder %s20, 0
      %s265 = scalar_select %p264, %s20, 0
      %p266 = scmp.lt.s32.totalorder %s263, 63
      %s267 = scalar_select %p266, %s263, 63
      %s268 = smul.addr %s265, 64
      %s269 = sadd.s32 %s267, %s268
      %s270 = smul.addr %s269, 4
      %s271 = scalar_lea.vmem %s3, %s270
      %s272 = smul.u32 32, %s21
      %s273 = smul.u32 %s20, 2
      %s274 = sadd.s32 %s273, %s21
      %p275 = scmp.lt.s32.totalorder %s274, 1
      %s276 = scalar_select %p275, %s274, 1
      %s277 = smul.addr %s276, 2
      %s278 = scalar_lea.vmem %s4, %s277
      %s279 = smul.u32 %s20, 2
      %s280 = sadd.s32 %s279, %s21
      %v282 = vld [vmem:[%s256] sm:$0xff]
      %v283 = vld [vmem:[%s256 + $0x8] sm:$0xf]
      %v284 = vld [vmem:[%s256 + $0xc] sm:$0xff]
      %v285 = vld [vmem:[%s256 + $0x14] sm:$0xf]
      %v286 = vld [vmem:[%s256 + $0x18] sm:$0xff]
      %v287 = vld [vmem:[%s256 + $0x20] sm:$0xf]
      %v288 = vld [vmem:[%s256 + $0x24] sm:$0xff]
      %v289 = vld [vmem:[%s256 + $0x2c] sm:$0xf]
      %v290 = vld [vmem:[%s256 + $0x30] sm:$0xff]
      %v291 = vld [vmem:[%s256 + $0x38] sm:$0xf]
      %v292 = vld [vmem:[%s256 + $0x3c] sm:$0xff]
      %v293 = vld [vmem:[%s256 + $0x44] sm:$0xf]
      %v294 = vld [vmem:[%s256 + $0x48] sm:$0xff]
      %v295 = vld [vmem:[%s256 + $0x50] sm:$0xf]
      %v296 = vld [vmem:[%s256 + $0x54] sm:$0xff]
      %v297 = vld [vmem:[%s256 + $0x5c] sm:$0xf]
      %v298 = vld [vmem:[%s256 + $0x60] sm:$0xff]
      %v299 = vld [vmem:[%s256 + $0x68] sm:$0xf]
      %v300 = vld [vmem:[%s256 + $0x6c] sm:$0xff]
      %v301 = vld [vmem:[%s256 + $0x74] sm:$0xf]
      %v302 = vld [vmem:[%s256 + $0x78] sm:$0xff]
      %v303 = vld [vmem:[%s256 + $0x80] sm:$0xf]
      %v304 = vld [vmem:[%s256 + $0x84] sm:$0xff]
      %v305 = vld [vmem:[%s256 + $0x8c] sm:$0xf]
      %v306 = vld [vmem:[%s256 + $0x90] sm:$0xff]
      %v307 = vld [vmem:[%s256 + $0x98] sm:$0xf]
      %v308 = vld [vmem:[%s256 + $0x9c] sm:$0xff]
      %v309 = vld [vmem:[%s256 + $0xa4] sm:$0xf]
      %v310 = vld [vmem:[%s256 + $0xa8] sm:$0xff]
      %v311 = vld [vmem:[%s256 + $0xb0] sm:$0xf]
      %v312 = vld [vmem:[%s256 + $0xb4] sm:$0xff]
      %v313 = vld [vmem:[%s256 + $0xbc] sm:$0xf]
      %v314 = vld [vmem:[%s256 + $0xc0] sm:$0xff]
      %v315 = vld [vmem:[%s256 + $0xc8] sm:$0xf]
      %v316 = vld [vmem:[%s256 + $0xcc] sm:$0xff]
      %v317 = vld [vmem:[%s256 + $0xd4] sm:$0xf]
      %v318 = vld [vmem:[%s256 + $0xd8] sm:$0xff]
      %v319 = vld [vmem:[%s256 + $0xe0] sm:$0xf]
      %v320 = vld [vmem:[%s256 + $0xe4] sm:$0xff]
      %v321 = vld [vmem:[%s256 + $0xec] sm:$0xf]
      %v322 = vld [vmem:[%s256 + $0xf0] sm:$0xff]
      %v323 = vld [vmem:[%s256 + $0xf8] sm:$0xf]
      %v324 = vld [vmem:[%s256 + $0xfc] sm:$0xff]
      %v325 = vld [vmem:[%s256 + $0x104] sm:$0xf]
      %v326 = vld [vmem:[%s256 + $0x108] sm:$0xff]
      %v327 = vld [vmem:[%s256 + $0x110] sm:$0xf]
      %v328 = vld [vmem:[%s256 + $0x114] sm:$0xff]
      %v329 = vld [vmem:[%s256 + $0x11c] sm:$0xf]
      %v330 = vld [vmem:[%s256 + $0x120] sm:$0xff]
      %v331 = vld [vmem:[%s256 + $0x128] sm:$0xf]
      %v332 = vld [vmem:[%s256 + $0x12c] sm:$0xff]
      %v333 = vld [vmem:[%s256 + $0x134] sm:$0xf]
      %v334 = vld [vmem:[%s256 + $0x138] sm:$0xff]
      %v335 = vld [vmem:[%s256 + $0x140] sm:$0xf]
      %v336 = vld [vmem:[%s256 + $0x144] sm:$0xff]
      %v337 = vld [vmem:[%s256 + $0x14c] sm:$0xf]
      %v338 = vld [vmem:[%s256 + $0x150] sm:$0xff]
      %v339 = vld [vmem:[%s256 + $0x158] sm:$0xf]
      %v340 = vld [vmem:[%s256 + $0x15c] sm:$0xff]
      %v341 = vld [vmem:[%s256 + $0x164] sm:$0xf]
      %v342 = vld [vmem:[%s256 + $0x168] sm:$0xff]
      %v343 = vld [vmem:[%s256 + $0x170] sm:$0xf]
      %v344 = vld [vmem:[%s256 + $0x174] sm:$0xff]
      %v345 = vld [vmem:[%s256 + $0x17c] sm:$0xf]
      %v346 = vld [vmem:[%s262] sm:$0xf]
      %v347 = vld [vmem:[%s262 + $0x4] sm:$0xf]
      %v348 = vld [vmem:[%s262 + $0x8] sm:$0xf]
      %v349 = vld [vmem:[%s262 + $0xc] sm:$0xf]
      %v350 = vld [vmem:[%s262 + $0x10] sm:$0xf]
      %v351 = vld [vmem:[%s262 + $0x14] sm:$0xf]
      %v352 = vld [vmem:[%s262 + $0x18] sm:$0xf]
      %v353 = vld [vmem:[%s262 + $0x1c] sm:$0xf]
      %v354 = vld [vmem:[%s262 + $0x20] sm:$0xf]
      %v355 = vld [vmem:[%s262 + $0x24] sm:$0xf]
      %v356 = vld [vmem:[%s262 + $0x28] sm:$0xf]
      %v357 = vld [vmem:[%s262 + $0x2c] sm:$0xf]
      %v358 = vld [vmem:[%s262 + $0x30] sm:$0xf]
      %v359 = vld [vmem:[%s262 + $0x34] sm:$0xf]
      %v360 = vld [vmem:[%s262 + $0x38] sm:$0xf]
      %v361 = vld [vmem:[%s262 + $0x3c] sm:$0xf]
      %v362 = vld [vmem:[%s262 + $0x40] sm:$0xf]
      %v363 = vld [vmem:[%s262 + $0x44] sm:$0xf]
      %v364 = vld [vmem:[%s262 + $0x48] sm:$0xf]
      %v365 = vld [vmem:[%s262 + $0x4c] sm:$0xf]
      %v366 = vld [vmem:[%s262 + $0x50] sm:$0xf]
      %v367 = vld [vmem:[%s262 + $0x54] sm:$0xf]
      %v368 = vld [vmem:[%s262 + $0x58] sm:$0xf]
      %v369 = vld [vmem:[%s262 + $0x5c] sm:$0xf]
      %v370 = vld [vmem:[%s262 + $0x60] sm:$0xf]
      %v371 = vld [vmem:[%s262 + $0x64] sm:$0xf]
      %v372 = vld [vmem:[%s262 + $0x68] sm:$0xf]
      %v373 = vld [vmem:[%s262 + $0x6c] sm:$0xf]
      %v374 = vld [vmem:[%s262 + $0x70] sm:$0xf]
      %v375 = vld [vmem:[%s262 + $0x74] sm:$0xf]
      %v376 = vld [vmem:[%s262 + $0x78] sm:$0xf]
      %v377 = vld [vmem:[%s262 + $0x7c] sm:$0xf]
      %v378 = vld [vmem:[%s262 + $0x80] sm:$0xf]
      %v379 = vld [vmem:[%s262 + $0x84] sm:$0xf]
      %v380 = vld [vmem:[%s262 + $0x88] sm:$0xf]
      %v381 = vld [vmem:[%s262 + $0x8c] sm:$0xf]
      %v382 = vld [vmem:[%s262 + $0x90] sm:$0xf]
      %v383 = vld [vmem:[%s262 + $0x94] sm:$0xf]
      %v384 = vld [vmem:[%s262 + $0x98] sm:$0xf]
      %v385 = vld [vmem:[%s262 + $0x9c] sm:$0xf]
      %v386 = vld [vmem:[%s262 + $0xa0] sm:$0xf]
      %v387 = vld [vmem:[%s262 + $0xa4] sm:$0xf]
      %v388 = vld [vmem:[%s262 + $0xa8] sm:$0xf]
      %v389 = vld [vmem:[%s262 + $0xac] sm:$0xf]
      %v390 = vld [vmem:[%s262 + $0xb0] sm:$0xf]
      %v391 = vld [vmem:[%s262 + $0xb4] sm:$0xf]
      %v392 = vld [vmem:[%s262 + $0xb8] sm:$0xf]
      %v393 = vld [vmem:[%s262 + $0xbc] sm:$0xf]
      %v394 = vld [vmem:[%s2] sm:$0x1]
      %v396 = vlaneseq
      %v397 = vshrl.u32 %v396, 7
      %v398 = vsub.s32 0, %v397
      %v399 = vrot.slane %v394, %v398
      %v465 = vunpack.c.l.b16 %v282
      %v466 = vunpack.c.h.b16 %v282
      %v467 = vunpack.c.l.b16 %v283
      %v468 = vunpack.c.l.b16 %v284
      %v469 = vunpack.c.h.b16 %v284
      %v470 = vunpack.c.l.b16 %v285
      %v471 = vunpack.c.l.b16 %v286
      %v472 = vunpack.c.h.b16 %v286
      %v473 = vunpack.c.l.b16 %v287
      %v474 = vunpack.c.l.b16 %v288
      %v475 = vunpack.c.h.b16 %v288
      %v476 = vunpack.c.l.b16 %v289
      %v477 = vunpack.c.l.b16 %v290
      %v478 = vunpack.c.h.b16 %v290
      %v479 = vunpack.c.l.b16 %v291
      %v480 = vunpack.c.l.b16 %v292
      %v481 = vunpack.c.h.b16 %v292
      %v482 = vunpack.c.l.b16 %v293
      %v483 = vunpack.c.l.b16 %v294
      %v484 = vunpack.c.h.b16 %v294
      %v485 = vunpack.c.l.b16 %v295
      %v486 = vunpack.c.l.b16 %v296
      %v487 = vunpack.c.h.b16 %v296
      %v488 = vunpack.c.l.b16 %v297
      %v489 = vunpack.c.l.b16 %v298
      %v490 = vunpack.c.h.b16 %v298
      %v491 = vunpack.c.l.b16 %v299
      %v492 = vunpack.c.l.b16 %v300
      %v493 = vunpack.c.h.b16 %v300
      %v494 = vunpack.c.l.b16 %v301
      %v495 = vunpack.c.l.b16 %v302
      %v496 = vunpack.c.h.b16 %v302
      %v497 = vunpack.c.l.b16 %v303
      %v498 = vunpack.c.l.b16 %v304
      %v499 = vunpack.c.h.b16 %v304
      %v500 = vunpack.c.l.b16 %v305
      %v501 = vunpack.c.l.b16 %v306
      %v502 = vunpack.c.h.b16 %v306
      %v503 = vunpack.c.l.b16 %v307
      %v504 = vunpack.c.l.b16 %v308
      %v505 = vunpack.c.h.b16 %v308
      %v506 = vunpack.c.l.b16 %v309
      %v507 = vunpack.c.l.b16 %v310
      %v508 = vunpack.c.h.b16 %v310
      %v509 = vunpack.c.l.b16 %v311
      %v510 = vunpack.c.l.b16 %v312
      %v511 = vunpack.c.h.b16 %v312
      %v512 = vunpack.c.l.b16 %v313
      %v513 = vunpack.c.l.b16 %v314
      %v514 = vunpack.c.h.b16 %v314
      %v515 = vunpack.c.l.b16 %v315
      %v516 = vunpack.c.l.b16 %v316
      %v517 = vunpack.c.h.b16 %v316
      %v518 = vunpack.c.l.b16 %v317
      %v519 = vunpack.c.l.b16 %v318
      %v520 = vunpack.c.h.b16 %v318
      %v521 = vunpack.c.l.b16 %v319
      %v522 = vunpack.c.l.b16 %v320
      %v523 = vunpack.c.h.b16 %v320
      %v524 = vunpack.c.l.b16 %v321
      %v525 = vunpack.c.l.b16 %v322
      %v526 = vunpack.c.h.b16 %v322
      %v527 = vunpack.c.l.b16 %v323
      %v528 = vunpack.c.l.b16 %v324
      %v529 = vunpack.c.h.b16 %v324
      %v530 = vunpack.c.l.b16 %v325
      %v531 = vunpack.c.l.b16 %v326
      %v532 = vunpack.c.h.b16 %v326
      %v533 = vunpack.c.l.b16 %v327
      %v534 = vunpack.c.l.b16 %v328
      %v535 = vunpack.c.h.b16 %v328
      %v536 = vunpack.c.l.b16 %v329
      %v537 = vunpack.c.l.b16 %v330
      %v538 = vunpack.c.h.b16 %v330
      %v539 = vunpack.c.l.b16 %v331
      %v540 = vunpack.c.l.b16 %v332
      %v541 = vunpack.c.h.b16 %v332
      %v542 = vunpack.c.l.b16 %v333
      %v543 = vunpack.c.l.b16 %v334
      %v544 = vunpack.c.h.b16 %v334
      %v545 = vunpack.c.l.b16 %v335
      %v546 = vunpack.c.l.b16 %v336
      %v547 = vunpack.c.h.b16 %v336
      %v548 = vunpack.c.l.b16 %v337
      %v549 = vunpack.c.l.b16 %v338
      %v550 = vunpack.c.h.b16 %v338
      %v551 = vunpack.c.l.b16 %v339
      %v552 = vunpack.c.l.b16 %v340
      %v553 = vunpack.c.h.b16 %v340
      %v554 = vunpack.c.l.b16 %v341
      %v555 = vunpack.c.l.b16 %v342
      %v556 = vunpack.c.h.b16 %v342
      %v557 = vunpack.c.l.b16 %v343
      %v558 = vunpack.c.l.b16 %v344
      %v559 = vunpack.c.h.b16 %v344
      %v560 = vunpack.c.l.b16 %v345
      %v561 = vpack.c.b16 %v468, %v465
      %v562 = vpack.c.b16 %v469, %v466
      %v563 = vpack.c.b16 %v470, %v467
      %v564 = vpack.c.b16 %v474, %v471
      %v565 = vpack.c.b16 %v475, %v472
      %v566 = vpack.c.b16 %v476, %v473
      %v567 = vpack.c.b16 %v480, %v477
      %v568 = vpack.c.b16 %v481, %v478
      %v569 = vpack.c.b16 %v482, %v479
      %v570 = vpack.c.b16 %v486, %v483
      %v571 = vpack.c.b16 %v487, %v484
      %v572 = vpack.c.b16 %v488, %v485
      %v573 = vpack.c.b16 %v492, %v489
      %v574 = vpack.c.b16 %v493, %v490
      %v575 = vpack.c.b16 %v494, %v491
      %v576 = vpack.c.b16 %v498, %v495
      %v577 = vpack.c.b16 %v499, %v496
      %v578 = vpack.c.b16 %v500, %v497
      %v579 = vpack.c.b16 %v504, %v501
      %v580 = vpack.c.b16 %v505, %v502
      %v581 = vpack.c.b16 %v506, %v503
      %v582 = vpack.c.b16 %v510, %v507
      %v583 = vpack.c.b16 %v511, %v508
      %v584 = vpack.c.b16 %v512, %v509
      %v585 = vpack.c.b16 %v516, %v513
      %v586 = vpack.c.b16 %v517, %v514
      %v587 = vpack.c.b16 %v518, %v515
      %v588 = vpack.c.b16 %v522, %v519
      %v589 = vpack.c.b16 %v523, %v520
      %v590 = vpack.c.b16 %v524, %v521
      %v591 = vpack.c.b16 %v528, %v525
      %v592 = vpack.c.b16 %v529, %v526
      %v593 = vpack.c.b16 %v530, %v527
      %v594 = vpack.c.b16 %v534, %v531
      %v595 = vpack.c.b16 %v535, %v532
      %v596 = vpack.c.b16 %v536, %v533
      %v597 = vpack.c.b16 %v540, %v537
      %v598 = vpack.c.b16 %v541, %v538
      %v599 = vpack.c.b16 %v542, %v539
      %v600 = vpack.c.b16 %v546, %v543
      %v601 = vpack.c.b16 %v547, %v544
      %v602 = vpack.c.b16 %v548, %v545
      %v603 = vpack.c.b16 %v552, %v549
      %v604 = vpack.c.b16 %v553, %v550
      %v605 = vpack.c.b16 %v554, %v551
      %v606 = vpack.c.b16 %v558, %v555
      %v607 = vpack.c.b16 %v559, %v556
      %v608 = vpack.c.b16 %v560, %v557
      %v705 = vunpack.c.l.b16 %v346
      %v706 = vunpack.c.l.b16 %v347
      %v707 = vunpack.c.l.b16 %v348
      %v708 = vunpack.c.l.b16 %v349
      %v709 = vunpack.c.l.b16 %v350
      %v710 = vunpack.c.l.b16 %v351
      %v711 = vunpack.c.l.b16 %v352
      %v712 = vunpack.c.l.b16 %v353
      %v713 = vunpack.c.l.b16 %v354
      %v714 = vunpack.c.l.b16 %v355
      %v715 = vunpack.c.l.b16 %v356
      %v716 = vunpack.c.l.b16 %v357
      %v717 = vunpack.c.l.b16 %v358
      %v718 = vunpack.c.l.b16 %v359
      %v719 = vunpack.c.l.b16 %v360
      %v720 = vunpack.c.l.b16 %v361
      %v721 = vunpack.c.l.b16 %v362
      %v722 = vunpack.c.l.b16 %v363
      %v723 = vunpack.c.l.b16 %v364
      %v724 = vunpack.c.l.b16 %v365
      %v725 = vunpack.c.l.b16 %v366
      %v726 = vunpack.c.l.b16 %v367
      %v727 = vunpack.c.l.b16 %v368
      %v728 = vunpack.c.l.b16 %v369
      %v729 = vunpack.c.l.b16 %v370
      %v730 = vunpack.c.l.b16 %v371
      %v731 = vunpack.c.l.b16 %v372
      %v732 = vunpack.c.l.b16 %v373
      %v733 = vunpack.c.l.b16 %v374
      %v734 = vunpack.c.l.b16 %v375
      %v735 = vunpack.c.l.b16 %v376
      %v736 = vunpack.c.l.b16 %v377
      %v737 = vunpack.c.l.b16 %v378
      %v738 = vunpack.c.l.b16 %v379
      %v739 = vunpack.c.l.b16 %v380
      %v740 = vunpack.c.l.b16 %v381
      %v741 = vunpack.c.l.b16 %v382
      %v742 = vunpack.c.l.b16 %v383
      %v743 = vunpack.c.l.b16 %v384
      %v744 = vunpack.c.l.b16 %v385
      %v745 = vunpack.c.l.b16 %v386
      %v746 = vunpack.c.l.b16 %v387
      %v747 = vunpack.c.l.b16 %v388
      %v748 = vunpack.c.l.b16 %v389
      %v749 = vunpack.c.l.b16 %v390
      %v750 = vunpack.c.l.b16 %v391
      %v751 = vunpack.c.l.b16 %v392
      %v752 = vunpack.c.l.b16 %v393
      %v753 = vpack.c.b16 %v706, %v705
      %v754 = vpack.c.b16 %v708, %v707
      %v755 = vpack.c.b16 %v710, %v709
      %v756 = vpack.c.b16 %v712, %v711
      %v757 = vpack.c.b16 %v714, %v713
      %v758 = vpack.c.b16 %v716, %v715
      %v759 = vpack.c.b16 %v718, %v717
      %v760 = vpack.c.b16 %v720, %v719
      %v761 = vpack.c.b16 %v722, %v721
      %v762 = vpack.c.b16 %v724, %v723
      %v763 = vpack.c.b16 %v726, %v725
      %v764 = vpack.c.b16 %v728, %v727
      %v765 = vpack.c.b16 %v730, %v729
      %v766 = vpack.c.b16 %v732, %v731
      %v767 = vpack.c.b16 %v734, %v733
      %v768 = vpack.c.b16 %v736, %v735
      %v769 = vpack.c.b16 %v738, %v737
      %v770 = vpack.c.b16 %v740, %v739
      %v771 = vpack.c.b16 %v742, %v741
      %v772 = vpack.c.b16 %v744, %v743
      %v773 = vpack.c.b16 %v746, %v745
      %v774 = vpack.c.b16 %v748, %v747
      %v775 = vpack.c.b16 %v750, %v749
      %v776 = vpack.c.b16 %v752, %v751
      %801 = vmatprep.subr.bf16.mxu0 0
      %802 = vmatpush1.bf16.msra.mxu0 %v753
      %803 = vmatprep.subr.bf16.mxu0 0
      %804 = vmatpush1.bf16.msra.mxu0 %v754
      %805 = vmatprep.subr.bf16.mxu0 0
      %806 = vmatpush1.bf16.msra.mxu0 %v755
      %807 = vmatprep.subr.bf16.mxu0 0
      %808 = vmatpush1.bf16.msra.mxu0 %v756
      %809 = vmatprep.subr.bf16.mxu0 0
      %810 = vmatpush1.bf16.msra.mxu0 %v757
      %811 = vmatprep.subr.bf16.mxu0 0
      %812 = vmatpush1.bf16.msra.mxu0 %v758
      %813 = vmatprep.subr.bf16.mxu0 0
      %814 = vmatpush1.bf16.msra.mxu0 %v759
      %815 = vmatprep.subr.bf16.mxu0 0
      %816 = vmatpush1.bf16.msra.mxu0 %v760
      %817 = vmatprep.subr.bf16.mxu0 0
      %818 = vmatpush1.bf16.msra.mxu0 %v761
      %819 = vmatprep.subr.bf16.mxu0 0
      %820 = vmatpush1.bf16.msra.mxu0 %v762
      %821 = vmatprep.subr.bf16.mxu0 0
      %822 = vmatpush1.bf16.msra.mxu0 %v763
      %823 = vmatprep.subr.bf16.mxu0 0
      %824 = vmatpush1.bf16.msra.mxu0 %v764
      %825 = vmatprep.subr.bf16.mxu0 0
      %826 = vmatpush1.bf16.msra.mxu0 %v765
      %827 = vmatprep.subr.bf16.mxu0 0
      %828 = vmatpush1.bf16.msra.mxu0 %v766
      %829 = vmatprep.subr.bf16.mxu0 0
      %830 = vmatpush1.bf16.msra.mxu0 %v767
      %831 = vmatprep.subr.bf16.mxu0 0
      %832 = vmatpush1.bf16.msra.mxu0 %v768
      %833 = vmatprep.mubr.bf16.mxu0 %v562
      %834 = vmatmul.mubr.bf16.gmra.mrb[0].mxu0 %v561
      %v835 = vpop.f32.mrb[0].mxu0
      %v836 = vadd.f32 %v399, %v835
      %v837 = vpop.f32.mrb[0].mxu0
      %v838 = vpop.f32.mrb[0].mxu0
      %v839 = vadd.f32 %v399, %v838
      %v840 = vpop.f32.mrb[0].mxu0
      %841 = vmatprep.mubr.bf16.mxu0 %v565
      %842 = vmatmul.mubr.bf16.gmra.mrb[0].mxu0 %v564
      %v843 = vpop.f32.mrb[0].mxu0
      %v844 = vadd.f32 %v399, %v843
      %v845 = vpop.f32.mrb[0].mxu0
      %v846 = vpop.f32.mrb[0].mxu0
      %v847 = vadd.f32 %v399, %v846
      %v848 = vpop.f32.mrb[0].mxu0
      %849 = vmatprep.mubr.bf16.mxu0 %v568
      %850 = vmatmul.mubr.bf16.gmra.mrb[0].mxu0 %v567
      %v851 = vpop.f32.mrb[0].mxu0
      %v852 = vadd.f32 %v399, %v851
      %v853 = vpop.f32.mrb[0].mxu0
      %v854 = vpop.f32.mrb[0].mxu0
      %v855 = vadd.f32 %v399, %v854
      %v856 = vpop.f32.mrb[0].mxu0
      %857 = vmatprep.mubr.bf16.mxu0 %v571
      %858 = vmatmul.mubr.bf16.gmra.mrb[0].mxu0 %v570
      %v859 = vpop.f32.mrb[0].mxu0
      %v860 = vadd.f32 %v399, %v859
      %v861 = vpop.f32.mrb[0].mxu0
      %v862 = vpop.f32.mrb[0].mxu0
      %v863 = vadd.f32 %v399, %v862
      %v864 = vpop.f32.mrb[0].mxu0
      %865 = vmatprep.mubr.bf16.mxu0 %v574
      %866 = vmatmul.mubr.bf16.gmra.mrb[0].mxu0 %v573
      %v867 = vpop.f32.mrb[0].mxu0
      %v868 = vadd.f32 %v399, %v867
      %v869 = vpop.f32.mrb[0].mxu0
      %v870 = vpop.f32.mrb[0].mxu0
      %v871 = vadd.f32 %v399, %v870
      %v872 = vpop.f32.mrb[0].mxu0
      %873 = vmatprep.mubr.bf16.mxu0 %v577
      %874 = vmatmul.mubr.bf16.gmra.mrb[0].mxu0 %v576
      %v875 = vpop.f32.mrb[0].mxu0
      %v876 = vadd.f32 %v399, %v875
      %v877 = vpop.f32.mrb[0].mxu0
      %v878 = vpop.f32.mrb[0].mxu0
      %v879 = vadd.f32 %v399, %v878
      %v880 = vpop.f32.mrb[0].mxu0
      %881 = vmatprep.mubr.bf16.mxu0 %v580
      %882 = vmatmul.mubr.bf16.gmra.mrb[0].mxu0 %v579
      %v883 = vpop.f32.mrb[0].mxu0
      %v884 = vadd.f32 %v399, %v883
      %v885 = vpop.f32.mrb[0].mxu0
      %v886 = vpop.f32.mrb[0].mxu0
      %v887 = vadd.f32 %v399, %v886
      %v888 = vpop.f32.mrb[0].mxu0
      %889 = vmatprep.mubr.bf16.mxu0 %v583
      %890 = vmatmul.mubr.bf16.gmra.mrb[0].mxu0 %v582
      %v891 = vpop.f32.mrb[0].mxu0
      %v892 = vadd.f32 %v399, %v891
      %v893 = vpop.f32.mrb[0].mxu0
      %v894 = vpop.f32.mrb[0].mxu0
      %v895 = vadd.f32 %v399, %v894
      %v896 = vpop.f32.mrb[0].mxu0
      %897 = vmatprep.mubr.bf16.mxu0 %v586
      %898 = vmatmul.mubr.bf16.gmra.mrb[0].mxu0 %v585
      %v899 = vpop.f32.mrb[0].mxu0
      %v900 = vadd.f32 %v399, %v899
      %v901 = vpop.f32.mrb[0].mxu0
      %v902 = vpop.f32.mrb[0].mxu0
      %v903 = vadd.f32 %v399, %v902
      %v904 = vpop.f32.mrb[0].mxu0
      %905 = vmatprep.mubr.bf16.mxu0 %v589
      %906 = vmatmul.mubr.bf16.gmra.mrb[0].mxu0 %v588
      %v907 = vpop.f32.mrb[0].mxu0
      %v908 = vadd.f32 %v399, %v907
      %v909 = vpop.f32.mrb[0].mxu0
      %v910 = vpop.f32.mrb[0].mxu0
      %v911 = vadd.f32 %v399, %v910
      %v912 = vpop.f32.mrb[0].mxu0
      %913 = vmatprep.mubr.bf16.mxu0 %v592
      %914 = vmatmul.mubr.bf16.gmra.mrb[0].mxu0 %v591
      %v915 = vpop.f32.mrb[0].mxu0
      %v916 = vadd.f32 %v399, %v915
      %v917 = vpop.f32.mrb[0].mxu0
      %v918 = vpop.f32.mrb[0].mxu0
      %v919 = vadd.f32 %v399, %v918
      %v920 = vpop.f32.mrb[0].mxu0
      %921 = vmatprep.mubr.bf16.mxu0 %v595
      %922 = vmatmul.mubr.bf16.gmra.mrb[0].mxu0 %v594
      %v923 = vpop.f32.mrb[0].mxu0
      %v924 = vadd.f32 %v399, %v923
      %v925 = vpop.f32.mrb[0].mxu0
      %v926 = vpop.f32.mrb[0].mxu0
      %v927 = vadd.f32 %v399, %v926
      %v928 = vpop.f32.mrb[0].mxu0
      %929 = vmatprep.mubr.bf16.mxu0 %v598
      %930 = vmatmul.mubr.bf16.gmra.mrb[0].mxu0 %v597
      %v931 = vpop.f32.mrb[0].mxu0
      %v932 = vadd.f32 %v399, %v931
      %v933 = vpop.f32.mrb[0].mxu0
      %v934 = vpop.f32.mrb[0].mxu0
      %v935 = vadd.f32 %v399, %v934
      %v936 = vpop.f32.mrb[0].mxu0
      %937 = vmatprep.mubr.bf16.mxu0 %v601
      %938 = vmatmul.mubr.bf16.gmra.mrb[0].mxu0 %v600
      %v939 = vpop.f32.mrb[0].mxu0
      %v940 = vadd.f32 %v399, %v939
      %v941 = vpop.f32.mrb[0].mxu0
      %v942 = vpop.f32.mrb[0].mxu0
      %v943 = vadd.f32 %v399, %v942
      %v944 = vpop.f32.mrb[0].mxu0
      %945 = vmatprep.mubr.bf16.mxu0 %v604
      %946 = vmatmul.mubr.bf16.gmra.mrb[0].mxu0 %v603
      %v947 = vpop.f32.mrb[0].mxu0
      %v948 = vadd.f32 %v399, %v947
      %v949 = vpop.f32.mrb[0].mxu0
      %v950 = vpop.f32.mrb[0].mxu0
      %v951 = vadd.f32 %v399, %v950
      %v952 = vpop.f32.mrb[0].mxu0
      %953 = vmatprep.mubr.bf16.mxu0 %v607
      %954 = vmatmul.mubr.bf16.gmra.mrb[0].mxu0 %v606
      %v955 = vpop.f32.mrb[0].mxu0
      %v956 = vadd.f32 %v399, %v955
      %v957 = vpop.f32.mrb[0].mxu0
      %v958 = vpop.f32.mrb[0].mxu0
      %v959 = vadd.f32 %v399, %v958
      %v960 = vpop.f32.mrb[0].mxu0
      %961 = vdwg.mxu0
      %962 = vmatprep.subr.bf16.mxu0 0
      %963 = vmatpush1.bf16.msra.mxu0 %v769
      %964 = vmatprep.subr.bf16.mxu0 0
      %965 = vmatpush1.bf16.msra.mxu0 %v770
      %966 = vmatprep.subr.bf16.mxu0 0
      %967 = vmatpush1.bf16.msra.mxu0 %v771
      %968 = vmatprep.subr.bf16.mxu0 0
      %969 = vmatpush1.bf16.msra.mxu0 %v772
      %970 = vmatprep.subr.bf16.mxu0 0
      %971 = vmatpush1.bf16.msra.mxu0 %v773
      %972 = vmatprep.subr.bf16.mxu0 0
      %973 = vmatpush1.bf16.msra.mxu0 %v774
      %974 = vmatprep.subr.bf16.mxu0 0
      %975 = vmatpush1.bf16.msra.mxu0 %v775
      %976 = vmatprep.subr.bf16.mxu0 0
      %977 = vmatpush1.bf16.msra.mxu0 %v776
      %978 = vmatprep.subr.bf16.mxu0 0
      %979 = vmatpush1.bf16.msra.mxu0 0
      %980 = vmatprep.subr.bf16.mxu0 0
      %981 = vmatpush1.bf16.msra.mxu0 0
      %982 = vmatprep.subr.bf16.mxu0 0
      %983 = vmatpush1.bf16.msra.mxu0 0
      %984 = vmatprep.subr.bf16.mxu0 0
      %985 = vmatpush1.bf16.msra.mxu0 0
      %986 = vmatprep.subr.bf16.mxu0 0
      %987 = vmatpush1.bf16.msra.mxu0 0
      %988 = vmatprep.subr.bf16.mxu0 0
      %989 = vmatpush1.bf16.msra.mxu0 0
      %990 = vmatprep.subr.bf16.mxu0 0
      %991 = vmatpush1.bf16.msra.mxu0 0
      %992 = vmatprep.subr.bf16.mxu0 0
      %993 = vmatpush1.bf16.msra.mxu0 0
      %994 = vmatprep.mubr.bf16.mxu0 0
      %995 = vmatmul.mubr.bf16.gmra.mrb[0].mxu0 %v563
      %v996 = vpop.f32.mrb[0].mxu0
      %v997 = vadd.f32 %v836, %v996
      %v998 = vpop.f32.mrb[0].mxu0
      %v999 = vpop.f32.mrb[0].mxu0
      %v1000 = vadd.f32 %v839, %v999
      %v1001 = vpop.f32.mrb[0].mxu0
      %1002 = vmatprep.mubr.bf16.mxu0 0
      %1003 = vmatmul.mubr.bf16.gmra.mrb[0].mxu0 %v566
      %v1004 = vpop.f32.mrb[0].mxu0
      %v1005 = vadd.f32 %v844, %v1004
      %v1006 = vpop.f32.mrb[0].mxu0
      %v1007 = vpop.f32.mrb[0].mxu0
      %v1008 = vadd.f32 %v847, %v1007
      %v1009 = vpop.f32.mrb[0].mxu0
      %1010 = vmatprep.mubr.bf16.mxu0 0
      %1011 = vmatmul.mubr.bf16.gmra.mrb[0].mxu0 %v569
      %v1012 = vpop.f32.mrb[0].mxu0
      %v1013 = vadd.f32 %v852, %v1012
      %v1014 = vpop.f32.mrb[0].mxu0
      %v1015 = vpop.f32.mrb[0].mxu0
      %v1016 = vadd.f32 %v855, %v1015
      %v1017 = vpop.f32.mrb[0].mxu0
      %1018 = vmatprep.mubr.bf16.mxu0 0
      %1019 = vmatmul.mubr.bf16.gmra.mrb[0].mxu0 %v572
      %v1020 = vpop.f32.mrb[0].mxu0
      %v1021 = vadd.f32 %v860, %v1020
      %v1022 = vpop.f32.mrb[0].mxu0
      %v1023 = vpop.f32.mrb[0].mxu0
      %v1024 = vadd.f32 %v863, %v1023
      %v1025 = vpop.f32.mrb[0].mxu0
      %1026 = vmatprep.mubr.bf16.mxu0 0
      %1027 = vmatmul.mubr.bf16.gmra.mrb[0].mxu0 %v575
      %v1028 = vpop.f32.mrb[0].mxu0
      %v1029 = vadd.f32 %v868, %v1028
      %v1030 = vpop.f32.mrb[0].mxu0
      %v1031 = vpop.f32.mrb[0].mxu0
      %v1032 = vadd.f32 %v871, %v1031
      %v1033 = vpop.f32.mrb[0].mxu0
      %1034 = vmatprep.mubr.bf16.mxu0 0
      %1035 = vmatmul.mubr.bf16.gmra.mrb[0].mxu0 %v578
      %v1036 = vpop.f32.mrb[0].mxu0
      %v1037 = vadd.f32 %v876, %v1036
      %v1038 = vpop.f32.mrb[0].mxu0
      %v1039 = vpop.f32.mrb[0].mxu0
      %v1040 = vadd.f32 %v879, %v1039
      %v1041 = vpop.f32.mrb[0].mxu0
      %1042 = vmatprep.mubr.bf16.mxu0 0
      %1043 = vmatmul.mubr.bf16.gmra.mrb[0].mxu0 %v581
      %v1044 = vpop.f32.mrb[0].mxu0
      %v1045 = vadd.f32 %v884, %v1044
      %v1046 = vpop.f32.mrb[0].mxu0
      %v1047 = vpop.f32.mrb[0].mxu0
      %v1048 = vadd.f32 %v887, %v1047
      %v1049 = vpop.f32.mrb[0].mxu0
      %1050 = vmatprep.mubr.bf16.mxu0 0
      %1051 = vmatmul.mubr.bf16.gmra.mrb[0].mxu0 %v584
      %v1052 = vpop.f32.mrb[0].mxu0
      %v1053 = vadd.f32 %v892, %v1052
      %v1054 = vpop.f32.mrb[0].mxu0
      %v1055 = vpop.f32.mrb[0].mxu0
      %v1056 = vadd.f32 %v895, %v1055
      %v1057 = vpop.f32.mrb[0].mxu0
      %1058 = vmatprep.mubr.bf16.mxu0 0
      %1059 = vmatmul.mubr.bf16.gmra.mrb[0].mxu0 %v587
      %v1060 = vpop.f32.mrb[0].mxu0
      %v1061 = vadd.f32 %v900, %v1060
      %v1062 = vpop.f32.mrb[0].mxu0
      %v1063 = vpop.f32.mrb[0].mxu0
      %v1064 = vadd.f32 %v903, %v1063
      %v1065 = vpop.f32.mrb[0].mxu0
      %1066 = vmatprep.mubr.bf16.mxu0 0
      %1067 = vmatmul.mubr.bf16.gmra.mrb[0].mxu0 %v590
      %v1068 = vpop.f32.mrb[0].mxu0
      %v1069 = vadd.f32 %v908, %v1068
      %v1070 = vpop.f32.mrb[0].mxu0
      %v1071 = vpop.f32.mrb[0].mxu0
      %v1072 = vadd.f32 %v911, %v1071
      %v1073 = vpop.f32.mrb[0].mxu0
      %1074 = vmatprep.mubr.bf16.mxu0 0
      %1075 = vmatmul.mubr.bf16.gmra.mrb[0].mxu0 %v593
      %v1076 = vpop.f32.mrb[0].mxu0
      %v1077 = vadd.f32 %v916, %v1076
      %v1078 = vpop.f32.mrb[0].mxu0
      %v1079 = vpop.f32.mrb[0].mxu0
      %v1080 = vadd.f32 %v919, %v1079
      %v1081 = vpop.f32.mrb[0].mxu0
      %1082 = vmatprep.mubr.bf16.mxu0 0
      %1083 = vmatmul.mubr.bf16.gmra.mrb[0].mxu0 %v596
      %v1084 = vpop.f32.mrb[0].mxu0
      %v1085 = vadd.f32 %v924, %v1084
      %v1086 = vpop.f32.mrb[0].mxu0
      %v1087 = vpop.f32.mrb[0].mxu0
      %v1088 = vadd.f32 %v927, %v1087
      %v1089 = vpop.f32.mrb[0].mxu0
      %1090 = vmatprep.mubr.bf16.mxu0 0
      %1091 = vmatmul.mubr.bf16.gmra.mrb[0].mxu0 %v599
      %v1092 = vpop.f32.mrb[0].mxu0
      %v1093 = vadd.f32 %v932, %v1092
      %v1094 = vpop.f32.mrb[0].mxu0
      %v1095 = vpop.f32.mrb[0].mxu0
      %v1096 = vadd.f32 %v935, %v1095
      %v1097 = vpop.f32.mrb[0].mxu0
      %1098 = vmatprep.mubr.bf16.mxu0 0
      %1099 = vmatmul.mubr.bf16.gmra.mrb[0].mxu0 %v602
      %v1100 = vpop.f32.mrb[0].mxu0
      %v1101 = vadd.f32 %v940, %v1100
      %v1102 = vpop.f32.mrb[0].mxu0
      %v1103 = vpop.f32.mrb[0].mxu0
      %v1104 = vadd.f32 %v943, %v1103
      %v1105 = vpop.f32.mrb[0].mxu0
      %1106 = vmatprep.mubr.bf16.mxu0 0
      %1107 = vmatmul.mubr.bf16.gmra.mrb[0].mxu0 %v605
      %v1108 = vpop.f32.mrb[0].mxu0
      %v1109 = vadd.f32 %v948, %v1108
      %v1110 = vpop.f32.mrb[0].mxu0
      %v1111 = vpop.f32.mrb[0].mxu0
      %v1112 = vadd.f32 %v951, %v1111
      %v1113 = vpop.f32.mrb[0].mxu0
      %1114 = vmatprep.mubr.bf16.mxu0 0
      %1115 = vmatmul.mubr.bf16.gmra.mrb[0].mxu0 %v608
      %v1116 = vpop.f32.mrb[0].mxu0
      %v1117 = vadd.f32 %v956, %v1116
      %v1118 = vpop.f32.mrb[0].mxu0
      %v1119 = vpop.f32.mrb[0].mxu0
      %v1120 = vadd.f32 %v959, %v1119
      %v1121 = vpop.f32.mrb[0].mxu0
      %1122 = vdwg.mxu0
      %v1123 = vmax.f32 %v997, 0.0
      %v1124 = vmax.f32 %v1000, 0.0
      %v1125 = vmax.f32 %v1005, 0.0
      %v1126 = vmax.f32 %v1008, 0.0
      %v1127 = vmax.f32 %v1013, 0.0
      %v1128 = vmax.f32 %v1016, 0.0
      %v1129 = vmax.f32 %v1021, 0.0
      %v1130 = vmax.f32 %v1024, 0.0
      %v1131 = vmax.f32 %v1029, 0.0
      %v1132 = vmax.f32 %v1032, 0.0
      %v1133 = vmax.f32 %v1037, 0.0
      %v1134 = vmax.f32 %v1040, 0.0
      %v1135 = vmax.f32 %v1045, 0.0
      %v1136 = vmax.f32 %v1048, 0.0
      %v1137 = vmax.f32 %v1053, 0.0
      %v1138 = vmax.f32 %v1056, 0.0
      %v1139 = vmax.f32 %v1061, 0.0
      %v1140 = vmax.f32 %v1064, 0.0
      %v1141 = vmax.f32 %v1069, 0.0
      %v1142 = vmax.f32 %v1072, 0.0
      %v1143 = vmax.f32 %v1077, 0.0
      %v1144 = vmax.f32 %v1080, 0.0
      %v1145 = vmax.f32 %v1085, 0.0
      %v1146 = vmax.f32 %v1088, 0.0
      %v1147 = vmax.f32 %v1093, 0.0
      %v1148 = vmax.f32 %v1096, 0.0
      %v1149 = vmax.f32 %v1101, 0.0
      %v1150 = vmax.f32 %v1104, 0.0
      %v1151 = vmax.f32 %v1109, 0.0
      %v1152 = vmax.f32 %v1112, 0.0
      %v1153 = vmax.f32 %v1117, 0.0
      %v1154 = vmax.f32 %v1120, 0.0
      %v1155 = vpack.c.bf16 %v1124, %v1123
      %v1156 = vpack.c.bf16 %v1126, %v1125
      %v1157 = vpack.c.bf16 %v1128, %v1127
      %v1158 = vpack.c.bf16 %v1130, %v1129
      %v1159 = vpack.c.bf16 %v1132, %v1131
      %v1160 = vpack.c.bf16 %v1134, %v1133
      %v1161 = vpack.c.bf16 %v1136, %v1135
      %v1162 = vpack.c.bf16 %v1138, %v1137
      %v1163 = vpack.c.bf16 %v1140, %v1139
      %v1164 = vpack.c.bf16 %v1142, %v1141
      %v1165 = vpack.c.bf16 %v1144, %v1143
      %v1166 = vpack.c.bf16 %v1146, %v1145
      %v1167 = vpack.c.bf16 %v1148, %v1147
      %v1168 = vpack.c.bf16 %v1150, %v1149
      %v1169 = vpack.c.bf16 %v1152, %v1151
      %v1170 = vpack.c.bf16 %v1154, %v1153
      %v1187 = vunpack.c.l.b16 %v1155
      %v1188 = vunpack.c.h.b16 %v1155
      %v1189 = vunpack.c.l.b16 %v1156
      %v1190 = vunpack.c.h.b16 %v1156
      %v1191 = vunpack.c.l.b16 %v1157
      %v1192 = vunpack.c.h.b16 %v1157
      %v1193 = vunpack.c.l.b16 %v1158
      %v1194 = vunpack.c.h.b16 %v1158
      %v1195 = vunpack.c.l.b16 %v1159
      %v1196 = vunpack.c.h.b16 %v1159
      %v1197 = vunpack.c.l.b16 %v1160
      %v1198 = vunpack.c.h.b16 %v1160
      %v1199 = vunpack.c.l.b16 %v1161
      %v1200 = vunpack.c.h.b16 %v1161
      %v1201 = vunpack.c.l.b16 %v1162
      %v1202 = vunpack.c.h.b16 %v1162
      %v1203 = vunpack.c.l.b16 %v1163
      %v1204 = vunpack.c.h.b16 %v1163
      %v1205 = vunpack.c.l.b16 %v1164
      %v1206 = vunpack.c.h.b16 %v1164
      %v1207 = vunpack.c.l.b16 %v1165
      %v1208 = vunpack.c.h.b16 %v1165
      %v1209 = vunpack.c.l.b16 %v1166
      %v1210 = vunpack.c.h.b16 %v1166
      %v1211 = vunpack.c.l.b16 %v1167
      %v1212 = vunpack.c.h.b16 %v1167
      %v1213 = vunpack.c.l.b16 %v1168
      %v1214 = vunpack.c.h.b16 %v1168
      %v1215 = vunpack.c.l.b16 %v1169
      %v1216 = vunpack.c.h.b16 %v1169
      %v1217 = vunpack.c.l.b16 %v1170
      %v1218 = vunpack.c.h.b16 %v1170
      %v1219 = vpack.c.b16 %v1187, %v1187
      %v1220 = vpack.c.b16 %v1188, %v1188
      %v1221 = vpack.c.b16 %v1189, %v1189
      %v1222 = vpack.c.b16 %v1190, %v1190
      %v1223 = vpack.c.b16 %v1191, %v1191
      %v1224 = vpack.c.b16 %v1192, %v1192
      %v1225 = vpack.c.b16 %v1193, %v1193
      %v1226 = vpack.c.b16 %v1194, %v1194
      %v1227 = vpack.c.b16 %v1195, %v1195
      %v1228 = vpack.c.b16 %v1196, %v1196
      %v1229 = vpack.c.b16 %v1197, %v1197
      %v1230 = vpack.c.b16 %v1198, %v1198
      %v1231 = vpack.c.b16 %v1199, %v1199
      %v1232 = vpack.c.b16 %v1200, %v1200
      %v1233 = vpack.c.b16 %v1201, %v1201
      %v1234 = vpack.c.b16 %v1202, %v1202
      %v1235 = vpack.c.b16 %v1203, %v1203
      %v1236 = vpack.c.b16 %v1204, %v1204
      %v1237 = vpack.c.b16 %v1205, %v1205
      %v1238 = vpack.c.b16 %v1206, %v1206
      %v1239 = vpack.c.b16 %v1207, %v1207
      %v1240 = vpack.c.b16 %v1208, %v1208
      %v1241 = vpack.c.b16 %v1209, %v1209
      %v1242 = vpack.c.b16 %v1210, %v1210
      %v1243 = vpack.c.b16 %v1211, %v1211
      %v1244 = vpack.c.b16 %v1212, %v1212
      %v1245 = vpack.c.b16 %v1213, %v1213
      %v1246 = vpack.c.b16 %v1214, %v1214
      %v1247 = vpack.c.b16 %v1215, %v1215
      %v1248 = vpack.c.b16 %v1216, %v1216
      %v1249 = vpack.c.b16 %v1217, %v1217
      %v1250 = vpack.c.b16 %v1218, %v1218
      %1283 = vst [vmem:[%s271] sm:$0xf] %v1219
      %1284 = vst [vmem:[%s271 + $0x4] sm:$0xf] %v1220
      %1285 = vst [vmem:[%s271 + $0x8] sm:$0xf] %v1221
      %1286 = vst [vmem:[%s271 + $0xc] sm:$0xf] %v1222
      %1287 = vst [vmem:[%s271 + $0x10] sm:$0xf] %v1223
      %1288 = vst [vmem:[%s271 + $0x14] sm:$0xf] %v1224
      %1289 = vst [vmem:[%s271 + $0x18] sm:$0xf] %v1225
      %1290 = vst [vmem:[%s271 + $0x1c] sm:$0xf] %v1226
      %1291 = vst [vmem:[%s271 + $0x20] sm:$0xf] %v1227
      %1292 = vst [vmem:[%s271 + $0x24] sm:$0xf] %v1228
      %1293 = vst [vmem:[%s271 + $0x28] sm:$0xf] %v1229
      %1294 = vst [vmem:[%s271 + $0x2c] sm:$0xf] %v1230
      %1295 = vst [vmem:[%s271 + $0x30] sm:$0xf] %v1231
      %1296 = vst [vmem:[%s271 + $0x34] sm:$0xf] %v1232
      %1297 = vst [vmem:[%s271 + $0x38] sm:$0xf] %v1233
      %1298 = vst [vmem:[%s271 + $0x3c] sm:$0xf] %v1234
      %1299 = vst [vmem:[%s271 + $0x40] sm:$0xf] %v1235
      %1300 = vst [vmem:[%s271 + $0x44] sm:$0xf] %v1236
      %1301 = vst [vmem:[%s271 + $0x48] sm:$0xf] %v1237
      %1302 = vst [vmem:[%s271 + $0x4c] sm:$0xf] %v1238
      %1303 = vst [vmem:[%s271 + $0x50] sm:$0xf] %v1239
      %1304 = vst [vmem:[%s271 + $0x54] sm:$0xf] %v1240
      %1305 = vst [vmem:[%s271 + $0x58] sm:$0xf] %v1241
      %1306 = vst [vmem:[%s271 + $0x5c] sm:$0xf] %v1242
      %1307 = vst [vmem:[%s271 + $0x60] sm:$0xf] %v1243
      %1308 = vst [vmem:[%s271 + $0x64] sm:$0xf] %v1244
      %1309 = vst [vmem:[%s271 + $0x68] sm:$0xf] %v1245
      %1310 = vst [vmem:[%s271 + $0x6c] sm:$0xf] %v1246
      %1311 = vst [vmem:[%s271 + $0x70] sm:$0xf] %v1247
      %1312 = vst [vmem:[%s271 + $0x74] sm:$0xf] %v1248
      %1313 = vst [vmem:[%s271 + $0x78] sm:$0xf] %v1249
      %1314 = vst [vmem:[%s271 + $0x7c] sm:$0xf] %v1250
      %v1315 = vadd.f32 %v1123, %v1124
      %v1316 = vadd.f32 %v1315, %v1125
      %v1317 = vadd.f32 %v1316, %v1126
      %v1318 = vadd.f32 %v1317, %v1127
      %v1319 = vadd.f32 %v1318, %v1128
      %v1320 = vadd.f32 %v1319, %v1129
      %v1321 = vadd.f32 %v1320, %v1130
      %v1322 = vadd.f32 %v1321, %v1131
      %v1323 = vadd.f32 %v1322, %v1132
      %v1324 = vadd.f32 %v1323, %v1133
      %v1325 = vadd.f32 %v1324, %v1134
      %v1326 = vadd.f32 %v1325, %v1135
      %v1327 = vadd.f32 %v1326, %v1136
      %v1328 = vadd.f32 %v1327, %v1137
      %v1329 = vadd.f32 %v1328, %v1138
      %v1330 = vadd.f32 %v1329, %v1139
      %v1331 = vadd.f32 %v1330, %v1140
      %v1332 = vadd.f32 %v1331, %v1141
      %v1333 = vadd.f32 %v1332, %v1142
      %v1334 = vadd.f32 %v1333, %v1143
      %v1335 = vadd.f32 %v1334, %v1144
      %v1336 = vadd.f32 %v1335, %v1145
      %v1337 = vadd.f32 %v1336, %v1146
      %v1338 = vadd.f32 %v1337, %v1147
      %v1339 = vadd.f32 %v1338, %v1148
      %v1340 = vadd.f32 %v1339, %v1149
      %v1341 = vadd.f32 %v1340, %v1150
      %v1342 = vadd.f32 %v1341, %v1151
      %v1343 = vadd.f32 %v1342, %v1152
      %v1344 = vadd.f32 %v1343, %v1153
      %v1345 = vadd.f32 %v1344, %v1154
      %v1346 = vrot.slane %v1345, 4
      %v1347 = vadd.f32 %v1345, %v1346
      %v1348 = vrot.slane %v1347, 2
      %v1349 = vadd.f32 %v1347, %v1348
      %v1350 = vrot.slane %v1349, 1
      %v1351 = vadd.f32 %v1349, %v1350
      %1352 = vst [vmem:[%s278] sm:$0x1] %v1351
      %v1353 = vmul.f32 %v1123, %v1123
      %v1354 = vmul.f32 %v1124, %v1124
      %v1355 = vmul.f32 %v1125, %v1125
      %v1356 = vmul.f32 %v1126, %v1126
      %v1357 = vmul.f32 %v1127, %v1127
      %v1358 = vmul.f32 %v1128, %v1128
      %v1359 = vmul.f32 %v1129, %v1129
      %v1360 = vmul.f32 %v1130, %v1130
      %v1361 = vmul.f32 %v1131, %v1131
      %v1362 = vmul.f32 %v1132, %v1132
      %v1363 = vmul.f32 %v1133, %v1133
      %v1364 = vmul.f32 %v1134, %v1134
      %v1365 = vmul.f32 %v1135, %v1135
      %v1366 = vmul.f32 %v1136, %v1136
      %v1367 = vmul.f32 %v1137, %v1137
      %v1368 = vmul.f32 %v1138, %v1138
      %v1369 = vmul.f32 %v1139, %v1139
      %v1370 = vmul.f32 %v1140, %v1140
      %v1371 = vmul.f32 %v1141, %v1141
      %v1372 = vmul.f32 %v1142, %v1142
      %v1373 = vmul.f32 %v1143, %v1143
      %v1374 = vmul.f32 %v1144, %v1144
      %v1375 = vmul.f32 %v1145, %v1145
      %v1376 = vmul.f32 %v1146, %v1146
      %v1377 = vmul.f32 %v1147, %v1147
      %v1378 = vmul.f32 %v1148, %v1148
      %v1379 = vmul.f32 %v1149, %v1149
      %v1380 = vmul.f32 %v1150, %v1150
      %v1381 = vmul.f32 %v1151, %v1151
      %v1382 = vmul.f32 %v1152, %v1152
      %v1383 = vmul.f32 %v1153, %v1153
      %v1384 = vmul.f32 %v1154, %v1154
      %v1385 = vadd.f32 %v1353, %v1354
      %v1386 = vadd.f32 %v1385, %v1355
      %v1387 = vadd.f32 %v1386, %v1356
      %v1388 = vadd.f32 %v1387, %v1357
      %v1389 = vadd.f32 %v1388, %v1358
      %v1390 = vadd.f32 %v1389, %v1359
      %v1391 = vadd.f32 %v1390, %v1360
      %v1392 = vadd.f32 %v1391, %v1361
      %v1393 = vadd.f32 %v1392, %v1362
      %v1394 = vadd.f32 %v1393, %v1363
      %v1395 = vadd.f32 %v1394, %v1364
      %v1396 = vadd.f32 %v1395, %v1365
      %v1397 = vadd.f32 %v1396, %v1366
      %v1398 = vadd.f32 %v1397, %v1367
      %v1399 = vadd.f32 %v1398, %v1368
      %v1400 = vadd.f32 %v1399, %v1369
      %v1401 = vadd.f32 %v1400, %v1370
      %v1402 = vadd.f32 %v1401, %v1371
      %v1403 = vadd.f32 %v1402, %v1372
      %v1404 = vadd.f32 %v1403, %v1373
      %v1405 = vadd.f32 %v1404, %v1374
      %v1406 = vadd.f32 %v1405, %v1375
      %v1407 = vadd.f32 %v1406, %v1376
      %v1408 = vadd.f32 %v1407, %v1377
      %v1409 = vadd.f32 %v1408, %v1378
      %v1410 = vadd.f32 %v1409, %v1379
      %v1411 = vadd.f32 %v1410, %v1380
      %v1412 = vadd.f32 %v1411, %v1381
      %v1413 = vadd.f32 %v1412, %v1382
      %v1414 = vadd.f32 %v1413, %v1383
      %v1415 = vadd.f32 %v1414, %v1384
      %v1416 = vrot.slane %v1415, 4
      %v1417 = vadd.f32 %v1415, %v1416
      %v1418 = vrot.slane %v1417, 2
      %v1419 = vadd.f32 %v1417, %v1418
      %v1420 = vrot.slane %v1419, 1
      %v1421 = vadd.f32 %v1419, %v1420
      %1422 = vst [vmem:[%s278 + $0x1] sm:$0x1] %v1421
      %s1423 = smul.u32 32, %s21
      %p1424 = scmp.lt.s32.totalorder %s20, 0
      %s1425 = scalar_select %p1424, %s20, 0
      %p1426 = scmp.lt.s32.totalorder %s1423, 63
      %s1427 = scalar_select %p1426, %s1423, 63
      %s1428 = smul.addr %s1425, 64
      %s1429 = sadd.s32 %s1427, %s1428
      %s1430 = smul.addr %s1429, 4
      %s1431 = scalar_lea.vmem %s3, %s1430
      %s1432 = smul.u32 %s20, 2
      %s1433 = sadd.s32 %s1432, %s21
      %p1434 = scmp.lt.s32.totalorder %s1433, 1
      %s1435 = scalar_select %p1434, %s1433, 1
      %s1436 = smul.addr %s1435, 2
      %s1437 = scalar_lea.vmem %s4, %s1436
      // Predicated region
      $region33: #{forward.32} parent=31 // pred_check
        %p1438 = pneg %p123
      $region34: #{forward.32} parent=31 // pred_check_branch
        %1440 = sbr.rel (%p1438) target = $region36
      $region35: #{forward.32} parent=31 // pred_region
        %s1441 = smul.u32 32, %s21
      $region36: #{forward.32} parent=31 // pred_fallthru
        _
      // Predicated region
      $region37: #{forward.32} parent=31 // pred_check
        %p1442 = pneg %p153
      $region38: #{forward.32} parent=31 // pred_check_branch
        %1444 = sbr.rel (%p1442) target = $region40
      $region39: #{forward.32} parent=31 // pred_region
        %s1445 = smul.u32 %s20, 2
        %s1446 = sadd.s32 %s1445, %s21
      $region40: #{forward.32} parent=31 // pred_fallthru
        _
    $region32: #{forward.32} parent=5 // pred_fallthru
      _
    %p1447 = scmp.le.s32.totalorder 2, %s11
    // Predicated region
    $region41: #{forward.32} parent=5 // pred_check
      %p1448 = pneg %p1447
    $region42: #{forward.32} parent=5 // pred_check_branch
      %1450 = sbr.rel (%p1448) target = $region44
    $region43: #{forward.32} parent=5 // pred_region
      %s1451 = ssub.s32 %s11, 2
      // Predicated region
      $region45: #{forward.32} parent=43 // pred_check
        %p1452 = pneg %p129
      $region46: #{forward.32} parent=43 // pred_check_branch
        %1454 = sbr.rel (%p1452) target = $region48
      $region47: #{forward.32} parent=43 // pred_region
        %s1455 = smul.u32 32, %s23
        %p1456 = scmp.lt.s32.totalorder %s22, 0
        %s1457 = scalar_select %p1456, %s22, 0
        %p1458 = scmp.lt.s32.totalorder %s1455, 63
        %s1459 = scalar_select %p1458, %s1455, 63
        %s1460 = smul.addr %s1457, 64
        %s1461 = sadd.s32 %s1459, %s1460
        %s1462 = smul.addr %s1461, 4
        %s1463 = scalar_lea.vmem %s3, %s1462
      $region48: #{forward.32} parent=43 // pred_fallthru
        _
      // Predicated region
      $region49: #{forward.32} parent=43 // pred_check
        %p1464 = pneg %p159
      $region50: #{forward.32} parent=43 // pred_check_branch
        %1466 = sbr.rel (%p1464) target = $region52
      $region51: #{forward.32} parent=43 // pred_region
        %s1467 = smul.u32 %s22, 2
        %s1468 = sadd.s32 %s1467, %s23
        %p1469 = scmp.lt.s32.totalorder %s1468, 1
        %s1470 = scalar_select %p1469, %s1468, 1
        %s1471 = smul.addr %s1470, 2
        %s1472 = scalar_lea.vmem %s4, %s1471
      $region52: #{forward.32} parent=43 // pred_fallthru
        _
    $region44: #{forward.32} parent=5 // pred_fallthru
      _
  $region6: #{forward.32} parent=0 // loop_footer
    %s15 = sadd.s32 1, %s11
  $region7: #{forward.32} parent=0 // loop_footer_branch
    %10 = sbr.rel target = $region3
  $region8: #{forward.32} parent=0 // loop_exit
    _

// kernel: forward.33
$region0: #{forward.33}
  #allocation0 [shape = 'u32[]', space=smem, size = 0x4, offset = 0x4, fixed_abs, tag = 'smem constant byte address 0x4 - core index']
  #allocation1 [shape = 'u32[144,128]{1,0:T(1,128)}', space=vmem, size = 0x12000, scoped, tag = 'internal scratch']
  %s0 = inlined_call_operand.vmem [shape: bf16[512,384], index: 0, kind: input, shape index: {}]
  %s1 = inlined_call_operand.vmem [shape: bf16[384,128], index: 1, kind: input, shape index: {}]
  %s2 = inlined_call_operand.vmem [shape: f32[1,128], index: 2, kind: input, shape index: {}]
  %s3 = inlined_call_operand.vmem [shape: f32[512,128], index: 3, kind: output, shape index: {}]
  %s4 = sld [smem:[#allocation0]]
  $region45: #{forward.33} parent=0
    _
  %s6 = ssub.s32 1, %s4
  %s7 = scalar_select 0, %s6, %s4
  loop: start=0, step=1, limit=4
  $region2: #{forward.33} parent=0 // loop_pre_header
    _
  $region3: #{forward.33} parent=0 // loop_header
    %s9 = sphi 0, %s13
    %p10 = scmp.ge.s32.totalorder %s9, 4
    %s19 = sphi 0, %s21
    %s22 = sphi 0, %s19
    %s23 = sphi 0, %s22
    %s39 = sphi 0, %s23
    %s43 = sphi 0, %s43
    %s45 = sphi 0, %s43
    %s46 = sphi 0, %s45
    %s60 = sphi 0, %s46
    %s64 = sphi 0, %s64
    %s66 = sphi 0, %s64
    %s67 = sphi 0, %s66
    %s81 = sphi 0, %s67
    %s87 = sphi 0, %s89
    %s90 = sphi 0, %s87
    %s91 = sphi 0, %s90
    %s107 = sphi 0, %s91
  $region4: #{forward.33} parent=0 // loop_header_branch
    %12 = sbr.rel (%p10) target = $region8
  $region5: #{forward.33} parent=0 // loop_body
    %s14 = ssub.s32 %s9, 1
    %s15 = ssub.s32 %s9, 2
    %s16 = sadd.s32 %s9, 1
    %s17 = ssub.s32 %s9, %s16
    %p18 = scmp.eq.s32.totalorder %s17, 0
    %s20 = sadd.s32 %s19, 1
    %s21 = scalar_select %p18, %s19, %s20
    %p24 = pneg %p18
    %p25 = scmp.eq.s32.totalorder %s9, 1
    %p26 = por %p24, %p25
    %p27 = scmp.ne.s32.totalorder %s19, %s22
    %p28 = scmp.eq.s32.totalorder %s9, 0
    %p29 = por %p27, %p28
    %p30 = scmp.ne.s32.totalorder %s19, %s22
    %p31 = scmp.eq.s32.totalorder %s14, 1
    %p32 = por %p30, %p31
    %p33 = scmp.ne.s32.totalorder %s22, %s23
    %p34 = scmp.eq.s32.totalorder %s14, 0
    %p35 = por %p33, %p34
    %p36 = scmp.ne.s32.totalorder %s22, %s23
    %p37 = scmp.eq.s32.totalorder %s15, 1
    %p38 = por %p36, %p37
    %p40 = scmp.ne.s32.totalorder %s23, %s39
    %p41 = scmp.eq.s32.totalorder %s15, 0
    %p42 = por %p40, %p41
    %s44 = sadd.s32 %s43, 1
    %p47 = scmp.eq.s32.totalorder %s9, 1
    %p48 = scmp.ne.s32.totalorder %s43, %s45
    %p49 = scmp.eq.s32.totalorder %s9, 0
    %p50 = por %p48, %p49
    %p51 = scmp.ne.s32.totalorder %s43, %s45
    %p52 = scmp.eq.s32.totalorder %s14, 1
    %p53 = por %p51, %p52
    %p54 = scmp.ne.s32.totalorder %s45, %s46
    %p55 = scmp.eq.s32.totalorder %s14, 0
    %p56 = por %p54, %p55
    %p57 = scmp.ne.s32.totalorder %s45, %s46
    %p58 = scmp.eq.s32.totalorder %s15, 1
    %p59 = por %p57, %p58
    %p61 = scmp.ne.s32.totalorder %s46, %s60
    %p62 = scmp.eq.s32.totalorder %s15, 0
    %p63 = por %p61, %p62
    %s65 = sadd.s32 %s64, 1
    %p68 = scmp.eq.s32.totalorder %s9, 1
    %p69 = scmp.ne.s32.totalorder %s64, %s66
    %p70 = scmp.eq.s32.totalorder %s9, 0
    %p71 = por %p69, %p70
    %p72 = scmp.ne.s32.totalorder %s64, %s66
    %p73 = scmp.eq.s32.totalorder %s14, 1
    %p74 = por %p72, %p73
    %p75 = scmp.ne.s32.totalorder %s66, %s67
    %p76 = scmp.eq.s32.totalorder %s14, 0
    %p77 = por %p75, %p76
    %p78 = scmp.ne.s32.totalorder %s66, %s67
    %p79 = scmp.eq.s32.totalorder %s15, 1
    %p80 = por %p78, %p79
    %p82 = scmp.ne.s32.totalorder %s67, %s81
    %p83 = scmp.eq.s32.totalorder %s15, 0
    %p84 = por %p82, %p83
    %s85 = ssub.s32 %s9, %s16
    %p86 = scmp.eq.s32.totalorder %s85, 0
    %s88 = sadd.s32 %s87, 1
    %s89 = scalar_select %p86, %s87, %s88
    %p92 = pneg %p86
    %p93 = scmp.eq.s32.totalorder %s9, 1
    %p94 = por %p92, %p93
    %p95 = scmp.ne.s32.totalorder %s87, %s90
    %p96 = scmp.eq.s32.totalorder %s9, 0
    %p97 = por %p95, %p96
    %p98 = scmp.ne.s32.totalorder %s87, %s90
    %p99 = scmp.eq.s32.totalorder %s14, 1
    %p100 = por %p98, %p99
    %p101 = scmp.ne.s32.totalorder %s90, %s91
    %p102 = scmp.eq.s32.totalorder %s14, 0
    %p103 = por %p101, %p102
    %p104 = scmp.ne.s32.totalorder %s90, %s91
    %p105 = scmp.eq.s32.totalorder %s15, 1
    %p106 = por %p104, %p105
    %p108 = scmp.ne.s32.totalorder %s91, %s107
    %p109 = scmp.eq.s32.totalorder %s15, 0
    %p110 = por %p108, %p109
    %p111 = scmp.le.s32.totalorder 1, %s9
    %p112 = scmp.lt.s32.totalorder %s9, 3
    %p113 = pnand %p111, %p112
    %p114 = pneg %p113
    // Predicated region
    $region9: #{forward.33} parent=5 // pred_check
      _
    $region10: #{forward.33} parent=5 // pred_check_branch
      %116 = sbr.rel (%p113) target = $region12
    $region11: #{forward.33} parent=5 // pred_region
      %s117 = ssub.s32 %s9, 1
      // Predicated region
      $region13: #{forward.33} parent=11 // pred_check
        %p118 = pneg %p56
      $region14: #{forward.33} parent=11 // pred_check_branch
        %120 = sbr.rel (%p118) target = $region16
      $region15: #{forward.33} parent=11 // pred_region
        _
      $region16: #{forward.33} parent=11 // pred_fallthru
        _
      // Predicated region
      $region17: #{forward.33} parent=11 // pred_check
        %p121 = pneg %p77
      $region18: #{forward.33} parent=11 // pred_check_branch
        %123 = sbr.rel (%p121) target = $region20
      $region19: #{forward.33} parent=11 // pred_region
        _
      $region20: #{forward.33} parent=11 // pred_fallthru
        _
    $region12: #{forward.33} parent=5 // pred_fallthru
      _
    %p124 = scmp.lt.s32.totalorder %s9, 2
    // Predicated region
    $region21: #{forward.33} parent=5 // pred_check
      %p125 = pneg %p124
    $region22: #{forward.33} parent=5 // pred_check_branch
      %127 = sbr.rel (%p125) target = $region24
    $region23: #{forward.33} parent=5 // pred_region
      // Predicated region
      $region25: #{forward.33} parent=23 // pred_check
        %p128 = pneg %p29
      $region26: #{forward.33} parent=23 // pred_check_branch
        %130 = sbr.rel (%p128) target = $region28
      $region27: #{forward.33} parent=23 // pred_region
        %s131 = smul.u32 32, %s9
        %p132 = scmp.lt.s32.totalorder %s131, 63
        %s133 = scalar_select %p132, %s131, 63
        %s134 = smul.addr %s133, 3
        %s135 = smul.addr %s134, 4
        %s136 = scalar_lea.vmem %s0, %s135
        %s137 = smul.u32 32, %s9
      $region28: #{forward.33} parent=23 // pred_fallthru
        _
    $region24: #{forward.33} parent=5 // pred_fallthru
      _
    %p138 = scmp.le.s32.totalorder 1, %s9
    %p139 = scmp.lt.s32.totalorder %s9, 3
    %p140 = pnand %p138, %p139
    %p141 = pneg %p140
    // Predicated region
    $region29: #{forward.33} parent=5 // pred_check
      _
    $region30: #{forward.33} parent=5 // pred_check_branch
      %143 = sbr.rel (%p140) target = $region32
    $region31: #{forward.33} parent=5 // pred_region
      %s144 = ssub.s32 %s9, 1
      %s145 = smul.u32 32, %s14
      %p146 = scmp.lt.s32.totalorder %s145, 63
      %s147 = scalar_select %p146, %s145, 63
      %s148 = smul.addr %s147, 3
      %s149 = smul.addr %s148, 4
      %s150 = scalar_lea.vmem %s0, %s149
      %p151 = pneg %p35
      %p152 = pneg %p32
      %p153 = pneg %p56
      %p154 = pneg %p53
      %p155 = pneg %p77
      %p156 = pneg %p74
      %p157 = pneg %p103
      %p158 = pneg %p100
      %s159 = smul.u32 32, %s14
      %p160 = scmp.lt.s32.totalorder %s159, 63
      %s161 = scalar_select %p160, %s159, 63
      %s162 = smul.addr %s161, 8
      %s163 = scalar_lea.vmem %s3, %s162
      %s164 = smul.u32 32, %s14
      %p165 = scmp.lt.s32.totalorder %s164, 63
      %s166 = scalar_select %p165, %s164, 63
      %s167 = smul.addr %s166, 3
      %s168 = smul.addr %s167, 4
      %s169 = scalar_lea.vmem %s0, %s168
      %s170 = smul.u32 32, %s14
      %s171 = smul.u32 32, %s14
      %p172 = scmp.lt.s32.totalorder %s171, 63
      %s173 = scalar_select %p172, %s171, 63
      %s174 = smul.addr %s173, 8
      %s175 = scalar_lea.vmem %s3, %s174
      %s176 = smul.u32 32, %s14
      %v178 = vld [vmem:[%s169] sm:$0xff]
      %v179 = vld [vmem:[%s169 + $0x8] sm:$0xf]
      %v180 = vld [vmem:[%s169 + $0xc] sm:$0xff]
      %v181 = vld [vmem:[%s169 + $0x14] sm:$0xf]
      %v182 = vld [vmem:[%s169 + $0x18] sm:$0xff]
      %v183 = vld [vmem:[%s169 + $0x20] sm:$0xf]
      %v184 = vld [vmem:[%s169 + $0x24] sm:$0xff]
      %v185 = vld [vmem:[%s169 + $0x2c] sm:$0xf]
      %v186 = vld [vmem:[%s169 + $0x30] sm:$0xff]
      %v187 = vld [vmem:[%s169 + $0x38] sm:$0xf]
      %v188 = vld [vmem:[%s169 + $0x3c] sm:$0xff]
      %v189 = vld [vmem:[%s169 + $0x44] sm:$0xf]
      %v190 = vld [vmem:[%s169 + $0x48] sm:$0xff]
      %v191 = vld [vmem:[%s169 + $0x50] sm:$0xf]
      %v192 = vld [vmem:[%s169 + $0x54] sm:$0xff]
      %v193 = vld [vmem:[%s169 + $0x5c] sm:$0xf]
      %v194 = vld [vmem:[%s169 + $0x60] sm:$0xff]
      %v195 = vld [vmem:[%s169 + $0x68] sm:$0xf]
      %v196 = vld [vmem:[%s169 + $0x6c] sm:$0xff]
      %v197 = vld [vmem:[%s169 + $0x74] sm:$0xf]
      %v198 = vld [vmem:[%s169 + $0x78] sm:$0xff]
      %v199 = vld [vmem:[%s169 + $0x80] sm:$0xf]
      %v200 = vld [vmem:[%s169 + $0x84] sm:$0xff]
      %v201 = vld [vmem:[%s169 + $0x8c] sm:$0xf]
      %v202 = vld [vmem:[%s169 + $0x90] sm:$0xff]
      %v203 = vld [vmem:[%s169 + $0x98] sm:$0xf]
      %v204 = vld [vmem:[%s169 + $0x9c] sm:$0xff]
      %v205 = vld [vmem:[%s169 + $0xa4] sm:$0xf]
      %v206 = vld [vmem:[%s169 + $0xa8] sm:$0xff]
      %v207 = vld [vmem:[%s169 + $0xb0] sm:$0xf]
      %v208 = vld [vmem:[%s169 + $0xb4] sm:$0xff]
      %v209 = vld [vmem:[%s169 + $0xbc] sm:$0xf]
      %v210 = vld [vmem:[%s169 + $0xc0] sm:$0xff]
      %v211 = vld [vmem:[%s169 + $0xc8] sm:$0xf]
      %v212 = vld [vmem:[%s169 + $0xcc] sm:$0xff]
      %v213 = vld [vmem:[%s169 + $0xd4] sm:$0xf]
      %v214 = vld [vmem:[%s169 + $0xd8] sm:$0xff]
      %v215 = vld [vmem:[%s169 + $0xe0] sm:$0xf]
      %v216 = vld [vmem:[%s169 + $0xe4] sm:$0xff]
      %v217 = vld [vmem:[%s169 + $0xec] sm:$0xf]
      %v218 = vld [vmem:[%s169 + $0xf0] sm:$0xff]
      %v219 = vld [vmem:[%s169 + $0xf8] sm:$0xf]
      %v220 = vld [vmem:[%s169 + $0xfc] sm:$0xff]
      %v221 = vld [vmem:[%s169 + $0x104] sm:$0xf]
      %v222 = vld [vmem:[%s169 + $0x108] sm:$0xff]
      %v223 = vld [vmem:[%s169 + $0x110] sm:$0xf]
      %v224 = vld [vmem:[%s169 + $0x114] sm:$0xff]
      %v225 = vld [vmem:[%s169 + $0x11c] sm:$0xf]
      %v226 = vld [vmem:[%s169 + $0x120] sm:$0xff]
      %v227 = vld [vmem:[%s169 + $0x128] sm:$0xf]
      %v228 = vld [vmem:[%s169 + $0x12c] sm:$0xff]
      %v229 = vld [vmem:[%s169 + $0x134] sm:$0xf]
      %v230 = vld [vmem:[%s169 + $0x138] sm:$0xff]
      %v231 = vld [vmem:[%s169 + $0x140] sm:$0xf]
      %v232 = vld [vmem:[%s169 + $0x144] sm:$0xff]
      %v233 = vld [vmem:[%s169 + $0x14c] sm:$0xf]
      %v234 = vld [vmem:[%s169 + $0x150] sm:$0xff]
      %v235 = vld [vmem:[%s169 + $0x158] sm:$0xf]
      %v236 = vld [vmem:[%s169 + $0x15c] sm:$0xff]
      %v237 = vld [vmem:[%s169 + $0x164] sm:$0xf]
      %v238 = vld [vmem:[%s169 + $0x168] sm:$0xff]
      %v239 = vld [vmem:[%s169 + $0x170] sm:$0xf]
      %v240 = vld [vmem:[%s169 + $0x174] sm:$0xff]
      %v241 = vld [vmem:[%s169 + $0x17c] sm:$0xf]
      %v242 = vld [vmem:[%s1] sm:$0xf]
      %v243 = vld [vmem:[%s1 + $0x4] sm:$0xf]
      %v244 = vld [vmem:[%s1 + $0x8] sm:$0xf]
      %v245 = vld [vmem:[%s1 + $0xc] sm:$0xf]
      %v246 = vld [vmem:[%s1 + $0x10] sm:$0xf]
      %v247 = vld [vmem:[%s1 + $0x14] sm:$0xf]
      %v248 = vld [vmem:[%s1 + $0x18] sm:$0xf]
      %v249 = vld [vmem:[%s1 + $0x1c] sm:$0xf]
      %v250 = vld [vmem:[%s1 + $0x20] sm:$0xf]
      %v251 = vld [vmem:[%s1 + $0x24] sm:$0xf]
      %v252 = vld [vmem:[%s1 + $0x28] sm:$0xf]
      %v253 = vld [vmem:[%s1 + $0x2c] sm:$0xf]
      %v254 = vld [vmem:[%s1 + $0x30] sm:$0xf]
      %v255 = vld [vmem:[%s1 + $0x34] sm:$0xf]
      %v256 = vld [vmem:[%s1 + $0x38] sm:$0xf]
      %v257 = vld [vmem:[%s1 + $0x3c] sm:$0xf]
      %v258 = vld [vmem:[%s1 + $0x40] sm:$0xf]
      %v259 = vld [vmem:[%s1 + $0x44] sm:$0xf]
      %v260 = vld [vmem:[%s1 + $0x48] sm:$0xf]
      %v261 = vld [vmem:[%s1 + $0x4c] sm:$0xf]
      %v262 = vld [vmem:[%s1 + $0x50] sm:$0xf]
      %v263 = vld [vmem:[%s1 + $0x54] sm:$0xf]
      %v264 = vld [vmem:[%s1 + $0x58] sm:$0xf]
      %v265 = vld [vmem:[%s1 + $0x5c] sm:$0xf]
      %v266 = vld [vmem:[%s1 + $0x60] sm:$0xf]
      %v267 = vld [vmem:[%s1 + $0x64] sm:$0xf]
      %v268 = vld [vmem:[%s1 + $0x68] sm:$0xf]
      %v269 = vld [vmem:[%s1 + $0x6c] sm:$0xf]
      %v270 = vld [vmem:[%s1 + $0x70] sm:$0xf]
      %v271 = vld [vmem:[%s1 + $0x74] sm:$0xf]
      %v272 = vld [vmem:[%s1 + $0x78] sm:$0xf]
      %v273 = vld [vmem:[%s1 + $0x7c] sm:$0xf]
      %v274 = vld [vmem:[%s1 + $0x80] sm:$0xf]
      %v275 = vld [vmem:[%s1 + $0x84] sm:$0xf]
      %v276 = vld [vmem:[%s1 + $0x88] sm:$0xf]
      %v277 = vld [vmem:[%s1 + $0x8c] sm:$0xf]
      %v278 = vld [vmem:[%s1 + $0x90] sm:$0xf]
      %v279 = vld [vmem:[%s1 + $0x94] sm:$0xf]
      %v280 = vld [vmem:[%s1 + $0x98] sm:$0xf]
      %v281 = vld [vmem:[%s1 + $0x9c] sm:$0xf]
      %v282 = vld [vmem:[%s1 + $0xa0] sm:$0xf]
      %v283 = vld [vmem:[%s1 + $0xa4] sm:$0xf]
      %v284 = vld [vmem:[%s1 + $0xa8] sm:$0xf]
      %v285 = vld [vmem:[%s1 + $0xac] sm:$0xf]
      %v286 = vld [vmem:[%s1 + $0xb0] sm:$0xf]
      %v287 = vld [vmem:[%s1 + $0xb4] sm:$0xf]
      %v288 = vld [vmem:[%s1 + $0xb8] sm:$0xf]
      %v289 = vld [vmem:[%s1 + $0xbc] sm:$0xf]
      %v290 = vld [vmem:[%s2] sm:$0x1]
      %v292 = vlaneseq
      %v293 = vshrl.u32 %v292, 7
      %v294 = vsub.s32 0, %v293
      %v295 = vrot.slane %v290, %v294
      %v361 = vunpack.c.l.b16 %v178
      %v362 = vunpack.c.h.b16 %v178
      %v363 = vunpack.c.l.b16 %v179
      %v364 = vunpack.c.l.b16 %v180
      %v365 = vunpack.c.h.b16 %v180
      %v366 = vunpack.c.l.b16 %v181
      %v367 = vunpack.c.l.b16 %v182
      %v368 = vunpack.c.h.b16 %v182
      %v369 = vunpack.c.l.b16 %v183
      %v370 = vunpack.c.l.b16 %v184
      %v371 = vunpack.c.h.b16 %v184
      %v372 = vunpack.c.l.b16 %v185
      %v373 = vunpack.c.l.b16 %v186
      %v374 = vunpack.c.h.b16 %v186
      %v375 = vunpack.c.l.b16 %v187
      %v376 = vunpack.c.l.b16 %v188
      %v377 = vunpack.c.h.b16 %v188
      %v378 = vunpack.c.l.b16 %v189
      %v379 = vunpack.c.l.b16 %v190
      %v380 = vunpack.c.h.b16 %v190
      %v381 = vunpack.c.l.b16 %v191
      %v382 = vunpack.c.l.b16 %v192
      %v383 = vunpack.c.h.b16 %v192
      %v384 = vunpack.c.l.b16 %v193
      %v385 = vunpack.c.l.b16 %v194
      %v386 = vunpack.c.h.b16 %v194
      %v387 = vunpack.c.l.b16 %v195
      %v388 = vunpack.c.l.b16 %v196
      %v389 = vunpack.c.h.b16 %v196
      %v390 = vunpack.c.l.b16 %v197
      %v391 = vunpack.c.l.b16 %v198
      %v392 = vunpack.c.h.b16 %v198
      %v393 = vunpack.c.l.b16 %v199
      %v394 = vunpack.c.l.b16 %v200
      %v395 = vunpack.c.h.b16 %v200
      %v396 = vunpack.c.l.b16 %v201
      %v397 = vunpack.c.l.b16 %v202
      %v398 = vunpack.c.h.b16 %v202
      %v399 = vunpack.c.l.b16 %v203
      %v400 = vunpack.c.l.b16 %v204
      %v401 = vunpack.c.h.b16 %v204
      %v402 = vunpack.c.l.b16 %v205
      %v403 = vunpack.c.l.b16 %v206
      %v404 = vunpack.c.h.b16 %v206
      %v405 = vunpack.c.l.b16 %v207
      %v406 = vunpack.c.l.b16 %v208
      %v407 = vunpack.c.h.b16 %v208
      %v408 = vunpack.c.l.b16 %v209
      %v409 = vunpack.c.l.b16 %v210
      %v410 = vunpack.c.h.b16 %v210
      %v411 = vunpack.c.l.b16 %v211
      %v412 = vunpack.c.l.b16 %v212
      %v413 = vunpack.c.h.b16 %v212
      %v414 = vunpack.c.l.b16 %v213
      %v415 = vunpack.c.l.b16 %v214
      %v416 = vunpack.c.h.b16 %v214
      %v417 = vunpack.c.l.b16 %v215
      %v418 = vunpack.c.l.b16 %v216
      %v419 = vunpack.c.h.b16 %v216
      %v420 = vunpack.c.l.b16 %v217
      %v421 = vunpack.c.l.b16 %v218
      %v422 = vunpack.c.h.b16 %v218
      %v423 = vunpack.c.l.b16 %v219
      %v424 = vunpack.c.l.b16 %v220
      %v425 = vunpack.c.h.b16 %v220
      %v426 = vunpack.c.l.b16 %v221
      %v427 = vunpack.c.l.b16 %v222
      %v428 = vunpack.c.h.b16 %v222
      %v429 = vunpack.c.l.b16 %v223
      %v430 = vunpack.c.l.b16 %v224
      %v431 = vunpack.c.h.b16 %v224
      %v432 = vunpack.c.l.b16 %v225
      %v433 = vunpack.c.l.b16 %v226
      %v434 = vunpack.c.h.b16 %v226
      %v435 = vunpack.c.l.b16 %v227
      %v436 = vunpack.c.l.b16 %v228
      %v437 = vunpack.c.h.b16 %v228
      %v438 = vunpack.c.l.b16 %v229
      %v439 = vunpack.c.l.b16 %v230
      %v440 = vunpack.c.h.b16 %v230
      %v441 = vunpack.c.l.b16 %v231
      %v442 = vunpack.c.l.b16 %v232
      %v443 = vunpack.c.h.b16 %v232
      %v444 = vunpack.c.l.b16 %v233
      %v445 = vunpack.c.l.b16 %v234
      %v446 = vunpack.c.h.b16 %v234
      %v447 = vunpack.c.l.b16 %v235
      %v448 = vunpack.c.l.b16 %v236
      %v449 = vunpack.c.h.b16 %v236
      %v450 = vunpack.c.l.b16 %v237
      %v451 = vunpack.c.l.b16 %v238
      %v452 = vunpack.c.h.b16 %v238
      %v453 = vunpack.c.l.b16 %v239
      %v454 = vunpack.c.l.b16 %v240
      %v455 = vunpack.c.h.b16 %v240
      %v456 = vunpack.c.l.b16 %v241
      %v457 = vpack.c.b16 %v364, %v361
      %v458 = vpack.c.b16 %v365, %v362
      %v459 = vpack.c.b16 %v366, %v363
      %v460 = vpack.c.b16 %v370, %v367
      %v461 = vpack.c.b16 %v371, %v368
      %v462 = vpack.c.b16 %v372, %v369
      %v463 = vpack.c.b16 %v376, %v373
      %v464 = vpack.c.b16 %v377, %v374
      %v465 = vpack.c.b16 %v378, %v375
      %v466 = vpack.c.b16 %v382, %v379
      %v467 = vpack.c.b16 %v383, %v380
      %v468 = vpack.c.b16 %v384, %v381
      %v469 = vpack.c.b16 %v388, %v385
      %v470 = vpack.c.b16 %v389, %v386
      %v471 = vpack.c.b16 %v390, %v387
      %v472 = vpack.c.b16 %v394, %v391
      %v473 = vpack.c.b16 %v395, %v392
      %v474 = vpack.c.b16 %v396, %v393
      %v475 = vpack.c.b16 %v400, %v397
      %v476 = vpack.c.b16 %v401, %v398
      %v477 = vpack.c.b16 %v402, %v399
      %v478 = vpack.c.b16 %v406, %v403
      %v479 = vpack.c.b16 %v407, %v404
      %v480 = vpack.c.b16 %v408, %v405
      %v481 = vpack.c.b16 %v412, %v409
      %v482 = vpack.c.b16 %v413, %v410
      %v483 = vpack.c.b16 %v414, %v411
      %v484 = vpack.c.b16 %v418, %v415
      %v485 = vpack.c.b16 %v419, %v416
      %v486 = vpack.c.b16 %v420, %v417
      %v487 = vpack.c.b16 %v424, %v421
      %v488 = vpack.c.b16 %v425, %v422
      %v489 = vpack.c.b16 %v426, %v423
      %v490 = vpack.c.b16 %v430, %v427
      %v491 = vpack.c.b16 %v431, %v428
      %v492 = vpack.c.b16 %v432, %v429
      %v493 = vpack.c.b16 %v436, %v433
      %v494 = vpack.c.b16 %v437, %v434
      %v495 = vpack.c.b16 %v438, %v435
      %v496 = vpack.c.b16 %v442, %v439
      %v497 = vpack.c.b16 %v443, %v440
      %v498 = vpack.c.b16 %v444, %v441
      %v499 = vpack.c.b16 %v448, %v445
      %v500 = vpack.c.b16 %v449, %v446
      %v501 = vpack.c.b16 %v450, %v447
      %v502 = vpack.c.b16 %v454, %v451
      %v503 = vpack.c.b16 %v455, %v452
      %v504 = vpack.c.b16 %v456, %v453
      %v601 = vunpack.c.l.b16 %v242
      %v602 = vunpack.c.l.b16 %v243
      %v603 = vunpack.c.l.b16 %v244
      %v604 = vunpack.c.l.b16 %v245
      %v605 = vunpack.c.l.b16 %v246
      %v606 = vunpack.c.l.b16 %v247
      %v607 = vunpack.c.l.b16 %v248
      %v608 = vunpack.c.l.b16 %v249
      %v609 = vunpack.c.l.b16 %v250
      %v610 = vunpack.c.l.b16 %v251
      %v611 = vunpack.c.l.b16 %v252
      %v612 = vunpack.c.l.b16 %v253
      %v613 = vunpack.c.l.b16 %v254
      %v614 = vunpack.c.l.b16 %v255
      %v615 = vunpack.c.l.b16 %v256
      %v616 = vunpack.c.l.b16 %v257
      %v617 = vunpack.c.l.b16 %v258
      %v618 = vunpack.c.l.b16 %v259
      %v619 = vunpack.c.l.b16 %v260
      %v620 = vunpack.c.l.b16 %v261
      %v621 = vunpack.c.l.b16 %v262
      %v622 = vunpack.c.l.b16 %v263
      %v623 = vunpack.c.l.b16 %v264
      %v624 = vunpack.c.l.b16 %v265
      %v625 = vunpack.c.l.b16 %v266
      %v626 = vunpack.c.l.b16 %v267
      %v627 = vunpack.c.l.b16 %v268
      %v628 = vunpack.c.l.b16 %v269
      %v629 = vunpack.c.l.b16 %v270
      %v630 = vunpack.c.l.b16 %v271
      %v631 = vunpack.c.l.b16 %v272
      %v632 = vunpack.c.l.b16 %v273
      %v633 = vunpack.c.l.b16 %v274
      %v634 = vunpack.c.l.b16 %v275
      %v635 = vunpack.c.l.b16 %v276
      %v636 = vunpack.c.l.b16 %v277
      %v637 = vunpack.c.l.b16 %v278
      %v638 = vunpack.c.l.b16 %v279
      %v639 = vunpack.c.l.b16 %v280
      %v640 = vunpack.c.l.b16 %v281
      %v641 = vunpack.c.l.b16 %v282
      %v642 = vunpack.c.l.b16 %v283
      %v643 = vunpack.c.l.b16 %v284
      %v644 = vunpack.c.l.b16 %v285
      %v645 = vunpack.c.l.b16 %v286
      %v646 = vunpack.c.l.b16 %v287
      %v647 = vunpack.c.l.b16 %v288
      %v648 = vunpack.c.l.b16 %v289
      %v649 = vpack.c.b16 %v602, %v601
      %v650 = vpack.c.b16 %v604, %v603
      %v651 = vpack.c.b16 %v606, %v605
      %v652 = vpack.c.b16 %v608, %v607
      %v653 = vpack.c.b16 %v610, %v609
      %v654 = vpack.c.b16 %v612, %v611
      %v655 = vpack.c.b16 %v614, %v613
      %v656 = vpack.c.b16 %v616, %v615
      %v657 = vpack.c.b16 %v618, %v617
      %v658 = vpack.c.b16 %v620, %v619
      %v659 = vpack.c.b16 %v622, %v621
      %v660 = vpack.c.b16 %v624, %v623
      %v661 = vpack.c.b16 %v626, %v625
      %v662 = vpack.c.b16 %v628, %v627
      %v663 = vpack.c.b16 %v630, %v629
      %v664 = vpack.c.b16 %v632, %v631
      %v665 = vpack.c.b16 %v634, %v633
      %v666 = vpack.c.b16 %v636, %v635
      %v667 = vpack.c.b16 %v638, %v637
      %v668 = vpack.c.b16 %v640, %v639
      %v669 = vpack.c.b16 %v642, %v641
      %v670 = vpack.c.b16 %v644, %v643
      %v671 = vpack.c.b16 %v646, %v645
      %v672 = vpack.c.b16 %v648, %v647
      %697 = vmatprep.subr.bf16.mxu0 0
      %698 = vmatpush1.bf16.msra.mxu0 %v649
      %699 = vmatprep.subr.bf16.mxu0 0
      %700 = vmatpush1.bf16.msra.mxu0 %v650
      %701 = vmatprep.subr.bf16.mxu0 0
      %702 = vmatpush1.bf16.msra.mxu0 %v651
      %703 = vmatprep.subr.bf16.mxu0 0
      %704 = vmatpush1.bf16.msra.mxu0 %v652
      %705 = vmatprep.subr.bf16.mxu0 0
      %706 = vmatpush1.bf16.msra.mxu0 %v653
      %707 = vmatprep.subr.bf16.mxu0 0
      %708 = vmatpush1.bf16.msra.mxu0 %v654
      %709 = vmatprep.subr.bf16.mxu0 0
      %710 = vmatpush1.bf16.msra.mxu0 %v655
      %711 = vmatprep.subr.bf16.mxu0 0
      %712 = vmatpush1.bf16.msra.mxu0 %v656
      %713 = vmatprep.subr.bf16.mxu0 0
      %714 = vmatpush1.bf16.msra.mxu0 %v657
      %715 = vmatprep.subr.bf16.mxu0 0
      %716 = vmatpush1.bf16.msra.mxu0 %v658
      %717 = vmatprep.subr.bf16.mxu0 0
      %718 = vmatpush1.bf16.msra.mxu0 %v659
      %719 = vmatprep.subr.bf16.mxu0 0
      %720 = vmatpush1.bf16.msra.mxu0 %v660
      %721 = vmatprep.subr.bf16.mxu0 0
      %722 = vmatpush1.bf16.msra.mxu0 %v661
      %723 = vmatprep.subr.bf16.mxu0 0
      %724 = vmatpush1.bf16.msra.mxu0 %v662
      %725 = vmatprep.subr.bf16.mxu0 0
      %726 = vmatpush1.bf16.msra.mxu0 %v663
      %727 = vmatprep.subr.bf16.mxu0 0
      %728 = vmatpush1.bf16.msra.mxu0 %v664
      %729 = vmatprep.mubr.bf16.mxu0 %v458
      %730 = vmatmul.mubr.bf16.gmra.mrb[0].mxu0 %v457
      %v731 = vpop.f32.mrb[0].mxu0
      %v732 = vadd.f32 %v295, %v731
      %v733 = vpop.f32.mrb[0].mxu0
      %v734 = vpop.f32.mrb[0].mxu0
      %v735 = vadd.f32 %v295, %v734
      %v736 = vpop.f32.mrb[0].mxu0
      %737 = vmatprep.mubr.bf16.mxu0 %v461
      %738 = vmatmul.mubr.bf16.gmra.mrb[0].mxu0 %v460
      %v739 = vpop.f32.mrb[0].mxu0
      %v740 = vadd.f32 %v295, %v739
      %v741 = vpop.f32.mrb[0].mxu0
      %v742 = vpop.f32.mrb[0].mxu0
      %v743 = vadd.f32 %v295, %v742
      %v744 = vpop.f32.mrb[0].mxu0
      %745 = vmatprep.mubr.bf16.mxu0 %v464
      %746 = vmatmul.mubr.bf16.gmra.mrb[0].mxu0 %v463
      %v747 = vpop.f32.mrb[0].mxu0
      %v748 = vadd.f32 %v295, %v747
      %v749 = vpop.f32.mrb[0].mxu0
      %v750 = vpop.f32.mrb[0].mxu0
      %v751 = vadd.f32 %v295, %v750
      %v752 = vpop.f32.mrb[0].mxu0
      %753 = vmatprep.mubr.bf16.mxu0 %v467
      %754 = vmatmul.mubr.bf16.gmra.mrb[0].mxu0 %v466
      %v755 = vpop.f32.mrb[0].mxu0
      %v756 = vadd.f32 %v295, %v755
      %v757 = vpop.f32.mrb[0].mxu0
      %v758 = vpop.f32.mrb[0].mxu0
      %v759 = vadd.f32 %v295, %v758
      %v760 = vpop.f32.mrb[0].mxu0
      %761 = vmatprep.mubr.bf16.mxu0 %v470
      %762 = vmatmul.mubr.bf16.gmra.mrb[0].mxu0 %v469
      %v763 = vpop.f32.mrb[0].mxu0
      %v764 = vadd.f32 %v295, %v763
      %v765 = vpop.f32.mrb[0].mxu0
      %v766 = vpop.f32.mrb[0].mxu0
      %v767 = vadd.f32 %v295, %v766
      %v768 = vpop.f32.mrb[0].mxu0
      %769 = vmatprep.mubr.bf16.mxu0 %v473
      %770 = vmatmul.mubr.bf16.gmra.mrb[0].mxu0 %v472
      %v771 = vpop.f32.mrb[0].mxu0
      %v772 = vadd.f32 %v295, %v771
      %v773 = vpop.f32.mrb[0].mxu0
      %v774 = vpop.f32.mrb[0].mxu0
      %v775 = vadd.f32 %v295, %v774
      %v776 = vpop.f32.mrb[0].mxu0
      %777 = vmatprep.mubr.bf16.mxu0 %v476
      %778 = vmatmul.mubr.bf16.gmra.mrb[0].mxu0 %v475
      %v779 = vpop.f32.mrb[0].mxu0
      %v780 = vadd.f32 %v295, %v779
      %v781 = vpop.f32.mrb[0].mxu0
      %v782 = vpop.f32.mrb[0].mxu0
      %v783 = vadd.f32 %v295, %v782
      %v784 = vpop.f32.mrb[0].mxu0
      %785 = vmatprep.mubr.bf16.mxu0 %v479
      %786 = vmatmul.mubr.bf16.gmra.mrb[0].mxu0 %v478
      %v787 = vpop.f32.mrb[0].mxu0
      %v788 = vadd.f32 %v295, %v787
      %v789 = vpop.f32.mrb[0].mxu0
      %v790 = vpop.f32.mrb[0].mxu0
      %v791 = vadd.f32 %v295, %v790
      %v792 = vpop.f32.mrb[0].mxu0
      %793 = vmatprep.mubr.bf16.mxu0 %v482
      %794 = vmatmul.mubr.bf16.gmra.mrb[0].mxu0 %v481
      %v795 = vpop.f32.mrb[0].mxu0
      %v796 = vadd.f32 %v295, %v795
      %v797 = vpop.f32.mrb[0].mxu0
      %v798 = vpop.f32.mrb[0].mxu0
      %v799 = vadd.f32 %v295, %v798
      %v800 = vpop.f32.mrb[0].mxu0
      %801 = vmatprep.mubr.bf16.mxu0 %v485
      %802 = vmatmul.mubr.bf16.gmra.mrb[0].mxu0 %v484
      %v803 = vpop.f32.mrb[0].mxu0
      %v804 = vadd.f32 %v295, %v803
      %v805 = vpop.f32.mrb[0].mxu0
      %v806 = vpop.f32.mrb[0].mxu0
      %v807 = vadd.f32 %v295, %v806
      %v808 = vpop.f32.mrb[0].mxu0
      %809 = vmatprep.mubr.bf16.mxu0 %v488
      %810 = vmatmul.mubr.bf16.gmra.mrb[0].mxu0 %v487
      %v811 = vpop.f32.mrb[0].mxu0
      %v812 = vadd.f32 %v295, %v811
      %v813 = vpop.f32.mrb[0].mxu0
      %v814 = vpop.f32.mrb[0].mxu0
      %v815 = vadd.f32 %v295, %v814
      %v816 = vpop.f32.mrb[0].mxu0
      %817 = vmatprep.mubr.bf16.mxu0 %v491
      %818 = vmatmul.mubr.bf16.gmra.mrb[0].mxu0 %v490
      %v819 = vpop.f32.mrb[0].mxu0
      %v820 = vadd.f32 %v295, %v819
      %v821 = vpop.f32.mrb[0].mxu0
      %v822 = vpop.f32.mrb[0].mxu0
      %v823 = vadd.f32 %v295, %v822
      %v824 = vpop.f32.mrb[0].mxu0
      %825 = vmatprep.mubr.bf16.mxu0 %v494
      %826 = vmatmul.mubr.bf16.gmra.mrb[0].mxu0 %v493
      %v827 = vpop.f32.mrb[0].mxu0
      %v828 = vadd.f32 %v295, %v827
      %v829 = vpop.f32.mrb[0].mxu0
      %v830 = vpop.f32.mrb[0].mxu0
      %v831 = vadd.f32 %v295, %v830
      %v832 = vpop.f32.mrb[0].mxu0
      %833 = vmatprep.mubr.bf16.mxu0 %v497
      %834 = vmatmul.mubr.bf16.gmra.mrb[0].mxu0 %v496
      %v835 = vpop.f32.mrb[0].mxu0
      %v836 = vadd.f32 %v295, %v835
      %v837 = vpop.f32.mrb[0].mxu0
      %v838 = vpop.f32.mrb[0].mxu0
      %v839 = vadd.f32 %v295, %v838
      %v840 = vpop.f32.mrb[0].mxu0
      %841 = vmatprep.mubr.bf16.mxu0 %v500
      %842 = vmatmul.mubr.bf16.gmra.mrb[0].mxu0 %v499
      %v843 = vpop.f32.mrb[0].mxu0
      %v844 = vadd.f32 %v295, %v843
      %v845 = vpop.f32.mrb[0].mxu0
      %v846 = vpop.f32.mrb[0].mxu0
      %v847 = vadd.f32 %v295, %v846
      %v848 = vpop.f32.mrb[0].mxu0
      %849 = vmatprep.mubr.bf16.mxu0 %v503
      %850 = vmatmul.mubr.bf16.gmra.mrb[0].mxu0 %v502
      %v851 = vpop.f32.mrb[0].mxu0
      %v852 = vadd.f32 %v295, %v851
      %v853 = vpop.f32.mrb[0].mxu0
      %v854 = vpop.f32.mrb[0].mxu0
      %v855 = vadd.f32 %v295, %v854
      %v856 = vpop.f32.mrb[0].mxu0
      %857 = vdwg.mxu0
      %858 = vmatprep.subr.bf16.mxu0 0
      %859 = vmatpush1.bf16.msra.mxu0 %v665
      %860 = vmatprep.subr.bf16.mxu0 0
      %861 = vmatpush1.bf16.msra.mxu0 %v666
      %862 = vmatprep.subr.bf16.mxu0 0
      %863 = vmatpush1.bf16.msra.mxu0 %v667
      %864 = vmatprep.subr.bf16.mxu0 0
      %865 = vmatpush1.bf16.msra.mxu0 %v668
      %866 = vmatprep.subr.bf16.mxu0 0
      %867 = vmatpush1.bf16.msra.mxu0 %v669
      %868 = vmatprep.subr.bf16.mxu0 0
      %869 = vmatpush1.bf16.msra.mxu0 %v670
      %870 = vmatprep.subr.bf16.mxu0 0
      %871 = vmatpush1.bf16.msra.mxu0 %v671
      %872 = vmatprep.subr.bf16.mxu0 0
      %873 = vmatpush1.bf16.msra.mxu0 %v672
      %874 = vmatprep.subr.bf16.mxu0 0
      %875 = vmatpush1.bf16.msra.mxu0 0
      %876 = vmatprep.subr.bf16.mxu0 0
      %877 = vmatpush1.bf16.msra.mxu0 0
      %878 = vmatprep.subr.bf16.mxu0 0
      %879 = vmatpush1.bf16.msra.mxu0 0
      %880 = vmatprep.subr.bf16.mxu0 0
      %881 = vmatpush1.bf16.msra.mxu0 0
      %882 = vmatprep.subr.bf16.mxu0 0
      %883 = vmatpush1.bf16.msra.mxu0 0
      %884 = vmatprep.subr.bf16.mxu0 0
      %885 = vmatpush1.bf16.msra.mxu0 0
      %886 = vmatprep.subr.bf16.mxu0 0
      %887 = vmatpush1.bf16.msra.mxu0 0
      %888 = vmatprep.subr.bf16.mxu0 0
      %889 = vmatpush1.bf16.msra.mxu0 0
      %890 = vmatprep.mubr.bf16.mxu0 0
      %891 = vmatmul.mubr.bf16.gmra.mrb[0].mxu0 %v459
      %v892 = vpop.f32.mrb[0].mxu0
      %v893 = vadd.f32 %v732, %v892
      %v894 = vpop.f32.mrb[0].mxu0
      %v895 = vpop.f32.mrb[0].mxu0
      %v896 = vadd.f32 %v735, %v895
      %v897 = vpop.f32.mrb[0].mxu0
      %898 = vmatprep.mubr.bf16.mxu0 0
      %899 = vmatmul.mubr.bf16.gmra.mrb[0].mxu0 %v462
      %v900 = vpop.f32.mrb[0].mxu0
      %v901 = vadd.f32 %v740, %v900
      %v902 = vpop.f32.mrb[0].mxu0
      %v903 = vpop.f32.mrb[0].mxu0
      %v904 = vadd.f32 %v743, %v903
      %v905 = vpop.f32.mrb[0].mxu0
      %906 = vmatprep.mubr.bf16.mxu0 0
      %907 = vmatmul.mubr.bf16.gmra.mrb[0].mxu0 %v465
      %v908 = vpop.f32.mrb[0].mxu0
      %v909 = vadd.f32 %v748, %v908
      %v910 = vpop.f32.mrb[0].mxu0
      %v911 = vpop.f32.mrb[0].mxu0
      %v912 = vadd.f32 %v751, %v911
      %v913 = vpop.f32.mrb[0].mxu0
      %914 = vmatprep.mubr.bf16.mxu0 0
      %915 = vmatmul.mubr.bf16.gmra.mrb[0].mxu0 %v468
      %v916 = vpop.f32.mrb[0].mxu0
      %v917 = vadd.f32 %v756, %v916
      %v918 = vpop.f32.mrb[0].mxu0
      %v919 = vpop.f32.mrb[0].mxu0
      %v920 = vadd.f32 %v759, %v919
      %v921 = vpop.f32.mrb[0].mxu0
      %922 = vmatprep.mubr.bf16.mxu0 0
      %923 = vmatmul.mubr.bf16.gmra.mrb[0].mxu0 %v471
      %v924 = vpop.f32.mrb[0].mxu0
      %v925 = vadd.f32 %v764, %v924
      %v926 = vpop.f32.mrb[0].mxu0
      %v927 = vpop.f32.mrb[0].mxu0
      %v928 = vadd.f32 %v767, %v927
      %v929 = vpop.f32.mrb[0].mxu0
      %930 = vmatprep.mubr.bf16.mxu0 0
      %931 = vmatmul.mubr.bf16.gmra.mrb[0].mxu0 %v474
      %v932 = vpop.f32.mrb[0].mxu0
      %v933 = vadd.f32 %v772, %v932
      %v934 = vpop.f32.mrb[0].mxu0
      %v935 = vpop.f32.mrb[0].mxu0
      %v936 = vadd.f32 %v775, %v935
      %v937 = vpop.f32.mrb[0].mxu0
      %938 = vmatprep.mubr.bf16.mxu0 0
      %939 = vmatmul.mubr.bf16.gmra.mrb[0].mxu0 %v477
      %v940 = vpop.f32.mrb[0].mxu0
      %v941 = vadd.f32 %v780, %v940
      %v942 = vpop.f32.mrb[0].mxu0
      %v943 = vpop.f32.mrb[0].mxu0
      %v944 = vadd.f32 %v783, %v943
      %v945 = vpop.f32.mrb[0].mxu0
      %946 = vmatprep.mubr.bf16.mxu0 0
      %947 = vmatmul.mubr.bf16.gmra.mrb[0].mxu0 %v480
      %v948 = vpop.f32.mrb[0].mxu0
      %v949 = vadd.f32 %v788, %v948
      %v950 = vpop.f32.mrb[0].mxu0
      %v951 = vpop.f32.mrb[0].mxu0
      %v952 = vadd.f32 %v791, %v951
      %v953 = vpop.f32.mrb[0].mxu0
      %954 = vmatprep.mubr.bf16.mxu0 0
      %955 = vmatmul.mubr.bf16.gmra.mrb[0].mxu0 %v483
      %v956 = vpop.f32.mrb[0].mxu0
      %v957 = vadd.f32 %v796, %v956
      %v958 = vpop.f32.mrb[0].mxu0
      %v959 = vpop.f32.mrb[0].mxu0
      %v960 = vadd.f32 %v799, %v959
      %v961 = vpop.f32.mrb[0].mxu0
      %962 = vmatprep.mubr.bf16.mxu0 0
      %963 = vmatmul.mubr.bf16.gmra.mrb[0].mxu0 %v486
      %v964 = vpop.f32.mrb[0].mxu0
      %v965 = vadd.f32 %v804, %v964
      %v966 = vpop.f32.mrb[0].mxu0
      %v967 = vpop.f32.mrb[0].mxu0
      %v968 = vadd.f32 %v807, %v967
      %v969 = vpop.f32.mrb[0].mxu0
      %970 = vmatprep.mubr.bf16.mxu0 0
      %971 = vmatmul.mubr.bf16.gmra.mrb[0].mxu0 %v489
      %v972 = vpop.f32.mrb[0].mxu0
      %v973 = vadd.f32 %v812, %v972
      %v974 = vpop.f32.mrb[0].mxu0
      %v975 = vpop.f32.mrb[0].mxu0
      %v976 = vadd.f32 %v815, %v975
      %v977 = vpop.f32.mrb[0].mxu0
      %978 = vmatprep.mubr.bf16.mxu0 0
      %979 = vmatmul.mubr.bf16.gmra.mrb[0].mxu0 %v492
      %v980 = vpop.f32.mrb[0].mxu0
      %v981 = vadd.f32 %v820, %v980
      %v982 = vpop.f32.mrb[0].mxu0
      %v983 = vpop.f32.mrb[0].mxu0
      %v984 = vadd.f32 %v823, %v983
      %v985 = vpop.f32.mrb[0].mxu0
      %986 = vmatprep.mubr.bf16.mxu0 0
      %987 = vmatmul.mubr.bf16.gmra.mrb[0].mxu0 %v495
      %v988 = vpop.f32.mrb[0].mxu0
      %v989 = vadd.f32 %v828, %v988
      %v990 = vpop.f32.mrb[0].mxu0
      %v991 = vpop.f32.mrb[0].mxu0
      %v992 = vadd.f32 %v831, %v991
      %v993 = vpop.f32.mrb[0].mxu0
      %994 = vmatprep.mubr.bf16.mxu0 0
      %995 = vmatmul.mubr.bf16.gmra.mrb[0].mxu0 %v498
      %v996 = vpop.f32.mrb[0].mxu0
      %v997 = vadd.f32 %v836, %v996
      %v998 = vpop.f32.mrb[0].mxu0
      %v999 = vpop.f32.mrb[0].mxu0
      %v1000 = vadd.f32 %v839, %v999
      %v1001 = vpop.f32.mrb[0].mxu0
      %1002 = vmatprep.mubr.bf16.mxu0 0
      %1003 = vmatmul.mubr.bf16.gmra.mrb[0].mxu0 %v501
      %v1004 = vpop.f32.mrb[0].mxu0
      %v1005 = vadd.f32 %v844, %v1004
      %v1006 = vpop.f32.mrb[0].mxu0
      %v1007 = vpop.f32.mrb[0].mxu0
      %v1008 = vadd.f32 %v847, %v1007
      %v1009 = vpop.f32.mrb[0].mxu0
      %1010 = vmatprep.mubr.bf16.mxu0 0
      %1011 = vmatmul.mubr.bf16.gmra.mrb[0].mxu0 %v504
      %v1012 = vpop.f32.mrb[0].mxu0
      %v1013 = vadd.f32 %v852, %v1012
      %v1014 = vpop.f32.mrb[0].mxu0
      %v1015 = vpop.f32.mrb[0].mxu0
      %v1016 = vadd.f32 %v855, %v1015
      %v1017 = vpop.f32.mrb[0].mxu0
      %1018 = vdwg.mxu0
      %v1019 = vsub.f32 0.0, %v893
      %v1020 = vsub.f32 0.0, %v896
      %v1021 = vsub.f32 0.0, %v901
      %v1022 = vsub.f32 0.0, %v904
      %v1023 = vsub.f32 0.0, %v909
      %v1024 = vsub.f32 0.0, %v912
      %v1025 = vsub.f32 0.0, %v917
      %v1026 = vsub.f32 0.0, %v920
      %v1027 = vsub.f32 0.0, %v925
      %v1028 = vsub.f32 0.0, %v928
      %v1029 = vsub.f32 0.0, %v933
      %v1030 = vsub.f32 0.0, %v936
      %v1031 = vsub.f32 0.0, %v941
      %v1032 = vsub.f32 0.0, %v944
      %v1033 = vsub.f32 0.0, %v949
      %v1034 = vsub.f32 0.0, %v952
      %v1035 = vsub.f32 0.0, %v957
      %v1036 = vsub.f32 0.0, %v960
      %v1037 = vsub.f32 0.0, %v965
      %v1038 = vsub.f32 0.0, %v968
      %v1039 = vsub.f32 0.0, %v973
      %v1040 = vsub.f32 0.0, %v976
      %v1041 = vsub.f32 0.0, %v981
      %v1042 = vsub.f32 0.0, %v984
      %v1043 = vsub.f32 0.0, %v989
      %v1044 = vsub.f32 0.0, %v992
      %v1045 = vsub.f32 0.0, %v997
      %v1046 = vsub.f32 0.0, %v1000
      %v1047 = vsub.f32 0.0, %v1005
      %v1048 = vsub.f32 0.0, %v1008
      %v1049 = vsub.f32 0.0, %v1013
      %v1050 = vsub.f32 0.0, %v1016
      %v1051 = vmul.f32 %v1019, 1.442695
      %v1052 = vpow.pop %v1051
      %v1053 = vmul.f32 %v1020, 1.442695
      %v1054 = vpow.pop %v1053
      %v1055 = vmul.f32 %v1021, 1.442695
      %v1056 = vpow.pop %v1055
      %v1057 = vmul.f32 %v1022, 1.442695
      %v1058 = vpow.pop %v1057
      %v1059 = vmul.f32 %v1023, 1.442695
      %v1060 = vpow.pop %v1059
      %v1061 = vmul.f32 %v1024, 1.442695
      %v1062 = vpow.pop %v1061
      %v1063 = vmul.f32 %v1025, 1.442695
      %v1064 = vpow.pop %v1063
      %v1065 = vmul.f32 %v1026, 1.442695
      %v1066 = vpow.pop %v1065
      %v1067 = vmul.f32 %v1027, 1.442695
      %v1068 = vpow.pop %v1067
      %v1069 = vmul.f32 %v1028, 1.442695
      %v1070 = vpow.pop %v1069
      %v1071 = vmul.f32 %v1029, 1.442695
      %v1072 = vpow.pop %v1071
      %v1073 = vmul.f32 %v1030, 1.442695
      %v1074 = vpow.pop %v1073
      %v1075 = vmul.f32 %v1031, 1.442695
      %v1076 = vpow.pop %v1075
      %v1077 = vmul.f32 %v1032, 1.442695
      %v1078 = vpow.pop %v1077
      %v1079 = vmul.f32 %v1033, 1.442695
      %v1080 = vpow.pop %v1079
      %v1081 = vmul.f32 %v1034, 1.442695
      %v1082 = vpow.pop %v1081
      %v1083 = vmul.f32 %v1035, 1.442695
      %v1084 = vpow.pop %v1083
      %v1085 = vmul.f32 %v1036, 1.442695
      %v1086 = vpow.pop %v1085
      %v1087 = vmul.f32 %v1037, 1.442695
      %v1088 = vpow.pop %v1087
      %v1089 = vmul.f32 %v1038, 1.442695
      %v1090 = vpow.pop %v1089
      %v1091 = vmul.f32 %v1039, 1.442695
      %v1092 = vpow.pop %v1091
      %v1093 = vmul.f32 %v1040, 1.442695
      %v1094 = vpow.pop %v1093
      %v1095 = vmul.f32 %v1041, 1.442695
      %v1096 = vpow.pop %v1095
      %v1097 = vmul.f32 %v1042, 1.442695
      %v1098 = vpow.pop %v1097
      %v1099 = vmul.f32 %v1043, 1.442695
      %v1100 = vpow.pop %v1099
      %v1101 = vmul.f32 %v1044, 1.442695
      %v1102 = vpow.pop %v1101
      %v1103 = vmul.f32 %v1045, 1.442695
      %v1104 = vpow.pop %v1103
      %v1105 = vmul.f32 %v1046, 1.442695
      %v1106 = vpow.pop %v1105
      %v1107 = vmul.f32 %v1047, 1.442695
      %v1108 = vpow.pop %v1107
      %v1109 = vmul.f32 %v1048, 1.442695
      %v1110 = vpow.pop %v1109
      %v1111 = vmul.f32 %v1049, 1.442695
      %v1112 = vpow.pop %v1111
      %v1113 = vmul.f32 %v1050, 1.442695
      %v1114 = vpow.pop %v1113
      %v1115 = vadd.f32 %v1052, 1.0
      %v1116 = vadd.f32 %v1054, 1.0
      %v1117 = vadd.f32 %v1056, 1.0
      %v1118 = vadd.f32 %v1058, 1.0
      %v1119 = vadd.f32 %v1060, 1.0
      %v1120 = vadd.f32 %v1062, 1.0
      %v1121 = vadd.f32 %v1064, 1.0
      %v1122 = vadd.f32 %v1066, 1.0
      %v1123 = vadd.f32 %v1068, 1.0
      %v1124 = vadd.f32 %v1070, 1.0
      %v1125 = vadd.f32 %v1072, 1.0
      %v1126 = vadd.f32 %v1074, 1.0
      %v1127 = vadd.f32 %v1076, 1.0
      %v1128 = vadd.f32 %v1078, 1.0
      %v1129 = vadd.f32 %v1080, 1.0
      %v1130 = vadd.f32 %v1082, 1.0
      %v1131 = vadd.f32 %v1084, 1.0
      %v1132 = vadd.f32 %v1086, 1.0
      %v1133 = vadd.f32 %v1088, 1.0
      %v1134 = vadd.f32 %v1090, 1.0
      %v1135 = vadd.f32 %v1092, 1.0
      %v1136 = vadd.f32 %v1094, 1.0
      %v1137 = vadd.f32 %v1096, 1.0
      %v1138 = vadd.f32 %v1098, 1.0
      %v1139 = vadd.f32 %v1100, 1.0
      %v1140 = vadd.f32 %v1102, 1.0
      %v1141 = vadd.f32 %v1104, 1.0
      %v1142 = vadd.f32 %v1106, 1.0
      %v1143 = vadd.f32 %v1108, 1.0
      %v1144 = vadd.f32 %v1110, 1.0
      %v1145 = vadd.f32 %v1112, 1.0
      %v1146 = vadd.f32 %v1114, 1.0
      %v1147 = vrcp.pop %v1115
      %v1148 = vmul.f32 1.0, %v1147
      %v1149 = vrcp.pop %v1116
      %v1150 = vmul.f32 1.0, %v1149
      %v1151 = vrcp.pop %v1117
      %v1152 = vmul.f32 1.0, %v1151
      %v1153 = vrcp.pop %v1118
      %v1154 = vmul.f32 1.0, %v1153
      %v1155 = vrcp.pop %v1119
      %v1156 = vmul.f32 1.0, %v1155
      %v1157 = vrcp.pop %v1120
      %v1158 = vmul.f32 1.0, %v1157
      %v1159 = vrcp.pop %v1121
      %v1160 = vmul.f32 1.0, %v1159
      %v1161 = vrcp.pop %v1122
      %v1162 = vmul.f32 1.0, %v1161
      %v1163 = vrcp.pop %v1123
      %v1164 = vmul.f32 1.0, %v1163
      %v1165 = vrcp.pop %v1124
      %v1166 = vmul.f32 1.0, %v1165
      %v1167 = vrcp.pop %v1125
      %v1168 = vmul.f32 1.0, %v1167
      %v1169 = vrcp.pop %v1126
      %v1170 = vmul.f32 1.0, %v1169
      %v1171 = vrcp.pop %v1127
      %v1172 = vmul.f32 1.0, %v1171
      %v1173 = vrcp.pop %v1128
      %v1174 = vmul.f32 1.0, %v1173
      %v1175 = vrcp.pop %v1129
      %v1176 = vmul.f32 1.0, %v1175
      %v1177 = vrcp.pop %v1130
      %v1178 = vmul.f32 1.0, %v1177
      %v1179 = vrcp.pop %v1131
      %v1180 = vmul.f32 1.0, %v1179
      %v1181 = vrcp.pop %v1132
      %v1182 = vmul.f32 1.0, %v1181
      %v1183 = vrcp.pop %v1133
      %v1184 = vmul.f32 1.0, %v1183
      %v1185 = vrcp.pop %v1134
      %v1186 = vmul.f32 1.0, %v1185
      %v1187 = vrcp.pop %v1135
      %v1188 = vmul.f32 1.0, %v1187
      %v1189 = vrcp.pop %v1136
      %v1190 = vmul.f32 1.0, %v1189
      %v1191 = vrcp.pop %v1137
      %v1192 = vmul.f32 1.0, %v1191
      %v1193 = vrcp.pop %v1138
      %v1194 = vmul.f32 1.0, %v1193
      %v1195 = vrcp.pop %v1139
      %v1196 = vmul.f32 1.0, %v1195
      %v1197 = vrcp.pop %v1140
      %v1198 = vmul.f32 1.0, %v1197
      %v1199 = vrcp.pop %v1141
      %v1200 = vmul.f32 1.0, %v1199
      %v1201 = vrcp.pop %v1142
      %v1202 = vmul.f32 1.0, %v1201
      %v1203 = vrcp.pop %v1143
      %v1204 = vmul.f32 1.0, %v1203
      %v1205 = vrcp.pop %v1144
      %v1206 = vmul.f32 1.0, %v1205
      %v1207 = vrcp.pop %v1145
      %v1208 = vmul.f32 1.0, %v1207
      %v1209 = vrcp.pop %v1146
      %v1210 = vmul.f32 1.0, %v1209
      %1211 = vst [vmem:[%s175] sm:$0xff] %v1148
      %1212 = vst [vmem:[%s175 + $0x8] sm:$0xff] %v1150
      %1213 = vst [vmem:[%s175 + $0x10] sm:$0xff] %v1152
      %1214 = vst [vmem:[%s175 + $0x18] sm:$0xff] %v1154
      %1215 = vst [vmem:[%s175 + $0x20] sm:$0xff] %v1156
      %1216 = vst [vmem:[%s175 + $0x28] sm:$0xff] %v1158
      %1217 = vst [vmem:[%s175 + $0x30] sm:$0xff] %v1160
      %1218 = vst [vmem:[%s175 + $0x38] sm:$0xff] %v1162
      %1219 = vst [vmem:[%s175 + $0x40] sm:$0xff] %v1164
      %1220 = vst [vmem:[%s175 + $0x48] sm:$0xff] %v1166
      %1221 = vst [vmem:[%s175 + $0x50] sm:$0xff] %v1168
      %1222 = vst [vmem:[%s175 + $0x58] sm:$0xff] %v1170
      %1223 = vst [vmem:[%s175 + $0x60] sm:$0xff] %v1172
      %1224 = vst [vmem:[%s175 + $0x68] sm:$0xff] %v1174
      %1225 = vst [vmem:[%s175 + $0x70] sm:$0xff] %v1176
      %1226 = vst [vmem:[%s175 + $0x78] sm:$0xff] %v1178
      %1227 = vst [vmem:[%s175 + $0x80] sm:$0xff] %v1180
      %1228 = vst [vmem:[%s175 + $0x88] sm:$0xff] %v1182
      %1229 = vst [vmem:[%s175 + $0x90] sm:$0xff] %v1184
      %1230 = vst [vmem:[%s175 + $0x98] sm:$0xff] %v1186
      %1231 = vst [vmem:[%s175 + $0xa0] sm:$0xff] %v1188
      %1232 = vst [vmem:[%s175 + $0xa8] sm:$0xff] %v1190
      %1233 = vst [vmem:[%s175 + $0xb0] sm:$0xff] %v1192
      %1234 = vst [vmem:[%s175 + $0xb8] sm:$0xff] %v1194
      %1235 = vst [vmem:[%s175 + $0xc0] sm:$0xff] %v1196
      %1236 = vst [vmem:[%s175 + $0xc8] sm:$0xff] %v1198
      %1237 = vst [vmem:[%s175 + $0xd0] sm:$0xff] %v1200
      %1238 = vst [vmem:[%s175 + $0xd8] sm:$0xff] %v1202
      %1239 = vst [vmem:[%s175 + $0xe0] sm:$0xff] %v1204
      %1240 = vst [vmem:[%s175 + $0xe8] sm:$0xff] %v1206
      %1241 = vst [vmem:[%s175 + $0xf0] sm:$0xff] %v1208
      %1242 = vst [vmem:[%s175 + $0xf8] sm:$0xff] %v1210
      %s1243 = smul.u32 32, %s14
      %p1244 = scmp.lt.s32.totalorder %s1243, 63
      %s1245 = scalar_select %p1244, %s1243, 63
      %s1246 = smul.addr %s1245, 8
      %s1247 = scalar_lea.vmem %s3, %s1246
      // Predicated region
      $region33: #{forward.33} parent=31 // pred_check
        %p1248 = pneg %p100
      $region34: #{forward.33} parent=31 // pred_check_branch
        %1250 = sbr.rel (%p1248) target = $region36
      $region35: #{forward.33} parent=31 // pred_region
        %s1251 = smul.u32 32, %s14
      $region36: #{forward.33} parent=31 // pred_fallthru
        _
    $region32: #{forward.33} parent=5 // pred_fallthru
      _
    %p1252 = scmp.le.s32.totalorder 2, %s9
    // Predicated region
    $region37: #{forward.33} parent=5 // pred_check
      %p1253 = pneg %p1252
    $region38: #{forward.33} parent=5 // pred_check_branch
      %1255 = sbr.rel (%p1253) target = $region40
    $region39: #{forward.33} parent=5 // pred_region
      %s1256 = ssub.s32 %s9, 2
      // Predicated region
      $region41: #{forward.33} parent=39 // pred_check
        %p1257 = pneg %p106
      $region42: #{forward.33} parent=39 // pred_check_branch
        %1259 = sbr.rel (%p1257) target = $region44
      $region43: #{forward.33} parent=39 // pred_region
        %s1260 = smul.u32 32, %s15
        %p1261 = scmp.lt.s32.totalorder %s1260, 63
        %s1262 = scalar_select %p1261, %s1260, 63
        %s1263 = smul.addr %s1262, 8
        %s1264 = scalar_lea.vmem %s3, %s1263
      $region44: #{forward.33} parent=39 // pred_fallthru
        _
    $region40: #{forward.33} parent=5 // pred_fallthru
      _
  $region6: #{forward.33} parent=0 // loop_footer
    %s13 = sadd.s32 1, %s9
  $region7: #{forward.33} parent=0 // loop_footer_branch
    %8 = sbr.rel target = $region3
  $region8: #{forward.33} parent=0 // loop_exit
    _

</llo_original>
